<compile_context>
chip_gen: v7x
topology: tpu7x:2x2x1
jax: 0.10.0
libtpu: 0.0.40
codegen_flags: <defaults>
</compile_context>

<pallas_src>
import functools

import jax
import jax.numpy as jnp
import numpy as np
from jax.experimental import pallas as pl
from jax.experimental.pallas import tpu as pltpu

_EPS = 1e-5


# ----------------------------------------------------------------------------
# In-kernel helpers
# ----------------------------------------------------------------------------
def _bn_act(x, gamma, beta, act):
    """BatchNorm2d (training-mode batch stats, biased var, eps=1e-5) + act.

    x: (M, C) float32 with M = N*H*W.  Two-pass statistics over axis 0."""
    inv_m = 1.0 / x.shape[0]
    mean = jnp.sum(x, axis=0, keepdims=True) * inv_m
    d = x - mean
    var = jnp.sum(d * d, axis=0, keepdims=True) * inv_m
    y = d * (gamma * jax.lax.rsqrt(var + _EPS)) + beta
    if act == "leaky":
        return jnp.where(y > 0, y, 0.2 * y)          # LeakyReLU(0.2)
    return jnp.tanh(y)                               # Tanh


def _encoder_fused_kernel(p1_ref, w1_ref, w2_ref, w3_ref,
                          g1_ref, be1_ref, g2_ref, be2_ref, g3_ref, be3_ref,
                          h1_ref, h2_ref, h3_ref,
                          col1_ref, pad1_ref, col2_ref, pad2_ref, col3_ref,
                          *, n_batch):
    f32, bf16 = jnp.float32, jnp.bfloat16
    m2 = n_batch * 8 * 8                 # rows of the 8x8 feature maps
    m1 = 4 * m2                          # rows of the 16x16 map (parity split)
    k1 = p1_ref.shape[-1]                # 16 * nc (unpadded contraction)
    k1p = col1_ref.shape[-1]             # padded to a multiple of 128

    # ---------------- layer 1: Conv(nc, 64, 4, 2, 1) + BN + LeakyReLU -------
    # Zero-pad the tiny contraction dim in VMEM (not in HBM) and do one
    # matmul.  Rows are grouped by output-pixel parity: (pr, pc, n, r, c)
    # with ho = 2r+pr, wo = 2c+pc.  w1 rows >= k1 are zero, so only the
    # padding lanes need to be cleared (garbage could be NaN otherwise).
    col1_ref[:, 0:k1] = p1_ref[...]
    col1_ref[:, k1:k1p] = jnp.zeros((m1, k1p - k1), bf16)
    acc1 = jnp.dot(col1_ref[...], w1_ref[...], preferred_element_type=f32)
    h1 = _bn_act(acc1, g1_ref[...], be1_ref[...], "leaky")       # (m1, 64)

    # Scatter h1 into the zero-guarded, parity-split buffer used by layer 2:
    #   pad1[2*pr+pc, n, pr+r, pc+c, :] = h1[n, 2r+pr, 2c+pc, :]
    # Only the guard row/col (never overwritten by data, always read by some
    # tap) is zeroed -- no full-buffer fill.
    for pr in range(2):
        for pc in range(2):
            k = pr * 2 + pc
            blk = h1[k * m2:(k + 1) * m2, :].reshape(n_batch, 8, 8, 64)
            h1_ref[k, :, :, :, :] = blk
            gr = 8 if pr == 0 else 0
            gc = 8 if pc == 0 else 0
            pad1_ref[k, :, gr:gr + 1, :, :] = jnp.zeros((n_batch, 1, 9, 64), f32)
            pad1_ref[k, :, :, gc:gc + 1, :] = jnp.zeros((n_batch, 9, 1, 64), f32)
            pad1_ref[k, :, pr:pr + 8, pc:pc + 8, :] = blk

    # ---------------- layer 2: Conv(64, 128, 4, 2, 1) + BN + LeakyReLU ------
    # Build the (m2, 16*64) bf16 im2col slab (each of the 16 stride-2 taps is
    # a contiguous slice of pad1 thanks to the parity split + guard), then ONE
    # K=1024 matmul on the MXU.
    for i in range(4):
        for j in range(4):
            k = (1 - (i % 2)) * 2 + (1 - (j % 2))
            t = i * 4 + j
            tap = pad1_ref[k, :, i // 2:i // 2 + 8, j // 2:j // 2 + 8, :]
            col2_ref[:, t * 64:(t + 1) * 64] = tap.reshape(m2, 64).astype(bf16)
    acc2 = jnp.dot(col2_ref[...], w2_ref[...], preferred_element_type=f32)
    h2 = _bn_act(acc2, g2_ref[...], be2_ref[...], "leaky")       # (m2, 128)
    h2_4d = h2.reshape(n_batch, 8, 8, 128)
    h2_ref[...] = h2_4d

    # ---------------- layer 3: Conv(128, dim, 3, 1, 1) + BN + Tanh ----------
    # Guard-only zeroing of the padded copy, im2col slab (K = 9*128 = 1152),
    # one matmul.
    z_row = jnp.zeros((n_batch, 1, 10, 128), f32)
    pad2_ref[:, 0:1, :, :] = z_row
    pad2_ref[:, 9:10, :, :] = z_row
    z_col = jnp.zeros((n_batch, 10, 1, 128), f32)
    pad2_ref[:, :, 0:1, :] = z_col
    pad2_ref[:, :, 9:10, :] = z_col
    pad2_ref[:, 1:9, 1:9, :] = h2_4d

    for i in range(3):
        for j in range(3):
            t = i * 3 + j
            tap = pad2_ref[:, i:i + 8, j:j + 8, :]
            col3_ref[:, t * 128:(t + 1) * 128] = tap.reshape(m2, 128).astype(bf16)
    acc3 = jnp.dot(col3_ref[...], w3_ref[...], preferred_element_type=f32)
    h3 = _bn_act(acc3, g3_ref[...], be3_ref[...], "tanh")        # (m2, dim)
    h3_ref[...] = h3.reshape(n_batch, 8, 8, h3_ref.shape[-1])


# ----------------------------------------------------------------------------
# pallas_call wrapper (grid-less: single invocation, whole arrays in VMEM,
# no double-buffering)
# ----------------------------------------------------------------------------
def _fused_encoder_call(patches1, prep, n_batch):
    dim = prep["w3t"].shape[-1]
    k1 = patches1.shape[-1]
    k1p = prep["w1"].shape[0]
    m2 = n_batch * 64
    m1 = 4 * m2

    operands = (patches1, prep["w1"], prep["w2t"], prep["w3t"],
                prep["g1"], prep["be1"], prep["g2"], prep["be2"],
                prep["g3"], prep["be3"])
    out_shape = (
        jax.ShapeDtypeStruct((4, n_batch, 8, 8, 64), jnp.float32),   # h1 (parity grouped)
        jax.ShapeDtypeStruct((n_batch, 8, 8, 128), jnp.float32),     # h2 (NHWC)
        jax.ShapeDtypeStruct((n_batch, 8, 8, dim), jnp.float32),     # h3 (NHWC)
    )

    vmem = pltpu.MemorySpace.VMEM
    flops = 2 * (m1 * k1p * 64 + m2 * 1024 * 128 + m2 * 1152 * dim)
    bytes_in = ((m1 * k1 + k1p * 64 + 1024 * 128 + 1152 * dim) * 2
                + 2 * (64 + 128 + dim) * 4)
    bytes_out = (4 * n_batch * 64 * 64 + n_batch * 64 * 128 + n_batch * 64 * dim) * 4

    return pl.pallas_call(
        functools.partial(_encoder_fused_kernel, n_batch=n_batch),
        out_shape=out_shape,
        in_specs=[pl.BlockSpec(memory_space=vmem) for _ in operands],
        out_specs=tuple(pl.BlockSpec(memory_space=vmem) for _ in out_shape),
        scratch_shapes=[
            pltpu.VMEM((m1, k1p), jnp.bfloat16),             # layer-1 padded patches
            pltpu.VMEM((4, n_batch, 9, 9, 64), jnp.float32), # padded, parity-split h1
            pltpu.VMEM((m2, 16 * 64), jnp.bfloat16),         # layer-2 im2col slab
            pltpu.VMEM((n_batch, 10, 10, 128), jnp.float32), # padded h2
            pltpu.VMEM((m2, 9 * 128), jnp.bfloat16),         # layer-3 im2col slab
        ],
        cost_estimate=pl.CostEstimate(
            flops=int(flops),
            transcendentals=int(m2 * dim + 320),
            bytes_accessed=int(bytes_in + bytes_out)),
    )(*operands)


# ----------------------------------------------------------------------------
# Plain-JAX glue: layer-1 im2col, parameter preparation, init
# ----------------------------------------------------------------------------
def _layer1_patches(x_nhwc):
    """im2col for layer 1 only (the input is tiny).  Rows are ordered
    (pr, pc, n, r, c) with output pixel (ho, wo) = (2r+pr, 2c+pc), so the
    kernel can write h1 straight into its parity-split padded VMEM buffer.
    The contraction dim (4*4*nc) is NOT padded here; padding to 128 lanes
    happens inside the kernel (VMEM), not through HBM."""
    n, h, w, nc = x_nhwc.shape
    assert h == 32 and w == 32, "dcgan_32 encoder expects 32x32 inputs"
    xp = jnp.pad(x_nhwc, ((0, 0), (1, 1), (1, 1), (0, 0)))
    taps = []
    for i in range(4):
        for j in range(4):
            taps.append(xp[:, i:i + 31:2, j:j + 31:2, :])       # (n,16,16,nc)
    k = 16 * nc
    p = jnp.stack(taps, axis=3).reshape(n, 16, 16, k)
    p = (p.reshape(n, 8, 2, 8, 2, k)
          .transpose(2, 4, 0, 1, 3, 5)                          # (pr,pc,n,r,c,k)
          .reshape(4 * n * 64, k))
    return p.astype(jnp.bfloat16)


def prepare_params(params):
    """PyTorch-layout params -> kernel-ready operands (call once, outside jit).
    Conv biases are dropped on purpose: a per-channel constant before a
    training-mode BatchNorm is exactly cancelled by the mean subtraction."""
    w1, _b1, g1, be1 = params["c1"]          # w1: (64,  nc, 4, 4)
    w2, _b2, g2, be2 = params["c2"]          # w2: (128, 64, 4, 4)
    w3, _b3, g3, be3 = params["c3"]          # w3: (dim, 128, 3, 3)
    nc = w1.shape[1]
    k1 = 16 * nc
    k1p = ((k1 + 127) // 128) * 128
    w1m = jnp.pad(jnp.transpose(w1, (2, 3, 1, 0)).reshape(k1, 64),
                  ((0, k1p - k1), (0, 0)))
    vec = lambda v: v.reshape(1, -1).astype(jnp.float32)
    bf16 = jnp.bfloat16
    return {
        "w1": w1m.astype(bf16),                                              # (k1p, 64)
        "w2t": jnp.transpose(w2, (2, 3, 1, 0)).reshape(16 * 64, 128).astype(bf16),
        "w3t": jnp.transpose(w3, (2, 3, 1, 0)).reshape(9 * 128, w3.shape[0]).astype(bf16),
        "g1": vec(g1), "be1": vec(be1),
        "g2": vec(g2), "be2": vec(be2),
        "g3": vec(g3), "be3": vec(be3),
    }


def init_params(key, dim, nc=1, nf=64):
    def conv_p(k, cout, cin, ksz):
        kw_, kb, kg, kbt = jax.random.split(k, 4)
        fan_in = cin * ksz * ksz
        w = (1.0 / jnp.sqrt(fan_in)) * jax.random.normal(
            kw_, (cout, cin, ksz, ksz), jnp.float32)
        b = 0.05 * jax.random.normal(kb, (cout,), jnp.float32)   # cancelled by BN
        gamma = 1.0 + 0.1 * jax.random.normal(kg, (cout,), jnp.float32)
        beta = 0.1 * jax.random.normal(kbt, (cout,), jnp.float32)
        return (w, b, gamma, beta)

    k1, k2, k3 = jax.random.split(key, 3)
    return {
        "c1": conv_p(k1, nf, nc, 4),        # Conv2d(nc,  64, 4, 2, 1)
        "c2": conv_p(k2, nf * 2, nf, 4),    # Conv2d(64, 128, 4, 2, 1)
        "c3": conv_p(k3, dim, nf * 2, 3),   # Conv2d(128, dim, 3, 1, 1)
    }


@functools.partial(jax.jit, static_argnames=("channels_last",))
def encoder_forward(x_nchw, prep, channels_last=False):
    """Matches PyTorch `encoder.forward`: returns (h3, [h1, h2]).
    NCHW by default for PyTorch parity; channels_last=True is the fast path
    that skips the boundary transposes (they are separate HBM round trips of
    the same order as the kernel itself at this size)."""
    n = x_nchw.shape[0]
    x = jnp.transpose(x_nchw, (0, 2, 3, 1))             # NCHW -> NHWC
    p1 = _layer1_patches(x)
    h1g, h2, h3 = _fused_encoder_call(p1, prep, n)
    # undo the parity grouping of h1: (pr,pc,n,r,c,co) -> (n, 2r+pr, 2c+pc, co)
    h1 = (h1g.reshape(2, 2, n, 8, 8, 64)
             .transpose(2, 3, 0, 4, 1, 5)
             .reshape(n, 16, 16, 64))
    if channels_last:
        return h3, [h1, h2]
    to_nchw = lambda t: jnp.transpose(t, (0, 3, 1, 2))
    return to_nchw(h3), [to_nchw(h1), to_nchw(h2)]


# ----------------------------------------------------------------------------
# Pure-JAX reference (exact PyTorch semantics incl. conv bias), for validation
# ----------------------------------------------------------------------------
def _reference_forward(x_nchw, params):
    def conv(x, w, stride, pad):
        return jax.lax.conv_general_dilated(
            x, w, window_strides=(stride, stride),
            padding=((pad, pad), (pad, pad)),
            dimension_numbers=("NCHW", "OIHW", "NCHW"))

    def bn(x, gamma, beta):
        mean = jnp.mean(x, axis=(0, 2, 3), keepdims=True)
        var = jnp.mean((x - mean) ** 2, axis=(0, 2, 3), keepdims=True)
        return ((x - mean) * jax.lax.rsqrt(var + _EPS)
                * gamma.reshape(1, -1, 1, 1) + beta.reshape(1, -1, 1, 1))

    leaky = lambda t: jnp.where(t > 0, t, 0.2 * t)
    w1, b1, g1, be1 = params["c1"]
    w2, b2, g2, be2 = params["c2"]
    w3, b3, g3, be3 = params["c3"]
    h1 = leaky(bn(conv(x_nchw, w1, 2, 1) + b1.reshape(1, -1, 1, 1), g1, be1))
    h2 = leaky(bn(conv(h1, w2, 2, 1) + b2.reshape(1, -1, 1, 1), g2, be2))
    h3 = jnp.tanh(bn(conv(h2, w3, 1, 1) + b3.reshape(1, -1, 1, 1), g3, be3))
    return h3, [h1, h2]


# ----------------------------------------------------------------------------
if __name__ == "__main__":
    key = jax.random.PRNGKey(0)
    kx, kp = jax.random.split(key)

    batch, nc, dim = 2, 1, 16
    x = jax.random.normal(kx, (batch, nc, 32, 32), jnp.float32)  # dcgan_32 input
    params = init_params(kp, dim=dim, nc=nc)
    prep = prepare_params(params)

    h3, (h1, h2) = encoder_forward(x, prep)
    jax.block_until_ready((h3, h1, h2))

    assert h1.shape == (batch, 64, 16, 16)
    assert h2.shape == (batch, 128, 8, 8)
    assert h3.shape == (batch, dim, 8, 8)

    # Numerical check vs. the f32 reference (bf16 MXU inputs => loose-ish tol;
    # accumulation, BN stats and activations are f32 in the kernel).
    r3, (r1, r2) = _reference_forward(x, params)
    np.testing.assert_allclose(np.asarray(h1), np.asarray(r1), atol=0.15, rtol=0.1)
    np.testing.assert_allclose(np.asarray(h2), np.asarray(r2), atol=0.15, rtol=0.1)
    np.testing.assert_allclose(np.asarray(h3), np.asarray(r3), atol=0.15, rtol=0.1)

    print("KERNEL_OK")
</pallas_src>

<mosaic_0001>
module attributes {stable_mosaic.version = 11 : i64} {
  func.func @_encoder_fused_kernel(%arg0: memref<512x16xbf16, #tpu.memory_space<vmem>>, %arg1: memref<128x64xbf16, #tpu.memory_space<vmem>>, %arg2: memref<1024x128xbf16, #tpu.memory_space<vmem>>, %arg3: memref<1152x16xbf16, #tpu.memory_space<vmem>>, %arg4: memref<1x64xf32, #tpu.memory_space<vmem>>, %arg5: memref<1x64xf32, #tpu.memory_space<vmem>>, %arg6: memref<1x128xf32, #tpu.memory_space<vmem>>, %arg7: memref<1x128xf32, #tpu.memory_space<vmem>>, %arg8: memref<1x16xf32, #tpu.memory_space<vmem>>, %arg9: memref<1x16xf32, #tpu.memory_space<vmem>>, %arg10: memref<4x2x8x8x64xf32, #tpu.memory_space<vmem>>, %arg11: memref<2x8x8x128xf32, #tpu.memory_space<vmem>>, %arg12: memref<2x8x8x16xf32, #tpu.memory_space<vmem>>, %arg13: memref<512x128xbf16, #tpu.memory_space<vmem>>, %arg14: memref<4x2x9x9x64xf32, #tpu.memory_space<vmem>>, %arg15: memref<128x1024xbf16, #tpu.memory_space<vmem>>, %arg16: memref<2x10x10x128xf32, #tpu.memory_space<vmem>>, %arg17: memref<128x1152xbf16, #tpu.memory_space<vmem>>) attributes {dimension_semantics = [], scalar_prefetch = 0 : i64, scratch_operands = 5 : i64, tpu.core_type = #tpu.core_type<tc>} {
    %c0 = arith.constant 0 : index
    %c0_0 = arith.constant 0 : index
    %0 = vector.load %arg0[%c0, %c0_0] : memref<512x16xbf16, #tpu.memory_space<vmem>>, vector<512x16xbf16>
    %c0_1 = arith.constant 0 : index
    %c0_2 = arith.constant 0 : index
    %1 = vector.load %arg13[%c0_1, %c0_2] : memref<512x128xbf16, #tpu.memory_space<vmem>>, vector<512x16xbf16>
    tpu.vector_store %arg13[%c0_1, %c0_2], %0 {strides = array<i32>} : memref<512x128xbf16, #tpu.memory_space<vmem>>, vector<512x16xbf16>,
    %cst = arith.constant 0.000000e+00 : bf16
    %2 = vector.broadcast %cst : bf16 to vector<512x112xbf16>
    %c0_3 = arith.constant 0 : index
    %c16 = arith.constant 16 : index
    %3 = vector.load %arg13[%c0_3, %c16] : memref<512x128xbf16, #tpu.memory_space<vmem>>, vector<512x112xbf16>
    tpu.vector_store %arg13[%c0_3, %c16], %2 {strides = array<i32>} : memref<512x128xbf16, #tpu.memory_space<vmem>>, vector<512x112xbf16>,
    %c0_4 = arith.constant 0 : index
    %c0_5 = arith.constant 0 : index
    %4 = vector.load %arg13[%c0_4, %c0_5] : memref<512x128xbf16, #tpu.memory_space<vmem>>, vector<512x128xbf16>
    %c0_6 = arith.constant 0 : index
    %c0_7 = arith.constant 0 : index
    %5 = vector.load %arg1[%c0_6, %c0_7] : memref<128x64xbf16, #tpu.memory_space<vmem>>, vector<128x64xbf16>
    %cst_8 = arith.constant dense<0.000000e+00> : vector<512x64xf32>
    %6 = tpu.matmul %4, %5, %cst_8 {dimension_numbers = #tpu.dot_dimension_numbers<[1], [0], [0], [1], [0, 0, 1, 1], [], []>} : vector<512x128xbf16>, vector<128x64xbf16>, vector<512x64xf32> -> vector<512x64xf32>
    %c0_9 = arith.constant 0 : index
    %c0_10 = arith.constant 0 : index
    %7 = vector.load %arg4[%c0_9, %c0_10] : memref<1x64xf32, #tpu.memory_space<vmem>>, vector<1x64xf32>
    %c0_11 = arith.constant 0 : index
    %c0_12 = arith.constant 0 : index
    %8 = vector.load %arg5[%c0_11, %c0_12] : memref<1x64xf32, #tpu.memory_space<vmem>>, vector<1x64xf32>
    %cst_13 = arith.constant dense<0.000000e+00> : vector<64xf32>
    %9 = vector.multi_reduction <add>, %6, %cst_13 [0] : vector<512x64xf32> to vector<64xf32>
    %10 = vector.shape_cast %9 : vector<64xf32> to vector<1x64xf32>
    %cst_14 = arith.constant 0.001953125 : f32
    %11 = vector.broadcast %cst_14 : f32 to vector<1x64xf32>
    %12 = arith.mulf %10, %11 : vector<1x64xf32>
    %13 = vector.broadcast %12 : vector<1x64xf32> to vector<512x64xf32>
    %14 = arith.subf %6, %13 : vector<512x64xf32>
    %15 = arith.mulf %14, %14 : vector<512x64xf32>
    %cst_15 = arith.constant dense<0.000000e+00> : vector<64xf32>
    %16 = vector.multi_reduction <add>, %15, %cst_15 [0] : vector<512x64xf32> to vector<64xf32>
    %17 = vector.shape_cast %16 : vector<64xf32> to vector<1x64xf32>
    %cst_16 = arith.constant 0.001953125 : f32
    %18 = vector.broadcast %cst_16 : f32 to vector<1x64xf32>
    %19 = arith.mulf %17, %18 : vector<1x64xf32>
    %cst_17 = arith.constant 9.99999974E-6 : f32
    %20 = vector.broadcast %cst_17 : f32 to vector<1x64xf32>
    %21 = arith.addf %19, %20 : vector<1x64xf32>
    %22 = math.rsqrt %21 : vector<1x64xf32>
    %23 = arith.mulf %7, %22 : vector<1x64xf32>
    %24 = vector.broadcast %23 : vector<1x64xf32> to vector<512x64xf32>
    %25 = arith.mulf %14, %24 : vector<512x64xf32>
    %26 = vector.broadcast %8 : vector<1x64xf32> to vector<512x64xf32>
    %27 = arith.addf %25, %26 : vector<512x64xf32>
    %cst_18 = arith.constant 0.000000e+00 : f32
    %28 = vector.broadcast %cst_18 : f32 to vector<512x64xf32>
    %29 = arith.cmpf ogt, %27, %28 : vector<512x64xf32>
    %cst_19 = arith.constant 2.000000e-01 : f32
    %30 = vector.broadcast %cst_19 : f32 to vector<512x64xf32>
    %31 = arith.mulf %30, %27 : vector<512x64xf32>
    %32 = arith.select %29, %27, %31 : vector<512x64xi1>, vector<512x64xf32>
    %33 = vector.extract_strided_slice %32 {offsets = [0, 0], sizes = [128, 64], strides = [1, 1]} : vector<512x64xf32> to vector<128x64xf32>
    %34 = vector.shape_cast %33 : vector<128x64xf32> to vector<2x8x8x64xf32>
    %c0_20 = arith.constant 0 : index
    %c0_21 = arith.constant 0 : index
    %c0_22 = arith.constant 0 : index
    %c0_23 = arith.constant 0 : index
    %c0_24 = arith.constant 0 : index
    %35 = vector.load %arg10[%c0_20, %c0_21, %c0_22, %c0_23, %c0_24] : memref<4x2x8x8x64xf32, #tpu.memory_space<vmem>>, vector<1x2x8x8x64xf32>
    %36 = vector.shape_cast %35 : vector<1x2x8x8x64xf32> to vector<2x8x8x64xf32>
    %37 = vector.shape_cast %34 : vector<2x8x8x64xf32> to vector<1x2x8x8x64xf32>
    tpu.vector_store %arg10[%c0_20, %c0_21, %c0_22, %c0_23, %c0_24], %37 {strides = array<i32>} : memref<4x2x8x8x64xf32, #tpu.memory_space<vmem>>, vector<1x2x8x8x64xf32>,
    %cst_25 = arith.constant 0.000000e+00 : f32
    %38 = vector.broadcast %cst_25 : f32 to vector<2x1x9x64xf32>
    %c0_26 = arith.constant 0 : index
    %c0_27 = arith.constant 0 : index
    %c8 = arith.constant 8 : index
    %c0_28 = arith.constant 0 : index
    %c0_29 = arith.constant 0 : index
    %39 = vector.load %arg14[%c0_26, %c0_27, %c8, %c0_28, %c0_29] : memref<4x2x9x9x64xf32, #tpu.memory_space<vmem>>, vector<1x2x1x9x64xf32>
    %40 = vector.shape_cast %39 : vector<1x2x1x9x64xf32> to vector<2x1x9x64xf32>
    %41 = vector.shape_cast %38 : vector<2x1x9x64xf32> to vector<1x2x1x9x64xf32>
    tpu.vector_store %arg14[%c0_26, %c0_27, %c8, %c0_28, %c0_29], %41 {strides = array<i32>} : memref<4x2x9x9x64xf32, #tpu.memory_space<vmem>>, vector<1x2x1x9x64xf32>,
    %cst_30 = arith.constant 0.000000e+00 : f32
    %42 = vector.broadcast %cst_30 : f32 to vector<2x9x1x64xf32>
    %c0_31 = arith.constant 0 : index
    %c0_32 = arith.constant 0 : index
    %c0_33 = arith.constant 0 : index
    %c8_34 = arith.constant 8 : index
    %c0_35 = arith.constant 0 : index
    %43 = vector.load %arg14[%c0_31, %c0_32, %c0_33, %c8_34, %c0_35] : memref<4x2x9x9x64xf32, #tpu.memory_space<vmem>>, vector<1x2x9x1x64xf32>
    %44 = vector.shape_cast %43 : vector<1x2x9x1x64xf32> to vector<2x9x1x64xf32>
    %45 = vector.shape_cast %42 : vector<2x9x1x64xf32> to vector<1x2x9x1x64xf32>
    tpu.vector_store %arg14[%c0_31, %c0_32, %c0_33, %c8_34, %c0_35], %45 {strides = array<i32>} : memref<4x2x9x9x64xf32, #tpu.memory_space<vmem>>, vector<1x2x9x1x64xf32>,
    %c0_36 = arith.constant 0 : index
    %c0_37 = arith.constant 0 : index
    %c0_38 = arith.constant 0 : index
    %c0_39 = arith.constant 0 : index
    %c0_40 = arith.constant 0 : index
    %46 = vector.load %arg14[%c0_36, %c0_37, %c0_38, %c0_39, %c0_40] : memref<4x2x9x9x64xf32, #tpu.memory_space<vmem>>, vector<1x2x8x8x64xf32>
    %47 = vector.shape_cast %46 : vector<1x2x8x8x64xf32> to vector<2x8x8x64xf32>
    %48 = vector.shape_cast %34 : vector<2x8x8x64xf32> to vector<1x2x8x8x64xf32>
    tpu.vector_store %arg14[%c0_36, %c0_37, %c0_38, %c0_39, %c0_40], %48 {strides = array<i32>} : memref<4x2x9x9x64xf32, #tpu.memory_space<vmem>>, vector<1x2x8x8x64xf32>,
    %49 = vector.extract_strided_slice %32 {offsets = [128, 0], sizes = [128, 64], strides = [1, 1]} : vector<512x64xf32> to vector<128x64xf32>
    %50 = vector.shape_cast %49 : vector<128x64xf32> to vector<2x8x8x64xf32>
    %c1 = arith.constant 1 : index
    %c0_41 = arith.constant 0 : index
    %c0_42 = arith.constant 0 : index
    %c0_43 = arith.constant 0 : index
    %c0_44 = arith.constant 0 : index
    %51 = vector.load %arg10[%c1, %c0_41, %c0_42, %c0_43, %c0_44] : memref<4x2x8x8x64xf32, #tpu.memory_space<vmem>>, vector<1x2x8x8x64xf32>
    %52 = vector.shape_cast %51 : vector<1x2x8x8x64xf32> to vector<2x8x8x64xf32>
    %53 = vector.shape_cast %50 : vector<2x8x8x64xf32> to vector<1x2x8x8x64xf32>
    tpu.vector_store %arg10[%c1, %c0_41, %c0_42, %c0_43, %c0_44], %53 {strides = array<i32>} : memref<4x2x8x8x64xf32, #tpu.memory_space<vmem>>, vector<1x2x8x8x64xf32>,
    %cst_45 = arith.constant 0.000000e+00 : f32
    %54 = vector.broadcast %cst_45 : f32 to vector<2x1x9x64xf32>
    %c1_46 = arith.constant 1 : index
    %c0_47 = arith.constant 0 : index
    %c8_48 = arith.constant 8 : index
    %c0_49 = arith.constant 0 : index
    %c0_50 = arith.constant 0 : index
    %55 = vector.load %arg14[%c1_46, %c0_47, %c8_48, %c0_49, %c0_50] : memref<4x2x9x9x64xf32, #tpu.memory_space<vmem>>, vector<1x2x1x9x64xf32>
    %56 = vector.shape_cast %55 : vector<1x2x1x9x64xf32> to vector<2x1x9x64xf32>
    %57 = vector.shape_cast %54 : vector<2x1x9x64xf32> to vector<1x2x1x9x64xf32>
    tpu.vector_store %arg14[%c1_46, %c0_47, %c8_48, %c0_49, %c0_50], %57 {strides = array<i32>} : memref<4x2x9x9x64xf32, #tpu.memory_space<vmem>>, vector<1x2x1x9x64xf32>,
    %cst_51 = arith.constant 0.000000e+00 : f32
    %58 = vector.broadcast %cst_51 : f32 to vector<2x9x1x64xf32>
    %c1_52 = arith.constant 1 : index
    %c0_53 = arith.constant 0 : index
    %c0_54 = arith.constant 0 : index
    %c0_55 = arith.constant 0 : index
    %c0_56 = arith.constant 0 : index
    %59 = vector.load %arg14[%c1_52, %c0_53, %c0_54, %c0_55, %c0_56] : memref<4x2x9x9x64xf32, #tpu.memory_space<vmem>>, vector<1x2x9x1x64xf32>
    %60 = vector.shape_cast %59 : vector<1x2x9x1x64xf32> to vector<2x9x1x64xf32>
    %61 = vector.shape_cast %58 : vector<2x9x1x64xf32> to vector<1x2x9x1x64xf32>
    tpu.vector_store %arg14[%c1_52, %c0_53, %c0_54, %c0_55, %c0_56], %61 {strides = array<i32>} : memref<4x2x9x9x64xf32, #tpu.memory_space<vmem>>, vector<1x2x9x1x64xf32>,
    %c1_57 = arith.constant 1 : index
    %c0_58 = arith.constant 0 : index
    %c0_59 = arith.constant 0 : index
    %c1_60 = arith.constant 1 : index
    %c0_61 = arith.constant 0 : index
    %62 = vector.load %arg14[%c1_57, %c0_58, %c0_59, %c1_60, %c0_61] : memref<4x2x9x9x64xf32, #tpu.memory_space<vmem>>, vector<1x2x8x8x64xf32>
    %63 = vector.shape_cast %62 : vector<1x2x8x8x64xf32> to vector<2x8x8x64xf32>
    %64 = vector.shape_cast %50 : vector<2x8x8x64xf32> to vector<1x2x8x8x64xf32>
    tpu.vector_store %arg14[%c1_57, %c0_58, %c0_59, %c1_60, %c0_61], %64 {strides = array<i32>} : memref<4x2x9x9x64xf32, #tpu.memory_space<vmem>>, vector<1x2x8x8x64xf32>,
    %65 = vector.extract_strided_slice %32 {offsets = [256, 0], sizes = [128, 64], strides = [1, 1]} : vector<512x64xf32> to vector<128x64xf32>
    %66 = vector.shape_cast %65 : vector<128x64xf32> to vector<2x8x8x64xf32>
    %c2 = arith.constant 2 : index
    %c0_62 = arith.constant 0 : index
    %c0_63 = arith.constant 0 : index
    %c0_64 = arith.constant 0 : index
    %c0_65 = arith.constant 0 : index
    %67 = vector.load %arg10[%c2, %c0_62, %c0_63, %c0_64, %c0_65] : memref<4x2x8x8x64xf32, #tpu.memory_space<vmem>>, vector<1x2x8x8x64xf32>
    %68 = vector.shape_cast %67 : vector<1x2x8x8x64xf32> to vector<2x8x8x64xf32>
    %69 = vector.shape_cast %66 : vector<2x8x8x64xf32> to vector<1x2x8x8x64xf32>
    tpu.vector_store %arg10[%c2, %c0_62, %c0_63, %c0_64, %c0_65], %69 {strides = array<i32>} : memref<4x2x8x8x64xf32, #tpu.memory_space<vmem>>, vector<1x2x8x8x64xf32>,
    %cst_66 = arith.constant 0.000000e+00 : f32
    %70 = vector.broadcast %cst_66 : f32 to vector<2x1x9x64xf32>
    %c2_67 = arith.constant 2 : index
    %c0_68 = arith.constant 0 : index
    %c0_69 = arith.constant 0 : index
    %c0_70 = arith.constant 0 : index
    %c0_71 = arith.constant 0 : index
    %71 = vector.load %arg14[%c2_67, %c0_68, %c0_69, %c0_70, %c0_71] : memref<4x2x9x9x64xf32, #tpu.memory_space<vmem>>, vector<1x2x1x9x64xf32>
    %72 = vector.shape_cast %71 : vector<1x2x1x9x64xf32> to vector<2x1x9x64xf32>
    %73 = vector.shape_cast %70 : vector<2x1x9x64xf32> to vector<1x2x1x9x64xf32>
    tpu.vector_store %arg14[%c2_67, %c0_68, %c0_69, %c0_70, %c0_71], %73 {strides = array<i32>} : memref<4x2x9x9x64xf32, #tpu.memory_space<vmem>>, vector<1x2x1x9x64xf32>,
    %cst_72 = arith.constant 0.000000e+00 : f32
    %74 = vector.broadcast %cst_72 : f32 to vector<2x9x1x64xf32>
    %c2_73 = arith.constant 2 : index
    %c0_74 = arith.constant 0 : index
    %c0_75 = arith.constant 0 : index
    %c8_76 = arith.constant 8 : index
    %c0_77 = arith.constant 0 : index
    %75 = vector.load %arg14[%c2_73, %c0_74, %c0_75, %c8_76, %c0_77] : memref<4x2x9x9x64xf32, #tpu.memory_space<vmem>>, vector<1x2x9x1x64xf32>
    %76 = vector.shape_cast %75 : vector<1x2x9x1x64xf32> to vector<2x9x1x64xf32>
    %77 = vector.shape_cast %74 : vector<2x9x1x64xf32> to vector<1x2x9x1x64xf32>
    tpu.vector_store %arg14[%c2_73, %c0_74, %c0_75, %c8_76, %c0_77], %77 {strides = array<i32>} : memref<4x2x9x9x64xf32, #tpu.memory_space<vmem>>, vector<1x2x9x1x64xf32>,
    %c2_78 = arith.constant 2 : index
    %c0_79 = arith.constant 0 : index
    %c1_80 = arith.constant 1 : index
    %c0_81 = arith.constant 0 : index
    %c0_82 = arith.constant 0 : index
    %78 = vector.load %arg14[%c2_78, %c0_79, %c1_80, %c0_81, %c0_82] : memref<4x2x9x9x64xf32, #tpu.memory_space<vmem>>, vector<1x2x8x8x64xf32>
    %79 = vector.shape_cast %78 : vector<1x2x8x8x64xf32> to vector<2x8x8x64xf32>
    %80 = vector.shape_cast %66 : vector<2x8x8x64xf32> to vector<1x2x8x8x64xf32>
    tpu.vector_store %arg14[%c2_78, %c0_79, %c1_80, %c0_81, %c0_82], %80 {strides = array<i32>} : memref<4x2x9x9x64xf32, #tpu.memory_space<vmem>>, vector<1x2x8x8x64xf32>,
    %81 = vector.extract_strided_slice %32 {offsets = [384, 0], sizes = [128, 64], strides = [1, 1]} : vector<512x64xf32> to vector<128x64xf32>
    %82 = vector.shape_cast %81 : vector<128x64xf32> to vector<2x8x8x64xf32>
    %c3 = arith.constant 3 : index
    %c0_83 = arith.constant 0 : index
    %c0_84 = arith.constant 0 : index
    %c0_85 = arith.constant 0 : index
    %c0_86 = arith.constant 0 : index
    %83 = vector.load %arg10[%c3, %c0_83, %c0_84, %c0_85, %c0_86] : memref<4x2x8x8x64xf32, #tpu.memory_space<vmem>>, vector<1x2x8x8x64xf32>
    %84 = vector.shape_cast %83 : vector<1x2x8x8x64xf32> to vector<2x8x8x64xf32>
    %85 = vector.shape_cast %82 : vector<2x8x8x64xf32> to vector<1x2x8x8x64xf32>
    tpu.vector_store %arg10[%c3, %c0_83, %c0_84, %c0_85, %c0_86], %85 {strides = array<i32>} : memref<4x2x8x8x64xf32, #tpu.memory_space<vmem>>, vector<1x2x8x8x64xf32>,
    %cst_87 = arith.constant 0.000000e+00 : f32
    %86 = vector.broadcast %cst_87 : f32 to vector<2x1x9x64xf32>
    %c3_88 = arith.constant 3 : index
    %c0_89 = arith.constant 0 : index
    %c0_90 = arith.constant 0 : index
    %c0_91 = arith.constant 0 : index
    %c0_92 = arith.constant 0 : index
    %87 = vector.load %arg14[%c3_88, %c0_89, %c0_90, %c0_91, %c0_92] : memref<4x2x9x9x64xf32, #tpu.memory_space<vmem>>, vector<1x2x1x9x64xf32>
    %88 = vector.shape_cast %87 : vector<1x2x1x9x64xf32> to vector<2x1x9x64xf32>
    %89 = vector.shape_cast %86 : vector<2x1x9x64xf32> to vector<1x2x1x9x64xf32>
    tpu.vector_store %arg14[%c3_88, %c0_89, %c0_90, %c0_91, %c0_92], %89 {strides = array<i32>} : memref<4x2x9x9x64xf32, #tpu.memory_space<vmem>>, vector<1x2x1x9x64xf32>,
    %cst_93 = arith.constant 0.000000e+00 : f32
    %90 = vector.broadcast %cst_93 : f32 to vector<2x9x1x64xf32>
    %c3_94 = arith.constant 3 : index
    %c0_95 = arith.constant 0 : index
    %c0_96 = arith.constant 0 : index
    %c0_97 = arith.constant 0 : index
    %c0_98 = arith.constant 0 : index
    %91 = vector.load %arg14[%c3_94, %c0_95, %c0_96, %c0_97, %c0_98] : memref<4x2x9x9x64xf32, #tpu.memory_space<vmem>>, vector<1x2x9x1x64xf32>
    %92 = vector.shape_cast %91 : vector<1x2x9x1x64xf32> to vector<2x9x1x64xf32>
    %93 = vector.shape_cast %90 : vector<2x9x1x64xf32> to vector<1x2x9x1x64xf32>
    tpu.vector_store %arg14[%c3_94, %c0_95, %c0_96, %c0_97, %c0_98], %93 {strides = array<i32>} : memref<4x2x9x9x64xf32, #tpu.memory_space<vmem>>, vector<1x2x9x1x64xf32>,
    %c3_99 = arith.constant 3 : index
    %c0_100 = arith.constant 0 : index
    %c1_101 = arith.constant 1 : index
    %c1_102 = arith.constant 1 : index
    %c0_103 = arith.constant 0 : index
    %94 = vector.load %arg14[%c3_99, %c0_100, %c1_101, %c1_102, %c0_103] : memref<4x2x9x9x64xf32, #tpu.memory_space<vmem>>, vector<1x2x8x8x64xf32>
    %95 = vector.shape_cast %94 : vector<1x2x8x8x64xf32> to vector<2x8x8x64xf32>
    %96 = vector.shape_cast %82 : vector<2x8x8x64xf32> to vector<1x2x8x8x64xf32>
    tpu.vector_store %arg14[%c3_99, %c0_100, %c1_101, %c1_102, %c0_103], %96 {strides = array<i32>} : memref<4x2x9x9x64xf32, #tpu.memory_space<vmem>>, vector<1x2x8x8x64xf32>,
    %c3_104 = arith.constant 3 : index
    %c0_105 = arith.constant 0 : index
    %c0_106 = arith.constant 0 : index
    %c0_107 = arith.constant 0 : index
    %c0_108 = arith.constant 0 : index
    %97 = vector.load %arg14[%c3_104, %c0_105, %c0_106, %c0_107, %c0_108] : memref<4x2x9x9x64xf32, #tpu.memory_space<vmem>>, vector<1x2x8x8x64xf32>
    %98 = vector.shape_cast %97 : vector<1x2x8x8x64xf32> to vector<2x8x8x64xf32>
    %99 = vector.shape_cast %98 : vector<2x8x8x64xf32> to vector<128x64xf32>
    %100 = arith.truncf %99 : vector<128x64xf32> to vector<128x64xbf16>
    %c0_109 = arith.constant 0 : index
    %c0_110 = arith.constant 0 : index
    %101 = vector.load %arg15[%c0_109, %c0_110] : memref<128x1024xbf16, #tpu.memory_space<vmem>>, vector<128x64xbf16>
    tpu.vector_store %arg15[%c0_109, %c0_110], %100 {strides = array<i32>} : memref<128x1024xbf16, #tpu.memory_space<vmem>>, vector<128x64xbf16>,
    %c2_111 = arith.constant 2 : index
    %c0_112 = arith.constant 0 : index
    %c0_113 = arith.constant 0 : index
    %c0_114 = arith.constant 0 : index
    %c0_115 = arith.constant 0 : index
    %102 = vector.load %arg14[%c2_111, %c0_112, %c0_113, %c0_114, %c0_115] : memref<4x2x9x9x64xf32, #tpu.memory_space<vmem>>, vector<1x2x8x8x64xf32>
    %103 = vector.shape_cast %102 : vector<1x2x8x8x64xf32> to vector<2x8x8x64xf32>
    %104 = vector.shape_cast %103 : vector<2x8x8x64xf32> to vector<128x64xf32>
    %105 = arith.truncf %104 : vector<128x64xf32> to vector<128x64xbf16>
    %c0_116 = arith.constant 0 : index
    %c64 = arith.constant 64 : index
    %106 = vector.load %arg15[%c0_116, %c64] : memref<128x1024xbf16, #tpu.memory_space<vmem>>, vector<128x64xbf16>
    tpu.vector_store %arg15[%c0_116, %c64], %105 {strides = array<i32>} : memref<128x1024xbf16, #tpu.memory_space<vmem>>, vector<128x64xbf16>,
    %c3_117 = arith.constant 3 : index
    %c0_118 = arith.constant 0 : index
    %c0_119 = arith.constant 0 : index
    %c1_120 = arith.constant 1 : index
    %c0_121 = arith.constant 0 : index
    %107 = vector.load %arg14[%c3_117, %c0_118, %c0_119, %c1_120, %c0_121] : memref<4x2x9x9x64xf32, #tpu.memory_space<vmem>>, vector<1x2x8x8x64xf32>
    %108 = vector.shape_cast %107 : vector<1x2x8x8x64xf32> to vector<2x8x8x64xf32>
    %109 = vector.shape_cast %108 : vector<2x8x8x64xf32> to vector<128x64xf32>
    %110 = arith.truncf %109 : vector<128x64xf32> to vector<128x64xbf16>
    %c0_122 = arith.constant 0 : index
    %c128 = arith.constant 128 : index
    %111 = vector.load %arg15[%c0_122, %c128] : memref<128x1024xbf16, #tpu.memory_space<vmem>>, vector<128x64xbf16>
    tpu.vector_store %arg15[%c0_122, %c128], %110 {strides = array<i32>} : memref<128x1024xbf16, #tpu.memory_space<vmem>>, vector<128x64xbf16>,
    %c2_123 = arith.constant 2 : index
    %c0_124 = arith.constant 0 : index
    %c0_125 = arith.constant 0 : index
    %c1_126 = arith.constant 1 : index
    %c0_127 = arith.constant 0 : index
    %112 = vector.load %arg14[%c2_123, %c0_124, %c0_125, %c1_126, %c0_127] : memref<4x2x9x9x64xf32, #tpu.memory_space<vmem>>, vector<1x2x8x8x64xf32>
    %113 = vector.shape_cast %112 : vector<1x2x8x8x64xf32> to vector<2x8x8x64xf32>
    %114 = vector.shape_cast %113 : vector<2x8x8x64xf32> to vector<128x64xf32>
    %115 = arith.truncf %114 : vector<128x64xf32> to vector<128x64xbf16>
    %c0_128 = arith.constant 0 : index
    %c192 = arith.constant 192 : index
    %116 = vector.load %arg15[%c0_128, %c192] : memref<128x1024xbf16, #tpu.memory_space<vmem>>, vector<128x64xbf16>
    tpu.vector_store %arg15[%c0_128, %c192], %115 {strides = array<i32>} : memref<128x1024xbf16, #tpu.memory_space<vmem>>, vector<128x64xbf16>,
    %c1_129 = arith.constant 1 : index
    %c0_130 = arith.constant 0 : index
    %c0_131 = arith.constant 0 : index
    %c0_132 = arith.constant 0 : index
    %c0_133 = arith.constant 0 : index
    %117 = vector.load %arg14[%c1_129, %c0_130, %c0_131, %c0_132, %c0_133] : memref<4x2x9x9x64xf32, #tpu.memory_space<vmem>>, vector<1x2x8x8x64xf32>
    %118 = vector.shape_cast %117 : vector<1x2x8x8x64xf32> to vector<2x8x8x64xf32>
    %119 = vector.shape_cast %118 : vector<2x8x8x64xf32> to vector<128x64xf32>
    %120 = arith.truncf %119 : vector<128x64xf32> to vector<128x64xbf16>
    %c0_134 = arith.constant 0 : index
    %c256 = arith.constant 256 : index
    %121 = vector.load %arg15[%c0_134, %c256] : memref<128x1024xbf16, #tpu.memory_space<vmem>>, vector<128x64xbf16>
    tpu.vector_store %arg15[%c0_134, %c256], %120 {strides = array<i32>} : memref<128x1024xbf16, #tpu.memory_space<vmem>>, vector<128x64xbf16>,
    %c0_135 = arith.constant 0 : index
    %c0_136 = arith.constant 0 : index
    %c0_137 = arith.constant 0 : index
    %c0_138 = arith.constant 0 : index
    %c0_139 = arith.constant 0 : index
    %122 = vector.load %arg14[%c0_135, %c0_136, %c0_137, %c0_138, %c0_139] : memref<4x2x9x9x64xf32, #tpu.memory_space<vmem>>, vector<1x2x8x8x64xf32>
    %123 = vector.shape_cast %122 : vector<1x2x8x8x64xf32> to vector<2x8x8x64xf32>
    %124 = vector.shape_cast %123 : vector<2x8x8x64xf32> to vector<128x64xf32>
    %125 = arith.truncf %124 : vector<128x64xf32> to vector<128x64xbf16>
    %c0_140 = arith.constant 0 : index
    %c320 = arith.constant 320 : index
    %126 = vector.load %arg15[%c0_140, %c320] : memref<128x1024xbf16, #tpu.memory_space<vmem>>, vector<128x64xbf16>
    tpu.vector_store %arg15[%c0_140, %c320], %125 {strides = array<i32>} : memref<128x1024xbf16, #tpu.memory_space<vmem>>, vector<128x64xbf16>,
    %c1_141 = arith.constant 1 : index
    %c0_142 = arith.constant 0 : index
    %c0_143 = arith.constant 0 : index
    %c1_144 = arith.constant 1 : index
    %c0_145 = arith.constant 0 : index
    %127 = vector.load %arg14[%c1_141, %c0_142, %c0_143, %c1_144, %c0_145] : memref<4x2x9x9x64xf32, #tpu.memory_space<vmem>>, vector<1x2x8x8x64xf32>
    %128 = vector.shape_cast %127 : vector<1x2x8x8x64xf32> to vector<2x8x8x64xf32>
    %129 = vector.shape_cast %128 : vector<2x8x8x64xf32> to vector<128x64xf32>
    %130 = arith.truncf %129 : vector<128x64xf32> to vector<128x64xbf16>
    %c0_146 = arith.constant 0 : index
    %c384 = arith.constant 384 : index
    %131 = vector.load %arg15[%c0_146, %c384] : memref<128x1024xbf16, #tpu.memory_space<vmem>>, vector<128x64xbf16>
    tpu.vector_store %arg15[%c0_146, %c384], %130 {strides = array<i32>} : memref<128x1024xbf16, #tpu.memory_space<vmem>>, vector<128x64xbf16>,
    %c0_147 = arith.constant 0 : index
    %c0_148 = arith.constant 0 : index
    %c0_149 = arith.constant 0 : index
    %c1_150 = arith.constant 1 : index
    %c0_151 = arith.constant 0 : index
    %132 = vector.load %arg14[%c0_147, %c0_148, %c0_149, %c1_150, %c0_151] : memref<4x2x9x9x64xf32, #tpu.memory_space<vmem>>, vector<1x2x8x8x64xf32>
    %133 = vector.shape_cast %132 : vector<1x2x8x8x64xf32> to vector<2x8x8x64xf32>
    %134 = vector.shape_cast %133 : vector<2x8x8x64xf32> to vector<128x64xf32>
    %135 = arith.truncf %134 : vector<128x64xf32> to vector<128x64xbf16>
    %c0_152 = arith.constant 0 : index
    %c448 = arith.constant 448 : index
    %136 = vector.load %arg15[%c0_152, %c448] : memref<128x1024xbf16, #tpu.memory_space<vmem>>, vector<128x64xbf16>
    tpu.vector_store %arg15[%c0_152, %c448], %135 {strides = array<i32>} : memref<128x1024xbf16, #tpu.memory_space<vmem>>, vector<128x64xbf16>,
    %c3_153 = arith.constant 3 : index
    %c0_154 = arith.constant 0 : index
    %c1_155 = arith.constant 1 : index
    %c0_156 = arith.constant 0 : index
    %c0_157 = arith.constant 0 : index
    %137 = vector.load %arg14[%c3_153, %c0_154, %c1_155, %c0_156, %c0_157] : memref<4x2x9x9x64xf32, #tpu.memory_space<vmem>>, vector<1x2x8x8x64xf32>
    %138 = vector.shape_cast %137 : vector<1x2x8x8x64xf32> to vector<2x8x8x64xf32>
    %139 = vector.shape_cast %138 : vector<2x8x8x64xf32> to vector<128x64xf32>
    %140 = arith.truncf %139 : vector<128x64xf32> to vector<128x64xbf16>
    %c0_158 = arith.constant 0 : index
    %c512 = arith.constant 512 : index
    %141 = vector.load %arg15[%c0_158, %c512] : memref<128x1024xbf16, #tpu.memory_space<vmem>>, vector<128x64xbf16>
    tpu.vector_store %arg15[%c0_158, %c512], %140 {strides = array<i32>} : memref<128x1024xbf16, #tpu.memory_space<vmem>>, vector<128x64xbf16>,
    %c2_159 = arith.constant 2 : index
    %c0_160 = arith.constant 0 : index
    %c1_161 = arith.constant 1 : index
    %c0_162 = arith.constant 0 : index
    %c0_163 = arith.constant 0 : index
    %142 = vector.load %arg14[%c2_159, %c0_160, %c1_161, %c0_162, %c0_163] : memref<4x2x9x9x64xf32, #tpu.memory_space<vmem>>, vector<1x2x8x8x64xf32>
    %143 = vector.shape_cast %142 : vector<1x2x8x8x64xf32> to vector<2x8x8x64xf32>
    %144 = vector.shape_cast %143 : vector<2x8x8x64xf32> to vector<128x64xf32>
    %145 = arith.truncf %144 : vector<128x64xf32> to vector<128x64xbf16>
    %c0_164 = arith.constant 0 : index
    %c576 = arith.constant 576 : index
    %146 = vector.load %arg15[%c0_164, %c576] : memref<128x1024xbf16, #tpu.memory_space<vmem>>, vector<128x64xbf16>
    tpu.vector_store %arg15[%c0_164, %c576], %145 {strides = array<i32>} : memref<128x1024xbf16, #tpu.memory_space<vmem>>, vector<128x64xbf16>,
    %c3_165 = arith.constant 3 : index
    %c0_166 = arith.constant 0 : index
    %c1_167 = arith.constant 1 : index
    %c1_168 = arith.constant 1 : index
    %c0_169 = arith.constant 0 : index
    %147 = vector.load %arg14[%c3_165, %c0_166, %c1_167, %c1_168, %c0_169] : memref<4x2x9x9x64xf32, #tpu.memory_space<vmem>>, vector<1x2x8x8x64xf32>
    %148 = vector.shape_cast %147 : vector<1x2x8x8x64xf32> to vector<2x8x8x64xf32>
    %149 = vector.shape_cast %148 : vector<2x8x8x64xf32> to vector<128x64xf32>
    %150 = arith.truncf %149 : vector<128x64xf32> to vector<128x64xbf16>
    %c0_170 = arith.constant 0 : index
    %c640 = arith.constant 640 : index
    %151 = vector.load %arg15[%c0_170, %c640] : memref<128x1024xbf16, #tpu.memory_space<vmem>>, vector<128x64xbf16>
    tpu.vector_store %arg15[%c0_170, %c640], %150 {strides = array<i32>} : memref<128x1024xbf16, #tpu.memory_space<vmem>>, vector<128x64xbf16>,
    %c2_171 = arith.constant 2 : index
    %c0_172 = arith.constant 0 : index
    %c1_173 = arith.constant 1 : index
    %c1_174 = arith.constant 1 : index
    %c0_175 = arith.constant 0 : index
    %152 = vector.load %arg14[%c2_171, %c0_172, %c1_173, %c1_174, %c0_175] : memref<4x2x9x9x64xf32, #tpu.memory_space<vmem>>, vector<1x2x8x8x64xf32>
    %153 = vector.shape_cast %152 : vector<1x2x8x8x64xf32> to vector<2x8x8x64xf32>
    %154 = vector.shape_cast %153 : vector<2x8x8x64xf32> to vector<128x64xf32>
    %155 = arith.truncf %154 : vector<128x64xf32> to vector<128x64xbf16>
    %c0_176 = arith.constant 0 : index
    %c704 = arith.constant 704 : index
    %156 = vector.load %arg15[%c0_176, %c704] : memref<128x1024xbf16, #tpu.memory_space<vmem>>, vector<128x64xbf16>
    tpu.vector_store %arg15[%c0_176, %c704], %155 {strides = array<i32>} : memref<128x1024xbf16, #tpu.memory_space<vmem>>, vector<128x64xbf16>,
    %c1_177 = arith.constant 1 : index
    %c0_178 = arith.constant 0 : index
    %c1_179 = arith.constant 1 : index
    %c0_180 = arith.constant 0 : index
    %c0_181 = arith.constant 0 : index
    %157 = vector.load %arg14[%c1_177, %c0_178, %c1_179, %c0_180, %c0_181] : memref<4x2x9x9x64xf32, #tpu.memory_space<vmem>>, vector<1x2x8x8x64xf32>
    %158 = vector.shape_cast %157 : vector<1x2x8x8x64xf32> to vector<2x8x8x64xf32>
    %159 = vector.shape_cast %158 : vector<2x8x8x64xf32> to vector<128x64xf32>
    %160 = arith.truncf %159 : vector<128x64xf32> to vector<128x64xbf16>
    %c0_182 = arith.constant 0 : index
    %c768 = arith.constant 768 : index
    %161 = vector.load %arg15[%c0_182, %c768] : memref<128x1024xbf16, #tpu.memory_space<vmem>>, vector<128x64xbf16>
    tpu.vector_store %arg15[%c0_182, %c768], %160 {strides = array<i32>} : memref<128x1024xbf16, #tpu.memory_space<vmem>>, vector<128x64xbf16>,
    %c0_183 = arith.constant 0 : index
    %c0_184 = arith.constant 0 : index
    %c1_185 = arith.constant 1 : index
    %c0_186 = arith.constant 0 : index
    %c0_187 = arith.constant 0 : index
    %162 = vector.load %arg14[%c0_183, %c0_184, %c1_185, %c0_186, %c0_187] : memref<4x2x9x9x64xf32, #tpu.memory_space<vmem>>, vector<1x2x8x8x64xf32>
    %163 = vector.shape_cast %162 : vector<1x2x8x8x64xf32> to vector<2x8x8x64xf32>
    %164 = vector.shape_cast %163 : vector<2x8x8x64xf32> to vector<128x64xf32>
    %165 = arith.truncf %164 : vector<128x64xf32> to vector<128x64xbf16>
    %c0_188 = arith.constant 0 : index
    %c832 = arith.constant 832 : index
    %166 = vector.load %arg15[%c0_188, %c832] : memref<128x1024xbf16, #tpu.memory_space<vmem>>, vector<128x64xbf16>
    tpu.vector_store %arg15[%c0_188, %c832], %165 {strides = array<i32>} : memref<128x1024xbf16, #tpu.memory_space<vmem>>, vector<128x64xbf16>,
    %c1_189 = arith.constant 1 : index
    %c0_190 = arith.constant 0 : index
    %c1_191 = arith.constant 1 : index
    %c1_192 = arith.constant 1 : index
    %c0_193 = arith.constant 0 : index
    %167 = vector.load %arg14[%c1_189, %c0_190, %c1_191, %c1_192, %c0_193] : memref<4x2x9x9x64xf32, #tpu.memory_space<vmem>>, vector<1x2x8x8x64xf32>
    %168 = vector.shape_cast %167 : vector<1x2x8x8x64xf32> to vector<2x8x8x64xf32>
    %169 = vector.shape_cast %168 : vector<2x8x8x64xf32> to vector<128x64xf32>
    %170 = arith.truncf %169 : vector<128x64xf32> to vector<128x64xbf16>
    %c0_194 = arith.constant 0 : index
    %c896 = arith.constant 896 : index
    %171 = vector.load %arg15[%c0_194, %c896] : memref<128x1024xbf16, #tpu.memory_space<vmem>>, vector<128x64xbf16>
    tpu.vector_store %arg15[%c0_194, %c896], %170 {strides = array<i32>} : memref<128x1024xbf16, #tpu.memory_space<vmem>>, vector<128x64xbf16>,
    %c0_195 = arith.constant 0 : index
    %c0_196 = arith.constant 0 : index
    %c1_197 = arith.constant 1 : index
    %c1_198 = arith.constant 1 : index
    %c0_199 = arith.constant 0 : index
    %172 = vector.load %arg14[%c0_195, %c0_196, %c1_197, %c1_198, %c0_199] : memref<4x2x9x9x64xf32, #tpu.memory_space<vmem>>, vector<1x2x8x8x64xf32>
    %173 = vector.shape_cast %172 : vector<1x2x8x8x64xf32> to vector<2x8x8x64xf32>
    %174 = vector.shape_cast %173 : vector<2x8x8x64xf32> to vector<128x64xf32>
    %175 = arith.truncf %174 : vector<128x64xf32> to vector<128x64xbf16>
    %c0_200 = arith.constant 0 : index
    %c960 = arith.constant 960 : index
    %176 = vector.load %arg15[%c0_200, %c960] : memref<128x1024xbf16, #tpu.memory_space<vmem>>, vector<128x64xbf16>
    tpu.vector_store %arg15[%c0_200, %c960], %175 {strides = array<i32>} : memref<128x1024xbf16, #tpu.memory_space<vmem>>, vector<128x64xbf16>,
    %c0_201 = arith.constant 0 : index
    %c0_202 = arith.constant 0 : index
    %177 = vector.load %arg15[%c0_201, %c0_202] : memref<128x1024xbf16, #tpu.memory_space<vmem>>, vector<128x1024xbf16>
    %c0_203 = arith.constant 0 : index
    %c0_204 = arith.constant 0 : index
    %178 = vector.load %arg2[%c0_203, %c0_204] : memref<1024x128xbf16, #tpu.memory_space<vmem>>, vector<1024x128xbf16>
    %cst_205 = arith.constant dense<0.000000e+00> : vector<128x128xf32>
    %179 = tpu.matmul %177, %178, %cst_205 {dimension_numbers = #tpu.dot_dimension_numbers<[1], [0], [0], [1], [0, 0, 1, 1], [], []>} : vector<128x1024xbf16>, vector<1024x128xbf16>, vector<128x128xf32> -> vector<128x128xf32>
    %c0_206 = arith.constant 0 : index
    %c0_207 = arith.constant 0 : index
    %180 = vector.load %arg6[%c0_206, %c0_207] : memref<1x128xf32, #tpu.memory_space<vmem>>, vector<1x128xf32>
    %c0_208 = arith.constant 0 : index
    %c0_209 = arith.constant 0 : index
    %181 = vector.load %arg7[%c0_208, %c0_209] : memref<1x128xf32, #tpu.memory_space<vmem>>, vector<1x128xf32>
    %cst_210 = arith.constant dense<0.000000e+00> : vector<128xf32>
    %182 = vector.multi_reduction <add>, %179, %cst_210 [0] : vector<128x128xf32> to vector<128xf32>
    %183 = vector.shape_cast %182 : vector<128xf32> to vector<1x128xf32>
    %cst_211 = arith.constant 7.812500e-03 : f32
    %184 = vector.broadcast %cst_211 : f32 to vector<1x128xf32>
    %185 = arith.mulf %183, %184 : vector<1x128xf32>
    %186 = vector.broadcast %185 : vector<1x128xf32> to vector<128x128xf32>
    %187 = arith.subf %179, %186 : vector<128x128xf32>
    %188 = arith.mulf %187, %187 : vector<128x128xf32>
    %cst_212 = arith.constant dense<0.000000e+00> : vector<128xf32>
    %189 = vector.multi_reduction <add>, %188, %cst_212 [0] : vector<128x128xf32> to vector<128xf32>
    %190 = vector.shape_cast %189 : vector<128xf32> to vector<1x128xf32>
    %cst_213 = arith.constant 7.812500e-03 : f32
    %191 = vector.broadcast %cst_213 : f32 to vector<1x128xf32>
    %192 = arith.mulf %190, %191 : vector<1x128xf32>
    %cst_214 = arith.constant 9.99999974E-6 : f32
    %193 = vector.broadcast %cst_214 : f32 to vector<1x128xf32>
    %194 = arith.addf %192, %193 : vector<1x128xf32>
    %195 = math.rsqrt %194 : vector<1x128xf32>
    %196 = arith.mulf %180, %195 : vector<1x128xf32>
    %197 = vector.broadcast %196 : vector<1x128xf32> to vector<128x128xf32>
    %198 = arith.mulf %187, %197 : vector<128x128xf32>
    %199 = vector.broadcast %181 : vector<1x128xf32> to vector<128x128xf32>
    %200 = arith.addf %198, %199 : vector<128x128xf32>
    %cst_215 = arith.constant 0.000000e+00 : f32
    %201 = vector.broadcast %cst_215 : f32 to vector<128x128xf32>
    %202 = arith.cmpf ogt, %200, %201 : vector<128x128xf32>
    %cst_216 = arith.constant 2.000000e-01 : f32
    %203 = vector.broadcast %cst_216 : f32 to vector<128x128xf32>
    %204 = arith.mulf %203, %200 : vector<128x128xf32>
    %205 = arith.select %202, %200, %204 : vector<128x128xi1>, vector<128x128xf32>
    %206 = vector.shape_cast %205 : vector<128x128xf32> to vector<2x8x8x128xf32>
    %c0_217 = arith.constant 0 : index
    %c0_218 = arith.constant 0 : index
    %c0_219 = arith.constant 0 : index
    %c0_220 = arith.constant 0 : index
    %207 = vector.load %arg11[%c0_217, %c0_218, %c0_219, %c0_220] : memref<2x8x8x128xf32, #tpu.memory_space<vmem>>, vector<2x8x8x128xf32>
    tpu.vector_store %arg11[%c0_217, %c0_218, %c0_219, %c0_220], %206 {strides = array<i32>} : memref<2x8x8x128xf32, #tpu.memory_space<vmem>>, vector<2x8x8x128xf32>,
    %cst_221 = arith.constant 0.000000e+00 : f32
    %208 = vector.broadcast %cst_221 : f32 to vector<2x1x10x128xf32>
    %c0_222 = arith.constant 0 : index
    %c0_223 = arith.constant 0 : index
    %c0_224 = arith.constant 0 : index
    %c0_225 = arith.constant 0 : index
    %209 = vector.load %arg16[%c0_222, %c0_223, %c0_224, %c0_225] : memref<2x10x10x128xf32, #tpu.memory_space<vmem>>, vector<2x1x10x128xf32>
    tpu.vector_store %arg16[%c0_222, %c0_223, %c0_224, %c0_225], %208 {strides = array<i32>} : memref<2x10x10x128xf32, #tpu.memory_space<vmem>>, vector<2x1x10x128xf32>,
    %c0_226 = arith.constant 0 : index
    %c9 = arith.constant 9 : index
    %c0_227 = arith.constant 0 : index
    %c0_228 = arith.constant 0 : index
    %210 = vector.load %arg16[%c0_226, %c9, %c0_227, %c0_228] : memref<2x10x10x128xf32, #tpu.memory_space<vmem>>, vector<2x1x10x128xf32>
    tpu.vector_store %arg16[%c0_226, %c9, %c0_227, %c0_228], %208 {strides = array<i32>} : memref<2x10x10x128xf32, #tpu.memory_space<vmem>>, vector<2x1x10x128xf32>,
    %cst_229 = arith.constant 0.000000e+00 : f32
    %211 = vector.broadcast %cst_229 : f32 to vector<2x10x1x128xf32>
    %c0_230 = arith.constant 0 : index
    %c0_231 = arith.constant 0 : index
    %c0_232 = arith.constant 0 : index
    %c0_233 = arith.constant 0 : index
    %212 = vector.load %arg16[%c0_230, %c0_231, %c0_232, %c0_233] : memref<2x10x10x128xf32, #tpu.memory_space<vmem>>, vector<2x10x1x128xf32>
    tpu.vector_store %arg16[%c0_230, %c0_231, %c0_232, %c0_233], %211 {strides = array<i32>} : memref<2x10x10x128xf32, #tpu.memory_space<vmem>>, vector<2x10x1x128xf32>,
    %c0_234 = arith.constant 0 : index
    %c0_235 = arith.constant 0 : index
    %c9_236 = arith.constant 9 : index
    %c0_237 = arith.constant 0 : index
    %213 = vector.load %arg16[%c0_234, %c0_235, %c9_236, %c0_237] : memref<2x10x10x128xf32, #tpu.memory_space<vmem>>, vector<2x10x1x128xf32>
    tpu.vector_store %arg16[%c0_234, %c0_235, %c9_236, %c0_237], %211 {strides = array<i32>} : memref<2x10x10x128xf32, #tpu.memory_space<vmem>>, vector<2x10x1x128xf32>,
    %c0_238 = arith.constant 0 : index
    %c1_239 = arith.constant 1 : index
    %c1_240 = arith.constant 1 : index
    %c0_241 = arith.constant 0 : index
    %214 = vector.load %arg16[%c0_238, %c1_239, %c1_240, %c0_241] : memref<2x10x10x128xf32, #tpu.memory_space<vmem>>, vector<2x8x8x128xf32>
    tpu.vector_store %arg16[%c0_238, %c1_239, %c1_240, %c0_241], %206 {strides = array<i32>} : memref<2x10x10x128xf32, #tpu.memory_space<vmem>>, vector<2x8x8x128xf32>,
    %c0_242 = arith.constant 0 : index
    %c0_243 = arith.constant 0 : index
    %c0_244 = arith.constant 0 : index
    %c0_245 = arith.constant 0 : index
    %215 = vector.load %arg16[%c0_242, %c0_243, %c0_244, %c0_245] : memref<2x10x10x128xf32, #tpu.memory_space<vmem>>, vector<2x8x8x128xf32>
    %216 = vector.shape_cast %215 : vector<2x8x8x128xf32> to vector<128x128xf32>
    %217 = arith.truncf %216 : vector<128x128xf32> to vector<128x128xbf16>
    %c0_246 = arith.constant 0 : index
    %c0_247 = arith.constant 0 : index
    %218 = vector.load %arg17[%c0_246, %c0_247] : memref<128x1152xbf16, #tpu.memory_space<vmem>>, vector<128x128xbf16>
    tpu.vector_store %arg17[%c0_246, %c0_247], %217 {strides = array<i32>} : memref<128x1152xbf16, #tpu.memory_space<vmem>>, vector<128x128xbf16>,
    %c0_248 = arith.constant 0 : index
    %c0_249 = arith.constant 0 : index
    %c1_250 = arith.constant 1 : index
    %c0_251 = arith.constant 0 : index
    %219 = vector.load %arg16[%c0_248, %c0_249, %c1_250, %c0_251] : memref<2x10x10x128xf32, #tpu.memory_space<vmem>>, vector<2x8x8x128xf32>
    %220 = vector.shape_cast %219 : vector<2x8x8x128xf32> to vector<128x128xf32>
    %221 = arith.truncf %220 : vector<128x128xf32> to vector<128x128xbf16>
    %c0_252 = arith.constant 0 : index
    %c128_253 = arith.constant 128 : index
    %222 = vector.load %arg17[%c0_252, %c128_253] : memref<128x1152xbf16, #tpu.memory_space<vmem>>, vector<128x128xbf16>
    tpu.vector_store %arg17[%c0_252, %c128_253], %221 {strides = array<i32>} : memref<128x1152xbf16, #tpu.memory_space<vmem>>, vector<128x128xbf16>,
    %c0_254 = arith.constant 0 : index
    %c0_255 = arith.constant 0 : index
    %c2_256 = arith.constant 2 : index
    %c0_257 = arith.constant 0 : index
    %223 = vector.load %arg16[%c0_254, %c0_255, %c2_256, %c0_257] : memref<2x10x10x128xf32, #tpu.memory_space<vmem>>, vector<2x8x8x128xf32>
    %224 = vector.shape_cast %223 : vector<2x8x8x128xf32> to vector<128x128xf32>
    %225 = arith.truncf %224 : vector<128x128xf32> to vector<128x128xbf16>
    %c0_258 = arith.constant 0 : index
    %c256_259 = arith.constant 256 : index
    %226 = vector.load %arg17[%c0_258, %c256_259] : memref<128x1152xbf16, #tpu.memory_space<vmem>>, vector<128x128xbf16>
    tpu.vector_store %arg17[%c0_258, %c256_259], %225 {strides = array<i32>} : memref<128x1152xbf16, #tpu.memory_space<vmem>>, vector<128x128xbf16>,
    %c0_260 = arith.constant 0 : index
    %c1_261 = arith.constant 1 : index
    %c0_262 = arith.constant 0 : index
    %c0_263 = arith.constant 0 : index
    %227 = vector.load %arg16[%c0_260, %c1_261, %c0_262, %c0_263] : memref<2x10x10x128xf32, #tpu.memory_space<vmem>>, vector<2x8x8x128xf32>
    %228 = vector.shape_cast %227 : vector<2x8x8x128xf32> to vector<128x128xf32>
    %229 = arith.truncf %228 : vector<128x128xf32> to vector<128x128xbf16>
    %c0_264 = arith.constant 0 : index
    %c384_265 = arith.constant 384 : index
    %230 = vector.load %arg17[%c0_264, %c384_265] : memref<128x1152xbf16, #tpu.memory_space<vmem>>, vector<128x128xbf16>
    tpu.vector_store %arg17[%c0_264, %c384_265], %229 {strides = array<i32>} : memref<128x1152xbf16, #tpu.memory_space<vmem>>, vector<128x128xbf16>,
    %c0_266 = arith.constant 0 : index
    %c1_267 = arith.constant 1 : index
    %c1_268 = arith.constant 1 : index
    %c0_269 = arith.constant 0 : index
    %231 = vector.load %arg16[%c0_266, %c1_267, %c1_268, %c0_269] : memref<2x10x10x128xf32, #tpu.memory_space<vmem>>, vector<2x8x8x128xf32>
    %232 = vector.shape_cast %231 : vector<2x8x8x128xf32> to vector<128x128xf32>
    %233 = arith.truncf %232 : vector<128x128xf32> to vector<128x128xbf16>
    %c0_270 = arith.constant 0 : index
    %c512_271 = arith.constant 512 : index
    %234 = vector.load %arg17[%c0_270, %c512_271] : memref<128x1152xbf16, #tpu.memory_space<vmem>>, vector<128x128xbf16>
    tpu.vector_store %arg17[%c0_270, %c512_271], %233 {strides = array<i32>} : memref<128x1152xbf16, #tpu.memory_space<vmem>>, vector<128x128xbf16>,
    %c0_272 = arith.constant 0 : index
    %c1_273 = arith.constant 1 : index
    %c2_274 = arith.constant 2 : index
    %c0_275 = arith.constant 0 : index
    %235 = vector.load %arg16[%c0_272, %c1_273, %c2_274, %c0_275] : memref<2x10x10x128xf32, #tpu.memory_space<vmem>>, vector<2x8x8x128xf32>
    %236 = vector.shape_cast %235 : vector<2x8x8x128xf32> to vector<128x128xf32>
    %237 = arith.truncf %236 : vector<128x128xf32> to vector<128x128xbf16>
    %c0_276 = arith.constant 0 : index
    %c640_277 = arith.constant 640 : index
    %238 = vector.load %arg17[%c0_276, %c640_277] : memref<128x1152xbf16, #tpu.memory_space<vmem>>, vector<128x128xbf16>
    tpu.vector_store %arg17[%c0_276, %c640_277], %237 {strides = array<i32>} : memref<128x1152xbf16, #tpu.memory_space<vmem>>, vector<128x128xbf16>,
    %c0_278 = arith.constant 0 : index
    %c2_279 = arith.constant 2 : index
    %c0_280 = arith.constant 0 : index
    %c0_281 = arith.constant 0 : index
    %239 = vector.load %arg16[%c0_278, %c2_279, %c0_280, %c0_281] : memref<2x10x10x128xf32, #tpu.memory_space<vmem>>, vector<2x8x8x128xf32>
    %240 = vector.shape_cast %239 : vector<2x8x8x128xf32> to vector<128x128xf32>
    %241 = arith.truncf %240 : vector<128x128xf32> to vector<128x128xbf16>
    %c0_282 = arith.constant 0 : index
    %c768_283 = arith.constant 768 : index
    %242 = vector.load %arg17[%c0_282, %c768_283] : memref<128x1152xbf16, #tpu.memory_space<vmem>>, vector<128x128xbf16>
    tpu.vector_store %arg17[%c0_282, %c768_283], %241 {strides = array<i32>} : memref<128x1152xbf16, #tpu.memory_space<vmem>>, vector<128x128xbf16>,
    %c0_284 = arith.constant 0 : index
    %c2_285 = arith.constant 2 : index
    %c1_286 = arith.constant 1 : index
    %c0_287 = arith.constant 0 : index
    %243 = vector.load %arg16[%c0_284, %c2_285, %c1_286, %c0_287] : memref<2x10x10x128xf32, #tpu.memory_space<vmem>>, vector<2x8x8x128xf32>
    %244 = vector.shape_cast %243 : vector<2x8x8x128xf32> to vector<128x128xf32>
    %245 = arith.truncf %244 : vector<128x128xf32> to vector<128x128xbf16>
    %c0_288 = arith.constant 0 : index
    %c896_289 = arith.constant 896 : index
    %246 = vector.load %arg17[%c0_288, %c896_289] : memref<128x1152xbf16, #tpu.memory_space<vmem>>, vector<128x128xbf16>
    tpu.vector_store %arg17[%c0_288, %c896_289], %245 {strides = array<i32>} : memref<128x1152xbf16, #tpu.memory_space<vmem>>, vector<128x128xbf16>,
    %c0_290 = arith.constant 0 : index
    %c2_291 = arith.constant 2 : index
    %c2_292 = arith.constant 2 : index
    %c0_293 = arith.constant 0 : index
    %247 = vector.load %arg16[%c0_290, %c2_291, %c2_292, %c0_293] : memref<2x10x10x128xf32, #tpu.memory_space<vmem>>, vector<2x8x8x128xf32>
    %248 = vector.shape_cast %247 : vector<2x8x8x128xf32> to vector<128x128xf32>
    %249 = arith.truncf %248 : vector<128x128xf32> to vector<128x128xbf16>
    %c0_294 = arith.constant 0 : index
    %c1024 = arith.constant 1024 : index
    %250 = vector.load %arg17[%c0_294, %c1024] : memref<128x1152xbf16, #tpu.memory_space<vmem>>, vector<128x128xbf16>
    tpu.vector_store %arg17[%c0_294, %c1024], %249 {strides = array<i32>} : memref<128x1152xbf16, #tpu.memory_space<vmem>>, vector<128x128xbf16>,
    %c0_295 = arith.constant 0 : index
    %c0_296 = arith.constant 0 : index
    %251 = vector.load %arg17[%c0_295, %c0_296] : memref<128x1152xbf16, #tpu.memory_space<vmem>>, vector<128x1152xbf16>
    %c0_297 = arith.constant 0 : index
    %c0_298 = arith.constant 0 : index
    %252 = vector.load %arg3[%c0_297, %c0_298] : memref<1152x16xbf16, #tpu.memory_space<vmem>>, vector<1152x16xbf16>
    %cst_299 = arith.constant dense<0.000000e+00> : vector<128x16xf32>
    %253 = tpu.matmul %251, %252, %cst_299 {dimension_numbers = #tpu.dot_dimension_numbers<[1], [0], [0], [1], [0, 0, 1, 1], [], []>} : vector<128x1152xbf16>, vector<1152x16xbf16>, vector<128x16xf32> -> vector<128x16xf32>
    %c0_300 = arith.constant 0 : index
    %c0_301 = arith.constant 0 : index
    %254 = vector.load %arg8[%c0_300, %c0_301] : memref<1x16xf32, #tpu.memory_space<vmem>>, vector<1x16xf32>
    %c0_302 = arith.constant 0 : index
    %c0_303 = arith.constant 0 : index
    %255 = vector.load %arg9[%c0_302, %c0_303] : memref<1x16xf32, #tpu.memory_space<vmem>>, vector<1x16xf32>
    %cst_304 = arith.constant dense<0.000000e+00> : vector<16xf32>
    %256 = vector.multi_reduction <add>, %253, %cst_304 [0] : vector<128x16xf32> to vector<16xf32>
    %257 = vector.shape_cast %256 : vector<16xf32> to vector<1x16xf32>
    %cst_305 = arith.constant 7.812500e-03 : f32
    %258 = vector.broadcast %cst_305 : f32 to vector<1x16xf32>
    %259 = arith.mulf %257, %258 : vector<1x16xf32>
    %260 = vector.broadcast %259 : vector<1x16xf32> to vector<128x16xf32>
    %261 = arith.subf %253, %260 : vector<128x16xf32>
    %262 = arith.mulf %261, %261 : vector<128x16xf32>
    %cst_306 = arith.constant dense<0.000000e+00> : vector<16xf32>
    %263 = vector.multi_reduction <add>, %262, %cst_306 [0] : vector<128x16xf32> to vector<16xf32>
    %264 = vector.shape_cast %263 : vector<16xf32> to vector<1x16xf32>
    %cst_307 = arith.constant 7.812500e-03 : f32
    %265 = vector.broadcast %cst_307 : f32 to vector<1x16xf32>
    %266 = arith.mulf %264, %265 : vector<1x16xf32>
    %cst_308 = arith.constant 9.99999974E-6 : f32
    %267 = vector.broadcast %cst_308 : f32 to vector<1x16xf32>
    %268 = arith.addf %266, %267 : vector<1x16xf32>
    %269 = math.rsqrt %268 : vector<1x16xf32>
    %270 = arith.mulf %254, %269 : vector<1x16xf32>
    %271 = vector.broadcast %270 : vector<1x16xf32> to vector<128x16xf32>
    %272 = arith.mulf %261, %271 : vector<128x16xf32>
    %273 = vector.broadcast %255 : vector<1x16xf32> to vector<128x16xf32>
    %274 = arith.addf %272, %273 : vector<128x16xf32>
    %275 = math.tanh %274 : vector<128x16xf32>
    %276 = vector.shape_cast %275 : vector<128x16xf32> to vector<2x8x8x16xf32>
    %c0_309 = arith.constant 0 : index
    %c0_310 = arith.constant 0 : index
    %c0_311 = arith.constant 0 : index
    %c0_312 = arith.constant 0 : index
    %277 = vector.load %arg12[%c0_309, %c0_310, %c0_311, %c0_312] : memref<2x8x8x16xf32, #tpu.memory_space<vmem>>, vector<2x8x8x16xf32>
    tpu.vector_store %arg12[%c0_309, %c0_310, %c0_311, %c0_312], %276 {strides = array<i32>} : memref<2x8x8x16xf32, #tpu.memory_space<vmem>>, vector<2x8x8x16xf32>,
    return
  }
}

</mosaic_0001>

<llo_original>
// kernel: encoder_forward.1
$region0: #{encoder_forward.1}
  #allocation0 [shape = 'u32[]', space=smem, size = 0x4, offset = 0x4, fixed_abs, tag = 'smem constant byte address 0x4 - core index']
  #allocation1 [shape = 'u32[144,128]{1,0:T(1,128)}', space=vmem, size = 0x12000, scoped, tag = 'internal scratch']
  #allocation2 [shape = 'bf16[512,128]{1,0:T(16,128)(2,1)}', space=vmem, size = 0x20000, scoped, tag = 'scratch operand']
  #allocation3 [shape = 'f32[4,2,9,9,64]{4,3,2,1,0:T(8,128)}', space=vmem, size = 0x90000, scoped, tag = 'scratch operand']
  #allocation4 [shape = 'bf16[128,1024]{1,0:T(16,128)(2,1)}', space=vmem, size = 0x40000, scoped, tag = 'scratch operand']
  #allocation5 [shape = 'f32[2,10,10,128]{3,2,1,0:T(8,128)}', space=vmem, size = 0x28000, scoped, tag = 'scratch operand']
  #allocation6 [shape = 'bf16[128,1152]{1,0:T(16,128)(2,1)}', space=vmem, size = 0x48000, scoped, tag = 'scratch operand']
  %s0 = inlined_call_operand.vmem [shape: bf16[512,16], index: 0, kind: input, shape index: {}]
  %s1 = inlined_call_operand.vmem [shape: bf16[128,64], index: 1, kind: input, shape index: {}]
  %s2 = inlined_call_operand.vmem [shape: bf16[1024,128], index: 2, kind: input, shape index: {}]
  %s3 = inlined_call_operand.vmem [shape: bf16[1152,16], index: 3, kind: input, shape index: {}]
  %s4 = inlined_call_operand.vmem [shape: f32[1,64], index: 4, kind: input, shape index: {}]
  %s5 = inlined_call_operand.vmem [shape: f32[1,64], index: 5, kind: input, shape index: {}]
  %s6 = inlined_call_operand.vmem [shape: f32[1,128], index: 6, kind: input, shape index: {}]
  %s7 = inlined_call_operand.vmem [shape: f32[1,128], index: 7, kind: input, shape index: {}]
  %s8 = inlined_call_operand.vmem [shape: f32[1,16], index: 8, kind: input, shape index: {}]
  %s9 = inlined_call_operand.vmem [shape: f32[1,16], index: 9, kind: input, shape index: {}]
  %s10 = inlined_call_operand.vmem [shape: f32[4,2,8,8,64], index: 10, kind: output, shape index: {0}]
  %s11 = inlined_call_operand.hbm [shape: f32[2,8,8,128], index: 11, kind: output, shape index: {1}]
  %s12 = inlined_call_operand.hbm [shape: f32[2,8,8,16], index: 12, kind: output, shape index: {2}]
  %13 = xla_tuple %s10, %s11, %s12
  %s14 = sld [smem:[#allocation0]]
  $region66: #{encoder_forward.1} parent=0
    _
  %s16 = ssub.s32 1, %s14
  %s17 = scalar_select 0, %s16, %s14
  $region1: #{encoder_forward.1} parent=0
    #allocation7 [shape = 'u8[65536]{0}', space=vmem, size = 0x10000, scoped, tag = 'output window, operand 1, single buffered']
    #allocation8 [shape = 's32[1]{0}', space=sflag, size = 0x4, scoped, tag = 'scoped memory for encoder_forward.1']
    #allocation9 [shape = 'u8[65536]{0}', space=vmem, size = 0x10000, scoped, tag = 'output window, operand 2, single buffered']
    #allocation10 [shape = 's32[1]{0}', space=sflag, size = 0x4, scoped, tag = 'scoped memory for encoder_forward.1']
    %18 = vsyncpa [#allocation8], 0
    %19 = vsyncpa [#allocation10], 0
    // Predicated region
    $region2: #{encoder_forward.1} parent=1 // pred_check
      _
    $region3: #{encoder_forward.1} parent=1 // pred_check_branch
      %21 = sbr.rel (0) target = $region5
    $region4: #{encoder_forward.1} parent=1 // pred_region
      _
    $region5: #{encoder_forward.1} parent=1 // pred_fallthru
      _
    // Predicated region
    $region6: #{encoder_forward.1} parent=1 // pred_check
      _
    $region7: #{encoder_forward.1} parent=1 // pred_check_branch
      %23 = sbr.rel (0) target = $region9
    $region8: #{encoder_forward.1} parent=1 // pred_region
      _
    $region9: #{encoder_forward.1} parent=1 // pred_fallthru
      _
    // Predicated region
    $region10: #{encoder_forward.1} parent=1 // pred_check
      _
    $region11: #{encoder_forward.1} parent=1 // pred_check_branch
      %25 = sbr.rel (0) target = $region13
    $region12: #{encoder_forward.1} parent=1 // pred_region
      _
    $region13: #{encoder_forward.1} parent=1 // pred_fallthru
      _
    // Predicated region
    $region14: #{encoder_forward.1} parent=1 // pred_check
      _
    $region15: #{encoder_forward.1} parent=1 // pred_check_branch
      %27 = sbr.rel (0) target = $region17
    $region16: #{encoder_forward.1} parent=1 // pred_region
      _
    $region17: #{encoder_forward.1} parent=1 // pred_fallthru
      _
    // Predicated region
    $region18: #{encoder_forward.1} parent=1 // pred_check
      _
    $region19: #{encoder_forward.1} parent=1 // pred_check_branch
      %29 = sbr.rel (0) target = $region21
    $region20: #{encoder_forward.1} parent=1 // pred_region
      _
    $region21: #{encoder_forward.1} parent=1 // pred_fallthru
      _
    // Predicated region
    $region22: #{encoder_forward.1} parent=1 // pred_check
      _
    $region23: #{encoder_forward.1} parent=1 // pred_check_branch
      %31 = sbr.rel (0) target = $region25
    $region24: #{encoder_forward.1} parent=1 // pred_region
      _
    $region25: #{encoder_forward.1} parent=1 // pred_fallthru
      _
    // Predicated region
    $region26: #{encoder_forward.1} parent=1 // pred_check
      _
    $region27: #{encoder_forward.1} parent=1 // pred_check_branch
      %33 = sbr.rel (0) target = $region29
    $region28: #{encoder_forward.1} parent=1 // pred_region
      _
    $region29: #{encoder_forward.1} parent=1 // pred_fallthru
      _
    // Predicated region
    $region30: #{encoder_forward.1} parent=1 // pred_check
      _
    $region31: #{encoder_forward.1} parent=1 // pred_check_branch
      %35 = sbr.rel (0) target = $region33
    $region32: #{encoder_forward.1} parent=1 // pred_region
      _
    $region33: #{encoder_forward.1} parent=1 // pred_fallthru
      _
    // Predicated region
    $region34: #{encoder_forward.1} parent=1 // pred_check
      _
    $region35: #{encoder_forward.1} parent=1 // pred_check_branch
      %37 = sbr.rel (0) target = $region37
    $region36: #{encoder_forward.1} parent=1 // pred_region
      _
    $region37: #{encoder_forward.1} parent=1 // pred_fallthru
      _
    // Predicated region
    $region38: #{encoder_forward.1} parent=1 // pred_check
      _
    $region39: #{encoder_forward.1} parent=1 // pred_check_branch
      %39 = sbr.rel (0) target = $region41
    $region40: #{encoder_forward.1} parent=1 // pred_region
      _
    $region41: #{encoder_forward.1} parent=1 // pred_fallthru
      _
    %v41 = vld [vmem:[%s0] sm:$0xf]
    %v42 = vld [vmem:[%s0 + $0x4] sm:$0xf]
    %v43 = vld [vmem:[%s0 + $0x8] sm:$0xf]
    %v44 = vld [vmem:[%s0 + $0xc] sm:$0xf]
    %v45 = vld [vmem:[%s0 + $0x10] sm:$0xf]
    %v46 = vld [vmem:[%s0 + $0x14] sm:$0xf]
    %v47 = vld [vmem:[%s0 + $0x18] sm:$0xf]
    %v48 = vld [vmem:[%s0 + $0x1c] sm:$0xf]
    %v49 = vld [vmem:[%s0 + $0x20] sm:$0xf]
    %v50 = vld [vmem:[%s0 + $0x24] sm:$0xf]
    %v51 = vld [vmem:[%s0 + $0x28] sm:$0xf]
    %v52 = vld [vmem:[%s0 + $0x2c] sm:$0xf]
    %v53 = vld [vmem:[%s0 + $0x30] sm:$0xf]
    %v54 = vld [vmem:[%s0 + $0x34] sm:$0xf]
    %v55 = vld [vmem:[%s0 + $0x38] sm:$0xf]
    %v56 = vld [vmem:[%s0 + $0x3c] sm:$0xf]
    %v57 = vld [vmem:[%s0 + $0x40] sm:$0xf]
    %v58 = vld [vmem:[%s0 + $0x44] sm:$0xf]
    %v59 = vld [vmem:[%s0 + $0x48] sm:$0xf]
    %v60 = vld [vmem:[%s0 + $0x4c] sm:$0xf]
    %v61 = vld [vmem:[%s0 + $0x50] sm:$0xf]
    %v62 = vld [vmem:[%s0 + $0x54] sm:$0xf]
    %v63 = vld [vmem:[%s0 + $0x58] sm:$0xf]
    %v64 = vld [vmem:[%s0 + $0x5c] sm:$0xf]
    %v65 = vld [vmem:[%s0 + $0x60] sm:$0xf]
    %v66 = vld [vmem:[%s0 + $0x64] sm:$0xf]
    %v67 = vld [vmem:[%s0 + $0x68] sm:$0xf]
    %v68 = vld [vmem:[%s0 + $0x6c] sm:$0xf]
    %v69 = vld [vmem:[%s0 + $0x70] sm:$0xf]
    %v70 = vld [vmem:[%s0 + $0x74] sm:$0xf]
    %v71 = vld [vmem:[%s0 + $0x78] sm:$0xf]
    %v72 = vld [vmem:[%s0 + $0x7c] sm:$0xf]
    %v73 = vld [vmem:[%s0 + $0x80] sm:$0xf]
    %v74 = vld [vmem:[%s0 + $0x84] sm:$0xf]
    %v75 = vld [vmem:[%s0 + $0x88] sm:$0xf]
    %v76 = vld [vmem:[%s0 + $0x8c] sm:$0xf]
    %v77 = vld [vmem:[%s0 + $0x90] sm:$0xf]
    %v78 = vld [vmem:[%s0 + $0x94] sm:$0xf]
    %v79 = vld [vmem:[%s0 + $0x98] sm:$0xf]
    %v80 = vld [vmem:[%s0 + $0x9c] sm:$0xf]
    %v81 = vld [vmem:[%s0 + $0xa0] sm:$0xf]
    %v82 = vld [vmem:[%s0 + $0xa4] sm:$0xf]
    %v83 = vld [vmem:[%s0 + $0xa8] sm:$0xf]
    %v84 = vld [vmem:[%s0 + $0xac] sm:$0xf]
    %v85 = vld [vmem:[%s0 + $0xb0] sm:$0xf]
    %v86 = vld [vmem:[%s0 + $0xb4] sm:$0xf]
    %v87 = vld [vmem:[%s0 + $0xb8] sm:$0xf]
    %v88 = vld [vmem:[%s0 + $0xbc] sm:$0xf]
    %v89 = vld [vmem:[%s0 + $0xc0] sm:$0xf]
    %v90 = vld [vmem:[%s0 + $0xc4] sm:$0xf]
    %v91 = vld [vmem:[%s0 + $0xc8] sm:$0xf]
    %v92 = vld [vmem:[%s0 + $0xcc] sm:$0xf]
    %v93 = vld [vmem:[%s0 + $0xd0] sm:$0xf]
    %v94 = vld [vmem:[%s0 + $0xd4] sm:$0xf]
    %v95 = vld [vmem:[%s0 + $0xd8] sm:$0xf]
    %v96 = vld [vmem:[%s0 + $0xdc] sm:$0xf]
    %v97 = vld [vmem:[%s0 + $0xe0] sm:$0xf]
    %v98 = vld [vmem:[%s0 + $0xe4] sm:$0xf]
    %v99 = vld [vmem:[%s0 + $0xe8] sm:$0xf]
    %v100 = vld [vmem:[%s0 + $0xec] sm:$0xf]
    %v101 = vld [vmem:[%s0 + $0xf0] sm:$0xf]
    %v102 = vld [vmem:[%s0 + $0xf4] sm:$0xf]
    %v103 = vld [vmem:[%s0 + $0xf8] sm:$0xf]
    %v104 = vld [vmem:[%s0 + $0xfc] sm:$0xf]
    %v169 = vunpack.c.l.b16 %v41
    %v170 = vunpack.c.l.b16 %v42
    %v171 = vunpack.c.l.b16 %v43
    %v172 = vunpack.c.l.b16 %v44
    %v173 = vunpack.c.l.b16 %v45
    %v174 = vunpack.c.l.b16 %v46
    %v175 = vunpack.c.l.b16 %v47
    %v176 = vunpack.c.l.b16 %v48
    %v177 = vunpack.c.l.b16 %v49
    %v178 = vunpack.c.l.b16 %v50
    %v179 = vunpack.c.l.b16 %v51
    %v180 = vunpack.c.l.b16 %v52
    %v181 = vunpack.c.l.b16 %v53
    %v182 = vunpack.c.l.b16 %v54
    %v183 = vunpack.c.l.b16 %v55
    %v184 = vunpack.c.l.b16 %v56
    %v185 = vunpack.c.l.b16 %v57
    %v186 = vunpack.c.l.b16 %v58
    %v187 = vunpack.c.l.b16 %v59
    %v188 = vunpack.c.l.b16 %v60
    %v189 = vunpack.c.l.b16 %v61
    %v190 = vunpack.c.l.b16 %v62
    %v191 = vunpack.c.l.b16 %v63
    %v192 = vunpack.c.l.b16 %v64
    %v193 = vunpack.c.l.b16 %v65
    %v194 = vunpack.c.l.b16 %v66
    %v195 = vunpack.c.l.b16 %v67
    %v196 = vunpack.c.l.b16 %v68
    %v197 = vunpack.c.l.b16 %v69
    %v198 = vunpack.c.l.b16 %v70
    %v199 = vunpack.c.l.b16 %v71
    %v200 = vunpack.c.l.b16 %v72
    %v201 = vunpack.c.l.b16 %v73
    %v202 = vunpack.c.l.b16 %v74
    %v203 = vunpack.c.l.b16 %v75
    %v204 = vunpack.c.l.b16 %v76
    %v205 = vunpack.c.l.b16 %v77
    %v206 = vunpack.c.l.b16 %v78
    %v207 = vunpack.c.l.b16 %v79
    %v208 = vunpack.c.l.b16 %v80
    %v209 = vunpack.c.l.b16 %v81
    %v210 = vunpack.c.l.b16 %v82
    %v211 = vunpack.c.l.b16 %v83
    %v212 = vunpack.c.l.b16 %v84
    %v213 = vunpack.c.l.b16 %v85
    %v214 = vunpack.c.l.b16 %v86
    %v215 = vunpack.c.l.b16 %v87
    %v216 = vunpack.c.l.b16 %v88
    %v217 = vunpack.c.l.b16 %v89
    %v218 = vunpack.c.l.b16 %v90
    %v219 = vunpack.c.l.b16 %v91
    %v220 = vunpack.c.l.b16 %v92
    %v221 = vunpack.c.l.b16 %v93
    %v222 = vunpack.c.l.b16 %v94
    %v223 = vunpack.c.l.b16 %v95
    %v224 = vunpack.c.l.b16 %v96
    %v225 = vunpack.c.l.b16 %v97
    %v226 = vunpack.c.l.b16 %v98
    %v227 = vunpack.c.l.b16 %v99
    %v228 = vunpack.c.l.b16 %v100
    %v229 = vunpack.c.l.b16 %v101
    %v230 = vunpack.c.l.b16 %v102
    %v231 = vunpack.c.l.b16 %v103
    %v232 = vunpack.c.l.b16 %v104
    %v233 = vpack.c.b16 %v170, %v169
    %v234 = vpack.c.b16 %v172, %v171
    %v235 = vpack.c.b16 %v174, %v173
    %v236 = vpack.c.b16 %v176, %v175
    %v237 = vpack.c.b16 %v178, %v177
    %v238 = vpack.c.b16 %v180, %v179
    %v239 = vpack.c.b16 %v182, %v181
    %v240 = vpack.c.b16 %v184, %v183
    %v241 = vpack.c.b16 %v186, %v185
    %v242 = vpack.c.b16 %v188, %v187
    %v243 = vpack.c.b16 %v190, %v189
    %v244 = vpack.c.b16 %v192, %v191
    %v245 = vpack.c.b16 %v194, %v193
    %v246 = vpack.c.b16 %v196, %v195
    %v247 = vpack.c.b16 %v198, %v197
    %v248 = vpack.c.b16 %v200, %v199
    %v249 = vpack.c.b16 %v202, %v201
    %v250 = vpack.c.b16 %v204, %v203
    %v251 = vpack.c.b16 %v206, %v205
    %v252 = vpack.c.b16 %v208, %v207
    %v253 = vpack.c.b16 %v210, %v209
    %v254 = vpack.c.b16 %v212, %v211
    %v255 = vpack.c.b16 %v214, %v213
    %v256 = vpack.c.b16 %v216, %v215
    %v257 = vpack.c.b16 %v218, %v217
    %v258 = vpack.c.b16 %v220, %v219
    %v259 = vpack.c.b16 %v222, %v221
    %v260 = vpack.c.b16 %v224, %v223
    %v261 = vpack.c.b16 %v226, %v225
    %v262 = vpack.c.b16 %v228, %v227
    %v263 = vpack.c.b16 %v230, %v229
    %v264 = vpack.c.b16 %v232, %v231
    %vm297 = vcmask 130048
    %298 = vst.msk [vmem:[#allocation2] sm:$0xff] %vm297, %v233
    %299 = vst.msk [vmem:[#allocation2 + $0x8] sm:$0xff] %vm297, %v234
    %300 = vst.msk [vmem:[#allocation2 + $0x10] sm:$0xff] %vm297, %v235
    %301 = vst.msk [vmem:[#allocation2 + $0x18] sm:$0xff] %vm297, %v236
    %302 = vst.msk [vmem:[#allocation2 + $0x20] sm:$0xff] %vm297, %v237
    %303 = vst.msk [vmem:[#allocation2 + $0x28] sm:$0xff] %vm297, %v238
    %304 = vst.msk [vmem:[#allocation2 + $0x30] sm:$0xff] %vm297, %v239
    %305 = vst.msk [vmem:[#allocation2 + $0x38] sm:$0xff] %vm297, %v240
    %306 = vst.msk [vmem:[#allocation2 + $0x40] sm:$0xff] %vm297, %v241
    %307 = vst.msk [vmem:[#allocation2 + $0x48] sm:$0xff] %vm297, %v242
    %308 = vst.msk [vmem:[#allocation2 + $0x50] sm:$0xff] %vm297, %v243
    %309 = vst.msk [vmem:[#allocation2 + $0x58] sm:$0xff] %vm297, %v244
    %310 = vst.msk [vmem:[#allocation2 + $0x60] sm:$0xff] %vm297, %v245
    %311 = vst.msk [vmem:[#allocation2 + $0x68] sm:$0xff] %vm297, %v246
    %312 = vst.msk [vmem:[#allocation2 + $0x70] sm:$0xff] %vm297, %v247
    %313 = vst.msk [vmem:[#allocation2 + $0x78] sm:$0xff] %vm297, %v248
    %314 = vst.msk [vmem:[#allocation2 + $0x80] sm:$0xff] %vm297, %v249
    %315 = vst.msk [vmem:[#allocation2 + $0x88] sm:$0xff] %vm297, %v250
    %316 = vst.msk [vmem:[#allocation2 + $0x90] sm:$0xff] %vm297, %v251
    %317 = vst.msk [vmem:[#allocation2 + $0x98] sm:$0xff] %vm297, %v252
    %318 = vst.msk [vmem:[#allocation2 + $0xa0] sm:$0xff] %vm297, %v253
    %319 = vst.msk [vmem:[#allocation2 + $0xa8] sm:$0xff] %vm297, %v254
    %320 = vst.msk [vmem:[#allocation2 + $0xb0] sm:$0xff] %vm297, %v255
    %321 = vst.msk [vmem:[#allocation2 + $0xb8] sm:$0xff] %vm297, %v256
    %322 = vst.msk [vmem:[#allocation2 + $0xc0] sm:$0xff] %vm297, %v257
    %323 = vst.msk [vmem:[#allocation2 + $0xc8] sm:$0xff] %vm297, %v258
    %324 = vst.msk [vmem:[#allocation2 + $0xd0] sm:$0xff] %vm297, %v259
    %325 = vst.msk [vmem:[#allocation2 + $0xd8] sm:$0xff] %vm297, %v260
    %326 = vst.msk [vmem:[#allocation2 + $0xe0] sm:$0xff] %vm297, %v261
    %327 = vst.msk [vmem:[#allocation2 + $0xe8] sm:$0xff] %vm297, %v262
    %328 = vst.msk [vmem:[#allocation2 + $0xf0] sm:$0xff] %vm297, %v263
    %329 = vst.msk [vmem:[#allocation2 + $0xf8] sm:$0xff] %vm297, %v264
    %vm330 = vcmask 1047680
    %331 = vst.msk [vmem:[#allocation2] sm:$0xff] %vm330, 0
    %332 = vst.msk [vmem:[#allocation2 + $0x8] sm:$0xff] %vm330, 0
    %333 = vst.msk [vmem:[#allocation2 + $0x10] sm:$0xff] %vm330, 0
    %334 = vst.msk [vmem:[#allocation2 + $0x18] sm:$0xff] %vm330, 0
    %335 = vst.msk [vmem:[#allocation2 + $0x20] sm:$0xff] %vm330, 0
    %336 = vst.msk [vmem:[#allocation2 + $0x28] sm:$0xff] %vm330, 0
    %337 = vst.msk [vmem:[#allocation2 + $0x30] sm:$0xff] %vm330, 0
    %338 = vst.msk [vmem:[#allocation2 + $0x38] sm:$0xff] %vm330, 0
    %339 = vst.msk [vmem:[#allocation2 + $0x40] sm:$0xff] %vm330, 0
    %340 = vst.msk [vmem:[#allocation2 + $0x48] sm:$0xff] %vm330, 0
    %341 = vst.msk [vmem:[#allocation2 + $0x50] sm:$0xff] %vm330, 0
    %342 = vst.msk [vmem:[#allocation2 + $0x58] sm:$0xff] %vm330, 0
    %343 = vst.msk [vmem:[#allocation2 + $0x60] sm:$0xff] %vm330, 0
    %344 = vst.msk [vmem:[#allocation2 + $0x68] sm:$0xff] %vm330, 0
    %345 = vst.msk [vmem:[#allocation2 + $0x70] sm:$0xff] %vm330, 0
    %346 = vst.msk [vmem:[#allocation2 + $0x78] sm:$0xff] %vm330, 0
    %347 = vst.msk [vmem:[#allocation2 + $0x80] sm:$0xff] %vm330, 0
    %348 = vst.msk [vmem:[#allocation2 + $0x88] sm:$0xff] %vm330, 0
    %349 = vst.msk [vmem:[#allocation2 + $0x90] sm:$0xff] %vm330, 0
    %350 = vst.msk [vmem:[#allocation2 + $0x98] sm:$0xff] %vm330, 0
    %351 = vst.msk [vmem:[#allocation2 + $0xa0] sm:$0xff] %vm330, 0
    %352 = vst.msk [vmem:[#allocation2 + $0xa8] sm:$0xff] %vm330, 0
    %353 = vst.msk [vmem:[#allocation2 + $0xb0] sm:$0xff] %vm330, 0
    %354 = vst.msk [vmem:[#allocation2 + $0xb8] sm:$0xff] %vm330, 0
    %355 = vst.msk [vmem:[#allocation2 + $0xc0] sm:$0xff] %vm330, 0
    %356 = vst.msk [vmem:[#allocation2 + $0xc8] sm:$0xff] %vm330, 0
    %357 = vst.msk [vmem:[#allocation2 + $0xd0] sm:$0xff] %vm330, 0
    %358 = vst.msk [vmem:[#allocation2 + $0xd8] sm:$0xff] %vm330, 0
    %359 = vst.msk [vmem:[#allocation2 + $0xe0] sm:$0xff] %vm330, 0
    %360 = vst.msk [vmem:[#allocation2 + $0xe8] sm:$0xff] %vm330, 0
    %361 = vst.msk [vmem:[#allocation2 + $0xf0] sm:$0xff] %vm330, 0
    %362 = vst.msk [vmem:[#allocation2 + $0xf8] sm:$0xff] %vm330, 0
    %v363 = vld [vmem:[#allocation2] sm:$0xff]
    %v364 = vld [vmem:[#allocation2 + $0x8] sm:$0xff]
    %v365 = vld [vmem:[#allocation2 + $0x10] sm:$0xff]
    %v366 = vld [vmem:[#allocation2 + $0x18] sm:$0xff]
    %v367 = vld [vmem:[#allocation2 + $0x20] sm:$0xff]
    %v368 = vld [vmem:[#allocation2 + $0x28] sm:$0xff]
    %v369 = vld [vmem:[#allocation2 + $0x30] sm:$0xff]
    %v370 = vld [vmem:[#allocation2 + $0x38] sm:$0xff]
    %v371 = vld [vmem:[#allocation2 + $0x40] sm:$0xff]
    %v372 = vld [vmem:[#allocation2 + $0x48] sm:$0xff]
    %v373 = vld [vmem:[#allocation2 + $0x50] sm:$0xff]
    %v374 = vld [vmem:[#allocation2 + $0x58] sm:$0xff]
    %v375 = vld [vmem:[#allocation2 + $0x60] sm:$0xff]
    %v376 = vld [vmem:[#allocation2 + $0x68] sm:$0xff]
    %v377 = vld [vmem:[#allocation2 + $0x70] sm:$0xff]
    %v378 = vld [vmem:[#allocation2 + $0x78] sm:$0xff]
    %v379 = vld [vmem:[#allocation2 + $0x80] sm:$0xff]
    %v380 = vld [vmem:[#allocation2 + $0x88] sm:$0xff]
    %v381 = vld [vmem:[#allocation2 + $0x90] sm:$0xff]
    %v382 = vld [vmem:[#allocation2 + $0x98] sm:$0xff]
    %v383 = vld [vmem:[#allocation2 + $0xa0] sm:$0xff]
    %v384 = vld [vmem:[#allocation2 + $0xa8] sm:$0xff]
    %v385 = vld [vmem:[#allocation2 + $0xb0] sm:$0xff]
    %v386 = vld [vmem:[#allocation2 + $0xb8] sm:$0xff]
    %v387 = vld [vmem:[#allocation2 + $0xc0] sm:$0xff]
    %v388 = vld [vmem:[#allocation2 + $0xc8] sm:$0xff]
    %v389 = vld [vmem:[#allocation2 + $0xd0] sm:$0xff]
    %v390 = vld [vmem:[#allocation2 + $0xd8] sm:$0xff]
    %v391 = vld [vmem:[#allocation2 + $0xe0] sm:$0xff]
    %v392 = vld [vmem:[#allocation2 + $0xe8] sm:$0xff]
    %v393 = vld [vmem:[#allocation2 + $0xf0] sm:$0xff]
    %v394 = vld [vmem:[#allocation2 + $0xf8] sm:$0xff]
    %v395 = vld [vmem:[%s1] sm:$0xf]
    %v396 = vld [vmem:[%s1 + $0x4] sm:$0xf]
    %v397 = vld [vmem:[%s1 + $0x8] sm:$0xf]
    %v398 = vld [vmem:[%s1 + $0xc] sm:$0xf]
    %v399 = vld [vmem:[%s1 + $0x10] sm:$0xf]
    %v400 = vld [vmem:[%s1 + $0x14] sm:$0xf]
    %v401 = vld [vmem:[%s1 + $0x18] sm:$0xf]
    %v402 = vld [vmem:[%s1 + $0x1c] sm:$0xf]
    %v403 = vld [vmem:[%s1 + $0x20] sm:$0xf]
    %v404 = vld [vmem:[%s1 + $0x24] sm:$0xf]
    %v405 = vld [vmem:[%s1 + $0x28] sm:$0xf]
    %v406 = vld [vmem:[%s1 + $0x2c] sm:$0xf]
    %v407 = vld [vmem:[%s1 + $0x30] sm:$0xf]
    %v408 = vld [vmem:[%s1 + $0x34] sm:$0xf]
    %v409 = vld [vmem:[%s1 + $0x38] sm:$0xf]
    %v410 = vld [vmem:[%s1 + $0x3c] sm:$0xf]
    %v427 = vunpack.c.l.b16 %v395
    %v428 = vunpack.c.l.b16 %v396
    %v429 = vunpack.c.l.b16 %v397
    %v430 = vunpack.c.l.b16 %v398
    %v431 = vunpack.c.l.b16 %v399
    %v432 = vunpack.c.l.b16 %v400
    %v433 = vunpack.c.l.b16 %v401
    %v434 = vunpack.c.l.b16 %v402
    %v435 = vunpack.c.l.b16 %v403
    %v436 = vunpack.c.l.b16 %v404
    %v437 = vunpack.c.l.b16 %v405
    %v438 = vunpack.c.l.b16 %v406
    %v439 = vunpack.c.l.b16 %v407
    %v440 = vunpack.c.l.b16 %v408
    %v441 = vunpack.c.l.b16 %v409
    %v442 = vunpack.c.l.b16 %v410
    %v443 = vpack.c.b16 %v428, %v427
    %v444 = vpack.c.b16 %v430, %v429
    %v445 = vpack.c.b16 %v432, %v431
    %v446 = vpack.c.b16 %v434, %v433
    %v447 = vpack.c.b16 %v436, %v435
    %v448 = vpack.c.b16 %v438, %v437
    %v449 = vpack.c.b16 %v440, %v439
    %v450 = vpack.c.b16 %v442, %v441
    %459 = vmatprep.subr.bf16.mxu0 0
    %460 = vmatpush1.bf16.msra.mxu0 %v443
    %461 = vmatprep.subr.bf16.mxu0 0
    %462 = vmatpush1.bf16.msra.mxu0 %v444
    %463 = vmatprep.subr.bf16.mxu0 0
    %464 = vmatpush1.bf16.msra.mxu0 %v445
    %465 = vmatprep.subr.bf16.mxu0 0
    %466 = vmatpush1.bf16.msra.mxu0 %v446
    %467 = vmatprep.subr.bf16.mxu0 0
    %468 = vmatpush1.bf16.msra.mxu0 %v447
    %469 = vmatprep.subr.bf16.mxu0 0
    %470 = vmatpush1.bf16.msra.mxu0 %v448
    %471 = vmatprep.subr.bf16.mxu0 0
    %472 = vmatpush1.bf16.msra.mxu0 %v449
    %473 = vmatprep.subr.bf16.mxu0 0
    %474 = vmatpush1.bf16.msra.mxu0 %v450
    %475 = vmatprep.subr.bf16.mxu0 0
    %476 = vmatpush1.bf16.msra.mxu0 0
    %477 = vmatprep.subr.bf16.mxu0 0
    %478 = vmatpush1.bf16.msra.mxu0 0
    %479 = vmatprep.subr.bf16.mxu0 0
    %480 = vmatpush1.bf16.msra.mxu0 0
    %481 = vmatprep.subr.bf16.mxu0 0
    %482 = vmatpush1.bf16.msra.mxu0 0
    %483 = vmatprep.subr.bf16.mxu0 0
    %484 = vmatpush1.bf16.msra.mxu0 0
    %485 = vmatprep.subr.bf16.mxu0 0
    %486 = vmatpush1.bf16.msra.mxu0 0
    %487 = vmatprep.subr.bf16.mxu0 0
    %488 = vmatpush1.bf16.msra.mxu0 0
    %489 = vmatprep.subr.bf16.mxu0 0
    %490 = vmatpush1.bf16.msra.mxu0 0
    %491 = vmatprep.mubr.bf16.mxu0 0
    %492 = vmatmul.mubr.bf16.gmra.mrb[0].mxu0 %v363
    %v493 = vpop.f32.mrb[0].mxu0
    %v494 = vadd.f32 0.0, %v493
    %v495 = vpop.f32.mrb[0].mxu0
    %v496 = vpop.f32.mrb[0].mxu0
    %v497 = vadd.f32 0.0, %v496
    %v498 = vpop.f32.mrb[0].mxu0
    %499 = vmatprep.mubr.bf16.mxu0 0
    %500 = vmatmul.mubr.bf16.gmra.mrb[0].mxu0 %v364
    %v501 = vpop.f32.mrb[0].mxu0
    %v502 = vadd.f32 0.0, %v501
    %v503 = vpop.f32.mrb[0].mxu0
    %v504 = vpop.f32.mrb[0].mxu0
    %v505 = vadd.f32 0.0, %v504
    %v506 = vpop.f32.mrb[0].mxu0
    %507 = vmatprep.mubr.bf16.mxu0 0
    %508 = vmatmul.mubr.bf16.gmra.mrb[0].mxu0 %v365
    %v509 = vpop.f32.mrb[0].mxu0
    %v510 = vadd.f32 0.0, %v509
    %v511 = vpop.f32.mrb[0].mxu0
    %v512 = vpop.f32.mrb[0].mxu0
    %v513 = vadd.f32 0.0, %v512
    %v514 = vpop.f32.mrb[0].mxu0
    %515 = vmatprep.mubr.bf16.mxu0 0
    %516 = vmatmul.mubr.bf16.gmra.mrb[0].mxu0 %v366
    %v517 = vpop.f32.mrb[0].mxu0
    %v518 = vadd.f32 0.0, %v517
    %v519 = vpop.f32.mrb[0].mxu0
    %v520 = vpop.f32.mrb[0].mxu0
    %v521 = vadd.f32 0.0, %v520
    %v522 = vpop.f32.mrb[0].mxu0
    %523 = vmatprep.mubr.bf16.mxu0 0
    %524 = vmatmul.mubr.bf16.gmra.mrb[0].mxu0 %v367
    %v525 = vpop.f32.mrb[0].mxu0
    %v526 = vadd.f32 0.0, %v525
    %v527 = vpop.f32.mrb[0].mxu0
    %v528 = vpop.f32.mrb[0].mxu0
    %v529 = vadd.f32 0.0, %v528
    %v530 = vpop.f32.mrb[0].mxu0
    %531 = vmatprep.mubr.bf16.mxu0 0
    %532 = vmatmul.mubr.bf16.gmra.mrb[0].mxu0 %v368
    %v533 = vpop.f32.mrb[0].mxu0
    %v534 = vadd.f32 0.0, %v533
    %v535 = vpop.f32.mrb[0].mxu0
    %v536 = vpop.f32.mrb[0].mxu0
    %v537 = vadd.f32 0.0, %v536
    %v538 = vpop.f32.mrb[0].mxu0
    %539 = vmatprep.mubr.bf16.mxu0 0
    %540 = vmatmul.mubr.bf16.gmra.mrb[0].mxu0 %v369
    %v541 = vpop.f32.mrb[0].mxu0
    %v542 = vadd.f32 0.0, %v541
    %v543 = vpop.f32.mrb[0].mxu0
    %v544 = vpop.f32.mrb[0].mxu0
    %v545 = vadd.f32 0.0, %v544
    %v546 = vpop.f32.mrb[0].mxu0
    %547 = vmatprep.mubr.bf16.mxu0 0
    %548 = vmatmul.mubr.bf16.gmra.mrb[0].mxu0 %v370
    %v549 = vpop.f32.mrb[0].mxu0
    %v550 = vadd.f32 0.0, %v549
    %v551 = vpop.f32.mrb[0].mxu0
    %v552 = vpop.f32.mrb[0].mxu0
    %v553 = vadd.f32 0.0, %v552
    %v554 = vpop.f32.mrb[0].mxu0
    %555 = vmatprep.mubr.bf16.mxu0 0
    %556 = vmatmul.mubr.bf16.gmra.mrb[0].mxu0 %v371
    %v557 = vpop.f32.mrb[0].mxu0
    %v558 = vadd.f32 0.0, %v557
    %v559 = vpop.f32.mrb[0].mxu0
    %v560 = vpop.f32.mrb[0].mxu0
    %v561 = vadd.f32 0.0, %v560
    %v562 = vpop.f32.mrb[0].mxu0
    %563 = vmatprep.mubr.bf16.mxu0 0
    %564 = vmatmul.mubr.bf16.gmra.mrb[0].mxu0 %v372
    %v565 = vpop.f32.mrb[0].mxu0
    %v566 = vadd.f32 0.0, %v565
    %v567 = vpop.f32.mrb[0].mxu0
    %v568 = vpop.f32.mrb[0].mxu0
    %v569 = vadd.f32 0.0, %v568
    %v570 = vpop.f32.mrb[0].mxu0
    %571 = vmatprep.mubr.bf16.mxu0 0
    %572 = vmatmul.mubr.bf16.gmra.mrb[0].mxu0 %v373
    %v573 = vpop.f32.mrb[0].mxu0
    %v574 = vadd.f32 0.0, %v573
    %v575 = vpop.f32.mrb[0].mxu0
    %v576 = vpop.f32.mrb[0].mxu0
    %v577 = vadd.f32 0.0, %v576
    %v578 = vpop.f32.mrb[0].mxu0
    %579 = vmatprep.mubr.bf16.mxu0 0
    %580 = vmatmul.mubr.bf16.gmra.mrb[0].mxu0 %v374
    %v581 = vpop.f32.mrb[0].mxu0
    %v582 = vadd.f32 0.0, %v581
    %v583 = vpop.f32.mrb[0].mxu0
    %v584 = vpop.f32.mrb[0].mxu0
    %v585 = vadd.f32 0.0, %v584
    %v586 = vpop.f32.mrb[0].mxu0
    %587 = vmatprep.mubr.bf16.mxu0 0
    %588 = vmatmul.mubr.bf16.gmra.mrb[0].mxu0 %v375
    %v589 = vpop.f32.mrb[0].mxu0
    %v590 = vadd.f32 0.0, %v589
    %v591 = vpop.f32.mrb[0].mxu0
    %v592 = vpop.f32.mrb[0].mxu0
    %v593 = vadd.f32 0.0, %v592
    %v594 = vpop.f32.mrb[0].mxu0
    %595 = vmatprep.mubr.bf16.mxu0 0
    %596 = vmatmul.mubr.bf16.gmra.mrb[0].mxu0 %v376
    %v597 = vpop.f32.mrb[0].mxu0
    %v598 = vadd.f32 0.0, %v597
    %v599 = vpop.f32.mrb[0].mxu0
    %v600 = vpop.f32.mrb[0].mxu0
    %v601 = vadd.f32 0.0, %v600
    %v602 = vpop.f32.mrb[0].mxu0
    %603 = vmatprep.mubr.bf16.mxu0 0
    %604 = vmatmul.mubr.bf16.gmra.mrb[0].mxu0 %v377
    %v605 = vpop.f32.mrb[0].mxu0
    %v606 = vadd.f32 0.0, %v605
    %v607 = vpop.f32.mrb[0].mxu0
    %v608 = vpop.f32.mrb[0].mxu0
    %v609 = vadd.f32 0.0, %v608
    %v610 = vpop.f32.mrb[0].mxu0
    %611 = vmatprep.mubr.bf16.mxu0 0
    %612 = vmatmul.mubr.bf16.gmra.mrb[0].mxu0 %v378
    %v613 = vpop.f32.mrb[0].mxu0
    %v614 = vadd.f32 0.0, %v613
    %v615 = vpop.f32.mrb[0].mxu0
    %v616 = vpop.f32.mrb[0].mxu0
    %v617 = vadd.f32 0.0, %v616
    %v618 = vpop.f32.mrb[0].mxu0
    %619 = vmatprep.mubr.bf16.mxu0 0
    %620 = vmatmul.mubr.bf16.gmra.mrb[0].mxu0 %v379
    %v621 = vpop.f32.mrb[0].mxu0
    %v622 = vadd.f32 0.0, %v621
    %v623 = vpop.f32.mrb[0].mxu0
    %v624 = vpop.f32.mrb[0].mxu0
    %v625 = vadd.f32 0.0, %v624
    %v626 = vpop.f32.mrb[0].mxu0
    %627 = vmatprep.mubr.bf16.mxu0 0
    %628 = vmatmul.mubr.bf16.gmra.mrb[0].mxu0 %v380
    %v629 = vpop.f32.mrb[0].mxu0
    %v630 = vadd.f32 0.0, %v629
    %v631 = vpop.f32.mrb[0].mxu0
    %v632 = vpop.f32.mrb[0].mxu0
    %v633 = vadd.f32 0.0, %v632
    %v634 = vpop.f32.mrb[0].mxu0
    %635 = vmatprep.mubr.bf16.mxu0 0
    %636 = vmatmul.mubr.bf16.gmra.mrb[0].mxu0 %v381
    %v637 = vpop.f32.mrb[0].mxu0
    %v638 = vadd.f32 0.0, %v637
    %v639 = vpop.f32.mrb[0].mxu0
    %v640 = vpop.f32.mrb[0].mxu0
    %v641 = vadd.f32 0.0, %v640
    %v642 = vpop.f32.mrb[0].mxu0
    %643 = vmatprep.mubr.bf16.mxu0 0
    %644 = vmatmul.mubr.bf16.gmra.mrb[0].mxu0 %v382
    %v645 = vpop.f32.mrb[0].mxu0
    %v646 = vadd.f32 0.0, %v645
    %v647 = vpop.f32.mrb[0].mxu0
    %v648 = vpop.f32.mrb[0].mxu0
    %v649 = vadd.f32 0.0, %v648
    %v650 = vpop.f32.mrb[0].mxu0
    %651 = vmatprep.mubr.bf16.mxu0 0
    %652 = vmatmul.mubr.bf16.gmra.mrb[0].mxu0 %v383
    %v653 = vpop.f32.mrb[0].mxu0
    %v654 = vadd.f32 0.0, %v653
    %v655 = vpop.f32.mrb[0].mxu0
    %v656 = vpop.f32.mrb[0].mxu0
    %v657 = vadd.f32 0.0, %v656
    %v658 = vpop.f32.mrb[0].mxu0
    %659 = vmatprep.mubr.bf16.mxu0 0
    %660 = vmatmul.mubr.bf16.gmra.mrb[0].mxu0 %v384
    %v661 = vpop.f32.mrb[0].mxu0
    %v662 = vadd.f32 0.0, %v661
    %v663 = vpop.f32.mrb[0].mxu0
    %v664 = vpop.f32.mrb[0].mxu0
    %v665 = vadd.f32 0.0, %v664
    %v666 = vpop.f32.mrb[0].mxu0
    %667 = vmatprep.mubr.bf16.mxu0 0
    %668 = vmatmul.mubr.bf16.gmra.mrb[0].mxu0 %v385
    %v669 = vpop.f32.mrb[0].mxu0
    %v670 = vadd.f32 0.0, %v669
    %v671 = vpop.f32.mrb[0].mxu0
    %v672 = vpop.f32.mrb[0].mxu0
    %v673 = vadd.f32 0.0, %v672
    %v674 = vpop.f32.mrb[0].mxu0
    %675 = vmatprep.mubr.bf16.mxu0 0
    %676 = vmatmul.mubr.bf16.gmra.mrb[0].mxu0 %v386
    %v677 = vpop.f32.mrb[0].mxu0
    %v678 = vadd.f32 0.0, %v677
    %v679 = vpop.f32.mrb[0].mxu0
    %v680 = vpop.f32.mrb[0].mxu0
    %v681 = vadd.f32 0.0, %v680
    %v682 = vpop.f32.mrb[0].mxu0
    %683 = vmatprep.mubr.bf16.mxu0 0
    %684 = vmatmul.mubr.bf16.gmra.mrb[0].mxu0 %v387
    %v685 = vpop.f32.mrb[0].mxu0
    %v686 = vadd.f32 0.0, %v685
    %v687 = vpop.f32.mrb[0].mxu0
    %v688 = vpop.f32.mrb[0].mxu0
    %v689 = vadd.f32 0.0, %v688
    %v690 = vpop.f32.mrb[0].mxu0
    %691 = vmatprep.mubr.bf16.mxu0 0
    %692 = vmatmul.mubr.bf16.gmra.mrb[0].mxu0 %v388
    %v693 = vpop.f32.mrb[0].mxu0
    %v694 = vadd.f32 0.0, %v693
    %v695 = vpop.f32.mrb[0].mxu0
    %v696 = vpop.f32.mrb[0].mxu0
    %v697 = vadd.f32 0.0, %v696
    %v698 = vpop.f32.mrb[0].mxu0
    %699 = vmatprep.mubr.bf16.mxu0 0
    %700 = vmatmul.mubr.bf16.gmra.mrb[0].mxu0 %v389
    %v701 = vpop.f32.mrb[0].mxu0
    %v702 = vadd.f32 0.0, %v701
    %v703 = vpop.f32.mrb[0].mxu0
    %v704 = vpop.f32.mrb[0].mxu0
    %v705 = vadd.f32 0.0, %v704
    %v706 = vpop.f32.mrb[0].mxu0
    %707 = vmatprep.mubr.bf16.mxu0 0
    %708 = vmatmul.mubr.bf16.gmra.mrb[0].mxu0 %v390
    %v709 = vpop.f32.mrb[0].mxu0
    %v710 = vadd.f32 0.0, %v709
    %v711 = vpop.f32.mrb[0].mxu0
    %v712 = vpop.f32.mrb[0].mxu0
    %v713 = vadd.f32 0.0, %v712
    %v714 = vpop.f32.mrb[0].mxu0
    %715 = vmatprep.mubr.bf16.mxu0 0
    %716 = vmatmul.mubr.bf16.gmra.mrb[0].mxu0 %v391
    %v717 = vpop.f32.mrb[0].mxu0
    %v718 = vadd.f32 0.0, %v717
    %v719 = vpop.f32.mrb[0].mxu0
    %v720 = vpop.f32.mrb[0].mxu0
    %v721 = vadd.f32 0.0, %v720
    %v722 = vpop.f32.mrb[0].mxu0
    %723 = vmatprep.mubr.bf16.mxu0 0
    %724 = vmatmul.mubr.bf16.gmra.mrb[0].mxu0 %v392
    %v725 = vpop.f32.mrb[0].mxu0
    %v726 = vadd.f32 0.0, %v725
    %v727 = vpop.f32.mrb[0].mxu0
    %v728 = vpop.f32.mrb[0].mxu0
    %v729 = vadd.f32 0.0, %v728
    %v730 = vpop.f32.mrb[0].mxu0
    %731 = vmatprep.mubr.bf16.mxu0 0
    %732 = vmatmul.mubr.bf16.gmra.mrb[0].mxu0 %v393
    %v733 = vpop.f32.mrb[0].mxu0
    %v734 = vadd.f32 0.0, %v733
    %v735 = vpop.f32.mrb[0].mxu0
    %v736 = vpop.f32.mrb[0].mxu0
    %v737 = vadd.f32 0.0, %v736
    %v738 = vpop.f32.mrb[0].mxu0
    %739 = vmatprep.mubr.bf16.mxu0 0
    %740 = vmatmul.mubr.bf16.gmra.mrb[0].mxu0 %v394
    %v741 = vpop.f32.mrb[0].mxu0
    %v742 = vadd.f32 0.0, %v741
    %v743 = vpop.f32.mrb[0].mxu0
    %v744 = vpop.f32.mrb[0].mxu0
    %v745 = vadd.f32 0.0, %v744
    %v746 = vpop.f32.mrb[0].mxu0
    %747 = vdwg.mxu0
    %v748 = vld [vmem:[%s4] sm:$0x1]
    %v749 = vld [vmem:[%s5] sm:$0x1]
    %vm750 = vcmask 523264
    %v751 = vsel %vm750, %v494, 0.0
    %v752 = vsel %vm750, %v497, 0.0
    %v753 = vadd.f32 %v751, %v752
    %v754 = vsel %vm750, %v502, 0.0
    %v755 = vadd.f32 %v753, %v754
    %v756 = vsel %vm750, %v505, 0.0
    %v757 = vadd.f32 %v755, %v756
    %v758 = vsel %vm750, %v510, 0.0
    %v759 = vadd.f32 %v757, %v758
    %v760 = vsel %vm750, %v513, 0.0
    %v761 = vadd.f32 %v759, %v760
    %v762 = vsel %vm750, %v518, 0.0
    %v763 = vadd.f32 %v761, %v762
    %v764 = vsel %vm750, %v521, 0.0
    %v765 = vadd.f32 %v763, %v764
    %v766 = vsel %vm750, %v526, 0.0
    %v767 = vadd.f32 %v765, %v766
    %v768 = vsel %vm750, %v529, 0.0
    %v769 = vadd.f32 %v767, %v768
    %v770 = vsel %vm750, %v534, 0.0
    %v771 = vadd.f32 %v769, %v770
    %v772 = vsel %vm750, %v537, 0.0
    %v773 = vadd.f32 %v771, %v772
    %v774 = vsel %vm750, %v542, 0.0
    %v775 = vadd.f32 %v773, %v774
    %v776 = vsel %vm750, %v545, 0.0
    %v777 = vadd.f32 %v775, %v776
    %v778 = vsel %vm750, %v550, 0.0
    %v779 = vadd.f32 %v777, %v778
    %v780 = vsel %vm750, %v553, 0.0
    %v781 = vadd.f32 %v779, %v780
    %v782 = vsel %vm750, %v558, 0.0
    %v783 = vadd.f32 %v781, %v782
    %v784 = vsel %vm750, %v561, 0.0
    %v785 = vadd.f32 %v783, %v784
    %v786 = vsel %vm750, %v566, 0.0
    %v787 = vadd.f32 %v785, %v786
    %v788 = vsel %vm750, %v569, 0.0
    %v789 = vadd.f32 %v787, %v788
    %v790 = vsel %vm750, %v574, 0.0
    %v791 = vadd.f32 %v789, %v790
    %v792 = vsel %vm750, %v577, 0.0
    %v793 = vadd.f32 %v791, %v792
    %v794 = vsel %vm750, %v582, 0.0
    %v795 = vadd.f32 %v793, %v794
    %v796 = vsel %vm750, %v585, 0.0
    %v797 = vadd.f32 %v795, %v796
    %v798 = vsel %vm750, %v590, 0.0
    %v799 = vadd.f32 %v797, %v798
    %v800 = vsel %vm750, %v593, 0.0
    %v801 = vadd.f32 %v799, %v800
    %v802 = vsel %vm750, %v598, 0.0
    %v803 = vadd.f32 %v801, %v802
    %v804 = vsel %vm750, %v601, 0.0
    %v805 = vadd.f32 %v803, %v804
    %v806 = vsel %vm750, %v606, 0.0
    %v807 = vadd.f32 %v805, %v806
    %v808 = vsel %vm750, %v609, 0.0
    %v809 = vadd.f32 %v807, %v808
    %v810 = vsel %vm750, %v614, 0.0
    %v811 = vadd.f32 %v809, %v810
    %v812 = vsel %vm750, %v617, 0.0
    %v813 = vadd.f32 %v811, %v812
    %v814 = vsel %vm750, %v622, 0.0
    %v815 = vadd.f32 %v813, %v814
    %v816 = vsel %vm750, %v625, 0.0
    %v817 = vadd.f32 %v815, %v816
    %v818 = vsel %vm750, %v630, 0.0
    %v819 = vadd.f32 %v817, %v818
    %v820 = vsel %vm750, %v633, 0.0
    %v821 = vadd.f32 %v819, %v820
    %v822 = vsel %vm750, %v638, 0.0
    %v823 = vadd.f32 %v821, %v822
    %v824 = vsel %vm750, %v641, 0.0
    %v825 = vadd.f32 %v823, %v824
    %v826 = vsel %vm750, %v646, 0.0
    %v827 = vadd.f32 %v825, %v826
    %v828 = vsel %vm750, %v649, 0.0
    %v829 = vadd.f32 %v827, %v828
    %v830 = vsel %vm750, %v654, 0.0
    %v831 = vadd.f32 %v829, %v830
    %v832 = vsel %vm750, %v657, 0.0
    %v833 = vadd.f32 %v831, %v832
    %v834 = vsel %vm750, %v662, 0.0
    %v835 = vadd.f32 %v833, %v834
    %v836 = vsel %vm750, %v665, 0.0
    %v837 = vadd.f32 %v835, %v836
    %v838 = vsel %vm750, %v670, 0.0
    %v839 = vadd.f32 %v837, %v838
    %v840 = vsel %vm750, %v673, 0.0
    %v841 = vadd.f32 %v839, %v840
    %v842 = vsel %vm750, %v678, 0.0
    %v843 = vadd.f32 %v841, %v842
    %v844 = vsel %vm750, %v681, 0.0
    %v845 = vadd.f32 %v843, %v844
    %v846 = vsel %vm750, %v686, 0.0
    %v847 = vadd.f32 %v845, %v846
    %v848 = vsel %vm750, %v689, 0.0
    %v849 = vadd.f32 %v847, %v848
    %v850 = vsel %vm750, %v694, 0.0
    %v851 = vadd.f32 %v849, %v850
    %v852 = vsel %vm750, %v697, 0.0
    %v853 = vadd.f32 %v851, %v852
    %v854 = vsel %vm750, %v702, 0.0
    %v855 = vadd.f32 %v853, %v854
    %v856 = vsel %vm750, %v705, 0.0
    %v857 = vadd.f32 %v855, %v856
    %v858 = vsel %vm750, %v710, 0.0
    %v859 = vadd.f32 %v857, %v858
    %v860 = vsel %vm750, %v713, 0.0
    %v861 = vadd.f32 %v859, %v860
    %v862 = vsel %vm750, %v718, 0.0
    %v863 = vadd.f32 %v861, %v862
    %v864 = vsel %vm750, %v721, 0.0
    %v865 = vadd.f32 %v863, %v864
    %v866 = vsel %vm750, %v726, 0.0
    %v867 = vadd.f32 %v865, %v866
    %v868 = vsel %vm750, %v729, 0.0
    %v869 = vadd.f32 %v867, %v868
    %v870 = vsel %vm750, %v734, 0.0
    %v871 = vadd.f32 %v869, %v870
    %v872 = vsel %vm750, %v737, 0.0
    %v873 = vadd.f32 %v871, %v872
    %v874 = vsel %vm750, %v742, 0.0
    %v875 = vadd.f32 %v873, %v874
    %v876 = vsel %vm750, %v745, 0.0
    %v877 = vadd.f32 %v875, %v876
    %v878 = vrot.slane %v877, 4
    %v879 = vadd.f32 %v877, %v878
    %v880 = vrot.slane %v879, 2
    %v881 = vadd.f32 %v879, %v880
    %v882 = vrot.slane %v881, 1
    %v883 = vadd.f32 %v881, %v882
    %v884 = vmul.f32 %v883, 0.001953125
    %v885 = vsub.f32 %v494, %v884
    %v886 = vsub.f32 %v497, %v884
    %v887 = vsub.f32 %v502, %v884
    %v888 = vsub.f32 %v505, %v884
    %v889 = vsub.f32 %v510, %v884
    %v890 = vsub.f32 %v513, %v884
    %v891 = vsub.f32 %v518, %v884
    %v892 = vsub.f32 %v521, %v884
    %v893 = vsub.f32 %v526, %v884
    %v894 = vsub.f32 %v529, %v884
    %v895 = vsub.f32 %v534, %v884
    %v896 = vsub.f32 %v537, %v884
    %v897 = vsub.f32 %v542, %v884
    %v898 = vsub.f32 %v545, %v884
    %v899 = vsub.f32 %v550, %v884
    %v900 = vsub.f32 %v553, %v884
    %v901 = vsub.f32 %v558, %v884
    %v902 = vsub.f32 %v561, %v884
    %v903 = vsub.f32 %v566, %v884
    %v904 = vsub.f32 %v569, %v884
    %v905 = vsub.f32 %v574, %v884
    %v906 = vsub.f32 %v577, %v884
    %v907 = vsub.f32 %v582, %v884
    %v908 = vsub.f32 %v585, %v884
    %v909 = vsub.f32 %v590, %v884
    %v910 = vsub.f32 %v593, %v884
    %v911 = vsub.f32 %v598, %v884
    %v912 = vsub.f32 %v601, %v884
    %v913 = vsub.f32 %v606, %v884
    %v914 = vsub.f32 %v609, %v884
    %v915 = vsub.f32 %v614, %v884
    %v916 = vsub.f32 %v617, %v884
    %v917 = vsub.f32 %v622, %v884
    %v918 = vsub.f32 %v625, %v884
    %v919 = vsub.f32 %v630, %v884
    %v920 = vsub.f32 %v633, %v884
    %v921 = vsub.f32 %v638, %v884
    %v922 = vsub.f32 %v641, %v884
    %v923 = vsub.f32 %v646, %v884
    %v924 = vsub.f32 %v649, %v884
    %v925 = vsub.f32 %v654, %v884
    %v926 = vsub.f32 %v657, %v884
    %v927 = vsub.f32 %v662, %v884
    %v928 = vsub.f32 %v665, %v884
    %v929 = vsub.f32 %v670, %v884
    %v930 = vsub.f32 %v673, %v884
    %v931 = vsub.f32 %v678, %v884
    %v932 = vsub.f32 %v681, %v884
    %v933 = vsub.f32 %v686, %v884
    %v934 = vsub.f32 %v689, %v884
    %v935 = vsub.f32 %v694, %v884
    %v936 = vsub.f32 %v697, %v884
    %v937 = vsub.f32 %v702, %v884
    %v938 = vsub.f32 %v705, %v884
    %v939 = vsub.f32 %v710, %v884
    %v940 = vsub.f32 %v713, %v884
    %v941 = vsub.f32 %v718, %v884
    %v942 = vsub.f32 %v721, %v884
    %v943 = vsub.f32 %v726, %v884
    %v944 = vsub.f32 %v729, %v884
    %v945 = vsub.f32 %v734, %v884
    %v946 = vsub.f32 %v737, %v884
    %v947 = vsub.f32 %v742, %v884
    %v948 = vsub.f32 %v745, %v884
    %v949 = vmul.f32 %v885, %v885
    %v950 = vmul.f32 %v886, %v886
    %v951 = vmul.f32 %v887, %v887
    %v952 = vmul.f32 %v888, %v888
    %v953 = vmul.f32 %v889, %v889
    %v954 = vmul.f32 %v890, %v890
    %v955 = vmul.f32 %v891, %v891
    %v956 = vmul.f32 %v892, %v892
    %v957 = vmul.f32 %v893, %v893
    %v958 = vmul.f32 %v894, %v894
    %v959 = vmul.f32 %v895, %v895
    %v960 = vmul.f32 %v896, %v896
    %v961 = vmul.f32 %v897, %v897
    %v962 = vmul.f32 %v898, %v898
    %v963 = vmul.f32 %v899, %v899
    %v964 = vmul.f32 %v900, %v900
    %v965 = vmul.f32 %v901, %v901
    %v966 = vmul.f32 %v902, %v902
    %v967 = vmul.f32 %v903, %v903
    %v968 = vmul.f32 %v904, %v904
    %v969 = vmul.f32 %v905, %v905
    %v970 = vmul.f32 %v906, %v906
    %v971 = vmul.f32 %v907, %v907
    %v972 = vmul.f32 %v908, %v908
    %v973 = vmul.f32 %v909, %v909
    %v974 = vmul.f32 %v910, %v910
    %v975 = vmul.f32 %v911, %v911
    %v976 = vmul.f32 %v912, %v912
    %v977 = vmul.f32 %v913, %v913
    %v978 = vmul.f32 %v914, %v914
    %v979 = vmul.f32 %v915, %v915
    %v980 = vmul.f32 %v916, %v916
    %v981 = vmul.f32 %v917, %v917
    %v982 = vmul.f32 %v918, %v918
    %v983 = vmul.f32 %v919, %v919
    %v984 = vmul.f32 %v920, %v920
    %v985 = vmul.f32 %v921, %v921
    %v986 = vmul.f32 %v922, %v922
    %v987 = vmul.f32 %v923, %v923
    %v988 = vmul.f32 %v924, %v924
    %v989 = vmul.f32 %v925, %v925
    %v990 = vmul.f32 %v926, %v926
    %v991 = vmul.f32 %v927, %v927
    %v992 = vmul.f32 %v928, %v928
    %v993 = vmul.f32 %v929, %v929
    %v994 = vmul.f32 %v930, %v930
    %v995 = vmul.f32 %v931, %v931
    %v996 = vmul.f32 %v932, %v932
    %v997 = vmul.f32 %v933, %v933
    %v998 = vmul.f32 %v934, %v934
    %v999 = vmul.f32 %v935, %v935
    %v1000 = vmul.f32 %v936, %v936
    %v1001 = vmul.f32 %v937, %v937
    %v1002 = vmul.f32 %v938, %v938
    %v1003 = vmul.f32 %v939, %v939
    %v1004 = vmul.f32 %v940, %v940
    %v1005 = vmul.f32 %v941, %v941
    %v1006 = vmul.f32 %v942, %v942
    %v1007 = vmul.f32 %v943, %v943
    %v1008 = vmul.f32 %v944, %v944
    %v1009 = vmul.f32 %v945, %v945
    %v1010 = vmul.f32 %v946, %v946
    %v1011 = vmul.f32 %v947, %v947
    %v1012 = vmul.f32 %v948, %v948
    %v1013 = vsel %vm750, %v949, 0.0
    %v1014 = vsel %vm750, %v950, 0.0
    %v1015 = vadd.f32 %v1013, %v1014
    %v1016 = vsel %vm750, %v951, 0.0
    %v1017 = vadd.f32 %v1015, %v1016
    %v1018 = vsel %vm750, %v952, 0.0
    %v1019 = vadd.f32 %v1017, %v1018
    %v1020 = vsel %vm750, %v953, 0.0
    %v1021 = vadd.f32 %v1019, %v1020
    %v1022 = vsel %vm750, %v954, 0.0
    %v1023 = vadd.f32 %v1021, %v1022
    %v1024 = vsel %vm750, %v955, 0.0
    %v1025 = vadd.f32 %v1023, %v1024
    %v1026 = vsel %vm750, %v956, 0.0
    %v1027 = vadd.f32 %v1025, %v1026
    %v1028 = vsel %vm750, %v957, 0.0
    %v1029 = vadd.f32 %v1027, %v1028
    %v1030 = vsel %vm750, %v958, 0.0
    %v1031 = vadd.f32 %v1029, %v1030
    %v1032 = vsel %vm750, %v959, 0.0
    %v1033 = vadd.f32 %v1031, %v1032
    %v1034 = vsel %vm750, %v960, 0.0
    %v1035 = vadd.f32 %v1033, %v1034
    %v1036 = vsel %vm750, %v961, 0.0
    %v1037 = vadd.f32 %v1035, %v1036
    %v1038 = vsel %vm750, %v962, 0.0
    %v1039 = vadd.f32 %v1037, %v1038
    %v1040 = vsel %vm750, %v963, 0.0
    %v1041 = vadd.f32 %v1039, %v1040
    %v1042 = vsel %vm750, %v964, 0.0
    %v1043 = vadd.f32 %v1041, %v1042
    %v1044 = vsel %vm750, %v965, 0.0
    %v1045 = vadd.f32 %v1043, %v1044
    %v1046 = vsel %vm750, %v966, 0.0
    %v1047 = vadd.f32 %v1045, %v1046
    %v1048 = vsel %vm750, %v967, 0.0
    %v1049 = vadd.f32 %v1047, %v1048
    %v1050 = vsel %vm750, %v968, 0.0
    %v1051 = vadd.f32 %v1049, %v1050
    %v1052 = vsel %vm750, %v969, 0.0
    %v1053 = vadd.f32 %v1051, %v1052
    %v1054 = vsel %vm750, %v970, 0.0
    %v1055 = vadd.f32 %v1053, %v1054
    %v1056 = vsel %vm750, %v971, 0.0
    %v1057 = vadd.f32 %v1055, %v1056
    %v1058 = vsel %vm750, %v972, 0.0
    %v1059 = vadd.f32 %v1057, %v1058
    %v1060 = vsel %vm750, %v973, 0.0
    %v1061 = vadd.f32 %v1059, %v1060
    %v1062 = vsel %vm750, %v974, 0.0
    %v1063 = vadd.f32 %v1061, %v1062
    %v1064 = vsel %vm750, %v975, 0.0
    %v1065 = vadd.f32 %v1063, %v1064
    %v1066 = vsel %vm750, %v976, 0.0
    %v1067 = vadd.f32 %v1065, %v1066
    %v1068 = vsel %vm750, %v977, 0.0
    %v1069 = vadd.f32 %v1067, %v1068
    %v1070 = vsel %vm750, %v978, 0.0
    %v1071 = vadd.f32 %v1069, %v1070
    %v1072 = vsel %vm750, %v979, 0.0
    %v1073 = vadd.f32 %v1071, %v1072
    %v1074 = vsel %vm750, %v980, 0.0
    %v1075 = vadd.f32 %v1073, %v1074
    %v1076 = vsel %vm750, %v981, 0.0
    %v1077 = vadd.f32 %v1075, %v1076
    %v1078 = vsel %vm750, %v982, 0.0
    %v1079 = vadd.f32 %v1077, %v1078
    %v1080 = vsel %vm750, %v983, 0.0
    %v1081 = vadd.f32 %v1079, %v1080
    %v1082 = vsel %vm750, %v984, 0.0
    %v1083 = vadd.f32 %v1081, %v1082
    %v1084 = vsel %vm750, %v985, 0.0
    %v1085 = vadd.f32 %v1083, %v1084
    %v1086 = vsel %vm750, %v986, 0.0
    %v1087 = vadd.f32 %v1085, %v1086
    %v1088 = vsel %vm750, %v987, 0.0
    %v1089 = vadd.f32 %v1087, %v1088
    %v1090 = vsel %vm750, %v988, 0.0
    %v1091 = vadd.f32 %v1089, %v1090
    %v1092 = vsel %vm750, %v989, 0.0
    %v1093 = vadd.f32 %v1091, %v1092
    %v1094 = vsel %vm750, %v990, 0.0
    %v1095 = vadd.f32 %v1093, %v1094
    %v1096 = vsel %vm750, %v991, 0.0
    %v1097 = vadd.f32 %v1095, %v1096
    %v1098 = vsel %vm750, %v992, 0.0
    %v1099 = vadd.f32 %v1097, %v1098
    %v1100 = vsel %vm750, %v993, 0.0
    %v1101 = vadd.f32 %v1099, %v1100
    %v1102 = vsel %vm750, %v994, 0.0
    %v1103 = vadd.f32 %v1101, %v1102
    %v1104 = vsel %vm750, %v995, 0.0
    %v1105 = vadd.f32 %v1103, %v1104
    %v1106 = vsel %vm750, %v996, 0.0
    %v1107 = vadd.f32 %v1105, %v1106
    %v1108 = vsel %vm750, %v997, 0.0
    %v1109 = vadd.f32 %v1107, %v1108
    %v1110 = vsel %vm750, %v998, 0.0
    %v1111 = vadd.f32 %v1109, %v1110
    %v1112 = vsel %vm750, %v999, 0.0
    %v1113 = vadd.f32 %v1111, %v1112
    %v1114 = vsel %vm750, %v1000, 0.0
    %v1115 = vadd.f32 %v1113, %v1114
    %v1116 = vsel %vm750, %v1001, 0.0
    %v1117 = vadd.f32 %v1115, %v1116
    %v1118 = vsel %vm750, %v1002, 0.0
    %v1119 = vadd.f32 %v1117, %v1118
    %v1120 = vsel %vm750, %v1003, 0.0
    %v1121 = vadd.f32 %v1119, %v1120
    %v1122 = vsel %vm750, %v1004, 0.0
    %v1123 = vadd.f32 %v1121, %v1122
    %v1124 = vsel %vm750, %v1005, 0.0
    %v1125 = vadd.f32 %v1123, %v1124
    %v1126 = vsel %vm750, %v1006, 0.0
    %v1127 = vadd.f32 %v1125, %v1126
    %v1128 = vsel %vm750, %v1007, 0.0
    %v1129 = vadd.f32 %v1127, %v1128
    %v1130 = vsel %vm750, %v1008, 0.0
    %v1131 = vadd.f32 %v1129, %v1130
    %v1132 = vsel %vm750, %v1009, 0.0
    %v1133 = vadd.f32 %v1131, %v1132
    %v1134 = vsel %vm750, %v1010, 0.0
    %v1135 = vadd.f32 %v1133, %v1134
    %v1136 = vsel %vm750, %v1011, 0.0
    %v1137 = vadd.f32 %v1135, %v1136
    %v1138 = vsel %vm750, %v1012, 0.0
    %v1139 = vadd.f32 %v1137, %v1138
    %v1140 = vrot.slane %v1139, 4
    %v1141 = vadd.f32 %v1139, %v1140
    %v1142 = vrot.slane %v1141, 2
    %v1143 = vadd.f32 %v1141, %v1142
    %v1144 = vrot.slane %v1143, 1
    %v1145 = vadd.f32 %v1143, %v1144
    %v1146 = vmul.f32 %v1145, 0.001953125
    %v1147 = vadd.f32 %v1146, 1e-05
    %v1148 = vrsqrt.pop %v1147
    %v1149 = vmul.f32 %v748, %v1148
    %v1151 = vlaneseq
    %v1152 = vshrl.u32 %v1151, 7
    %v1153 = vsub.s32 0, %v1152
    %v1154 = vrot.slane %v1149, %v1153
    %v1156 = vmul.f32 %v885, %v1154
    %v1157 = vmul.f32 %v886, %v1154
    %v1158 = vmul.f32 %v887, %v1154
    %v1159 = vmul.f32 %v888, %v1154
    %v1160 = vmul.f32 %v889, %v1154
    %v1161 = vmul.f32 %v890, %v1154
    %v1162 = vmul.f32 %v891, %v1154
    %v1163 = vmul.f32 %v892, %v1154
    %v1164 = vmul.f32 %v893, %v1154
    %v1165 = vmul.f32 %v894, %v1154
    %v1166 = vmul.f32 %v895, %v1154
    %v1167 = vmul.f32 %v896, %v1154
    %v1168 = vmul.f32 %v897, %v1154
    %v1169 = vmul.f32 %v898, %v1154
    %v1170 = vmul.f32 %v899, %v1154
    %v1171 = vmul.f32 %v900, %v1154
    %v1172 = vmul.f32 %v901, %v1154
    %v1173 = vmul.f32 %v902, %v1154
    %v1174 = vmul.f32 %v903, %v1154
    %v1175 = vmul.f32 %v904, %v1154
    %v1176 = vmul.f32 %v905, %v1154
    %v1177 = vmul.f32 %v906, %v1154
    %v1178 = vmul.f32 %v907, %v1154
    %v1179 = vmul.f32 %v908, %v1154
    %v1180 = vmul.f32 %v909, %v1154
    %v1181 = vmul.f32 %v910, %v1154
    %v1182 = vmul.f32 %v911, %v1154
    %v1183 = vmul.f32 %v912, %v1154
    %v1184 = vmul.f32 %v913, %v1154
    %v1185 = vmul.f32 %v914, %v1154
    %v1186 = vmul.f32 %v915, %v1154
    %v1187 = vmul.f32 %v916, %v1154
    %v1188 = vmul.f32 %v917, %v1154
    %v1189 = vmul.f32 %v918, %v1154
    %v1190 = vmul.f32 %v919, %v1154
    %v1191 = vmul.f32 %v920, %v1154
    %v1192 = vmul.f32 %v921, %v1154
    %v1193 = vmul.f32 %v922, %v1154
    %v1194 = vmul.f32 %v923, %v1154
    %v1195 = vmul.f32 %v924, %v1154
    %v1196 = vmul.f32 %v925, %v1154
    %v1197 = vmul.f32 %v926, %v1154
    %v1198 = vmul.f32 %v927, %v1154
    %v1199 = vmul.f32 %v928, %v1154
    %v1200 = vmul.f32 %v929, %v1154
    %v1201 = vmul.f32 %v930, %v1154
    %v1202 = vmul.f32 %v931, %v1154
    %v1203 = vmul.f32 %v932, %v1154
    %v1204 = vmul.f32 %v933, %v1154
    %v1205 = vmul.f32 %v934, %v1154
    %v1206 = vmul.f32 %v935, %v1154
    %v1207 = vmul.f32 %v936, %v1154
    %v1208 = vmul.f32 %v937, %v1154
    %v1209 = vmul.f32 %v938, %v1154
    %v1210 = vmul.f32 %v939, %v1154
    %v1211 = vmul.f32 %v940, %v1154
    %v1212 = vmul.f32 %v941, %v1154
    %v1213 = vmul.f32 %v942, %v1154
    %v1214 = vmul.f32 %v943, %v1154
    %v1215 = vmul.f32 %v944, %v1154
    %v1216 = vmul.f32 %v945, %v1154
    %v1217 = vmul.f32 %v946, %v1154
    %v1218 = vmul.f32 %v947, %v1154
    %v1219 = vmul.f32 %v948, %v1154
    %v1221 = vlaneseq
    %v1222 = vshrl.u32 %v1221, 7
    %v1223 = vsub.s32 0, %v1222
    %v1224 = vrot.slane %v749, %v1223
    %v1226 = vadd.f32 %v1156, %v1224
    %v1227 = vadd.f32 %v1157, %v1224
    %v1228 = vadd.f32 %v1158, %v1224
    %v1229 = vadd.f32 %v1159, %v1224
    %v1230 = vadd.f32 %v1160, %v1224
    %v1231 = vadd.f32 %v1161, %v1224
    %v1232 = vadd.f32 %v1162, %v1224
    %v1233 = vadd.f32 %v1163, %v1224
    %v1234 = vadd.f32 %v1164, %v1224
    %v1235 = vadd.f32 %v1165, %v1224
    %v1236 = vadd.f32 %v1166, %v1224
    %v1237 = vadd.f32 %v1167, %v1224
    %v1238 = vadd.f32 %v1168, %v1224
    %v1239 = vadd.f32 %v1169, %v1224
    %v1240 = vadd.f32 %v1170, %v1224
    %v1241 = vadd.f32 %v1171, %v1224
    %v1242 = vadd.f32 %v1172, %v1224
    %v1243 = vadd.f32 %v1173, %v1224
    %v1244 = vadd.f32 %v1174, %v1224
    %v1245 = vadd.f32 %v1175, %v1224
    %v1246 = vadd.f32 %v1176, %v1224
    %v1247 = vadd.f32 %v1177, %v1224
    %v1248 = vadd.f32 %v1178, %v1224
    %v1249 = vadd.f32 %v1179, %v1224
    %v1250 = vadd.f32 %v1180, %v1224
    %v1251 = vadd.f32 %v1181, %v1224
    %v1252 = vadd.f32 %v1182, %v1224
    %v1253 = vadd.f32 %v1183, %v1224
    %v1254 = vadd.f32 %v1184, %v1224
    %v1255 = vadd.f32 %v1185, %v1224
    %v1256 = vadd.f32 %v1186, %v1224
    %v1257 = vadd.f32 %v1187, %v1224
    %v1258 = vadd.f32 %v1188, %v1224
    %v1259 = vadd.f32 %v1189, %v1224
    %v1260 = vadd.f32 %v1190, %v1224
    %v1261 = vadd.f32 %v1191, %v1224
    %v1262 = vadd.f32 %v1192, %v1224
    %v1263 = vadd.f32 %v1193, %v1224
    %v1264 = vadd.f32 %v1194, %v1224
    %v1265 = vadd.f32 %v1195, %v1224
    %v1266 = vadd.f32 %v1196, %v1224
    %v1267 = vadd.f32 %v1197, %v1224
    %v1268 = vadd.f32 %v1198, %v1224
    %v1269 = vadd.f32 %v1199, %v1224
    %v1270 = vadd.f32 %v1200, %v1224
    %v1271 = vadd.f32 %v1201, %v1224
    %v1272 = vadd.f32 %v1202, %v1224
    %v1273 = vadd.f32 %v1203, %v1224
    %v1274 = vadd.f32 %v1204, %v1224
    %v1275 = vadd.f32 %v1205, %v1224
    %v1276 = vadd.f32 %v1206, %v1224
    %v1277 = vadd.f32 %v1207, %v1224
    %v1278 = vadd.f32 %v1208, %v1224
    %v1279 = vadd.f32 %v1209, %v1224
    %v1280 = vadd.f32 %v1210, %v1224
    %v1281 = vadd.f32 %v1211, %v1224
    %v1282 = vadd.f32 %v1212, %v1224
    %v1283 = vadd.f32 %v1213, %v1224
    %v1284 = vadd.f32 %v1214, %v1224
    %v1285 = vadd.f32 %v1215, %v1224
    %v1286 = vadd.f32 %v1216, %v1224
    %v1287 = vadd.f32 %v1217, %v1224
    %v1288 = vadd.f32 %v1218, %v1224
    %v1289 = vadd.f32 %v1219, %v1224
    %vm1290 = vcmp.gt.f32.partialorder %v1226, 0.0
    %vm1291 = vcmp.gt.f32.partialorder %v1227, 0.0
    %vm1292 = vcmp.gt.f32.partialorder %v1228, 0.0
    %vm1293 = vcmp.gt.f32.partialorder %v1229, 0.0
    %vm1294 = vcmp.gt.f32.partialorder %v1230, 0.0
    %vm1295 = vcmp.gt.f32.partialorder %v1231, 0.0
    %vm1296 = vcmp.gt.f32.partialorder %v1232, 0.0
    %vm1297 = vcmp.gt.f32.partialorder %v1233, 0.0
    %vm1298 = vcmp.gt.f32.partialorder %v1234, 0.0
    %vm1299 = vcmp.gt.f32.partialorder %v1235, 0.0
    %vm1300 = vcmp.gt.f32.partialorder %v1236, 0.0
    %vm1301 = vcmp.gt.f32.partialorder %v1237, 0.0
    %vm1302 = vcmp.gt.f32.partialorder %v1238, 0.0
    %vm1303 = vcmp.gt.f32.partialorder %v1239, 0.0
    %vm1304 = vcmp.gt.f32.partialorder %v1240, 0.0
    %vm1305 = vcmp.gt.f32.partialorder %v1241, 0.0
    %vm1306 = vcmp.gt.f32.partialorder %v1242, 0.0
    %vm1307 = vcmp.gt.f32.partialorder %v1243, 0.0
    %vm1308 = vcmp.gt.f32.partialorder %v1244, 0.0
    %vm1309 = vcmp.gt.f32.partialorder %v1245, 0.0
    %vm1310 = vcmp.gt.f32.partialorder %v1246, 0.0
    %vm1311 = vcmp.gt.f32.partialorder %v1247, 0.0
    %vm1312 = vcmp.gt.f32.partialorder %v1248, 0.0
    %vm1313 = vcmp.gt.f32.partialorder %v1249, 0.0
    %vm1314 = vcmp.gt.f32.partialorder %v1250, 0.0
    %vm1315 = vcmp.gt.f32.partialorder %v1251, 0.0
    %vm1316 = vcmp.gt.f32.partialorder %v1252, 0.0
    %vm1317 = vcmp.gt.f32.partialorder %v1253, 0.0
    %vm1318 = vcmp.gt.f32.partialorder %v1254, 0.0
    %vm1319 = vcmp.gt.f32.partialorder %v1255, 0.0
    %vm1320 = vcmp.gt.f32.partialorder %v1256, 0.0
    %vm1321 = vcmp.gt.f32.partialorder %v1257, 0.0
    %vm1322 = vcmp.gt.f32.partialorder %v1258, 0.0
    %vm1323 = vcmp.gt.f32.partialorder %v1259, 0.0
    %vm1324 = vcmp.gt.f32.partialorder %v1260, 0.0
    %vm1325 = vcmp.gt.f32.partialorder %v1261, 0.0
    %vm1326 = vcmp.gt.f32.partialorder %v1262, 0.0
    %vm1327 = vcmp.gt.f32.partialorder %v1263, 0.0
    %vm1328 = vcmp.gt.f32.partialorder %v1264, 0.0
    %vm1329 = vcmp.gt.f32.partialorder %v1265, 0.0
    %vm1330 = vcmp.gt.f32.partialorder %v1266, 0.0
    %vm1331 = vcmp.gt.f32.partialorder %v1267, 0.0
    %vm1332 = vcmp.gt.f32.partialorder %v1268, 0.0
    %vm1333 = vcmp.gt.f32.partialorder %v1269, 0.0
    %vm1334 = vcmp.gt.f32.partialorder %v1270, 0.0
    %vm1335 = vcmp.gt.f32.partialorder %v1271, 0.0
    %vm1336 = vcmp.gt.f32.partialorder %v1272, 0.0
    %vm1337 = vcmp.gt.f32.partialorder %v1273, 0.0
    %vm1338 = vcmp.gt.f32.partialorder %v1274, 0.0
    %vm1339 = vcmp.gt.f32.partialorder %v1275, 0.0
    %vm1340 = vcmp.gt.f32.partialorder %v1276, 0.0
    %vm1341 = vcmp.gt.f32.partialorder %v1277, 0.0
    %vm1342 = vcmp.gt.f32.partialorder %v1278, 0.0
    %vm1343 = vcmp.gt.f32.partialorder %v1279, 0.0
    %vm1344 = vcmp.gt.f32.partialorder %v1280, 0.0
    %vm1345 = vcmp.gt.f32.partialorder %v1281, 0.0
    %vm1346 = vcmp.gt.f32.partialorder %v1282, 0.0
    %vm1347 = vcmp.gt.f32.partialorder %v1283, 0.0
    %vm1348 = vcmp.gt.f32.partialorder %v1284, 0.0
    %vm1349 = vcmp.gt.f32.partialorder %v1285, 0.0
    %vm1350 = vcmp.gt.f32.partialorder %v1286, 0.0
    %vm1351 = vcmp.gt.f32.partialorder %v1287, 0.0
    %vm1352 = vcmp.gt.f32.partialorder %v1288, 0.0
    %vm1353 = vcmp.gt.f32.partialorder %v1289, 0.0
    %v1354 = vmul.f32 %v1226, 0.2
    %v1355 = vmul.f32 %v1227, 0.2
    %v1356 = vmul.f32 %v1228, 0.2
    %v1357 = vmul.f32 %v1229, 0.2
    %v1358 = vmul.f32 %v1230, 0.2
    %v1359 = vmul.f32 %v1231, 0.2
    %v1360 = vmul.f32 %v1232, 0.2
    %v1361 = vmul.f32 %v1233, 0.2
    %v1362 = vmul.f32 %v1234, 0.2
    %v1363 = vmul.f32 %v1235, 0.2
    %v1364 = vmul.f32 %v1236, 0.2
    %v1365 = vmul.f32 %v1237, 0.2
    %v1366 = vmul.f32 %v1238, 0.2
    %v1367 = vmul.f32 %v1239, 0.2
    %v1368 = vmul.f32 %v1240, 0.2
    %v1369 = vmul.f32 %v1241, 0.2
    %v1370 = vmul.f32 %v1242, 0.2
    %v1371 = vmul.f32 %v1243, 0.2
    %v1372 = vmul.f32 %v1244, 0.2
    %v1373 = vmul.f32 %v1245, 0.2
    %v1374 = vmul.f32 %v1246, 0.2
    %v1375 = vmul.f32 %v1247, 0.2
    %v1376 = vmul.f32 %v1248, 0.2
    %v1377 = vmul.f32 %v1249, 0.2
    %v1378 = vmul.f32 %v1250, 0.2
    %v1379 = vmul.f32 %v1251, 0.2
    %v1380 = vmul.f32 %v1252, 0.2
    %v1381 = vmul.f32 %v1253, 0.2
    %v1382 = vmul.f32 %v1254, 0.2
    %v1383 = vmul.f32 %v1255, 0.2
    %v1384 = vmul.f32 %v1256, 0.2
    %v1385 = vmul.f32 %v1257, 0.2
    %v1386 = vmul.f32 %v1258, 0.2
    %v1387 = vmul.f32 %v1259, 0.2
    %v1388 = vmul.f32 %v1260, 0.2
    %v1389 = vmul.f32 %v1261, 0.2
    %v1390 = vmul.f32 %v1262, 0.2
    %v1391 = vmul.f32 %v1263, 0.2
    %v1392 = vmul.f32 %v1264, 0.2
    %v1393 = vmul.f32 %v1265, 0.2
    %v1394 = vmul.f32 %v1266, 0.2
    %v1395 = vmul.f32 %v1267, 0.2
    %v1396 = vmul.f32 %v1268, 0.2
    %v1397 = vmul.f32 %v1269, 0.2
    %v1398 = vmul.f32 %v1270, 0.2
    %v1399 = vmul.f32 %v1271, 0.2
    %v1400 = vmul.f32 %v1272, 0.2
    %v1401 = vmul.f32 %v1273, 0.2
    %v1402 = vmul.f32 %v1274, 0.2
    %v1403 = vmul.f32 %v1275, 0.2
    %v1404 = vmul.f32 %v1276, 0.2
    %v1405 = vmul.f32 %v1277, 0.2
    %v1406 = vmul.f32 %v1278, 0.2
    %v1407 = vmul.f32 %v1279, 0.2
    %v1408 = vmul.f32 %v1280, 0.2
    %v1409 = vmul.f32 %v1281, 0.2
    %v1410 = vmul.f32 %v1282, 0.2
    %v1411 = vmul.f32 %v1283, 0.2
    %v1412 = vmul.f32 %v1284, 0.2
    %v1413 = vmul.f32 %v1285, 0.2
    %v1414 = vmul.f32 %v1286, 0.2
    %v1415 = vmul.f32 %v1287, 0.2
    %v1416 = vmul.f32 %v1288, 0.2
    %v1417 = vmul.f32 %v1289, 0.2
    %v1418 = vsel %vm1290, %v1226, %v1354
    %v1419 = vsel %vm1291, %v1227, %v1355
    %v1420 = vsel %vm1292, %v1228, %v1356
    %v1421 = vsel %vm1293, %v1229, %v1357
    %v1422 = vsel %vm1294, %v1230, %v1358
    %v1423 = vsel %vm1295, %v1231, %v1359
    %v1424 = vsel %vm1296, %v1232, %v1360
    %v1425 = vsel %vm1297, %v1233, %v1361
    %v1426 = vsel %vm1298, %v1234, %v1362
    %v1427 = vsel %vm1299, %v1235, %v1363
    %v1428 = vsel %vm1300, %v1236, %v1364
    %v1429 = vsel %vm1301, %v1237, %v1365
    %v1430 = vsel %vm1302, %v1238, %v1366
    %v1431 = vsel %vm1303, %v1239, %v1367
    %v1432 = vsel %vm1304, %v1240, %v1368
    %v1433 = vsel %vm1305, %v1241, %v1369
    %v1434 = vsel %vm1306, %v1242, %v1370
    %v1435 = vsel %vm1307, %v1243, %v1371
    %v1436 = vsel %vm1308, %v1244, %v1372
    %v1437 = vsel %vm1309, %v1245, %v1373
    %v1438 = vsel %vm1310, %v1246, %v1374
    %v1439 = vsel %vm1311, %v1247, %v1375
    %v1440 = vsel %vm1312, %v1248, %v1376
    %v1441 = vsel %vm1313, %v1249, %v1377
    %v1442 = vsel %vm1314, %v1250, %v1378
    %v1443 = vsel %vm1315, %v1251, %v1379
    %v1444 = vsel %vm1316, %v1252, %v1380
    %v1445 = vsel %vm1317, %v1253, %v1381
    %v1446 = vsel %vm1318, %v1254, %v1382
    %v1447 = vsel %vm1319, %v1255, %v1383
    %v1448 = vsel %vm1320, %v1256, %v1384
    %v1449 = vsel %vm1321, %v1257, %v1385
    %v1450 = vsel %vm1322, %v1258, %v1386
    %v1451 = vsel %vm1323, %v1259, %v1387
    %v1452 = vsel %vm1324, %v1260, %v1388
    %v1453 = vsel %vm1325, %v1261, %v1389
    %v1454 = vsel %vm1326, %v1262, %v1390
    %v1455 = vsel %vm1327, %v1263, %v1391
    %v1456 = vsel %vm1328, %v1264, %v1392
    %v1457 = vsel %vm1329, %v1265, %v1393
    %v1458 = vsel %vm1330, %v1266, %v1394
    %v1459 = vsel %vm1331, %v1267, %v1395
    %v1460 = vsel %vm1332, %v1268, %v1396
    %v1461 = vsel %vm1333, %v1269, %v1397
    %v1462 = vsel %vm1334, %v1270, %v1398
    %v1463 = vsel %vm1335, %v1271, %v1399
    %v1464 = vsel %vm1336, %v1272, %v1400
    %v1465 = vsel %vm1337, %v1273, %v1401
    %v1466 = vsel %vm1338, %v1274, %v1402
    %v1467 = vsel %vm1339, %v1275, %v1403
    %v1468 = vsel %vm1340, %v1276, %v1404
    %v1469 = vsel %vm1341, %v1277, %v1405
    %v1470 = vsel %vm1342, %v1278, %v1406
    %v1471 = vsel %vm1343, %v1279, %v1407
    %v1472 = vsel %vm1344, %v1280, %v1408
    %v1473 = vsel %vm1345, %v1281, %v1409
    %v1474 = vsel %vm1346, %v1282, %v1410
    %v1475 = vsel %vm1347, %v1283, %v1411
    %v1476 = vsel %vm1348, %v1284, %v1412
    %v1477 = vsel %vm1349, %v1285, %v1413
    %v1478 = vsel %vm1350, %v1286, %v1414
    %v1479 = vsel %vm1351, %v1287, %v1415
    %v1480 = vsel %vm1352, %v1288, %v1416
    %v1481 = vsel %vm1353, %v1289, %v1417
    %1482 = vst.msk [vmem:[%s10] sm:$0xff] %vm750, %v1418
    %1483 = vst.msk [vmem:[%s10 + $0x8] sm:$0xff] %vm750, %v1419
    %1484 = vst.msk [vmem:[%s10 + $0x10] sm:$0xff] %vm750, %v1420
    %1485 = vst.msk [vmem:[%s10 + $0x18] sm:$0xff] %vm750, %v1421
    %1486 = vst.msk [vmem:[%s10 + $0x20] sm:$0xff] %vm750, %v1422
    %1487 = vst.msk [vmem:[%s10 + $0x28] sm:$0xff] %vm750, %v1423
    %1488 = vst.msk [vmem:[%s10 + $0x30] sm:$0xff] %vm750, %v1424
    %1489 = vst.msk [vmem:[%s10 + $0x38] sm:$0xff] %vm750, %v1425
    %1490 = vst.msk [vmem:[%s10 + $0x40] sm:$0xff] %vm750, %v1426
    %1491 = vst.msk [vmem:[%s10 + $0x48] sm:$0xff] %vm750, %v1427
    %1492 = vst.msk [vmem:[%s10 + $0x50] sm:$0xff] %vm750, %v1428
    %1493 = vst.msk [vmem:[%s10 + $0x58] sm:$0xff] %vm750, %v1429
    %1494 = vst.msk [vmem:[%s10 + $0x60] sm:$0xff] %vm750, %v1430
    %1495 = vst.msk [vmem:[%s10 + $0x68] sm:$0xff] %vm750, %v1431
    %1496 = vst.msk [vmem:[%s10 + $0x70] sm:$0xff] %vm750, %v1432
    %1497 = vst.msk [vmem:[%s10 + $0x78] sm:$0xff] %vm750, %v1433
    %s1498 = scalar_lea.vmem [#allocation3], 128
    %1499 = vst.msk [vmem:[%s1498] sm:$0xff] %vm750, 0.0
    %vm1500 = vcmask 516096
    %1501 = vst.msk [vmem:[%s1498 + $0x8] sm:$0x1] %vm1500, 0.0
    %1502 = vst.msk [vmem:[%s1498 + $0x90] sm:$0xff] %vm750, 0.0
    %1503 = vst.msk [vmem:[%s1498 + $0x98] sm:$0x1] %vm1500, 0.0
    %1504 = vst.msk [vmem:[#allocation3 + $0x8] sm:$0x1] %vm1500, 0.0
    %1505 = vst.msk [vmem:[#allocation3 + $0x18] sm:$0x1] %vm1500, 0.0
    %1506 = vst.msk [vmem:[#allocation3 + $0x28] sm:$0x1] %vm1500, 0.0
    %1507 = vst.msk [vmem:[#allocation3 + $0x38] sm:$0x1] %vm1500, 0.0
    %1508 = vst.msk [vmem:[#allocation3 + $0x48] sm:$0x1] %vm1500, 0.0
    %1509 = vst.msk [vmem:[#allocation3 + $0x58] sm:$0x1] %vm1500, 0.0
    %1510 = vst.msk [vmem:[#allocation3 + $0x68] sm:$0x1] %vm1500, 0.0
    %1511 = vst.msk [vmem:[#allocation3 + $0x78] sm:$0x1] %vm1500, 0.0
    %1512 = vst.msk [vmem:[#allocation3 + $0x88] sm:$0x1] %vm1500, 0.0
    %1513 = vst.msk [vmem:[#allocation3 + $0x98] sm:$0x1] %vm1500, 0.0
    %1514 = vst.msk [vmem:[#allocation3 + $0xa8] sm:$0x1] %vm1500, 0.0
    %1515 = vst.msk [vmem:[#allocation3 + $0xb8] sm:$0x1] %vm1500, 0.0
    %1516 = vst.msk [vmem:[#allocation3 + $0xc8] sm:$0x1] %vm1500, 0.0
    %1517 = vst.msk [vmem:[#allocation3 + $0xd8] sm:$0x1] %vm1500, 0.0
    %1518 = vst.msk [vmem:[#allocation3 + $0xe8] sm:$0x1] %vm1500, 0.0
    %1519 = vst.msk [vmem:[#allocation3 + $0xf8] sm:$0x1] %vm1500, 0.0
    %1520 = vst.msk [vmem:[#allocation3 + $0x108] sm:$0x1] %vm1500, 0.0
    %1521 = vst.msk [vmem:[#allocation3 + $0x118] sm:$0x1] %vm1500, 0.0
    %1522 = vst.msk [vmem:[#allocation3] sm:$0xff] %vm750, %v1418
    %1523 = vst.msk [vmem:[#allocation3 + $0x10] sm:$0xff] %vm750, %v1419
    %1524 = vst.msk [vmem:[#allocation3 + $0x20] sm:$0xff] %vm750, %v1420
    %1525 = vst.msk [vmem:[#allocation3 + $0x30] sm:$0xff] %vm750, %v1421
    %1526 = vst.msk [vmem:[#allocation3 + $0x40] sm:$0xff] %vm750, %v1422
    %1527 = vst.msk [vmem:[#allocation3 + $0x50] sm:$0xff] %vm750, %v1423
    %1528 = vst.msk [vmem:[#allocation3 + $0x60] sm:$0xff] %vm750, %v1424
    %1529 = vst.msk [vmem:[#allocation3 + $0x70] sm:$0xff] %vm750, %v1425
    %1530 = vst.msk [vmem:[#allocation3 + $0x90] sm:$0xff] %vm750, %v1426
    %1531 = vst.msk [vmem:[#allocation3 + $0xa0] sm:$0xff] %vm750, %v1427
    %1532 = vst.msk [vmem:[#allocation3 + $0xb0] sm:$0xff] %vm750, %v1428
    %1533 = vst.msk [vmem:[#allocation3 + $0xc0] sm:$0xff] %vm750, %v1429
    %1534 = vst.msk [vmem:[#allocation3 + $0xd0] sm:$0xff] %vm750, %v1430
    %1535 = vst.msk [vmem:[#allocation3 + $0xe0] sm:$0xff] %vm750, %v1431
    %1536 = vst.msk [vmem:[#allocation3 + $0xf0] sm:$0xff] %vm750, %v1432
    %1537 = vst.msk [vmem:[#allocation3 + $0x100] sm:$0xff] %vm750, %v1433
    %s1538 = scalar_lea.vmem %s10, 128
    %1539 = vst.msk [vmem:[%s1538] sm:$0xff] %vm750, %v1434
    %1540 = vst.msk [vmem:[%s1538 + $0x8] sm:$0xff] %vm750, %v1435
    %1541 = vst.msk [vmem:[%s1538 + $0x10] sm:$0xff] %vm750, %v1436
    %1542 = vst.msk [vmem:[%s1538 + $0x18] sm:$0xff] %vm750, %v1437
    %1543 = vst.msk [vmem:[%s1538 + $0x20] sm:$0xff] %vm750, %v1438
    %1544 = vst.msk [vmem:[%s1538 + $0x28] sm:$0xff] %vm750, %v1439
    %1545 = vst.msk [vmem:[%s1538 + $0x30] sm:$0xff] %vm750, %v1440
    %1546 = vst.msk [vmem:[%s1538 + $0x38] sm:$0xff] %vm750, %v1441
    %1547 = vst.msk [vmem:[%s1538 + $0x40] sm:$0xff] %vm750, %v1442
    %1548 = vst.msk [vmem:[%s1538 + $0x48] sm:$0xff] %vm750, %v1443
    %1549 = vst.msk [vmem:[%s1538 + $0x50] sm:$0xff] %vm750, %v1444
    %1550 = vst.msk [vmem:[%s1538 + $0x58] sm:$0xff] %vm750, %v1445
    %1551 = vst.msk [vmem:[%s1538 + $0x60] sm:$0xff] %vm750, %v1446
    %1552 = vst.msk [vmem:[%s1538 + $0x68] sm:$0xff] %vm750, %v1447
    %1553 = vst.msk [vmem:[%s1538 + $0x70] sm:$0xff] %vm750, %v1448
    %1554 = vst.msk [vmem:[%s1538 + $0x78] sm:$0xff] %vm750, %v1449
    %s1555 = scalar_lea.vmem [#allocation3], 416
    %1556 = vst.msk [vmem:[%s1555] sm:$0xff] %vm750, 0.0
    %1557 = vst.msk [vmem:[%s1555 + $0x8] sm:$0x1] %vm1500, 0.0
    %1558 = vst.msk [vmem:[%s1555 + $0x90] sm:$0xff] %vm750, 0.0
    %1559 = vst.msk [vmem:[%s1555 + $0x98] sm:$0x1] %vm1500, 0.0
    %s1560 = scalar_lea.vmem [#allocation3], 288
    %1561 = vst.msk [vmem:[%s1560] sm:$0x1] %vm1500, 0.0
    %1562 = vst.msk [vmem:[%s1560 + $0x10] sm:$0x1] %vm1500, 0.0
    %1563 = vst.msk [vmem:[%s1560 + $0x20] sm:$0x1] %vm1500, 0.0
    %1564 = vst.msk [vmem:[%s1560 + $0x30] sm:$0x1] %vm1500, 0.0
    %1565 = vst.msk [vmem:[%s1560 + $0x40] sm:$0x1] %vm1500, 0.0
    %1566 = vst.msk [vmem:[%s1560 + $0x50] sm:$0x1] %vm1500, 0.0
    %1567 = vst.msk [vmem:[%s1560 + $0x60] sm:$0x1] %vm1500, 0.0
    %1568 = vst.msk [vmem:[%s1560 + $0x70] sm:$0x1] %vm1500, 0.0
    %1569 = vst.msk [vmem:[%s1560 + $0x80] sm:$0x1] %vm1500, 0.0
    %1570 = vst.msk [vmem:[%s1560 + $0x90] sm:$0x1] %vm1500, 0.0
    %1571 = vst.msk [vmem:[%s1560 + $0xa0] sm:$0x1] %vm1500, 0.0
    %1572 = vst.msk [vmem:[%s1560 + $0xb0] sm:$0x1] %vm1500, 0.0
    %1573 = vst.msk [vmem:[%s1560 + $0xc0] sm:$0x1] %vm1500, 0.0
    %1574 = vst.msk [vmem:[%s1560 + $0xd0] sm:$0x1] %vm1500, 0.0
    %1575 = vst.msk [vmem:[%s1560 + $0xe0] sm:$0x1] %vm1500, 0.0
    %1576 = vst.msk [vmem:[%s1560 + $0xf0] sm:$0x1] %vm1500, 0.0
    %1577 = vst.msk [vmem:[%s1560 + $0x100] sm:$0x1] %vm1500, 0.0
    %1578 = vst.msk [vmem:[%s1560 + $0x110] sm:$0x1] %vm1500, 0.0
    %1579 = vst.msk [vmem:[%s1560 + $0x1] sm:$0xff] %vm750, %v1434
    %1580 = vst.msk [vmem:[%s1560 + $0x11] sm:$0xff] %vm750, %v1435
    %1581 = vst.msk [vmem:[%s1560 + $0x21] sm:$0xff] %vm750, %v1436
    %1582 = vst.msk [vmem:[%s1560 + $0x31] sm:$0xff] %vm750, %v1437
    %1583 = vst.msk [vmem:[%s1560 + $0x41] sm:$0xff] %vm750, %v1438
    %1584 = vst.msk [vmem:[%s1560 + $0x51] sm:$0xff] %vm750, %v1439
    %1585 = vst.msk [vmem:[%s1560 + $0x61] sm:$0xff] %vm750, %v1440
    %1586 = vst.msk [vmem:[%s1560 + $0x71] sm:$0xff] %vm750, %v1441
    %1587 = vst.msk [vmem:[%s1560 + $0x91] sm:$0xff] %vm750, %v1442
    %1588 = vst.msk [vmem:[%s1560 + $0xa1] sm:$0xff] %vm750, %v1443
    %1589 = vst.msk [vmem:[%s1560 + $0xb1] sm:$0xff] %vm750, %v1444
    %1590 = vst.msk [vmem:[%s1560 + $0xc1] sm:$0xff] %vm750, %v1445
    %1591 = vst.msk [vmem:[%s1560 + $0xd1] sm:$0xff] %vm750, %v1446
    %1592 = vst.msk [vmem:[%s1560 + $0xe1] sm:$0xff] %vm750, %v1447
    %1593 = vst.msk [vmem:[%s1560 + $0xf1] sm:$0xff] %vm750, %v1448
    %1594 = vst.msk [vmem:[%s1560 + $0x101] sm:$0xff] %vm750, %v1449
    %s1595 = scalar_lea.vmem %s10, 256
    %1596 = vst.msk [vmem:[%s1595] sm:$0xff] %vm750, %v1450
    %1597 = vst.msk [vmem:[%s1595 + $0x8] sm:$0xff] %vm750, %v1451
    %1598 = vst.msk [vmem:[%s1595 + $0x10] sm:$0xff] %vm750, %v1452
    %1599 = vst.msk [vmem:[%s1595 + $0x18] sm:$0xff] %vm750, %v1453
    %1600 = vst.msk [vmem:[%s1595 + $0x20] sm:$0xff] %vm750, %v1454
    %1601 = vst.msk [vmem:[%s1595 + $0x28] sm:$0xff] %vm750, %v1455
    %1602 = vst.msk [vmem:[%s1595 + $0x30] sm:$0xff] %vm750, %v1456
    %1603 = vst.msk [vmem:[%s1595 + $0x38] sm:$0xff] %vm750, %v1457
    %1604 = vst.msk [vmem:[%s1595 + $0x40] sm:$0xff] %vm750, %v1458
    %1605 = vst.msk [vmem:[%s1595 + $0x48] sm:$0xff] %vm750, %v1459
    %1606 = vst.msk [vmem:[%s1595 + $0x50] sm:$0xff] %vm750, %v1460
    %1607 = vst.msk [vmem:[%s1595 + $0x58] sm:$0xff] %vm750, %v1461
    %1608 = vst.msk [vmem:[%s1595 + $0x60] sm:$0xff] %vm750, %v1462
    %1609 = vst.msk [vmem:[%s1595 + $0x68] sm:$0xff] %vm750, %v1463
    %1610 = vst.msk [vmem:[%s1595 + $0x70] sm:$0xff] %vm750, %v1464
    %1611 = vst.msk [vmem:[%s1595 + $0x78] sm:$0xff] %vm750, %v1465
    %s1612 = scalar_lea.vmem [#allocation3], 576
    %1613 = vst.msk [vmem:[%s1612] sm:$0xff] %vm750, 0.0
    %1614 = vst.msk [vmem:[%s1612 + $0x8] sm:$0x1] %vm1500, 0.0
    %1615 = vst.msk [vmem:[%s1612 + $0x90] sm:$0xff] %vm750, 0.0
    %1616 = vst.msk [vmem:[%s1612 + $0x98] sm:$0x1] %vm1500, 0.0
    %1617 = vst.msk [vmem:[%s1612 + $0x8] sm:$0x1] %vm1500, 0.0
    %1618 = vst.msk [vmem:[%s1612 + $0x18] sm:$0x1] %vm1500, 0.0
    %1619 = vst.msk [vmem:[%s1612 + $0x28] sm:$0x1] %vm1500, 0.0
    %1620 = vst.msk [vmem:[%s1612 + $0x38] sm:$0x1] %vm1500, 0.0
    %1621 = vst.msk [vmem:[%s1612 + $0x48] sm:$0x1] %vm1500, 0.0
    %1622 = vst.msk [vmem:[%s1612 + $0x58] sm:$0x1] %vm1500, 0.0
    %1623 = vst.msk [vmem:[%s1612 + $0x68] sm:$0x1] %vm1500, 0.0
    %1624 = vst.msk [vmem:[%s1612 + $0x78] sm:$0x1] %vm1500, 0.0
    %1625 = vst.msk [vmem:[%s1612 + $0x88] sm:$0x1] %vm1500, 0.0
    %1626 = vst.msk [vmem:[%s1612 + $0x98] sm:$0x1] %vm1500, 0.0
    %1627 = vst.msk [vmem:[%s1612 + $0xa8] sm:$0x1] %vm1500, 0.0
    %1628 = vst.msk [vmem:[%s1612 + $0xb8] sm:$0x1] %vm1500, 0.0
    %1629 = vst.msk [vmem:[%s1612 + $0xc8] sm:$0x1] %vm1500, 0.0
    %1630 = vst.msk [vmem:[%s1612 + $0xd8] sm:$0x1] %vm1500, 0.0
    %1631 = vst.msk [vmem:[%s1612 + $0xe8] sm:$0x1] %vm1500, 0.0
    %1632 = vst.msk [vmem:[%s1612 + $0xf8] sm:$0x1] %vm1500, 0.0
    %1633 = vst.msk [vmem:[%s1612 + $0x108] sm:$0x1] %vm1500, 0.0
    %1634 = vst.msk [vmem:[%s1612 + $0x118] sm:$0x1] %vm1500, 0.0
    %s1635 = scalar_lea.vmem [#allocation3], 592
    %1636 = vst.msk [vmem:[%s1635] sm:$0xff] %vm750, %v1450
    %1637 = vst.msk [vmem:[%s1635 + $0x10] sm:$0xff] %vm750, %v1451
    %1638 = vst.msk [vmem:[%s1635 + $0x20] sm:$0xff] %vm750, %v1452
    %1639 = vst.msk [vmem:[%s1635 + $0x30] sm:$0xff] %vm750, %v1453
    %1640 = vst.msk [vmem:[%s1635 + $0x40] sm:$0xff] %vm750, %v1454
    %1641 = vst.msk [vmem:[%s1635 + $0x50] sm:$0xff] %vm750, %v1455
    %1642 = vst.msk [vmem:[%s1635 + $0x60] sm:$0xff] %vm750, %v1456
    %1643 = vst.msk [vmem:[%s1635 + $0x70] sm:$0xff] %vm750, %v1457
    %1644 = vst.msk [vmem:[%s1635 + $0x90] sm:$0xff] %vm750, %v1458
    %1645 = vst.msk [vmem:[%s1635 + $0xa0] sm:$0xff] %vm750, %v1459
    %1646 = vst.msk [vmem:[%s1635 + $0xb0] sm:$0xff] %vm750, %v1460
    %1647 = vst.msk [vmem:[%s1635 + $0xc0] sm:$0xff] %vm750, %v1461
    %1648 = vst.msk [vmem:[%s1635 + $0xd0] sm:$0xff] %vm750, %v1462
    %1649 = vst.msk [vmem:[%s1635 + $0xe0] sm:$0xff] %vm750, %v1463
    %1650 = vst.msk [vmem:[%s1635 + $0xf0] sm:$0xff] %vm750, %v1464
    %1651 = vst.msk [vmem:[%s1635 + $0x100] sm:$0xff] %vm750, %v1465
    %s1652 = scalar_lea.vmem %s10, 384
    %1653 = vst.msk [vmem:[%s1652] sm:$0xff] %vm750, %v1466
    %1654 = vst.msk [vmem:[%s1652 + $0x8] sm:$0xff] %vm750, %v1467
    %1655 = vst.msk [vmem:[%s1652 + $0x10] sm:$0xff] %vm750, %v1468
    %1656 = vst.msk [vmem:[%s1652 + $0x18] sm:$0xff] %vm750, %v1469
    %1657 = vst.msk [vmem:[%s1652 + $0x20] sm:$0xff] %vm750, %v1470
    %1658 = vst.msk [vmem:[%s1652 + $0x28] sm:$0xff] %vm750, %v1471
    %1659 = vst.msk [vmem:[%s1652 + $0x30] sm:$0xff] %vm750, %v1472
    %1660 = vst.msk [vmem:[%s1652 + $0x38] sm:$0xff] %vm750, %v1473
    %1661 = vst.msk [vmem:[%s1652 + $0x40] sm:$0xff] %vm750, %v1474
    %1662 = vst.msk [vmem:[%s1652 + $0x48] sm:$0xff] %vm750, %v1475
    %1663 = vst.msk [vmem:[%s1652 + $0x50] sm:$0xff] %vm750, %v1476
    %1664 = vst.msk [vmem:[%s1652 + $0x58] sm:$0xff] %vm750, %v1477
    %1665 = vst.msk [vmem:[%s1652 + $0x60] sm:$0xff] %vm750, %v1478
    %1666 = vst.msk [vmem:[%s1652 + $0x68] sm:$0xff] %vm750, %v1479
    %1667 = vst.msk [vmem:[%s1652 + $0x70] sm:$0xff] %vm750, %v1480
    %1668 = vst.msk [vmem:[%s1652 + $0x78] sm:$0xff] %vm750, %v1481
    %s1669 = scalar_lea.vmem [#allocation3], 864
    %1670 = vst.msk [vmem:[%s1669] sm:$0xff] %vm750, 0.0
    %1671 = vst.msk [vmem:[%s1669 + $0x8] sm:$0x1] %vm1500, 0.0
    %1672 = vst.msk [vmem:[%s1669 + $0x90] sm:$0xff] %vm750, 0.0
    %1673 = vst.msk [vmem:[%s1669 + $0x98] sm:$0x1] %vm1500, 0.0
    %1674 = vst.msk [vmem:[%s1669] sm:$0x1] %vm1500, 0.0
    %1675 = vst.msk [vmem:[%s1669 + $0x10] sm:$0x1] %vm1500, 0.0
    %1676 = vst.msk [vmem:[%s1669 + $0x20] sm:$0x1] %vm1500, 0.0
    %1677 = vst.msk [vmem:[%s1669 + $0x30] sm:$0x1] %vm1500, 0.0
    %1678 = vst.msk [vmem:[%s1669 + $0x40] sm:$0x1] %vm1500, 0.0
    %1679 = vst.msk [vmem:[%s1669 + $0x50] sm:$0x1] %vm1500, 0.0
    %1680 = vst.msk [vmem:[%s1669 + $0x60] sm:$0x1] %vm1500, 0.0
    %1681 = vst.msk [vmem:[%s1669 + $0x70] sm:$0x1] %vm1500, 0.0
    %1682 = vst.msk [vmem:[%s1669 + $0x80] sm:$0x1] %vm1500, 0.0
    %1683 = vst.msk [vmem:[%s1669 + $0x90] sm:$0x1] %vm1500, 0.0
    %1684 = vst.msk [vmem:[%s1669 + $0xa0] sm:$0x1] %vm1500, 0.0
    %1685 = vst.msk [vmem:[%s1669 + $0xb0] sm:$0x1] %vm1500, 0.0
    %1686 = vst.msk [vmem:[%s1669 + $0xc0] sm:$0x1] %vm1500, 0.0
    %1687 = vst.msk [vmem:[%s1669 + $0xd0] sm:$0x1] %vm1500, 0.0
    %1688 = vst.msk [vmem:[%s1669 + $0xe0] sm:$0x1] %vm1500, 0.0
    %1689 = vst.msk [vmem:[%s1669 + $0xf0] sm:$0x1] %vm1500, 0.0
    %1690 = vst.msk [vmem:[%s1669 + $0x100] sm:$0x1] %vm1500, 0.0
    %1691 = vst.msk [vmem:[%s1669 + $0x110] sm:$0x1] %vm1500, 0.0
    %s1692 = scalar_lea.vmem [#allocation3], 880
    %1693 = vst.msk [vmem:[%s1692 + $0x1] sm:$0xff] %vm750, %v1466
    %1694 = vst.msk [vmem:[%s1692 + $0x11] sm:$0xff] %vm750, %v1467
    %1695 = vst.msk [vmem:[%s1692 + $0x21] sm:$0xff] %vm750, %v1468
    %1696 = vst.msk [vmem:[%s1692 + $0x31] sm:$0xff] %vm750, %v1469
    %1697 = vst.msk [vmem:[%s1692 + $0x41] sm:$0xff] %vm750, %v1470
    %1698 = vst.msk [vmem:[%s1692 + $0x51] sm:$0xff] %vm750, %v1471
    %1699 = vst.msk [vmem:[%s1692 + $0x61] sm:$0xff] %vm750, %v1472
    %1700 = vst.msk [vmem:[%s1692 + $0x71] sm:$0xff] %vm750, %v1473
    %1701 = vst.msk [vmem:[%s1692 + $0x91] sm:$0xff] %vm750, %v1474
    %1702 = vst.msk [vmem:[%s1692 + $0xa1] sm:$0xff] %vm750, %v1475
    %1703 = vst.msk [vmem:[%s1692 + $0xb1] sm:$0xff] %vm750, %v1476
    %1704 = vst.msk [vmem:[%s1692 + $0xc1] sm:$0xff] %vm750, %v1477
    %1705 = vst.msk [vmem:[%s1692 + $0xd1] sm:$0xff] %vm750, %v1478
    %1706 = vst.msk [vmem:[%s1692 + $0xe1] sm:$0xff] %vm750, %v1479
    %1707 = vst.msk [vmem:[%s1692 + $0xf1] sm:$0xff] %vm750, %v1480
    %1708 = vst.msk [vmem:[%s1692 + $0x101] sm:$0xff] %vm750, %v1481
    %v1709 = vld [vmem:[%s1669] sm:$0xff]
    %v1710 = vld [vmem:[%s1669 + $0x10] sm:$0xff]
    %v1711 = vld [vmem:[%s1669 + $0x20] sm:$0xff]
    %v1712 = vld [vmem:[%s1669 + $0x30] sm:$0xff]
    %v1713 = vld [vmem:[%s1669 + $0x40] sm:$0xff]
    %v1714 = vld [vmem:[%s1669 + $0x50] sm:$0xff]
    %v1715 = vld [vmem:[%s1669 + $0x60] sm:$0xff]
    %v1716 = vld [vmem:[%s1669 + $0x70] sm:$0xff]
    %v1717 = vld [vmem:[%s1669 + $0x90] sm:$0xff]
    %v1718 = vld [vmem:[%s1669 + $0xa0] sm:$0xff]
    %v1719 = vld [vmem:[%s1669 + $0xb0] sm:$0xff]
    %v1720 = vld [vmem:[%s1669 + $0xc0] sm:$0xff]
    %v1721 = vld [vmem:[%s1669 + $0xd0] sm:$0xff]
    %v1722 = vld [vmem:[%s1669 + $0xe0] sm:$0xff]
    %v1723 = vld [vmem:[%s1669 + $0xf0] sm:$0xff]
    %v1724 = vld [vmem:[%s1669 + $0x100] sm:$0xff]
    %v1725 = vpack.c.bf16 %v1710, %v1709
    %v1726 = vpack.c.bf16 %v1712, %v1711
    %v1727 = vpack.c.bf16 %v1714, %v1713
    %v1728 = vpack.c.bf16 %v1716, %v1715
    %v1729 = vpack.c.bf16 %v1718, %v1717
    %v1730 = vpack.c.bf16 %v1720, %v1719
    %v1731 = vpack.c.bf16 %v1722, %v1721
    %v1732 = vpack.c.bf16 %v1724, %v1723
    %1733 = vst.msk [vmem:[#allocation4] sm:$0xff] %vm750, %v1725
    %1734 = vst.msk [vmem:[#allocation4 + $0x40] sm:$0xff] %vm750, %v1726
    %1735 = vst.msk [vmem:[#allocation4 + $0x80] sm:$0xff] %vm750, %v1727
    %1736 = vst.msk [vmem:[#allocation4 + $0xc0] sm:$0xff] %vm750, %v1728
    %1737 = vst.msk [vmem:[#allocation4 + $0x100] sm:$0xff] %vm750, %v1729
    %1738 = vst.msk [vmem:[#allocation4 + $0x140] sm:$0xff] %vm750, %v1730
    %1739 = vst.msk [vmem:[#allocation4 + $0x180] sm:$0xff] %vm750, %v1731
    %1740 = vst.msk [vmem:[#allocation4 + $0x1c0] sm:$0xff] %vm750, %v1732
    %v1741 = vld [vmem:[%s1612] sm:$0xff]
    %v1742 = vld [vmem:[%s1612 + $0x10] sm:$0xff]
    %v1743 = vld [vmem:[%s1612 + $0x20] sm:$0xff]
    %v1744 = vld [vmem:[%s1612 + $0x30] sm:$0xff]
    %v1745 = vld [vmem:[%s1612 + $0x40] sm:$0xff]
    %v1746 = vld [vmem:[%s1612 + $0x50] sm:$0xff]
    %v1747 = vld [vmem:[%s1612 + $0x60] sm:$0xff]
    %v1748 = vld [vmem:[%s1612 + $0x70] sm:$0xff]
    %v1749 = vld [vmem:[%s1612 + $0x90] sm:$0xff]
    %v1750 = vld [vmem:[%s1612 + $0xa0] sm:$0xff]
    %v1751 = vld [vmem:[%s1612 + $0xb0] sm:$0xff]
    %v1752 = vld [vmem:[%s1612 + $0xc0] sm:$0xff]
    %v1753 = vld [vmem:[%s1612 + $0xd0] sm:$0xff]
    %v1754 = vld [vmem:[%s1612 + $0xe0] sm:$0xff]
    %v1755 = vld [vmem:[%s1612 + $0xf0] sm:$0xff]
    %v1756 = vld [vmem:[%s1612 + $0x100] sm:$0xff]
    %v1757 = vpack.c.bf16 %v1742, %v1741
    %v1758 = vpack.c.bf16 %v1744, %v1743
    %v1759 = vpack.c.bf16 %v1746, %v1745
    %v1760 = vpack.c.bf16 %v1748, %v1747
    %v1761 = vpack.c.bf16 %v1750, %v1749
    %v1762 = vpack.c.bf16 %v1752, %v1751
    %v1763 = vpack.c.bf16 %v1754, %v1753
    %v1764 = vpack.c.bf16 %v1756, %v1755
    %1773 = vrot.lane.b32.xlu0 %v1757, 64
    %v1774 = vpop.permute.xlu0 %1773
    %1775 = vrot.lane.b32.xlu0 %v1758, 64
    %v1776 = vpop.permute.xlu0 %1775
    %1777 = vrot.lane.b32.xlu0 %v1759, 64
    %v1778 = vpop.permute.xlu0 %1777
    %1779 = vrot.lane.b32.xlu0 %v1760, 64
    %v1780 = vpop.permute.xlu0 %1779
    %1781 = vrot.lane.b32.xlu0 %v1761, 64
    %v1782 = vpop.permute.xlu0 %1781
    %1783 = vrot.lane.b32.xlu0 %v1762, 64
    %v1784 = vpop.permute.xlu0 %1783
    %1785 = vrot.lane.b32.xlu0 %v1763, 64
    %v1786 = vpop.permute.xlu0 %1785
    %1787 = vrot.lane.b32.xlu0 %v1764, 64
    %v1788 = vpop.permute.xlu0 %1787
    %vm1797 = vcmask 1048064
    %1798 = vst.msk [vmem:[#allocation4] sm:$0xff] %vm1797, %v1774
    %1799 = vst.msk [vmem:[#allocation4 + $0x40] sm:$0xff] %vm1797, %v1776
    %1800 = vst.msk [vmem:[#allocation4 + $0x80] sm:$0xff] %vm1797, %v1778
    %1801 = vst.msk [vmem:[#allocation4 + $0xc0] sm:$0xff] %vm1797, %v1780
    %1802 = vst.msk [vmem:[#allocation4 + $0x100] sm:$0xff] %vm1797, %v1782
    %1803 = vst.msk [vmem:[#allocation4 + $0x140] sm:$0xff] %vm1797, %v1784
    %1804 = vst.msk [vmem:[#allocation4 + $0x180] sm:$0xff] %vm1797, %v1786
    %1805 = vst.msk [vmem:[#allocation4 + $0x1c0] sm:$0xff] %vm1797, %v1788
    %v1806 = vld [vmem:[%s1669 + $0x1] sm:$0xff]
    %v1807 = vld [vmem:[%s1669 + $0x11] sm:$0xff]
    %v1808 = vld [vmem:[%s1669 + $0x21] sm:$0xff]
    %v1809 = vld [vmem:[%s1669 + $0x31] sm:$0xff]
    %v1810 = vld [vmem:[%s1669 + $0x41] sm:$0xff]
    %v1811 = vld [vmem:[%s1669 + $0x51] sm:$0xff]
    %v1812 = vld [vmem:[%s1669 + $0x61] sm:$0xff]
    %v1813 = vld [vmem:[%s1669 + $0x71] sm:$0xff]
    %v1814 = vld [vmem:[%s1669 + $0x91] sm:$0xff]
    %v1815 = vld [vmem:[%s1669 + $0xa1] sm:$0xff]
    %v1816 = vld [vmem:[%s1669 + $0xb1] sm:$0xff]
    %v1817 = vld [vmem:[%s1669 + $0xc1] sm:$0xff]
    %v1818 = vld [vmem:[%s1669 + $0xd1] sm:$0xff]
    %v1819 = vld [vmem:[%s1669 + $0xe1] sm:$0xff]
    %v1820 = vld [vmem:[%s1669 + $0xf1] sm:$0xff]
    %v1821 = vld [vmem:[%s1669 + $0x101] sm:$0xff]
    %v1822 = vpack.c.bf16 %v1807, %v1806
    %v1823 = vpack.c.bf16 %v1809, %v1808
    %v1824 = vpack.c.bf16 %v1811, %v1810
    %v1825 = vpack.c.bf16 %v1813, %v1812
    %v1826 = vpack.c.bf16 %v1815, %v1814
    %v1827 = vpack.c.bf16 %v1817, %v1816
    %v1828 = vpack.c.bf16 %v1819, %v1818
    %v1829 = vpack.c.bf16 %v1821, %v1820
    %1830 = vst.msk [vmem:[#allocation4 + $0x8] sm:$0xff] %vm750, %v1822
    %1831 = vst.msk [vmem:[#allocation4 + $0x48] sm:$0xff] %vm750, %v1823
    %1832 = vst.msk [vmem:[#allocation4 + $0x88] sm:$0xff] %vm750, %v1824
    %1833 = vst.msk [vmem:[#allocation4 + $0xc8] sm:$0xff] %vm750, %v1825
    %1834 = vst.msk [vmem:[#allocation4 + $0x108] sm:$0xff] %vm750, %v1826
    %1835 = vst.msk [vmem:[#allocation4 + $0x148] sm:$0xff] %vm750, %v1827
    %1836 = vst.msk [vmem:[#allocation4 + $0x188] sm:$0xff] %vm750, %v1828
    %1837 = vst.msk [vmem:[#allocation4 + $0x1c8] sm:$0xff] %vm750, %v1829
    %v1838 = vld [vmem:[%s1612 + $0x1] sm:$0xff]
    %v1839 = vld [vmem:[%s1612 + $0x11] sm:$0xff]
    %v1840 = vld [vmem:[%s1612 + $0x21] sm:$0xff]
    %v1841 = vld [vmem:[%s1612 + $0x31] sm:$0xff]
    %v1842 = vld [vmem:[%s1612 + $0x41] sm:$0xff]
    %v1843 = vld [vmem:[%s1612 + $0x51] sm:$0xff]
    %v1844 = vld [vmem:[%s1612 + $0x61] sm:$0xff]
    %v1845 = vld [vmem:[%s1612 + $0x71] sm:$0xff]
    %v1846 = vld [vmem:[%s1612 + $0x91] sm:$0xff]
    %v1847 = vld [vmem:[%s1612 + $0xa1] sm:$0xff]
    %v1848 = vld [vmem:[%s1612 + $0xb1] sm:$0xff]
    %v1849 = vld [vmem:[%s1612 + $0xc1] sm:$0xff]
    %v1850 = vld [vmem:[%s1612 + $0xd1] sm:$0xff]
    %v1851 = vld [vmem:[%s1612 + $0xe1] sm:$0xff]
    %v1852 = vld [vmem:[%s1612 + $0xf1] sm:$0xff]
    %v1853 = vld [vmem:[%s1612 + $0x101] sm:$0xff]
    %v1854 = vpack.c.bf16 %v1839, %v1838
    %v1855 = vpack.c.bf16 %v1841, %v1840
    %v1856 = vpack.c.bf16 %v1843, %v1842
    %v1857 = vpack.c.bf16 %v1845, %v1844
    %v1858 = vpack.c.bf16 %v1847, %v1846
    %v1859 = vpack.c.bf16 %v1849, %v1848
    %v1860 = vpack.c.bf16 %v1851, %v1850
    %v1861 = vpack.c.bf16 %v1853, %v1852
    %1870 = vrot.lane.b32.xlu0 %v1854, 64
    %v1871 = vpop.permute.xlu0 %1870
    %1872 = vrot.lane.b32.xlu0 %v1855, 64
    %v1873 = vpop.permute.xlu0 %1872
    %1874 = vrot.lane.b32.xlu0 %v1856, 64
    %v1875 = vpop.permute.xlu0 %1874
    %1876 = vrot.lane.b32.xlu0 %v1857, 64
    %v1877 = vpop.permute.xlu0 %1876
    %1878 = vrot.lane.b32.xlu0 %v1858, 64
    %v1879 = vpop.permute.xlu0 %1878
    %1880 = vrot.lane.b32.xlu0 %v1859, 64
    %v1881 = vpop.permute.xlu0 %1880
    %1882 = vrot.lane.b32.xlu0 %v1860, 64
    %v1883 = vpop.permute.xlu0 %1882
    %1884 = vrot.lane.b32.xlu0 %v1861, 64
    %v1885 = vpop.permute.xlu0 %1884
    %1894 = vst.msk [vmem:[#allocation4 + $0x8] sm:$0xff] %vm1797, %v1871
    %1895 = vst.msk [vmem:[#allocation4 + $0x48] sm:$0xff] %vm1797, %v1873
    %1896 = vst.msk [vmem:[#allocation4 + $0x88] sm:$0xff] %vm1797, %v1875
    %1897 = vst.msk [vmem:[#allocation4 + $0xc8] sm:$0xff] %vm1797, %v1877
    %1898 = vst.msk [vmem:[#allocation4 + $0x108] sm:$0xff] %vm1797, %v1879
    %1899 = vst.msk [vmem:[#allocation4 + $0x148] sm:$0xff] %vm1797, %v1881
    %1900 = vst.msk [vmem:[#allocation4 + $0x188] sm:$0xff] %vm1797, %v1883
    %1901 = vst.msk [vmem:[#allocation4 + $0x1c8] sm:$0xff] %vm1797, %v1885
    %v1902 = vld [vmem:[%s1560] sm:$0xff]
    %v1903 = vld [vmem:[%s1560 + $0x10] sm:$0xff]
    %v1904 = vld [vmem:[%s1560 + $0x20] sm:$0xff]
    %v1905 = vld [vmem:[%s1560 + $0x30] sm:$0xff]
    %v1906 = vld [vmem:[%s1560 + $0x40] sm:$0xff]
    %v1907 = vld [vmem:[%s1560 + $0x50] sm:$0xff]
    %v1908 = vld [vmem:[%s1560 + $0x60] sm:$0xff]
    %v1909 = vld [vmem:[%s1560 + $0x70] sm:$0xff]
    %v1910 = vld [vmem:[%s1560 + $0x90] sm:$0xff]
    %v1911 = vld [vmem:[%s1560 + $0xa0] sm:$0xff]
    %v1912 = vld [vmem:[%s1560 + $0xb0] sm:$0xff]
    %v1913 = vld [vmem:[%s1560 + $0xc0] sm:$0xff]
    %v1914 = vld [vmem:[%s1560 + $0xd0] sm:$0xff]
    %v1915 = vld [vmem:[%s1560 + $0xe0] sm:$0xff]
    %v1916 = vld [vmem:[%s1560 + $0xf0] sm:$0xff]
    %v1917 = vld [vmem:[%s1560 + $0x100] sm:$0xff]
    %v1918 = vpack.c.bf16 %v1903, %v1902
    %v1919 = vpack.c.bf16 %v1905, %v1904
    %v1920 = vpack.c.bf16 %v1907, %v1906
    %v1921 = vpack.c.bf16 %v1909, %v1908
    %v1922 = vpack.c.bf16 %v1911, %v1910
    %v1923 = vpack.c.bf16 %v1913, %v1912
    %v1924 = vpack.c.bf16 %v1915, %v1914
    %v1925 = vpack.c.bf16 %v1917, %v1916
    %1926 = vst.msk [vmem:[#allocation4 + $0x10] sm:$0xff] %vm750, %v1918
    %1927 = vst.msk [vmem:[#allocation4 + $0x50] sm:$0xff] %vm750, %v1919
    %1928 = vst.msk [vmem:[#allocation4 + $0x90] sm:$0xff] %vm750, %v1920
    %1929 = vst.msk [vmem:[#allocation4 + $0xd0] sm:$0xff] %vm750, %v1921
    %1930 = vst.msk [vmem:[#allocation4 + $0x110] sm:$0xff] %vm750, %v1922
    %1931 = vst.msk [vmem:[#allocation4 + $0x150] sm:$0xff] %vm750, %v1923
    %1932 = vst.msk [vmem:[#allocation4 + $0x190] sm:$0xff] %vm750, %v1924
    %1933 = vst.msk [vmem:[#allocation4 + $0x1d0] sm:$0xff] %vm750, %v1925
    %v1934 = vld [vmem:[#allocation3] sm:$0xff]
    %v1935 = vld [vmem:[#allocation3 + $0x10] sm:$0xff]
    %v1936 = vld [vmem:[#allocation3 + $0x20] sm:$0xff]
    %v1937 = vld [vmem:[#allocation3 + $0x30] sm:$0xff]
    %v1938 = vld [vmem:[#allocation3 + $0x40] sm:$0xff]
    %v1939 = vld [vmem:[#allocation3 + $0x50] sm:$0xff]
    %v1940 = vld [vmem:[#allocation3 + $0x60] sm:$0xff]
    %v1941 = vld [vmem:[#allocation3 + $0x70] sm:$0xff]
    %v1942 = vld [vmem:[#allocation3 + $0x90] sm:$0xff]
    %v1943 = vld [vmem:[#allocation3 + $0xa0] sm:$0xff]
    %v1944 = vld [vmem:[#allocation3 + $0xb0] sm:$0xff]
    %v1945 = vld [vmem:[#allocation3 + $0xc0] sm:$0xff]
    %v1946 = vld [vmem:[#allocation3 + $0xd0] sm:$0xff]
    %v1947 = vld [vmem:[#allocation3 + $0xe0] sm:$0xff]
    %v1948 = vld [vmem:[#allocation3 + $0xf0] sm:$0xff]
    %v1949 = vld [vmem:[#allocation3 + $0x100] sm:$0xff]
    %v1950 = vpack.c.bf16 %v1935, %v1934
    %v1951 = vpack.c.bf16 %v1937, %v1936
    %v1952 = vpack.c.bf16 %v1939, %v1938
    %v1953 = vpack.c.bf16 %v1941, %v1940
    %v1954 = vpack.c.bf16 %v1943, %v1942
    %v1955 = vpack.c.bf16 %v1945, %v1944
    %v1956 = vpack.c.bf16 %v1947, %v1946
    %v1957 = vpack.c.bf16 %v1949, %v1948
    %1966 = vrot.lane.b32.xlu0 %v1950, 64
    %v1967 = vpop.permute.xlu0 %1966
    %1968 = vrot.lane.b32.xlu0 %v1951, 64
    %v1969 = vpop.permute.xlu0 %1968
    %1970 = vrot.lane.b32.xlu0 %v1952, 64
    %v1971 = vpop.permute.xlu0 %1970
    %1972 = vrot.lane.b32.xlu0 %v1953, 64
    %v1973 = vpop.permute.xlu0 %1972
    %1974 = vrot.lane.b32.xlu0 %v1954, 64
    %v1975 = vpop.permute.xlu0 %1974
    %1976 = vrot.lane.b32.xlu0 %v1955, 64
    %v1977 = vpop.permute.xlu0 %1976
    %1978 = vrot.lane.b32.xlu0 %v1956, 64
    %v1979 = vpop.permute.xlu0 %1978
    %1980 = vrot.lane.b32.xlu0 %v1957, 64
    %v1981 = vpop.permute.xlu0 %1980
    %1990 = vst.msk [vmem:[#allocation4 + $0x10] sm:$0xff] %vm1797, %v1967
    %1991 = vst.msk [vmem:[#allocation4 + $0x50] sm:$0xff] %vm1797, %v1969
    %1992 = vst.msk [vmem:[#allocation4 + $0x90] sm:$0xff] %vm1797, %v1971
    %1993 = vst.msk [vmem:[#allocation4 + $0xd0] sm:$0xff] %vm1797, %v1973
    %1994 = vst.msk [vmem:[#allocation4 + $0x110] sm:$0xff] %vm1797, %v1975
    %1995 = vst.msk [vmem:[#allocation4 + $0x150] sm:$0xff] %vm1797, %v1977
    %1996 = vst.msk [vmem:[#allocation4 + $0x190] sm:$0xff] %vm1797, %v1979
    %1997 = vst.msk [vmem:[#allocation4 + $0x1d0] sm:$0xff] %vm1797, %v1981
    %v1998 = vld [vmem:[%s1560 + $0x1] sm:$0xff]
    %v1999 = vld [vmem:[%s1560 + $0x11] sm:$0xff]
    %v2000 = vld [vmem:[%s1560 + $0x21] sm:$0xff]
    %v2001 = vld [vmem:[%s1560 + $0x31] sm:$0xff]
    %v2002 = vld [vmem:[%s1560 + $0x41] sm:$0xff]
    %v2003 = vld [vmem:[%s1560 + $0x51] sm:$0xff]
    %v2004 = vld [vmem:[%s1560 + $0x61] sm:$0xff]
    %v2005 = vld [vmem:[%s1560 + $0x71] sm:$0xff]
    %v2006 = vld [vmem:[%s1560 + $0x91] sm:$0xff]
    %v2007 = vld [vmem:[%s1560 + $0xa1] sm:$0xff]
    %v2008 = vld [vmem:[%s1560 + $0xb1] sm:$0xff]
    %v2009 = vld [vmem:[%s1560 + $0xc1] sm:$0xff]
    %v2010 = vld [vmem:[%s1560 + $0xd1] sm:$0xff]
    %v2011 = vld [vmem:[%s1560 + $0xe1] sm:$0xff]
    %v2012 = vld [vmem:[%s1560 + $0xf1] sm:$0xff]
    %v2013 = vld [vmem:[%s1560 + $0x101] sm:$0xff]
    %v2014 = vpack.c.bf16 %v1999, %v1998
    %v2015 = vpack.c.bf16 %v2001, %v2000
    %v2016 = vpack.c.bf16 %v2003, %v2002
    %v2017 = vpack.c.bf16 %v2005, %v2004
    %v2018 = vpack.c.bf16 %v2007, %v2006
    %v2019 = vpack.c.bf16 %v2009, %v2008
    %v2020 = vpack.c.bf16 %v2011, %v2010
    %v2021 = vpack.c.bf16 %v2013, %v2012
    %2022 = vst.msk [vmem:[#allocation4 + $0x18] sm:$0xff] %vm750, %v2014
    %2023 = vst.msk [vmem:[#allocation4 + $0x58] sm:$0xff] %vm750, %v2015
    %2024 = vst.msk [vmem:[#allocation4 + $0x98] sm:$0xff] %vm750, %v2016
    %2025 = vst.msk [vmem:[#allocation4 + $0xd8] sm:$0xff] %vm750, %v2017
    %2026 = vst.msk [vmem:[#allocation4 + $0x118] sm:$0xff] %vm750, %v2018
    %2027 = vst.msk [vmem:[#allocation4 + $0x158] sm:$0xff] %vm750, %v2019
    %2028 = vst.msk [vmem:[#allocation4 + $0x198] sm:$0xff] %vm750, %v2020
    %2029 = vst.msk [vmem:[#allocation4 + $0x1d8] sm:$0xff] %vm750, %v2021
    %v2030 = vld [vmem:[#allocation3 + $0x1] sm:$0xff]
    %v2031 = vld [vmem:[#allocation3 + $0x11] sm:$0xff]
    %v2032 = vld [vmem:[#allocation3 + $0x21] sm:$0xff]
    %v2033 = vld [vmem:[#allocation3 + $0x31] sm:$0xff]
    %v2034 = vld [vmem:[#allocation3 + $0x41] sm:$0xff]
    %v2035 = vld [vmem:[#allocation3 + $0x51] sm:$0xff]
    %v2036 = vld [vmem:[#allocation3 + $0x61] sm:$0xff]
    %v2037 = vld [vmem:[#allocation3 + $0x71] sm:$0xff]
    %v2038 = vld [vmem:[#allocation3 + $0x91] sm:$0xff]
    %v2039 = vld [vmem:[#allocation3 + $0xa1] sm:$0xff]
    %v2040 = vld [vmem:[#allocation3 + $0xb1] sm:$0xff]
    %v2041 = vld [vmem:[#allocation3 + $0xc1] sm:$0xff]
    %v2042 = vld [vmem:[#allocation3 + $0xd1] sm:$0xff]
    %v2043 = vld [vmem:[#allocation3 + $0xe1] sm:$0xff]
    %v2044 = vld [vmem:[#allocation3 + $0xf1] sm:$0xff]
    %v2045 = vld [vmem:[#allocation3 + $0x101] sm:$0xff]
    %v2046 = vpack.c.bf16 %v2031, %v2030
    %v2047 = vpack.c.bf16 %v2033, %v2032
    %v2048 = vpack.c.bf16 %v2035, %v2034
    %v2049 = vpack.c.bf16 %v2037, %v2036
    %v2050 = vpack.c.bf16 %v2039, %v2038
    %v2051 = vpack.c.bf16 %v2041, %v2040
    %v2052 = vpack.c.bf16 %v2043, %v2042
    %v2053 = vpack.c.bf16 %v2045, %v2044
    %2062 = vrot.lane.b32.xlu0 %v2046, 64
    %v2063 = vpop.permute.xlu0 %2062
    %2064 = vrot.lane.b32.xlu0 %v2047, 64
    %v2065 = vpop.permute.xlu0 %2064
    %2066 = vrot.lane.b32.xlu0 %v2048, 64
    %v2067 = vpop.permute.xlu0 %2066
    %2068 = vrot.lane.b32.xlu0 %v2049, 64
    %v2069 = vpop.permute.xlu0 %2068
    %2070 = vrot.lane.b32.xlu0 %v2050, 64
    %v2071 = vpop.permute.xlu0 %2070
    %2072 = vrot.lane.b32.xlu0 %v2051, 64
    %v2073 = vpop.permute.xlu0 %2072
    %2074 = vrot.lane.b32.xlu0 %v2052, 64
    %v2075 = vpop.permute.xlu0 %2074
    %2076 = vrot.lane.b32.xlu0 %v2053, 64
    %v2077 = vpop.permute.xlu0 %2076
    %2086 = vst.msk [vmem:[#allocation4 + $0x18] sm:$0xff] %vm1797, %v2063
    %2087 = vst.msk [vmem:[#allocation4 + $0x58] sm:$0xff] %vm1797, %v2065
    %2088 = vst.msk [vmem:[#allocation4 + $0x98] sm:$0xff] %vm1797, %v2067
    %2089 = vst.msk [vmem:[#allocation4 + $0xd8] sm:$0xff] %vm1797, %v2069
    %2090 = vst.msk [vmem:[#allocation4 + $0x118] sm:$0xff] %vm1797, %v2071
    %2091 = vst.msk [vmem:[#allocation4 + $0x158] sm:$0xff] %vm1797, %v2073
    %2092 = vst.msk [vmem:[#allocation4 + $0x198] sm:$0xff] %vm1797, %v2075
    %2093 = vst.msk [vmem:[#allocation4 + $0x1d8] sm:$0xff] %vm1797, %v2077
    %v2094 = vld [vmem:[%s1692] sm:$0xff]
    %v2095 = vld [vmem:[%s1692 + $0x10] sm:$0xff]
    %v2096 = vld [vmem:[%s1692 + $0x20] sm:$0xff]
    %v2097 = vld [vmem:[%s1692 + $0x30] sm:$0xff]
    %v2098 = vld [vmem:[%s1692 + $0x40] sm:$0xff]
    %v2099 = vld [vmem:[%s1692 + $0x50] sm:$0xff]
    %v2100 = vld [vmem:[%s1692 + $0x60] sm:$0xff]
    %v2101 = vld [vmem:[%s1692 + $0x70] sm:$0xff]
    %v2102 = vld [vmem:[%s1692 + $0x90] sm:$0xff]
    %v2103 = vld [vmem:[%s1692 + $0xa0] sm:$0xff]
    %v2104 = vld [vmem:[%s1692 + $0xb0] sm:$0xff]
    %v2105 = vld [vmem:[%s1692 + $0xc0] sm:$0xff]
    %v2106 = vld [vmem:[%s1692 + $0xd0] sm:$0xff]
    %v2107 = vld [vmem:[%s1692 + $0xe0] sm:$0xff]
    %v2108 = vld [vmem:[%s1692 + $0xf0] sm:$0xff]
    %v2109 = vld [vmem:[%s1692 + $0x100] sm:$0xff]
    %v2110 = vpack.c.bf16 %v2095, %v2094
    %v2111 = vpack.c.bf16 %v2097, %v2096
    %v2112 = vpack.c.bf16 %v2099, %v2098
    %v2113 = vpack.c.bf16 %v2101, %v2100
    %v2114 = vpack.c.bf16 %v2103, %v2102
    %v2115 = vpack.c.bf16 %v2105, %v2104
    %v2116 = vpack.c.bf16 %v2107, %v2106
    %v2117 = vpack.c.bf16 %v2109, %v2108
    %2118 = vst.msk [vmem:[#allocation4 + $0x20] sm:$0xff] %vm750, %v2110
    %2119 = vst.msk [vmem:[#allocation4 + $0x60] sm:$0xff] %vm750, %v2111
    %2120 = vst.msk [vmem:[#allocation4 + $0xa0] sm:$0xff] %vm750, %v2112
    %2121 = vst.msk [vmem:[#allocation4 + $0xe0] sm:$0xff] %vm750, %v2113
    %2122 = vst.msk [vmem:[#allocation4 + $0x120] sm:$0xff] %vm750, %v2114
    %2123 = vst.msk [vmem:[#allocation4 + $0x160] sm:$0xff] %vm750, %v2115
    %2124 = vst.msk [vmem:[#allocation4 + $0x1a0] sm:$0xff] %vm750, %v2116
    %2125 = vst.msk [vmem:[#allocation4 + $0x1e0] sm:$0xff] %vm750, %v2117
    %v2126 = vld [vmem:[%s1635] sm:$0xff]
    %v2127 = vld [vmem:[%s1635 + $0x10] sm:$0xff]
    %v2128 = vld [vmem:[%s1635 + $0x20] sm:$0xff]
    %v2129 = vld [vmem:[%s1635 + $0x30] sm:$0xff]
    %v2130 = vld [vmem:[%s1635 + $0x40] sm:$0xff]
    %v2131 = vld [vmem:[%s1635 + $0x50] sm:$0xff]
    %v2132 = vld [vmem:[%s1635 + $0x60] sm:$0xff]
    %v2133 = vld [vmem:[%s1635 + $0x70] sm:$0xff]
    %v2134 = vld [vmem:[%s1635 + $0x90] sm:$0xff]
    %v2135 = vld [vmem:[%s1635 + $0xa0] sm:$0xff]
    %v2136 = vld [vmem:[%s1635 + $0xb0] sm:$0xff]
    %v2137 = vld [vmem:[%s1635 + $0xc0] sm:$0xff]
    %v2138 = vld [vmem:[%s1635 + $0xd0] sm:$0xff]
    %v2139 = vld [vmem:[%s1635 + $0xe0] sm:$0xff]
    %v2140 = vld [vmem:[%s1635 + $0xf0] sm:$0xff]
    %v2141 = vld [vmem:[%s1635 + $0x100] sm:$0xff]
    %v2142 = vpack.c.bf16 %v2127, %v2126
    %v2143 = vpack.c.bf16 %v2129, %v2128
    %v2144 = vpack.c.bf16 %v2131, %v2130
    %v2145 = vpack.c.bf16 %v2133, %v2132
    %v2146 = vpack.c.bf16 %v2135, %v2134
    %v2147 = vpack.c.bf16 %v2137, %v2136
    %v2148 = vpack.c.bf16 %v2139, %v2138
    %v2149 = vpack.c.bf16 %v2141, %v2140
    %2158 = vrot.lane.b32.xlu0 %v2142, 64
    %v2159 = vpop.permute.xlu0 %2158
    %2160 = vrot.lane.b32.xlu0 %v2143, 64
    %v2161 = vpop.permute.xlu0 %2160
    %2162 = vrot.lane.b32.xlu0 %v2144, 64
    %v2163 = vpop.permute.xlu0 %2162
    %2164 = vrot.lane.b32.xlu0 %v2145, 64
    %v2165 = vpop.permute.xlu0 %2164
    %2166 = vrot.lane.b32.xlu0 %v2146, 64
    %v2167 = vpop.permute.xlu0 %2166
    %2168 = vrot.lane.b32.xlu0 %v2147, 64
    %v2169 = vpop.permute.xlu0 %2168
    %2170 = vrot.lane.b32.xlu0 %v2148, 64
    %v2171 = vpop.permute.xlu0 %2170
    %2172 = vrot.lane.b32.xlu0 %v2149, 64
    %v2173 = vpop.permute.xlu0 %2172
    %2182 = vst.msk [vmem:[#allocation4 + $0x20] sm:$0xff] %vm1797, %v2159
    %2183 = vst.msk [vmem:[#allocation4 + $0x60] sm:$0xff] %vm1797, %v2161
    %2184 = vst.msk [vmem:[#allocation4 + $0xa0] sm:$0xff] %vm1797, %v2163
    %2185 = vst.msk [vmem:[#allocation4 + $0xe0] sm:$0xff] %vm1797, %v2165
    %2186 = vst.msk [vmem:[#allocation4 + $0x120] sm:$0xff] %vm1797, %v2167
    %2187 = vst.msk [vmem:[#allocation4 + $0x160] sm:$0xff] %vm1797, %v2169
    %2188 = vst.msk [vmem:[#allocation4 + $0x1a0] sm:$0xff] %vm1797, %v2171
    %2189 = vst.msk [vmem:[#allocation4 + $0x1e0] sm:$0xff] %vm1797, %v2173
    %v2190 = vld [vmem:[%s1692 + $0x1] sm:$0xff]
    %v2191 = vld [vmem:[%s1692 + $0x11] sm:$0xff]
    %v2192 = vld [vmem:[%s1692 + $0x21] sm:$0xff]
    %v2193 = vld [vmem:[%s1692 + $0x31] sm:$0xff]
    %v2194 = vld [vmem:[%s1692 + $0x41] sm:$0xff]
    %v2195 = vld [vmem:[%s1692 + $0x51] sm:$0xff]
    %v2196 = vld [vmem:[%s1692 + $0x61] sm:$0xff]
    %v2197 = vld [vmem:[%s1692 + $0x71] sm:$0xff]
    %v2198 = vld [vmem:[%s1692 + $0x91] sm:$0xff]
    %v2199 = vld [vmem:[%s1692 + $0xa1] sm:$0xff]
    %v2200 = vld [vmem:[%s1692 + $0xb1] sm:$0xff]
    %v2201 = vld [vmem:[%s1692 + $0xc1] sm:$0xff]
    %v2202 = vld [vmem:[%s1692 + $0xd1] sm:$0xff]
    %v2203 = vld [vmem:[%s1692 + $0xe1] sm:$0xff]
    %v2204 = vld [vmem:[%s1692 + $0xf1] sm:$0xff]
    %v2205 = vld [vmem:[%s1692 + $0x101] sm:$0xff]
    %v2206 = vpack.c.bf16 %v2191, %v2190
    %v2207 = vpack.c.bf16 %v2193, %v2192
    %v2208 = vpack.c.bf16 %v2195, %v2194
    %v2209 = vpack.c.bf16 %v2197, %v2196
    %v2210 = vpack.c.bf16 %v2199, %v2198
    %v2211 = vpack.c.bf16 %v2201, %v2200
    %v2212 = vpack.c.bf16 %v2203, %v2202
    %v2213 = vpack.c.bf16 %v2205, %v2204
    %2214 = vst.msk [vmem:[#allocation4 + $0x28] sm:$0xff] %vm750, %v2206
    %2215 = vst.msk [vmem:[#allocation4 + $0x68] sm:$0xff] %vm750, %v2207
    %2216 = vst.msk [vmem:[#allocation4 + $0xa8] sm:$0xff] %vm750, %v2208
    %2217 = vst.msk [vmem:[#allocation4 + $0xe8] sm:$0xff] %vm750, %v2209
    %2218 = vst.msk [vmem:[#allocation4 + $0x128] sm:$0xff] %vm750, %v2210
    %2219 = vst.msk [vmem:[#allocation4 + $0x168] sm:$0xff] %vm750, %v2211
    %2220 = vst.msk [vmem:[#allocation4 + $0x1a8] sm:$0xff] %vm750, %v2212
    %2221 = vst.msk [vmem:[#allocation4 + $0x1e8] sm:$0xff] %vm750, %v2213
    %v2222 = vld [vmem:[%s1635 + $0x1] sm:$0xff]
    %v2223 = vld [vmem:[%s1635 + $0x11] sm:$0xff]
    %v2224 = vld [vmem:[%s1635 + $0x21] sm:$0xff]
    %v2225 = vld [vmem:[%s1635 + $0x31] sm:$0xff]
    %v2226 = vld [vmem:[%s1635 + $0x41] sm:$0xff]
    %v2227 = vld [vmem:[%s1635 + $0x51] sm:$0xff]
    %v2228 = vld [vmem:[%s1635 + $0x61] sm:$0xff]
    %v2229 = vld [vmem:[%s1635 + $0x71] sm:$0xff]
    %v2230 = vld [vmem:[%s1635 + $0x91] sm:$0xff]
    %v2231 = vld [vmem:[%s1635 + $0xa1] sm:$0xff]
    %v2232 = vld [vmem:[%s1635 + $0xb1] sm:$0xff]
    %v2233 = vld [vmem:[%s1635 + $0xc1] sm:$0xff]
    %v2234 = vld [vmem:[%s1635 + $0xd1] sm:$0xff]
    %v2235 = vld [vmem:[%s1635 + $0xe1] sm:$0xff]
    %v2236 = vld [vmem:[%s1635 + $0xf1] sm:$0xff]
    %v2237 = vld [vmem:[%s1635 + $0x101] sm:$0xff]
    %v2238 = vpack.c.bf16 %v2223, %v2222
    %v2239 = vpack.c.bf16 %v2225, %v2224
    %v2240 = vpack.c.bf16 %v2227, %v2226
    %v2241 = vpack.c.bf16 %v2229, %v2228
    %v2242 = vpack.c.bf16 %v2231, %v2230
    %v2243 = vpack.c.bf16 %v2233, %v2232
    %v2244 = vpack.c.bf16 %v2235, %v2234
    %v2245 = vpack.c.bf16 %v2237, %v2236
    %2254 = vrot.lane.b32.xlu0 %v2238, 64
    %v2255 = vpop.permute.xlu0 %2254
    %2256 = vrot.lane.b32.xlu0 %v2239, 64
    %v2257 = vpop.permute.xlu0 %2256
    %2258 = vrot.lane.b32.xlu0 %v2240, 64
    %v2259 = vpop.permute.xlu0 %2258
    %2260 = vrot.lane.b32.xlu0 %v2241, 64
    %v2261 = vpop.permute.xlu0 %2260
    %2262 = vrot.lane.b32.xlu0 %v2242, 64
    %v2263 = vpop.permute.xlu0 %2262
    %2264 = vrot.lane.b32.xlu0 %v2243, 64
    %v2265 = vpop.permute.xlu0 %2264
    %2266 = vrot.lane.b32.xlu0 %v2244, 64
    %v2267 = vpop.permute.xlu0 %2266
    %2268 = vrot.lane.b32.xlu0 %v2245, 64
    %v2269 = vpop.permute.xlu0 %2268
    %2278 = vst.msk [vmem:[#allocation4 + $0x28] sm:$0xff] %vm1797, %v2255
    %2279 = vst.msk [vmem:[#allocation4 + $0x68] sm:$0xff] %vm1797, %v2257
    %2280 = vst.msk [vmem:[#allocation4 + $0xa8] sm:$0xff] %vm1797, %v2259
    %2281 = vst.msk [vmem:[#allocation4 + $0xe8] sm:$0xff] %vm1797, %v2261
    %2282 = vst.msk [vmem:[#allocation4 + $0x128] sm:$0xff] %vm1797, %v2263
    %2283 = vst.msk [vmem:[#allocation4 + $0x168] sm:$0xff] %vm1797, %v2265
    %2284 = vst.msk [vmem:[#allocation4 + $0x1a8] sm:$0xff] %vm1797, %v2267
    %2285 = vst.msk [vmem:[#allocation4 + $0x1e8] sm:$0xff] %vm1797, %v2269
    %s2286 = scalar_lea.vmem [#allocation3], 304
    %v2287 = vld [vmem:[%s2286] sm:$0xff]
    %v2288 = vld [vmem:[%s2286 + $0x10] sm:$0xff]
    %v2289 = vld [vmem:[%s2286 + $0x20] sm:$0xff]
    %v2290 = vld [vmem:[%s2286 + $0x30] sm:$0xff]
    %v2291 = vld [vmem:[%s2286 + $0x40] sm:$0xff]
    %v2292 = vld [vmem:[%s2286 + $0x50] sm:$0xff]
    %v2293 = vld [vmem:[%s2286 + $0x60] sm:$0xff]
    %v2294 = vld [vmem:[%s2286 + $0x70] sm:$0xff]
    %v2295 = vld [vmem:[%s2286 + $0x90] sm:$0xff]
    %v2296 = vld [vmem:[%s2286 + $0xa0] sm:$0xff]
    %v2297 = vld [vmem:[%s2286 + $0xb0] sm:$0xff]
    %v2298 = vld [vmem:[%s2286 + $0xc0] sm:$0xff]
    %v2299 = vld [vmem:[%s2286 + $0xd0] sm:$0xff]
    %v2300 = vld [vmem:[%s2286 + $0xe0] sm:$0xff]
    %v2301 = vld [vmem:[%s2286 + $0xf0] sm:$0xff]
    %v2302 = vld [vmem:[%s2286 + $0x100] sm:$0xff]
    %v2303 = vpack.c.bf16 %v2288, %v2287
    %v2304 = vpack.c.bf16 %v2290, %v2289
    %v2305 = vpack.c.bf16 %v2292, %v2291
    %v2306 = vpack.c.bf16 %v2294, %v2293
    %v2307 = vpack.c.bf16 %v2296, %v2295
    %v2308 = vpack.c.bf16 %v2298, %v2297
    %v2309 = vpack.c.bf16 %v2300, %v2299
    %v2310 = vpack.c.bf16 %v2302, %v2301
    %2311 = vst.msk [vmem:[#allocation4 + $0x30] sm:$0xff] %vm750, %v2303
    %2312 = vst.msk [vmem:[#allocation4 + $0x70] sm:$0xff] %vm750, %v2304
    %2313 = vst.msk [vmem:[#allocation4 + $0xb0] sm:$0xff] %vm750, %v2305
    %2314 = vst.msk [vmem:[#allocation4 + $0xf0] sm:$0xff] %vm750, %v2306
    %2315 = vst.msk [vmem:[#allocation4 + $0x130] sm:$0xff] %vm750, %v2307
    %2316 = vst.msk [vmem:[#allocation4 + $0x170] sm:$0xff] %vm750, %v2308
    %2317 = vst.msk [vmem:[#allocation4 + $0x1b0] sm:$0xff] %vm750, %v2309
    %2318 = vst.msk [vmem:[#allocation4 + $0x1f0] sm:$0xff] %vm750, %v2310
    %s2319 = scalar_lea.vmem [#allocation3], 16
    %v2320 = vld [vmem:[%s2319] sm:$0xff]
    %v2321 = vld [vmem:[%s2319 + $0x10] sm:$0xff]
    %v2322 = vld [vmem:[%s2319 + $0x20] sm:$0xff]
    %v2323 = vld [vmem:[%s2319 + $0x30] sm:$0xff]
    %v2324 = vld [vmem:[%s2319 + $0x40] sm:$0xff]
    %v2325 = vld [vmem:[%s2319 + $0x50] sm:$0xff]
    %v2326 = vld [vmem:[%s2319 + $0x60] sm:$0xff]
    %v2327 = vld [vmem:[%s2319 + $0x70] sm:$0xff]
    %v2328 = vld [vmem:[%s2319 + $0x90] sm:$0xff]
    %v2329 = vld [vmem:[%s2319 + $0xa0] sm:$0xff]
    %v2330 = vld [vmem:[%s2319 + $0xb0] sm:$0xff]
    %v2331 = vld [vmem:[%s2319 + $0xc0] sm:$0xff]
    %v2332 = vld [vmem:[%s2319 + $0xd0] sm:$0xff]
    %v2333 = vld [vmem:[%s2319 + $0xe0] sm:$0xff]
    %v2334 = vld [vmem:[%s2319 + $0xf0] sm:$0xff]
    %v2335 = vld [vmem:[%s2319 + $0x100] sm:$0xff]
    %v2336 = vpack.c.bf16 %v2321, %v2320
    %v2337 = vpack.c.bf16 %v2323, %v2322
    %v2338 = vpack.c.bf16 %v2325, %v2324
    %v2339 = vpack.c.bf16 %v2327, %v2326
    %v2340 = vpack.c.bf16 %v2329, %v2328
    %v2341 = vpack.c.bf16 %v2331, %v2330
    %v2342 = vpack.c.bf16 %v2333, %v2332
    %v2343 = vpack.c.bf16 %v2335, %v2334
    %2352 = vrot.lane.b32.xlu0 %v2336, 64
    %v2353 = vpop.permute.xlu0 %2352
    %2354 = vrot.lane.b32.xlu0 %v2337, 64
    %v2355 = vpop.permute.xlu0 %2354
    %2356 = vrot.lane.b32.xlu0 %v2338, 64
    %v2357 = vpop.permute.xlu0 %2356
    %2358 = vrot.lane.b32.xlu0 %v2339, 64
    %v2359 = vpop.permute.xlu0 %2358
    %2360 = vrot.lane.b32.xlu0 %v2340, 64
    %v2361 = vpop.permute.xlu0 %2360
    %2362 = vrot.lane.b32.xlu0 %v2341, 64
    %v2363 = vpop.permute.xlu0 %2362
    %2364 = vrot.lane.b32.xlu0 %v2342, 64
    %v2365 = vpop.permute.xlu0 %2364
    %2366 = vrot.lane.b32.xlu0 %v2343, 64
    %v2367 = vpop.permute.xlu0 %2366
    %2376 = vst.msk [vmem:[#allocation4 + $0x30] sm:$0xff] %vm1797, %v2353
    %2377 = vst.msk [vmem:[#allocation4 + $0x70] sm:$0xff] %vm1797, %v2355
    %2378 = vst.msk [vmem:[#allocation4 + $0xb0] sm:$0xff] %vm1797, %v2357
    %2379 = vst.msk [vmem:[#allocation4 + $0xf0] sm:$0xff] %vm1797, %v2359
    %2380 = vst.msk [vmem:[#allocation4 + $0x130] sm:$0xff] %vm1797, %v2361
    %2381 = vst.msk [vmem:[#allocation4 + $0x170] sm:$0xff] %vm1797, %v2363
    %2382 = vst.msk [vmem:[#allocation4 + $0x1b0] sm:$0xff] %vm1797, %v2365
    %2383 = vst.msk [vmem:[#allocation4 + $0x1f0] sm:$0xff] %vm1797, %v2367
    %v2384 = vld [vmem:[%s2286 + $0x1] sm:$0xff]
    %v2385 = vld [vmem:[%s2286 + $0x11] sm:$0xff]
    %v2386 = vld [vmem:[%s2286 + $0x21] sm:$0xff]
    %v2387 = vld [vmem:[%s2286 + $0x31] sm:$0xff]
    %v2388 = vld [vmem:[%s2286 + $0x41] sm:$0xff]
    %v2389 = vld [vmem:[%s2286 + $0x51] sm:$0xff]
    %v2390 = vld [vmem:[%s2286 + $0x61] sm:$0xff]
    %v2391 = vld [vmem:[%s2286 + $0x71] sm:$0xff]
    %v2392 = vld [vmem:[%s2286 + $0x91] sm:$0xff]
    %v2393 = vld [vmem:[%s2286 + $0xa1] sm:$0xff]
    %v2394 = vld [vmem:[%s2286 + $0xb1] sm:$0xff]
    %v2395 = vld [vmem:[%s2286 + $0xc1] sm:$0xff]
    %v2396 = vld [vmem:[%s2286 + $0xd1] sm:$0xff]
    %v2397 = vld [vmem:[%s2286 + $0xe1] sm:$0xff]
    %v2398 = vld [vmem:[%s2286 + $0xf1] sm:$0xff]
    %v2399 = vld [vmem:[%s2286 + $0x101] sm:$0xff]
    %v2400 = vpack.c.bf16 %v2385, %v2384
    %v2401 = vpack.c.bf16 %v2387, %v2386
    %v2402 = vpack.c.bf16 %v2389, %v2388
    %v2403 = vpack.c.bf16 %v2391, %v2390
    %v2404 = vpack.c.bf16 %v2393, %v2392
    %v2405 = vpack.c.bf16 %v2395, %v2394
    %v2406 = vpack.c.bf16 %v2397, %v2396
    %v2407 = vpack.c.bf16 %v2399, %v2398
    %2408 = vst.msk [vmem:[#allocation4 + $0x38] sm:$0xff] %vm750, %v2400
    %2409 = vst.msk [vmem:[#allocation4 + $0x78] sm:$0xff] %vm750, %v2401
    %2410 = vst.msk [vmem:[#allocation4 + $0xb8] sm:$0xff] %vm750, %v2402
    %2411 = vst.msk [vmem:[#allocation4 + $0xf8] sm:$0xff] %vm750, %v2403
    %2412 = vst.msk [vmem:[#allocation4 + $0x138] sm:$0xff] %vm750, %v2404
    %2413 = vst.msk [vmem:[#allocation4 + $0x178] sm:$0xff] %vm750, %v2405
    %2414 = vst.msk [vmem:[#allocation4 + $0x1b8] sm:$0xff] %vm750, %v2406
    %2415 = vst.msk [vmem:[#allocation4 + $0x1f8] sm:$0xff] %vm750, %v2407
    %v2416 = vld [vmem:[%s2319 + $0x1] sm:$0xff]
    %v2417 = vld [vmem:[%s2319 + $0x11] sm:$0xff]
    %v2418 = vld [vmem:[%s2319 + $0x21] sm:$0xff]
    %v2419 = vld [vmem:[%s2319 + $0x31] sm:$0xff]
    %v2420 = vld [vmem:[%s2319 + $0x41] sm:$0xff]
    %v2421 = vld [vmem:[%s2319 + $0x51] sm:$0xff]
    %v2422 = vld [vmem:[%s2319 + $0x61] sm:$0xff]
    %v2423 = vld [vmem:[%s2319 + $0x71] sm:$0xff]
    %v2424 = vld [vmem:[%s2319 + $0x91] sm:$0xff]
    %v2425 = vld [vmem:[%s2319 + $0xa1] sm:$0xff]
    %v2426 = vld [vmem:[%s2319 + $0xb1] sm:$0xff]
    %v2427 = vld [vmem:[%s2319 + $0xc1] sm:$0xff]
    %v2428 = vld [vmem:[%s2319 + $0xd1] sm:$0xff]
    %v2429 = vld [vmem:[%s2319 + $0xe1] sm:$0xff]
    %v2430 = vld [vmem:[%s2319 + $0xf1] sm:$0xff]
    %v2431 = vld [vmem:[%s2319 + $0x101] sm:$0xff]
    %v2432 = vpack.c.bf16 %v2417, %v2416
    %v2433 = vpack.c.bf16 %v2419, %v2418
    %v2434 = vpack.c.bf16 %v2421, %v2420
    %v2435 = vpack.c.bf16 %v2423, %v2422
    %v2436 = vpack.c.bf16 %v2425, %v2424
    %v2437 = vpack.c.bf16 %v2427, %v2426
    %v2438 = vpack.c.bf16 %v2429, %v2428
    %v2439 = vpack.c.bf16 %v2431, %v2430
    %2448 = vrot.lane.b32.xlu0 %v2432, 64
    %v2449 = vpop.permute.xlu0 %2448
    %2450 = vrot.lane.b32.xlu0 %v2433, 64
    %v2451 = vpop.permute.xlu0 %2450
    %2452 = vrot.lane.b32.xlu0 %v2434, 64
    %v2453 = vpop.permute.xlu0 %2452
    %2454 = vrot.lane.b32.xlu0 %v2435, 64
    %v2455 = vpop.permute.xlu0 %2454
    %2456 = vrot.lane.b32.xlu0 %v2436, 64
    %v2457 = vpop.permute.xlu0 %2456
    %2458 = vrot.lane.b32.xlu0 %v2437, 64
    %v2459 = vpop.permute.xlu0 %2458
    %2460 = vrot.lane.b32.xlu0 %v2438, 64
    %v2461 = vpop.permute.xlu0 %2460
    %2462 = vrot.lane.b32.xlu0 %v2439, 64
    %v2463 = vpop.permute.xlu0 %2462
    %2472 = vst.msk [vmem:[#allocation4 + $0x38] sm:$0xff] %vm1797, %v2449
    %2473 = vst.msk [vmem:[#allocation4 + $0x78] sm:$0xff] %vm1797, %v2451
    %2474 = vst.msk [vmem:[#allocation4 + $0xb8] sm:$0xff] %vm1797, %v2453
    %2475 = vst.msk [vmem:[#allocation4 + $0xf8] sm:$0xff] %vm1797, %v2455
    %2476 = vst.msk [vmem:[#allocation4 + $0x138] sm:$0xff] %vm1797, %v2457
    %2477 = vst.msk [vmem:[#allocation4 + $0x178] sm:$0xff] %vm1797, %v2459
    %2478 = vst.msk [vmem:[#allocation4 + $0x1b8] sm:$0xff] %vm1797, %v2461
    %2479 = vst.msk [vmem:[#allocation4 + $0x1f8] sm:$0xff] %vm1797, %v2463
    %v2480 = vld [vmem:[#allocation4] sm:$0xff]
    %v2481 = vld [vmem:[#allocation4 + $0x8] sm:$0xff]
    %v2482 = vld [vmem:[#allocation4 + $0x10] sm:$0xff]
    %v2483 = vld [vmem:[#allocation4 + $0x18] sm:$0xff]
    %v2484 = vld [vmem:[#allocation4 + $0x20] sm:$0xff]
    %v2485 = vld [vmem:[#allocation4 + $0x28] sm:$0xff]
    %v2486 = vld [vmem:[#allocation4 + $0x30] sm:$0xff]
    %v2487 = vld [vmem:[#allocation4 + $0x38] sm:$0xff]
    %v2488 = vld [vmem:[#allocation4 + $0x40] sm:$0xff]
    %v2489 = vld [vmem:[#allocation4 + $0x48] sm:$0xff]
    %v2490 = vld [vmem:[#allocation4 + $0x50] sm:$0xff]
    %v2491 = vld [vmem:[#allocation4 + $0x58] sm:$0xff]
    %v2492 = vld [vmem:[#allocation4 + $0x60] sm:$0xff]
    %v2493 = vld [vmem:[#allocation4 + $0x68] sm:$0xff]
    %v2494 = vld [vmem:[#allocation4 + $0x70] sm:$0xff]
    %v2495 = vld [vmem:[#allocation4 + $0x78] sm:$0xff]
    %v2496 = vld [vmem:[#allocation4 + $0x80] sm:$0xff]
    %v2497 = vld [vmem:[#allocation4 + $0x88] sm:$0xff]
    %v2498 = vld [vmem:[#allocation4 + $0x90] sm:$0xff]
    %v2499 = vld [vmem:[#allocation4 + $0x98] sm:$0xff]
    %v2500 = vld [vmem:[#allocation4 + $0xa0] sm:$0xff]
    %v2501 = vld [vmem:[#allocation4 + $0xa8] sm:$0xff]
    %v2502 = vld [vmem:[#allocation4 + $0xb0] sm:$0xff]
    %v2503 = vld [vmem:[#allocation4 + $0xb8] sm:$0xff]
    %v2504 = vld [vmem:[#allocation4 + $0xc0] sm:$0xff]
    %v2505 = vld [vmem:[#allocation4 + $0xc8] sm:$0xff]
    %v2506 = vld [vmem:[#allocation4 + $0xd0] sm:$0xff]
    %v2507 = vld [vmem:[#allocation4 + $0xd8] sm:$0xff]
    %v2508 = vld [vmem:[#allocation4 + $0xe0] sm:$0xff]
    %v2509 = vld [vmem:[#allocation4 + $0xe8] sm:$0xff]
    %v2510 = vld [vmem:[#allocation4 + $0xf0] sm:$0xff]
    %v2511 = vld [vmem:[#allocation4 + $0xf8] sm:$0xff]
    %v2512 = vld [vmem:[#allocation4 + $0x100] sm:$0xff]
    %v2513 = vld [vmem:[#allocation4 + $0x108] sm:$0xff]
    %v2514 = vld [vmem:[#allocation4 + $0x110] sm:$0xff]
    %v2515 = vld [vmem:[#allocation4 + $0x118] sm:$0xff]
    %v2516 = vld [vmem:[#allocation4 + $0x120] sm:$0xff]
    %v2517 = vld [vmem:[#allocation4 + $0x128] sm:$0xff]
    %v2518 = vld [vmem:[#allocation4 + $0x130] sm:$0xff]
    %v2519 = vld [vmem:[#allocation4 + $0x138] sm:$0xff]
    %v2520 = vld [vmem:[#allocation4 + $0x140] sm:$0xff]
    %v2521 = vld [vmem:[#allocation4 + $0x148] sm:$0xff]
    %v2522 = vld [vmem:[#allocation4 + $0x150] sm:$0xff]
    %v2523 = vld [vmem:[#allocation4 + $0x158] sm:$0xff]
    %v2524 = vld [vmem:[#allocation4 + $0x160] sm:$0xff]
    %v2525 = vld [vmem:[#allocation4 + $0x168] sm:$0xff]
    %v2526 = vld [vmem:[#allocation4 + $0x170] sm:$0xff]
    %v2527 = vld [vmem:[#allocation4 + $0x178] sm:$0xff]
    %v2528 = vld [vmem:[#allocation4 + $0x180] sm:$0xff]
    %v2529 = vld [vmem:[#allocation4 + $0x188] sm:$0xff]
    %v2530 = vld [vmem:[#allocation4 + $0x190] sm:$0xff]
    %v2531 = vld [vmem:[#allocation4 + $0x198] sm:$0xff]
    %v2532 = vld [vmem:[#allocation4 + $0x1a0] sm:$0xff]
    %v2533 = vld [vmem:[#allocation4 + $0x1a8] sm:$0xff]
    %v2534 = vld [vmem:[#allocation4 + $0x1b0] sm:$0xff]
    %v2535 = vld [vmem:[#allocation4 + $0x1b8] sm:$0xff]
    %v2536 = vld [vmem:[#allocation4 + $0x1c0] sm:$0xff]
    %v2537 = vld [vmem:[#allocation4 + $0x1c8] sm:$0xff]
    %v2538 = vld [vmem:[#allocation4 + $0x1d0] sm:$0xff]
    %v2539 = vld [vmem:[#allocation4 + $0x1d8] sm:$0xff]
    %v2540 = vld [vmem:[#allocation4 + $0x1e0] sm:$0xff]
    %v2541 = vld [vmem:[#allocation4 + $0x1e8] sm:$0xff]
    %v2542 = vld [vmem:[#allocation4 + $0x1f0] sm:$0xff]
    %v2543 = vld [vmem:[#allocation4 + $0x1f8] sm:$0xff]
    %v2544 = vld [vmem:[%s2] sm:$0xf]
    %v2545 = vld [vmem:[%s2 + $0x4] sm:$0xf]
    %v2546 = vld [vmem:[%s2 + $0x8] sm:$0xf]
    %v2547 = vld [vmem:[%s2 + $0xc] sm:$0xf]
    %v2548 = vld [vmem:[%s2 + $0x10] sm:$0xf]
    %v2549 = vld [vmem:[%s2 + $0x14] sm:$0xf]
    %v2550 = vld [vmem:[%s2 + $0x18] sm:$0xf]
    %v2551 = vld [vmem:[%s2 + $0x1c] sm:$0xf]
    %v2552 = vld [vmem:[%s2 + $0x20] sm:$0xf]
    %v2553 = vld [vmem:[%s2 + $0x24] sm:$0xf]
    %v2554 = vld [vmem:[%s2 + $0x28] sm:$0xf]
    %v2555 = vld [vmem:[%s2 + $0x2c] sm:$0xf]
    %v2556 = vld [vmem:[%s2 + $0x30] sm:$0xf]
    %v2557 = vld [vmem:[%s2 + $0x34] sm:$0xf]
    %v2558 = vld [vmem:[%s2 + $0x38] sm:$0xf]
    %v2559 = vld [vmem:[%s2 + $0x3c] sm:$0xf]
    %v2560 = vld [vmem:[%s2 + $0x40] sm:$0xf]
    %v2561 = vld [vmem:[%s2 + $0x44] sm:$0xf]
    %v2562 = vld [vmem:[%s2 + $0x48] sm:$0xf]
    %v2563 = vld [vmem:[%s2 + $0x4c] sm:$0xf]
    %v2564 = vld [vmem:[%s2 + $0x50] sm:$0xf]
    %v2565 = vld [vmem:[%s2 + $0x54] sm:$0xf]
    %v2566 = vld [vmem:[%s2 + $0x58] sm:$0xf]
    %v2567 = vld [vmem:[%s2 + $0x5c] sm:$0xf]
    %v2568 = vld [vmem:[%s2 + $0x60] sm:$0xf]
    %v2569 = vld [vmem:[%s2 + $0x64] sm:$0xf]
    %v2570 = vld [vmem:[%s2 + $0x68] sm:$0xf]
    %v2571 = vld [vmem:[%s2 + $0x6c] sm:$0xf]
    %v2572 = vld [vmem:[%s2 + $0x70] sm:$0xf]
    %v2573 = vld [vmem:[%s2 + $0x74] sm:$0xf]
    %v2574 = vld [vmem:[%s2 + $0x78] sm:$0xf]
    %v2575 = vld [vmem:[%s2 + $0x7c] sm:$0xf]
    %v2576 = vld [vmem:[%s2 + $0x80] sm:$0xf]
    %v2577 = vld [vmem:[%s2 + $0x84] sm:$0xf]
    %v2578 = vld [vmem:[%s2 + $0x88] sm:$0xf]
    %v2579 = vld [vmem:[%s2 + $0x8c] sm:$0xf]
    %v2580 = vld [vmem:[%s2 + $0x90] sm:$0xf]
    %v2581 = vld [vmem:[%s2 + $0x94] sm:$0xf]
    %v2582 = vld [vmem:[%s2 + $0x98] sm:$0xf]
    %v2583 = vld [vmem:[%s2 + $0x9c] sm:$0xf]
    %v2584 = vld [vmem:[%s2 + $0xa0] sm:$0xf]
    %v2585 = vld [vmem:[%s2 + $0xa4] sm:$0xf]
    %v2586 = vld [vmem:[%s2 + $0xa8] sm:$0xf]
    %v2587 = vld [vmem:[%s2 + $0xac] sm:$0xf]
    %v2588 = vld [vmem:[%s2 + $0xb0] sm:$0xf]
    %v2589 = vld [vmem:[%s2 + $0xb4] sm:$0xf]
    %v2590 = vld [vmem:[%s2 + $0xb8] sm:$0xf]
    %v2591 = vld [vmem:[%s2 + $0xbc] sm:$0xf]
    %v2592 = vld [vmem:[%s2 + $0xc0] sm:$0xf]
    %v2593 = vld [vmem:[%s2 + $0xc4] sm:$0xf]
    %v2594 = vld [vmem:[%s2 + $0xc8] sm:$0xf]
    %v2595 = vld [vmem:[%s2 + $0xcc] sm:$0xf]
    %v2596 = vld [vmem:[%s2 + $0xd0] sm:$0xf]
    %v2597 = vld [vmem:[%s2 + $0xd4] sm:$0xf]
    %v2598 = vld [vmem:[%s2 + $0xd8] sm:$0xf]
    %v2599 = vld [vmem:[%s2 + $0xdc] sm:$0xf]
    %v2600 = vld [vmem:[%s2 + $0xe0] sm:$0xf]
    %v2601 = vld [vmem:[%s2 + $0xe4] sm:$0xf]
    %v2602 = vld [vmem:[%s2 + $0xe8] sm:$0xf]
    %v2603 = vld [vmem:[%s2 + $0xec] sm:$0xf]
    %v2604 = vld [vmem:[%s2 + $0xf0] sm:$0xf]
    %v2605 = vld [vmem:[%s2 + $0xf4] sm:$0xf]
    %v2606 = vld [vmem:[%s2 + $0xf8] sm:$0xf]
    %v2607 = vld [vmem:[%s2 + $0xfc] sm:$0xf]
    %v2608 = vld [vmem:[%s2 + $0x100] sm:$0xf]
    %v2609 = vld [vmem:[%s2 + $0x104] sm:$0xf]
    %v2610 = vld [vmem:[%s2 + $0x108] sm:$0xf]
    %v2611 = vld [vmem:[%s2 + $0x10c] sm:$0xf]
    %v2612 = vld [vmem:[%s2 + $0x110] sm:$0xf]
    %v2613 = vld [vmem:[%s2 + $0x114] sm:$0xf]
    %v2614 = vld [vmem:[%s2 + $0x118] sm:$0xf]
    %v2615 = vld [vmem:[%s2 + $0x11c] sm:$0xf]
    %v2616 = vld [vmem:[%s2 + $0x120] sm:$0xf]
    %v2617 = vld [vmem:[%s2 + $0x124] sm:$0xf]
    %v2618 = vld [vmem:[%s2 + $0x128] sm:$0xf]
    %v2619 = vld [vmem:[%s2 + $0x12c] sm:$0xf]
    %v2620 = vld [vmem:[%s2 + $0x130] sm:$0xf]
    %v2621 = vld [vmem:[%s2 + $0x134] sm:$0xf]
    %v2622 = vld [vmem:[%s2 + $0x138] sm:$0xf]
    %v2623 = vld [vmem:[%s2 + $0x13c] sm:$0xf]
    %v2624 = vld [vmem:[%s2 + $0x140] sm:$0xf]
    %v2625 = vld [vmem:[%s2 + $0x144] sm:$0xf]
    %v2626 = vld [vmem:[%s2 + $0x148] sm:$0xf]
    %v2627 = vld [vmem:[%s2 + $0x14c] sm:$0xf]
    %v2628 = vld [vmem:[%s2 + $0x150] sm:$0xf]
    %v2629 = vld [vmem:[%s2 + $0x154] sm:$0xf]
    %v2630 = vld [vmem:[%s2 + $0x158] sm:$0xf]
    %v2631 = vld [vmem:[%s2 + $0x15c] sm:$0xf]
    %v2632 = vld [vmem:[%s2 + $0x160] sm:$0xf]
    %v2633 = vld [vmem:[%s2 + $0x164] sm:$0xf]
    %v2634 = vld [vmem:[%s2 + $0x168] sm:$0xf]
    %v2635 = vld [vmem:[%s2 + $0x16c] sm:$0xf]
    %v2636 = vld [vmem:[%s2 + $0x170] sm:$0xf]
    %v2637 = vld [vmem:[%s2 + $0x174] sm:$0xf]
    %v2638 = vld [vmem:[%s2 + $0x178] sm:$0xf]
    %v2639 = vld [vmem:[%s2 + $0x17c] sm:$0xf]
    %v2640 = vld [vmem:[%s2 + $0x180] sm:$0xf]
    %v2641 = vld [vmem:[%s2 + $0x184] sm:$0xf]
    %v2642 = vld [vmem:[%s2 + $0x188] sm:$0xf]
    %v2643 = vld [vmem:[%s2 + $0x18c] sm:$0xf]
    %v2644 = vld [vmem:[%s2 + $0x190] sm:$0xf]
    %v2645 = vld [vmem:[%s2 + $0x194] sm:$0xf]
    %v2646 = vld [vmem:[%s2 + $0x198] sm:$0xf]
    %v2647 = vld [vmem:[%s2 + $0x19c] sm:$0xf]
    %v2648 = vld [vmem:[%s2 + $0x1a0] sm:$0xf]
    %v2649 = vld [vmem:[%s2 + $0x1a4] sm:$0xf]
    %v2650 = vld [vmem:[%s2 + $0x1a8] sm:$0xf]
    %v2651 = vld [vmem:[%s2 + $0x1ac] sm:$0xf]
    %v2652 = vld [vmem:[%s2 + $0x1b0] sm:$0xf]
    %v2653 = vld [vmem:[%s2 + $0x1b4] sm:$0xf]
    %v2654 = vld [vmem:[%s2 + $0x1b8] sm:$0xf]
    %v2655 = vld [vmem:[%s2 + $0x1bc] sm:$0xf]
    %v2656 = vld [vmem:[%s2 + $0x1c0] sm:$0xf]
    %v2657 = vld [vmem:[%s2 + $0x1c4] sm:$0xf]
    %v2658 = vld [vmem:[%s2 + $0x1c8] sm:$0xf]
    %v2659 = vld [vmem:[%s2 + $0x1cc] sm:$0xf]
    %v2660 = vld [vmem:[%s2 + $0x1d0] sm:$0xf]
    %v2661 = vld [vmem:[%s2 + $0x1d4] sm:$0xf]
    %v2662 = vld [vmem:[%s2 + $0x1d8] sm:$0xf]
    %v2663 = vld [vmem:[%s2 + $0x1dc] sm:$0xf]
    %v2664 = vld [vmem:[%s2 + $0x1e0] sm:$0xf]
    %v2665 = vld [vmem:[%s2 + $0x1e4] sm:$0xf]
    %v2666 = vld [vmem:[%s2 + $0x1e8] sm:$0xf]
    %v2667 = vld [vmem:[%s2 + $0x1ec] sm:$0xf]
    %v2668 = vld [vmem:[%s2 + $0x1f0] sm:$0xf]
    %v2669 = vld [vmem:[%s2 + $0x1f4] sm:$0xf]
    %v2670 = vld [vmem:[%s2 + $0x1f8] sm:$0xf]
    %v2671 = vld [vmem:[%s2 + $0x1fc] sm:$0xf]
    %v2800 = vunpack.c.l.b16 %v2544
    %v2801 = vunpack.c.l.b16 %v2545
    %v2802 = vunpack.c.l.b16 %v2546
    %v2803 = vunpack.c.l.b16 %v2547
    %v2804 = vunpack.c.l.b16 %v2548
    %v2805 = vunpack.c.l.b16 %v2549
    %v2806 = vunpack.c.l.b16 %v2550
    %v2807 = vunpack.c.l.b16 %v2551
    %v2808 = vunpack.c.l.b16 %v2552
    %v2809 = vunpack.c.l.b16 %v2553
    %v2810 = vunpack.c.l.b16 %v2554
    %v2811 = vunpack.c.l.b16 %v2555
    %v2812 = vunpack.c.l.b16 %v2556
    %v2813 = vunpack.c.l.b16 %v2557
    %v2814 = vunpack.c.l.b16 %v2558
    %v2815 = vunpack.c.l.b16 %v2559
    %v2816 = vunpack.c.l.b16 %v2560
    %v2817 = vunpack.c.l.b16 %v2561
    %v2818 = vunpack.c.l.b16 %v2562
    %v2819 = vunpack.c.l.b16 %v2563
    %v2820 = vunpack.c.l.b16 %v2564
    %v2821 = vunpack.c.l.b16 %v2565
    %v2822 = vunpack.c.l.b16 %v2566
    %v2823 = vunpack.c.l.b16 %v2567
    %v2824 = vunpack.c.l.b16 %v2568
    %v2825 = vunpack.c.l.b16 %v2569
    %v2826 = vunpack.c.l.b16 %v2570
    %v2827 = vunpack.c.l.b16 %v2571
    %v2828 = vunpack.c.l.b16 %v2572
    %v2829 = vunpack.c.l.b16 %v2573
    %v2830 = vunpack.c.l.b16 %v2574
    %v2831 = vunpack.c.l.b16 %v2575
    %v2832 = vunpack.c.l.b16 %v2576
    %v2833 = vunpack.c.l.b16 %v2577
    %v2834 = vunpack.c.l.b16 %v2578
    %v2835 = vunpack.c.l.b16 %v2579
    %v2836 = vunpack.c.l.b16 %v2580
    %v2837 = vunpack.c.l.b16 %v2581
    %v2838 = vunpack.c.l.b16 %v2582
    %v2839 = vunpack.c.l.b16 %v2583
    %v2840 = vunpack.c.l.b16 %v2584
    %v2841 = vunpack.c.l.b16 %v2585
    %v2842 = vunpack.c.l.b16 %v2586
    %v2843 = vunpack.c.l.b16 %v2587
    %v2844 = vunpack.c.l.b16 %v2588
    %v2845 = vunpack.c.l.b16 %v2589
    %v2846 = vunpack.c.l.b16 %v2590
    %v2847 = vunpack.c.l.b16 %v2591
    %v2848 = vunpack.c.l.b16 %v2592
    %v2849 = vunpack.c.l.b16 %v2593
    %v2850 = vunpack.c.l.b16 %v2594
    %v2851 = vunpack.c.l.b16 %v2595
    %v2852 = vunpack.c.l.b16 %v2596
    %v2853 = vunpack.c.l.b16 %v2597
    %v2854 = vunpack.c.l.b16 %v2598
    %v2855 = vunpack.c.l.b16 %v2599
    %v2856 = vunpack.c.l.b16 %v2600
    %v2857 = vunpack.c.l.b16 %v2601
    %v2858 = vunpack.c.l.b16 %v2602
    %v2859 = vunpack.c.l.b16 %v2603
    %v2860 = vunpack.c.l.b16 %v2604
    %v2861 = vunpack.c.l.b16 %v2605
    %v2862 = vunpack.c.l.b16 %v2606
    %v2863 = vunpack.c.l.b16 %v2607
    %v2864 = vunpack.c.l.b16 %v2608
    %v2865 = vunpack.c.l.b16 %v2609
    %v2866 = vunpack.c.l.b16 %v2610
    %v2867 = vunpack.c.l.b16 %v2611
    %v2868 = vunpack.c.l.b16 %v2612
    %v2869 = vunpack.c.l.b16 %v2613
    %v2870 = vunpack.c.l.b16 %v2614
    %v2871 = vunpack.c.l.b16 %v2615
    %v2872 = vunpack.c.l.b16 %v2616
    %v2873 = vunpack.c.l.b16 %v2617
    %v2874 = vunpack.c.l.b16 %v2618
    %v2875 = vunpack.c.l.b16 %v2619
    %v2876 = vunpack.c.l.b16 %v2620
    %v2877 = vunpack.c.l.b16 %v2621
    %v2878 = vunpack.c.l.b16 %v2622
    %v2879 = vunpack.c.l.b16 %v2623
    %v2880 = vunpack.c.l.b16 %v2624
    %v2881 = vunpack.c.l.b16 %v2625
    %v2882 = vunpack.c.l.b16 %v2626
    %v2883 = vunpack.c.l.b16 %v2627
    %v2884 = vunpack.c.l.b16 %v2628
    %v2885 = vunpack.c.l.b16 %v2629
    %v2886 = vunpack.c.l.b16 %v2630
    %v2887 = vunpack.c.l.b16 %v2631
    %v2888 = vunpack.c.l.b16 %v2632
    %v2889 = vunpack.c.l.b16 %v2633
    %v2890 = vunpack.c.l.b16 %v2634
    %v2891 = vunpack.c.l.b16 %v2635
    %v2892 = vunpack.c.l.b16 %v2636
    %v2893 = vunpack.c.l.b16 %v2637
    %v2894 = vunpack.c.l.b16 %v2638
    %v2895 = vunpack.c.l.b16 %v2639
    %v2896 = vunpack.c.l.b16 %v2640
    %v2897 = vunpack.c.l.b16 %v2641
    %v2898 = vunpack.c.l.b16 %v2642
    %v2899 = vunpack.c.l.b16 %v2643
    %v2900 = vunpack.c.l.b16 %v2644
    %v2901 = vunpack.c.l.b16 %v2645
    %v2902 = vunpack.c.l.b16 %v2646
    %v2903 = vunpack.c.l.b16 %v2647
    %v2904 = vunpack.c.l.b16 %v2648
    %v2905 = vunpack.c.l.b16 %v2649
    %v2906 = vunpack.c.l.b16 %v2650
    %v2907 = vunpack.c.l.b16 %v2651
    %v2908 = vunpack.c.l.b16 %v2652
    %v2909 = vunpack.c.l.b16 %v2653
    %v2910 = vunpack.c.l.b16 %v2654
    %v2911 = vunpack.c.l.b16 %v2655
    %v2912 = vunpack.c.l.b16 %v2656
    %v2913 = vunpack.c.l.b16 %v2657
    %v2914 = vunpack.c.l.b16 %v2658
    %v2915 = vunpack.c.l.b16 %v2659
    %v2916 = vunpack.c.l.b16 %v2660
    %v2917 = vunpack.c.l.b16 %v2661
    %v2918 = vunpack.c.l.b16 %v2662
    %v2919 = vunpack.c.l.b16 %v2663
    %v2920 = vunpack.c.l.b16 %v2664
    %v2921 = vunpack.c.l.b16 %v2665
    %v2922 = vunpack.c.l.b16 %v2666
    %v2923 = vunpack.c.l.b16 %v2667
    %v2924 = vunpack.c.l.b16 %v2668
    %v2925 = vunpack.c.l.b16 %v2669
    %v2926 = vunpack.c.l.b16 %v2670
    %v2927 = vunpack.c.l.b16 %v2671
    %v2928 = vpack.c.b16 %v2801, %v2800
    %v2929 = vpack.c.b16 %v2803, %v2802
    %v2930 = vpack.c.b16 %v2805, %v2804
    %v2931 = vpack.c.b16 %v2807, %v2806
    %v2932 = vpack.c.b16 %v2809, %v2808
    %v2933 = vpack.c.b16 %v2811, %v2810
    %v2934 = vpack.c.b16 %v2813, %v2812
    %v2935 = vpack.c.b16 %v2815, %v2814
    %v2936 = vpack.c.b16 %v2817, %v2816
    %v2937 = vpack.c.b16 %v2819, %v2818
    %v2938 = vpack.c.b16 %v2821, %v2820
    %v2939 = vpack.c.b16 %v2823, %v2822
    %v2940 = vpack.c.b16 %v2825, %v2824
    %v2941 = vpack.c.b16 %v2827, %v2826
    %v2942 = vpack.c.b16 %v2829, %v2828
    %v2943 = vpack.c.b16 %v2831, %v2830
    %v2944 = vpack.c.b16 %v2833, %v2832
    %v2945 = vpack.c.b16 %v2835, %v2834
    %v2946 = vpack.c.b16 %v2837, %v2836
    %v2947 = vpack.c.b16 %v2839, %v2838
    %v2948 = vpack.c.b16 %v2841, %v2840
    %v2949 = vpack.c.b16 %v2843, %v2842
    %v2950 = vpack.c.b16 %v2845, %v2844
    %v2951 = vpack.c.b16 %v2847, %v2846
    %v2952 = vpack.c.b16 %v2849, %v2848
    %v2953 = vpack.c.b16 %v2851, %v2850
    %v2954 = vpack.c.b16 %v2853, %v2852
    %v2955 = vpack.c.b16 %v2855, %v2854
    %v2956 = vpack.c.b16 %v2857, %v2856
    %v2957 = vpack.c.b16 %v2859, %v2858
    %v2958 = vpack.c.b16 %v2861, %v2860
    %v2959 = vpack.c.b16 %v2863, %v2862
    %v2960 = vpack.c.b16 %v2865, %v2864
    %v2961 = vpack.c.b16 %v2867, %v2866
    %v2962 = vpack.c.b16 %v2869, %v2868
    %v2963 = vpack.c.b16 %v2871, %v2870
    %v2964 = vpack.c.b16 %v2873, %v2872
    %v2965 = vpack.c.b16 %v2875, %v2874
    %v2966 = vpack.c.b16 %v2877, %v2876
    %v2967 = vpack.c.b16 %v2879, %v2878
    %v2968 = vpack.c.b16 %v2881, %v2880
    %v2969 = vpack.c.b16 %v2883, %v2882
    %v2970 = vpack.c.b16 %v2885, %v2884
    %v2971 = vpack.c.b16 %v2887, %v2886
    %v2972 = vpack.c.b16 %v2889, %v2888
    %v2973 = vpack.c.b16 %v2891, %v2890
    %v2974 = vpack.c.b16 %v2893, %v2892
    %v2975 = vpack.c.b16 %v2895, %v2894
    %v2976 = vpack.c.b16 %v2897, %v2896
    %v2977 = vpack.c.b16 %v2899, %v2898
    %v2978 = vpack.c.b16 %v2901, %v2900
    %v2979 = vpack.c.b16 %v2903, %v2902
    %v2980 = vpack.c.b16 %v2905, %v2904
    %v2981 = vpack.c.b16 %v2907, %v2906
    %v2982 = vpack.c.b16 %v2909, %v2908
    %v2983 = vpack.c.b16 %v2911, %v2910
    %v2984 = vpack.c.b16 %v2913, %v2912
    %v2985 = vpack.c.b16 %v2915, %v2914
    %v2986 = vpack.c.b16 %v2917, %v2916
    %v2987 = vpack.c.b16 %v2919, %v2918
    %v2988 = vpack.c.b16 %v2921, %v2920
    %v2989 = vpack.c.b16 %v2923, %v2922
    %v2990 = vpack.c.b16 %v2925, %v2924
    %v2991 = vpack.c.b16 %v2927, %v2926
    %3056 = vmatprep.subr.bf16.mxu0 0
    %3057 = vmatpush1.bf16.msra.mxu0 %v2928
    %3058 = vmatprep.subr.bf16.mxu0 0
    %3059 = vmatpush1.bf16.msra.mxu0 %v2929
    %3060 = vmatprep.subr.bf16.mxu0 0
    %3061 = vmatpush1.bf16.msra.mxu0 %v2930
    %3062 = vmatprep.subr.bf16.mxu0 0
    %3063 = vmatpush1.bf16.msra.mxu0 %v2931
    %3064 = vmatprep.subr.bf16.mxu0 0
    %3065 = vmatpush1.bf16.msra.mxu0 %v2932
    %3066 = vmatprep.subr.bf16.mxu0 0
    %3067 = vmatpush1.bf16.msra.mxu0 %v2933
    %3068 = vmatprep.subr.bf16.mxu0 0
    %3069 = vmatpush1.bf16.msra.mxu0 %v2934
    %3070 = vmatprep.subr.bf16.mxu0 0
    %3071 = vmatpush1.bf16.msra.mxu0 %v2935
    %3072 = vmatprep.subr.bf16.mxu0 0
    %3073 = vmatpush1.bf16.msra.mxu0 %v2936
    %3074 = vmatprep.subr.bf16.mxu0 0
    %3075 = vmatpush1.bf16.msra.mxu0 %v2937
    %3076 = vmatprep.subr.bf16.mxu0 0
    %3077 = vmatpush1.bf16.msra.mxu0 %v2938
    %3078 = vmatprep.subr.bf16.mxu0 0
    %3079 = vmatpush1.bf16.msra.mxu0 %v2939
    %3080 = vmatprep.subr.bf16.mxu0 0
    %3081 = vmatpush1.bf16.msra.mxu0 %v2940
    %3082 = vmatprep.subr.bf16.mxu0 0
    %3083 = vmatpush1.bf16.msra.mxu0 %v2941
    %3084 = vmatprep.subr.bf16.mxu0 0
    %3085 = vmatpush1.bf16.msra.mxu0 %v2942
    %3086 = vmatprep.subr.bf16.mxu0 0
    %3087 = vmatpush1.bf16.msra.mxu0 %v2943
    %3088 = vmatprep.mubr.bf16.mxu0 %v2481
    %3089 = vmatmul.mubr.bf16.gmra.mrb[0].mxu0 %v2480
    %v3090 = vpop.f32.mrb[0].mxu0
    %v3091 = vadd.f32 0.0, %v3090
    %v3092 = vpop.f32.mrb[0].mxu0
    %v3093 = vpop.f32.mrb[0].mxu0
    %v3094 = vadd.f32 0.0, %v3093
    %v3095 = vpop.f32.mrb[0].mxu0
    %3096 = vmatprep.mubr.bf16.mxu0 %v2489
    %3097 = vmatmul.mubr.bf16.gmra.mrb[0].mxu0 %v2488
    %v3098 = vpop.f32.mrb[0].mxu0
    %v3099 = vadd.f32 0.0, %v3098
    %v3100 = vpop.f32.mrb[0].mxu0
    %v3101 = vpop.f32.mrb[0].mxu0
    %v3102 = vadd.f32 0.0, %v3101
    %v3103 = vpop.f32.mrb[0].mxu0
    %3104 = vmatprep.mubr.bf16.mxu0 %v2497
    %3105 = vmatmul.mubr.bf16.gmra.mrb[0].mxu0 %v2496
    %v3106 = vpop.f32.mrb[0].mxu0
    %v3107 = vadd.f32 0.0, %v3106
    %v3108 = vpop.f32.mrb[0].mxu0
    %v3109 = vpop.f32.mrb[0].mxu0
    %v3110 = vadd.f32 0.0, %v3109
    %v3111 = vpop.f32.mrb[0].mxu0
    %3112 = vmatprep.mubr.bf16.mxu0 %v2505
    %3113 = vmatmul.mubr.bf16.gmra.mrb[0].mxu0 %v2504
    %v3114 = vpop.f32.mrb[0].mxu0
    %v3115 = vadd.f32 0.0, %v3114
    %v3116 = vpop.f32.mrb[0].mxu0
    %v3117 = vpop.f32.mrb[0].mxu0
    %v3118 = vadd.f32 0.0, %v3117
    %v3119 = vpop.f32.mrb[0].mxu0
    %3120 = vmatprep.mubr.bf16.mxu0 %v2513
    %3121 = vmatmul.mubr.bf16.gmra.mrb[0].mxu0 %v2512
    %v3122 = vpop.f32.mrb[0].mxu0
    %v3123 = vadd.f32 0.0, %v3122
    %v3124 = vpop.f32.mrb[0].mxu0
    %v3125 = vpop.f32.mrb[0].mxu0
    %v3126 = vadd.f32 0.0, %v3125
    %v3127 = vpop.f32.mrb[0].mxu0
    %3128 = vmatprep.mubr.bf16.mxu0 %v2521
    %3129 = vmatmul.mubr.bf16.gmra.mrb[0].mxu0 %v2520
    %v3130 = vpop.f32.mrb[0].mxu0
    %v3131 = vadd.f32 0.0, %v3130
    %v3132 = vpop.f32.mrb[0].mxu0
    %v3133 = vpop.f32.mrb[0].mxu0
    %v3134 = vadd.f32 0.0, %v3133
    %v3135 = vpop.f32.mrb[0].mxu0
    %3136 = vmatprep.mubr.bf16.mxu0 %v2529
    %3137 = vmatmul.mubr.bf16.gmra.mrb[0].mxu0 %v2528
    %v3138 = vpop.f32.mrb[0].mxu0
    %v3139 = vadd.f32 0.0, %v3138
    %v3140 = vpop.f32.mrb[0].mxu0
    %v3141 = vpop.f32.mrb[0].mxu0
    %v3142 = vadd.f32 0.0, %v3141
    %v3143 = vpop.f32.mrb[0].mxu0
    %3144 = vmatprep.mubr.bf16.mxu0 %v2537
    %3145 = vmatmul.mubr.bf16.gmra.mrb[0].mxu0 %v2536
    %v3146 = vpop.f32.mrb[0].mxu0
    %v3147 = vadd.f32 0.0, %v3146
    %v3148 = vpop.f32.mrb[0].mxu0
    %v3149 = vpop.f32.mrb[0].mxu0
    %v3150 = vadd.f32 0.0, %v3149
    %v3151 = vpop.f32.mrb[0].mxu0
    %3152 = vdwg.mxu0
    %3153 = vmatprep.subr.bf16.mxu0 0
    %3154 = vmatpush1.bf16.msra.mxu0 %v2944
    %3155 = vmatprep.subr.bf16.mxu0 0
    %3156 = vmatpush1.bf16.msra.mxu0 %v2945
    %3157 = vmatprep.subr.bf16.mxu0 0
    %3158 = vmatpush1.bf16.msra.mxu0 %v2946
    %3159 = vmatprep.subr.bf16.mxu0 0
    %3160 = vmatpush1.bf16.msra.mxu0 %v2947
    %3161 = vmatprep.subr.bf16.mxu0 0
    %3162 = vmatpush1.bf16.msra.mxu0 %v2948
    %3163 = vmatprep.subr.bf16.mxu0 0
    %3164 = vmatpush1.bf16.msra.mxu0 %v2949
    %3165 = vmatprep.subr.bf16.mxu0 0
    %3166 = vmatpush1.bf16.msra.mxu0 %v2950
    %3167 = vmatprep.subr.bf16.mxu0 0
    %3168 = vmatpush1.bf16.msra.mxu0 %v2951
    %3169 = vmatprep.subr.bf16.mxu0 0
    %3170 = vmatpush1.bf16.msra.mxu0 %v2952
    %3171 = vmatprep.subr.bf16.mxu0 0
    %3172 = vmatpush1.bf16.msra.mxu0 %v2953
    %3173 = vmatprep.subr.bf16.mxu0 0
    %3174 = vmatpush1.bf16.msra.mxu0 %v2954
    %3175 = vmatprep.subr.bf16.mxu0 0
    %3176 = vmatpush1.bf16.msra.mxu0 %v2955
    %3177 = vmatprep.subr.bf16.mxu0 0
    %3178 = vmatpush1.bf16.msra.mxu0 %v2956
    %3179 = vmatprep.subr.bf16.mxu0 0
    %3180 = vmatpush1.bf16.msra.mxu0 %v2957
    %3181 = vmatprep.subr.bf16.mxu0 0
    %3182 = vmatpush1.bf16.msra.mxu0 %v2958
    %3183 = vmatprep.subr.bf16.mxu0 0
    %3184 = vmatpush1.bf16.msra.mxu0 %v2959
    %3185 = vmatprep.mubr.bf16.mxu0 %v2483
    %3186 = vmatmul.mubr.bf16.gmra.mrb[0].mxu0 %v2482
    %v3187 = vpop.f32.mrb[0].mxu0
    %v3188 = vadd.f32 %v3091, %v3187
    %v3189 = vpop.f32.mrb[0].mxu0
    %v3190 = vpop.f32.mrb[0].mxu0
    %v3191 = vadd.f32 %v3094, %v3190
    %v3192 = vpop.f32.mrb[0].mxu0
    %3193 = vmatprep.mubr.bf16.mxu0 %v2491
    %3194 = vmatmul.mubr.bf16.gmra.mrb[0].mxu0 %v2490
    %v3195 = vpop.f32.mrb[0].mxu0
    %v3196 = vadd.f32 %v3099, %v3195
    %v3197 = vpop.f32.mrb[0].mxu0
    %v3198 = vpop.f32.mrb[0].mxu0
    %v3199 = vadd.f32 %v3102, %v3198
    %v3200 = vpop.f32.mrb[0].mxu0
    %3201 = vmatprep.mubr.bf16.mxu0 %v2499
    %3202 = vmatmul.mubr.bf16.gmra.mrb[0].mxu0 %v2498
    %v3203 = vpop.f32.mrb[0].mxu0
    %v3204 = vadd.f32 %v3107, %v3203
    %v3205 = vpop.f32.mrb[0].mxu0
    %v3206 = vpop.f32.mrb[0].mxu0
    %v3207 = vadd.f32 %v3110, %v3206
    %v3208 = vpop.f32.mrb[0].mxu0
    %3209 = vmatprep.mubr.bf16.mxu0 %v2507
    %3210 = vmatmul.mubr.bf16.gmra.mrb[0].mxu0 %v2506
    %v3211 = vpop.f32.mrb[0].mxu0
    %v3212 = vadd.f32 %v3115, %v3211
    %v3213 = vpop.f32.mrb[0].mxu0
    %v3214 = vpop.f32.mrb[0].mxu0
    %v3215 = vadd.f32 %v3118, %v3214
    %v3216 = vpop.f32.mrb[0].mxu0
    %3217 = vmatprep.mubr.bf16.mxu0 %v2515
    %3218 = vmatmul.mubr.bf16.gmra.mrb[0].mxu0 %v2514
    %v3219 = vpop.f32.mrb[0].mxu0
    %v3220 = vadd.f32 %v3123, %v3219
    %v3221 = vpop.f32.mrb[0].mxu0
    %v3222 = vpop.f32.mrb[0].mxu0
    %v3223 = vadd.f32 %v3126, %v3222
    %v3224 = vpop.f32.mrb[0].mxu0
    %3225 = vmatprep.mubr.bf16.mxu0 %v2523
    %3226 = vmatmul.mubr.bf16.gmra.mrb[0].mxu0 %v2522
    %v3227 = vpop.f32.mrb[0].mxu0
    %v3228 = vadd.f32 %v3131, %v3227
    %v3229 = vpop.f32.mrb[0].mxu0
    %v3230 = vpop.f32.mrb[0].mxu0
    %v3231 = vadd.f32 %v3134, %v3230
    %v3232 = vpop.f32.mrb[0].mxu0
    %3233 = vmatprep.mubr.bf16.mxu0 %v2531
    %3234 = vmatmul.mubr.bf16.gmra.mrb[0].mxu0 %v2530
    %v3235 = vpop.f32.mrb[0].mxu0
    %v3236 = vadd.f32 %v3139, %v3235
    %v3237 = vpop.f32.mrb[0].mxu0
    %v3238 = vpop.f32.mrb[0].mxu0
    %v3239 = vadd.f32 %v3142, %v3238
    %v3240 = vpop.f32.mrb[0].mxu0
    %3241 = vmatprep.mubr.bf16.mxu0 %v2539
    %3242 = vmatmul.mubr.bf16.gmra.mrb[0].mxu0 %v2538
    %v3243 = vpop.f32.mrb[0].mxu0
    %v3244 = vadd.f32 %v3147, %v3243
    %v3245 = vpop.f32.mrb[0].mxu0
    %v3246 = vpop.f32.mrb[0].mxu0
    %v3247 = vadd.f32 %v3150, %v3246
    %v3248 = vpop.f32.mrb[0].mxu0
    %3249 = vdwg.mxu0
    %3250 = vmatprep.subr.bf16.mxu0 0
    %3251 = vmatpush1.bf16.msra.mxu0 %v2960
    %3252 = vmatprep.subr.bf16.mxu0 0
    %3253 = vmatpush1.bf16.msra.mxu0 %v2961
    %3254 = vmatprep.subr.bf16.mxu0 0
    %3255 = vmatpush1.bf16.msra.mxu0 %v2962
    %3256 = vmatprep.subr.bf16.mxu0 0
    %3257 = vmatpush1.bf16.msra.mxu0 %v2963
    %3258 = vmatprep.subr.bf16.mxu0 0
    %3259 = vmatpush1.bf16.msra.mxu0 %v2964
    %3260 = vmatprep.subr.bf16.mxu0 0
    %3261 = vmatpush1.bf16.msra.mxu0 %v2965
    %3262 = vmatprep.subr.bf16.mxu0 0
    %3263 = vmatpush1.bf16.msra.mxu0 %v2966
    %3264 = vmatprep.subr.bf16.mxu0 0
    %3265 = vmatpush1.bf16.msra.mxu0 %v2967
    %3266 = vmatprep.subr.bf16.mxu0 0
    %3267 = vmatpush1.bf16.msra.mxu0 %v2968
    %3268 = vmatprep.subr.bf16.mxu0 0
    %3269 = vmatpush1.bf16.msra.mxu0 %v2969
    %3270 = vmatprep.subr.bf16.mxu0 0
    %3271 = vmatpush1.bf16.msra.mxu0 %v2970
    %3272 = vmatprep.subr.bf16.mxu0 0
    %3273 = vmatpush1.bf16.msra.mxu0 %v2971
    %3274 = vmatprep.subr.bf16.mxu0 0
    %3275 = vmatpush1.bf16.msra.mxu0 %v2972
    %3276 = vmatprep.subr.bf16.mxu0 0
    %3277 = vmatpush1.bf16.msra.mxu0 %v2973
    %3278 = vmatprep.subr.bf16.mxu0 0
    %3279 = vmatpush1.bf16.msra.mxu0 %v2974
    %3280 = vmatprep.subr.bf16.mxu0 0
    %3281 = vmatpush1.bf16.msra.mxu0 %v2975
    %3282 = vmatprep.mubr.bf16.mxu0 %v2485
    %3283 = vmatmul.mubr.bf16.gmra.mrb[0].mxu0 %v2484
    %v3284 = vpop.f32.mrb[0].mxu0
    %v3285 = vadd.f32 %v3188, %v3284
    %v3286 = vpop.f32.mrb[0].mxu0
    %v3287 = vpop.f32.mrb[0].mxu0
    %v3288 = vadd.f32 %v3191, %v3287
    %v3289 = vpop.f32.mrb[0].mxu0
    %3290 = vmatprep.mubr.bf16.mxu0 %v2493
    %3291 = vmatmul.mubr.bf16.gmra.mrb[0].mxu0 %v2492
    %v3292 = vpop.f32.mrb[0].mxu0
    %v3293 = vadd.f32 %v3196, %v3292
    %v3294 = vpop.f32.mrb[0].mxu0
    %v3295 = vpop.f32.mrb[0].mxu0
    %v3296 = vadd.f32 %v3199, %v3295
    %v3297 = vpop.f32.mrb[0].mxu0
    %3298 = vmatprep.mubr.bf16.mxu0 %v2501
    %3299 = vmatmul.mubr.bf16.gmra.mrb[0].mxu0 %v2500
    %v3300 = vpop.f32.mrb[0].mxu0
    %v3301 = vadd.f32 %v3204, %v3300
    %v3302 = vpop.f32.mrb[0].mxu0
    %v3303 = vpop.f32.mrb[0].mxu0
    %v3304 = vadd.f32 %v3207, %v3303
    %v3305 = vpop.f32.mrb[0].mxu0
    %3306 = vmatprep.mubr.bf16.mxu0 %v2509
    %3307 = vmatmul.mubr.bf16.gmra.mrb[0].mxu0 %v2508
    %v3308 = vpop.f32.mrb[0].mxu0
    %v3309 = vadd.f32 %v3212, %v3308
    %v3310 = vpop.f32.mrb[0].mxu0
    %v3311 = vpop.f32.mrb[0].mxu0
    %v3312 = vadd.f32 %v3215, %v3311
    %v3313 = vpop.f32.mrb[0].mxu0
    %3314 = vmatprep.mubr.bf16.mxu0 %v2517
    %3315 = vmatmul.mubr.bf16.gmra.mrb[0].mxu0 %v2516
    %v3316 = vpop.f32.mrb[0].mxu0
    %v3317 = vadd.f32 %v3220, %v3316
    %v3318 = vpop.f32.mrb[0].mxu0
    %v3319 = vpop.f32.mrb[0].mxu0
    %v3320 = vadd.f32 %v3223, %v3319
    %v3321 = vpop.f32.mrb[0].mxu0
    %3322 = vmatprep.mubr.bf16.mxu0 %v2525
    %3323 = vmatmul.mubr.bf16.gmra.mrb[0].mxu0 %v2524
    %v3324 = vpop.f32.mrb[0].mxu0
    %v3325 = vadd.f32 %v3228, %v3324
    %v3326 = vpop.f32.mrb[0].mxu0
    %v3327 = vpop.f32.mrb[0].mxu0
    %v3328 = vadd.f32 %v3231, %v3327
    %v3329 = vpop.f32.mrb[0].mxu0
    %3330 = vmatprep.mubr.bf16.mxu0 %v2533
    %3331 = vmatmul.mubr.bf16.gmra.mrb[0].mxu0 %v2532
    %v3332 = vpop.f32.mrb[0].mxu0
    %v3333 = vadd.f32 %v3236, %v3332
    %v3334 = vpop.f32.mrb[0].mxu0
    %v3335 = vpop.f32.mrb[0].mxu0
    %v3336 = vadd.f32 %v3239, %v3335
    %v3337 = vpop.f32.mrb[0].mxu0
    %3338 = vmatprep.mubr.bf16.mxu0 %v2541
    %3339 = vmatmul.mubr.bf16.gmra.mrb[0].mxu0 %v2540
    %v3340 = vpop.f32.mrb[0].mxu0
    %v3341 = vadd.f32 %v3244, %v3340
    %v3342 = vpop.f32.mrb[0].mxu0
    %v3343 = vpop.f32.mrb[0].mxu0
    %v3344 = vadd.f32 %v3247, %v3343
    %v3345 = vpop.f32.mrb[0].mxu0
    %3346 = vdwg.mxu0
    %3347 = vmatprep.subr.bf16.mxu0 0
    %3348 = vmatpush1.bf16.msra.mxu0 %v2976
    %3349 = vmatprep.subr.bf16.mxu0 0
    %3350 = vmatpush1.bf16.msra.mxu0 %v2977
    %3351 = vmatprep.subr.bf16.mxu0 0
    %3352 = vmatpush1.bf16.msra.mxu0 %v2978
    %3353 = vmatprep.subr.bf16.mxu0 0
    %3354 = vmatpush1.bf16.msra.mxu0 %v2979
    %3355 = vmatprep.subr.bf16.mxu0 0
    %3356 = vmatpush1.bf16.msra.mxu0 %v2980
    %3357 = vmatprep.subr.bf16.mxu0 0
    %3358 = vmatpush1.bf16.msra.mxu0 %v2981
    %3359 = vmatprep.subr.bf16.mxu0 0
    %3360 = vmatpush1.bf16.msra.mxu0 %v2982
    %3361 = vmatprep.subr.bf16.mxu0 0
    %3362 = vmatpush1.bf16.msra.mxu0 %v2983
    %3363 = vmatprep.subr.bf16.mxu0 0
    %3364 = vmatpush1.bf16.msra.mxu0 %v2984
    %3365 = vmatprep.subr.bf16.mxu0 0
    %3366 = vmatpush1.bf16.msra.mxu0 %v2985
    %3367 = vmatprep.subr.bf16.mxu0 0
    %3368 = vmatpush1.bf16.msra.mxu0 %v2986
    %3369 = vmatprep.subr.bf16.mxu0 0
    %3370 = vmatpush1.bf16.msra.mxu0 %v2987
    %3371 = vmatprep.subr.bf16.mxu0 0
    %3372 = vmatpush1.bf16.msra.mxu0 %v2988
    %3373 = vmatprep.subr.bf16.mxu0 0
    %3374 = vmatpush1.bf16.msra.mxu0 %v2989
    %3375 = vmatprep.subr.bf16.mxu0 0
    %3376 = vmatpush1.bf16.msra.mxu0 %v2990
    %3377 = vmatprep.subr.bf16.mxu0 0
    %3378 = vmatpush1.bf16.msra.mxu0 %v2991
    %3379 = vmatprep.mubr.bf16.mxu0 %v2487
    %3380 = vmatmul.mubr.bf16.gmra.mrb[0].mxu0 %v2486
    %v3381 = vpop.f32.mrb[0].mxu0
    %v3382 = vadd.f32 %v3285, %v3381
    %v3383 = vpop.f32.mrb[0].mxu0
    %v3384 = vpop.f32.mrb[0].mxu0
    %v3385 = vadd.f32 %v3288, %v3384
    %v3386 = vpop.f32.mrb[0].mxu0
    %3387 = vmatprep.mubr.bf16.mxu0 %v2495
    %3388 = vmatmul.mubr.bf16.gmra.mrb[0].mxu0 %v2494
    %v3389 = vpop.f32.mrb[0].mxu0
    %v3390 = vadd.f32 %v3293, %v3389
    %v3391 = vpop.f32.mrb[0].mxu0
    %v3392 = vpop.f32.mrb[0].mxu0
    %v3393 = vadd.f32 %v3296, %v3392
    %v3394 = vpop.f32.mrb[0].mxu0
    %3395 = vmatprep.mubr.bf16.mxu0 %v2503
    %3396 = vmatmul.mubr.bf16.gmra.mrb[0].mxu0 %v2502
    %v3397 = vpop.f32.mrb[0].mxu0
    %v3398 = vadd.f32 %v3301, %v3397
    %v3399 = vpop.f32.mrb[0].mxu0
    %v3400 = vpop.f32.mrb[0].mxu0
    %v3401 = vadd.f32 %v3304, %v3400
    %v3402 = vpop.f32.mrb[0].mxu0
    %3403 = vmatprep.mubr.bf16.mxu0 %v2511
    %3404 = vmatmul.mubr.bf16.gmra.mrb[0].mxu0 %v2510
    %v3405 = vpop.f32.mrb[0].mxu0
    %v3406 = vadd.f32 %v3309, %v3405
    %v3407 = vpop.f32.mrb[0].mxu0
    %v3408 = vpop.f32.mrb[0].mxu0
    %v3409 = vadd.f32 %v3312, %v3408
    %v3410 = vpop.f32.mrb[0].mxu0
    %3411 = vmatprep.mubr.bf16.mxu0 %v2519
    %3412 = vmatmul.mubr.bf16.gmra.mrb[0].mxu0 %v2518
    %v3413 = vpop.f32.mrb[0].mxu0
    %v3414 = vadd.f32 %v3317, %v3413
    %v3415 = vpop.f32.mrb[0].mxu0
    %v3416 = vpop.f32.mrb[0].mxu0
    %v3417 = vadd.f32 %v3320, %v3416
    %v3418 = vpop.f32.mrb[0].mxu0
    %3419 = vmatprep.mubr.bf16.mxu0 %v2527
    %3420 = vmatmul.mubr.bf16.gmra.mrb[0].mxu0 %v2526
    %v3421 = vpop.f32.mrb[0].mxu0
    %v3422 = vadd.f32 %v3325, %v3421
    %v3423 = vpop.f32.mrb[0].mxu0
    %v3424 = vpop.f32.mrb[0].mxu0
    %v3425 = vadd.f32 %v3328, %v3424
    %v3426 = vpop.f32.mrb[0].mxu0
    %3427 = vmatprep.mubr.bf16.mxu0 %v2535
    %3428 = vmatmul.mubr.bf16.gmra.mrb[0].mxu0 %v2534
    %v3429 = vpop.f32.mrb[0].mxu0
    %v3430 = vadd.f32 %v3333, %v3429
    %v3431 = vpop.f32.mrb[0].mxu0
    %v3432 = vpop.f32.mrb[0].mxu0
    %v3433 = vadd.f32 %v3336, %v3432
    %v3434 = vpop.f32.mrb[0].mxu0
    %3435 = vmatprep.mubr.bf16.mxu0 %v2543
    %3436 = vmatmul.mubr.bf16.gmra.mrb[0].mxu0 %v2542
    %v3437 = vpop.f32.mrb[0].mxu0
    %v3438 = vadd.f32 %v3341, %v3437
    %v3439 = vpop.f32.mrb[0].mxu0
    %v3440 = vpop.f32.mrb[0].mxu0
    %v3441 = vadd.f32 %v3344, %v3440
    %v3442 = vpop.f32.mrb[0].mxu0
    %3443 = vdwg.mxu0
    %v3444 = vld [vmem:[%s6] sm:$0x1]
    %v3445 = vld [vmem:[%s7] sm:$0x1]
    %v3446 = vadd.f32 %v3382, %v3385
    %v3447 = vadd.f32 %v3446, %v3390
    %v3448 = vadd.f32 %v3447, %v3393
    %v3449 = vadd.f32 %v3448, %v3398
    %v3450 = vadd.f32 %v3449, %v3401
    %v3451 = vadd.f32 %v3450, %v3406
    %v3452 = vadd.f32 %v3451, %v3409
    %v3453 = vadd.f32 %v3452, %v3414
    %v3454 = vadd.f32 %v3453, %v3417
    %v3455 = vadd.f32 %v3454, %v3422
    %v3456 = vadd.f32 %v3455, %v3425
    %v3457 = vadd.f32 %v3456, %v3430
    %v3458 = vadd.f32 %v3457, %v3433
    %v3459 = vadd.f32 %v3458, %v3438
    %v3460 = vadd.f32 %v3459, %v3441
    %v3461 = vrot.slane %v3460, 4
    %v3462 = vadd.f32 %v3460, %v3461
    %v3463 = vrot.slane %v3462, 2
    %v3464 = vadd.f32 %v3462, %v3463
    %v3465 = vrot.slane %v3464, 1
    %v3466 = vadd.f32 %v3464, %v3465
    %v3467 = vmul.f32 %v3466, 0.0078125
    %v3468 = vsub.f32 %v3382, %v3467
    %v3469 = vsub.f32 %v3385, %v3467
    %v3470 = vsub.f32 %v3390, %v3467
    %v3471 = vsub.f32 %v3393, %v3467
    %v3472 = vsub.f32 %v3398, %v3467
    %v3473 = vsub.f32 %v3401, %v3467
    %v3474 = vsub.f32 %v3406, %v3467
    %v3475 = vsub.f32 %v3409, %v3467
    %v3476 = vsub.f32 %v3414, %v3467
    %v3477 = vsub.f32 %v3417, %v3467
    %v3478 = vsub.f32 %v3422, %v3467
    %v3479 = vsub.f32 %v3425, %v3467
    %v3480 = vsub.f32 %v3430, %v3467
    %v3481 = vsub.f32 %v3433, %v3467
    %v3482 = vsub.f32 %v3438, %v3467
    %v3483 = vsub.f32 %v3441, %v3467
    %v3484 = vmul.f32 %v3468, %v3468
    %v3485 = vmul.f32 %v3469, %v3469
    %v3486 = vmul.f32 %v3470, %v3470
    %v3487 = vmul.f32 %v3471, %v3471
    %v3488 = vmul.f32 %v3472, %v3472
    %v3489 = vmul.f32 %v3473, %v3473
    %v3490 = vmul.f32 %v3474, %v3474
    %v3491 = vmul.f32 %v3475, %v3475
    %v3492 = vmul.f32 %v3476, %v3476
    %v3493 = vmul.f32 %v3477, %v3477
    %v3494 = vmul.f32 %v3478, %v3478
    %v3495 = vmul.f32 %v3479, %v3479
    %v3496 = vmul.f32 %v3480, %v3480
    %v3497 = vmul.f32 %v3481, %v3481
    %v3498 = vmul.f32 %v3482, %v3482
    %v3499 = vmul.f32 %v3483, %v3483
    %v3500 = vadd.f32 %v3484, %v3485
    %v3501 = vadd.f32 %v3500, %v3486
    %v3502 = vadd.f32 %v3501, %v3487
    %v3503 = vadd.f32 %v3502, %v3488
    %v3504 = vadd.f32 %v3503, %v3489
    %v3505 = vadd.f32 %v3504, %v3490
    %v3506 = vadd.f32 %v3505, %v3491
    %v3507 = vadd.f32 %v3506, %v3492
    %v3508 = vadd.f32 %v3507, %v3493
    %v3509 = vadd.f32 %v3508, %v3494
    %v3510 = vadd.f32 %v3509, %v3495
    %v3511 = vadd.f32 %v3510, %v3496
    %v3512 = vadd.f32 %v3511, %v3497
    %v3513 = vadd.f32 %v3512, %v3498
    %v3514 = vadd.f32 %v3513, %v3499
    %v3515 = vrot.slane %v3514, 4
    %v3516 = vadd.f32 %v3514, %v3515
    %v3517 = vrot.slane %v3516, 2
    %v3518 = vadd.f32 %v3516, %v3517
    %v3519 = vrot.slane %v3518, 1
    %v3520 = vadd.f32 %v3518, %v3519
    %v3521 = vmul.f32 %v3520, 0.0078125
    %v3522 = vadd.f32 %v3521, 1e-05
    %v3523 = vrsqrt.pop %v3522
    %v3524 = vmul.f32 %v3444, %v3523
    %v3526 = vlaneseq
    %v3527 = vshrl.u32 %v3526, 7
    %v3528 = vsub.s32 0, %v3527
    %v3529 = vrot.slane %v3524, %v3528
    %v3531 = vmul.f32 %v3468, %v3529
    %v3532 = vmul.f32 %v3469, %v3529
    %v3533 = vmul.f32 %v3470, %v3529
    %v3534 = vmul.f32 %v3471, %v3529
    %v3535 = vmul.f32 %v3472, %v3529
    %v3536 = vmul.f32 %v3473, %v3529
    %v3537 = vmul.f32 %v3474, %v3529
    %v3538 = vmul.f32 %v3475, %v3529
    %v3539 = vmul.f32 %v3476, %v3529
    %v3540 = vmul.f32 %v3477, %v3529
    %v3541 = vmul.f32 %v3478, %v3529
    %v3542 = vmul.f32 %v3479, %v3529
    %v3543 = vmul.f32 %v3480, %v3529
    %v3544 = vmul.f32 %v3481, %v3529
    %v3545 = vmul.f32 %v3482, %v3529
    %v3546 = vmul.f32 %v3483, %v3529
    %v3548 = vlaneseq
    %v3549 = vshrl.u32 %v3548, 7
    %v3550 = vsub.s32 0, %v3549
    %v3551 = vrot.slane %v3445, %v3550
    %v3553 = vadd.f32 %v3531, %v3551
    %v3554 = vadd.f32 %v3532, %v3551
    %v3555 = vadd.f32 %v3533, %v3551
    %v3556 = vadd.f32 %v3534, %v3551
    %v3557 = vadd.f32 %v3535, %v3551
    %v3558 = vadd.f32 %v3536, %v3551
    %v3559 = vadd.f32 %v3537, %v3551
    %v3560 = vadd.f32 %v3538, %v3551
    %v3561 = vadd.f32 %v3539, %v3551
    %v3562 = vadd.f32 %v3540, %v3551
    %v3563 = vadd.f32 %v3541, %v3551
    %v3564 = vadd.f32 %v3542, %v3551
    %v3565 = vadd.f32 %v3543, %v3551
    %v3566 = vadd.f32 %v3544, %v3551
    %v3567 = vadd.f32 %v3545, %v3551
    %v3568 = vadd.f32 %v3546, %v3551
    %vm3569 = vcmp.gt.f32.partialorder %v3553, 0.0
    %vm3570 = vcmp.gt.f32.partialorder %v3554, 0.0
    %vm3571 = vcmp.gt.f32.partialorder %v3555, 0.0
    %vm3572 = vcmp.gt.f32.partialorder %v3556, 0.0
    %vm3573 = vcmp.gt.f32.partialorder %v3557, 0.0
    %vm3574 = vcmp.gt.f32.partialorder %v3558, 0.0
    %vm3575 = vcmp.gt.f32.partialorder %v3559, 0.0
    %vm3576 = vcmp.gt.f32.partialorder %v3560, 0.0
    %vm3577 = vcmp.gt.f32.partialorder %v3561, 0.0
    %vm3578 = vcmp.gt.f32.partialorder %v3562, 0.0
    %vm3579 = vcmp.gt.f32.partialorder %v3563, 0.0
    %vm3580 = vcmp.gt.f32.partialorder %v3564, 0.0
    %vm3581 = vcmp.gt.f32.partialorder %v3565, 0.0
    %vm3582 = vcmp.gt.f32.partialorder %v3566, 0.0
    %vm3583 = vcmp.gt.f32.partialorder %v3567, 0.0
    %vm3584 = vcmp.gt.f32.partialorder %v3568, 0.0
    %v3585 = vmul.f32 %v3553, 0.2
    %v3586 = vmul.f32 %v3554, 0.2
    %v3587 = vmul.f32 %v3555, 0.2
    %v3588 = vmul.f32 %v3556, 0.2
    %v3589 = vmul.f32 %v3557, 0.2
    %v3590 = vmul.f32 %v3558, 0.2
    %v3591 = vmul.f32 %v3559, 0.2
    %v3592 = vmul.f32 %v3560, 0.2
    %v3593 = vmul.f32 %v3561, 0.2
    %v3594 = vmul.f32 %v3562, 0.2
    %v3595 = vmul.f32 %v3563, 0.2
    %v3596 = vmul.f32 %v3564, 0.2
    %v3597 = vmul.f32 %v3565, 0.2
    %v3598 = vmul.f32 %v3566, 0.2
    %v3599 = vmul.f32 %v3567, 0.2
    %v3600 = vmul.f32 %v3568, 0.2
    %v3601 = vsel %vm3569, %v3553, %v3585
    %v3602 = vsel %vm3570, %v3554, %v3586
    %v3603 = vsel %vm3571, %v3555, %v3587
    %v3604 = vsel %vm3572, %v3556, %v3588
    %v3605 = vsel %vm3573, %v3557, %v3589
    %v3606 = vsel %vm3574, %v3558, %v3590
    %v3607 = vsel %vm3575, %v3559, %v3591
    %v3608 = vsel %vm3576, %v3560, %v3592
    %v3609 = vsel %vm3577, %v3561, %v3593
    %v3610 = vsel %vm3578, %v3562, %v3594
    %v3611 = vsel %vm3579, %v3563, %v3595
    %v3612 = vsel %vm3580, %v3564, %v3596
    %v3613 = vsel %vm3581, %v3565, %v3597
    %v3614 = vsel %vm3582, %v3566, %v3598
    %v3615 = vsel %vm3583, %v3567, %v3599
    %v3616 = vsel %vm3584, %v3568, %v3600
    %3617 = vst [vmem:[#allocation7] sm:$0xff] %v3601
    %3618 = vst [vmem:[#allocation7 + $0x8] sm:$0xff] %v3602
    %3619 = vst [vmem:[#allocation7 + $0x10] sm:$0xff] %v3603
    %3620 = vst [vmem:[#allocation7 + $0x18] sm:$0xff] %v3604
    %3621 = vst [vmem:[#allocation7 + $0x20] sm:$0xff] %v3605
    %3622 = vst [vmem:[#allocation7 + $0x28] sm:$0xff] %v3606
    %3623 = vst [vmem:[#allocation7 + $0x30] sm:$0xff] %v3607
    %3624 = vst [vmem:[#allocation7 + $0x38] sm:$0xff] %v3608
    %3625 = vst [vmem:[#allocation7 + $0x40] sm:$0xff] %v3609
    %3626 = vst [vmem:[#allocation7 + $0x48] sm:$0xff] %v3610
    %3627 = vst [vmem:[#allocation7 + $0x50] sm:$0xff] %v3611
    %3628 = vst [vmem:[#allocation7 + $0x58] sm:$0xff] %v3612
    %3629 = vst [vmem:[#allocation7 + $0x60] sm:$0xff] %v3613
    %3630 = vst [vmem:[#allocation7 + $0x68] sm:$0xff] %v3614
    %3631 = vst [vmem:[#allocation7 + $0x70] sm:$0xff] %v3615
    %3632 = vst [vmem:[#allocation7 + $0x78] sm:$0xff] %v3616
    %3633 = vst [vmem:[#allocation5] sm:$0xff] 0.0
    %3634 = vst [vmem:[#allocation5 + $0x8] sm:$0x3] 0.0
    %3635 = vst [vmem:[#allocation5 + $0xa0] sm:$0xff] 0.0
    %3636 = vst [vmem:[#allocation5 + $0xa8] sm:$0x3] 0.0
    %s3637 = scalar_lea.vmem [#allocation5], 144
    %3638 = vst [vmem:[%s3637] sm:$0xff] 0.0
    %3639 = vst [vmem:[%s3637 + $0x8] sm:$0x3] 0.0
    %3640 = vst [vmem:[%s3637 + $0xa0] sm:$0xff] 0.0
    %3641 = vst [vmem:[%s3637 + $0xa8] sm:$0x3] 0.0
    %3642 = vst [vmem:[#allocation5] sm:$0x1] 0.0
    %3643 = vst [vmem:[#allocation5 + $0x10] sm:$0x1] 0.0
    %3644 = vst [vmem:[#allocation5 + $0x20] sm:$0x1] 0.0
    %3645 = vst [vmem:[#allocation5 + $0x30] sm:$0x1] 0.0
    %3646 = vst [vmem:[#allocation5 + $0x40] sm:$0x1] 0.0
    %3647 = vst [vmem:[#allocation5 + $0x50] sm:$0x1] 0.0
    %3648 = vst [vmem:[#allocation5 + $0x60] sm:$0x1] 0.0
    %3649 = vst [vmem:[#allocation5 + $0x70] sm:$0x1] 0.0
    %3650 = vst [vmem:[#allocation5 + $0x80] sm:$0x1] 0.0
    %3651 = vst [vmem:[#allocation5 + $0x90] sm:$0x1] 0.0
    %3652 = vst [vmem:[#allocation5 + $0xa0] sm:$0x1] 0.0
    %3653 = vst [vmem:[#allocation5 + $0xb0] sm:$0x1] 0.0
    %3654 = vst [vmem:[#allocation5 + $0xc0] sm:$0x1] 0.0
    %3655 = vst [vmem:[#allocation5 + $0xd0] sm:$0x1] 0.0
    %3656 = vst [vmem:[#allocation5 + $0xe0] sm:$0x1] 0.0
    %3657 = vst [vmem:[#allocation5 + $0xf0] sm:$0x1] 0.0
    %3658 = vst [vmem:[#allocation5 + $0x100] sm:$0x1] 0.0
    %3659 = vst [vmem:[#allocation5 + $0x110] sm:$0x1] 0.0
    %3660 = vst [vmem:[#allocation5 + $0x120] sm:$0x1] 0.0
    %3661 = vst [vmem:[#allocation5 + $0x130] sm:$0x1] 0.0
    %3662 = vst [vmem:[#allocation5 + $0x9] sm:$0x1] 0.0
    %3663 = vst [vmem:[#allocation5 + $0x19] sm:$0x1] 0.0
    %3664 = vst [vmem:[#allocation5 + $0x29] sm:$0x1] 0.0
    %3665 = vst [vmem:[#allocation5 + $0x39] sm:$0x1] 0.0
    %3666 = vst [vmem:[#allocation5 + $0x49] sm:$0x1] 0.0
    %3667 = vst [vmem:[#allocation5 + $0x59] sm:$0x1] 0.0
    %3668 = vst [vmem:[#allocation5 + $0x69] sm:$0x1] 0.0
    %3669 = vst [vmem:[#allocation5 + $0x79] sm:$0x1] 0.0
    %3670 = vst [vmem:[#allocation5 + $0x89] sm:$0x1] 0.0
    %3671 = vst [vmem:[#allocation5 + $0x99] sm:$0x1] 0.0
    %3672 = vst [vmem:[#allocation5 + $0xa9] sm:$0x1] 0.0
    %3673 = vst [vmem:[#allocation5 + $0xb9] sm:$0x1] 0.0
    %3674 = vst [vmem:[#allocation5 + $0xc9] sm:$0x1] 0.0
    %3675 = vst [vmem:[#allocation5 + $0xd9] sm:$0x1] 0.0
    %3676 = vst [vmem:[#allocation5 + $0xe9] sm:$0x1] 0.0
    %3677 = vst [vmem:[#allocation5 + $0xf9] sm:$0x1] 0.0
    %3678 = vst [vmem:[#allocation5 + $0x109] sm:$0x1] 0.0
    %3679 = vst [vmem:[#allocation5 + $0x119] sm:$0x1] 0.0
    %3680 = vst [vmem:[#allocation5 + $0x129] sm:$0x1] 0.0
    %3681 = vst [vmem:[#allocation5 + $0x139] sm:$0x1] 0.0
    %s3682 = scalar_lea.vmem [#allocation5], 16
    %3683 = vst [vmem:[%s3682 + $0x1] sm:$0xff] %v3601
    %3684 = vst [vmem:[%s3682 + $0x11] sm:$0xff] %v3602
    %3685 = vst [vmem:[%s3682 + $0x21] sm:$0xff] %v3603
    %3686 = vst [vmem:[%s3682 + $0x31] sm:$0xff] %v3604
    %3687 = vst [vmem:[%s3682 + $0x41] sm:$0xff] %v3605
    %3688 = vst [vmem:[%s3682 + $0x51] sm:$0xff] %v3606
    %3689 = vst [vmem:[%s3682 + $0x61] sm:$0xff] %v3607
    %3690 = vst [vmem:[%s3682 + $0x71] sm:$0xff] %v3608
    %3691 = vst [vmem:[%s3682 + $0xa1] sm:$0xff] %v3609
    %3692 = vst [vmem:[%s3682 + $0xb1] sm:$0xff] %v3610
    %3693 = vst [vmem:[%s3682 + $0xc1] sm:$0xff] %v3611
    %3694 = vst [vmem:[%s3682 + $0xd1] sm:$0xff] %v3612
    %3695 = vst [vmem:[%s3682 + $0xe1] sm:$0xff] %v3613
    %3696 = vst [vmem:[%s3682 + $0xf1] sm:$0xff] %v3614
    %3697 = vst [vmem:[%s3682 + $0x101] sm:$0xff] %v3615
    %3698 = vst [vmem:[%s3682 + $0x111] sm:$0xff] %v3616
    %v3699 = vld [vmem:[#allocation5] sm:$0xff]
    %v3700 = vld [vmem:[#allocation5 + $0x10] sm:$0xff]
    %v3701 = vld [vmem:[#allocation5 + $0x20] sm:$0xff]
    %v3702 = vld [vmem:[#allocation5 + $0x30] sm:$0xff]
    %v3703 = vld [vmem:[#allocation5 + $0x40] sm:$0xff]
    %v3704 = vld [vmem:[#allocation5 + $0x50] sm:$0xff]
    %v3705 = vld [vmem:[#allocation5 + $0x60] sm:$0xff]
    %v3706 = vld [vmem:[#allocation5 + $0x70] sm:$0xff]
    %v3707 = vld [vmem:[#allocation5 + $0xa0] sm:$0xff]
    %v3708 = vld [vmem:[#allocation5 + $0xb0] sm:$0xff]
    %v3709 = vld [vmem:[#allocation5 + $0xc0] sm:$0xff]
    %v3710 = vld [vmem:[#allocation5 + $0xd0] sm:$0xff]
    %v3711 = vld [vmem:[#allocation5 + $0xe0] sm:$0xff]
    %v3712 = vld [vmem:[#allocation5 + $0xf0] sm:$0xff]
    %v3713 = vld [vmem:[#allocation5 + $0x100] sm:$0xff]
    %v3714 = vld [vmem:[#allocation5 + $0x110] sm:$0xff]
    %v3715 = vpack.c.bf16 %v3700, %v3699
    %v3716 = vpack.c.bf16 %v3702, %v3701
    %v3717 = vpack.c.bf16 %v3704, %v3703
    %v3718 = vpack.c.bf16 %v3706, %v3705
    %v3719 = vpack.c.bf16 %v3708, %v3707
    %v3720 = vpack.c.bf16 %v3710, %v3709
    %v3721 = vpack.c.bf16 %v3712, %v3711
    %v3722 = vpack.c.bf16 %v3714, %v3713
    %3723 = vst [vmem:[#allocation6] sm:$0xff] %v3715
    %3724 = vst [vmem:[#allocation6 + $0x48] sm:$0xff] %v3716
    %3725 = vst [vmem:[#allocation6 + $0x90] sm:$0xff] %v3717
    %3726 = vst [vmem:[#allocation6 + $0xd8] sm:$0xff] %v3718
    %3727 = vst [vmem:[#allocation6 + $0x120] sm:$0xff] %v3719
    %3728 = vst [vmem:[#allocation6 + $0x168] sm:$0xff] %v3720
    %3729 = vst [vmem:[#allocation6 + $0x1b0] sm:$0xff] %v3721
    %3730 = vst [vmem:[#allocation6 + $0x1f8] sm:$0xff] %v3722
    %v3731 = vld [vmem:[#allocation5 + $0x1] sm:$0xff]
    %v3732 = vld [vmem:[#allocation5 + $0x11] sm:$0xff]
    %v3733 = vld [vmem:[#allocation5 + $0x21] sm:$0xff]
    %v3734 = vld [vmem:[#allocation5 + $0x31] sm:$0xff]
    %v3735 = vld [vmem:[#allocation5 + $0x41] sm:$0xff]
    %v3736 = vld [vmem:[#allocation5 + $0x51] sm:$0xff]
    %v3737 = vld [vmem:[#allocation5 + $0x61] sm:$0xff]
    %v3738 = vld [vmem:[#allocation5 + $0x71] sm:$0xff]
    %v3739 = vld [vmem:[#allocation5 + $0xa1] sm:$0xff]
    %v3740 = vld [vmem:[#allocation5 + $0xb1] sm:$0xff]
    %v3741 = vld [vmem:[#allocation5 + $0xc1] sm:$0xff]
    %v3742 = vld [vmem:[#allocation5 + $0xd1] sm:$0xff]
    %v3743 = vld [vmem:[#allocation5 + $0xe1] sm:$0xff]
    %v3744 = vld [vmem:[#allocation5 + $0xf1] sm:$0xff]
    %v3745 = vld [vmem:[#allocation5 + $0x101] sm:$0xff]
    %v3746 = vld [vmem:[#allocation5 + $0x111] sm:$0xff]
    %v3747 = vpack.c.bf16 %v3732, %v3731
    %v3748 = vpack.c.bf16 %v3734, %v3733
    %v3749 = vpack.c.bf16 %v3736, %v3735
    %v3750 = vpack.c.bf16 %v3738, %v3737
    %v3751 = vpack.c.bf16 %v3740, %v3739
    %v3752 = vpack.c.bf16 %v3742, %v3741
    %v3753 = vpack.c.bf16 %v3744, %v3743
    %v3754 = vpack.c.bf16 %v3746, %v3745
    %3755 = vst [vmem:[#allocation6 + $0x8] sm:$0xff] %v3747
    %3756 = vst [vmem:[#allocation6 + $0x50] sm:$0xff] %v3748
    %3757 = vst [vmem:[#allocation6 + $0x98] sm:$0xff] %v3749
    %3758 = vst [vmem:[#allocation6 + $0xe0] sm:$0xff] %v3750
    %3759 = vst [vmem:[#allocation6 + $0x128] sm:$0xff] %v3751
    %3760 = vst [vmem:[#allocation6 + $0x170] sm:$0xff] %v3752
    %3761 = vst [vmem:[#allocation6 + $0x1b8] sm:$0xff] %v3753
    %3762 = vst [vmem:[#allocation6 + $0x200] sm:$0xff] %v3754
    %v3763 = vld [vmem:[#allocation5 + $0x2] sm:$0xff]
    %v3764 = vld [vmem:[#allocation5 + $0x12] sm:$0xff]
    %v3765 = vld [vmem:[#allocation5 + $0x22] sm:$0xff]
    %v3766 = vld [vmem:[#allocation5 + $0x32] sm:$0xff]
    %v3767 = vld [vmem:[#allocation5 + $0x42] sm:$0xff]
    %v3768 = vld [vmem:[#allocation5 + $0x52] sm:$0xff]
    %v3769 = vld [vmem:[#allocation5 + $0x62] sm:$0xff]
    %v3770 = vld [vmem:[#allocation5 + $0x72] sm:$0xff]
    %v3771 = vld [vmem:[#allocation5 + $0xa2] sm:$0xff]
    %v3772 = vld [vmem:[#allocation5 + $0xb2] sm:$0xff]
    %v3773 = vld [vmem:[#allocation5 + $0xc2] sm:$0xff]
    %v3774 = vld [vmem:[#allocation5 + $0xd2] sm:$0xff]
    %v3775 = vld [vmem:[#allocation5 + $0xe2] sm:$0xff]
    %v3776 = vld [vmem:[#allocation5 + $0xf2] sm:$0xff]
    %v3777 = vld [vmem:[#allocation5 + $0x102] sm:$0xff]
    %v3778 = vld [vmem:[#allocation5 + $0x112] sm:$0xff]
    %v3779 = vpack.c.bf16 %v3764, %v3763
    %v3780 = vpack.c.bf16 %v3766, %v3765
    %v3781 = vpack.c.bf16 %v3768, %v3767
    %v3782 = vpack.c.bf16 %v3770, %v3769
    %v3783 = vpack.c.bf16 %v3772, %v3771
    %v3784 = vpack.c.bf16 %v3774, %v3773
    %v3785 = vpack.c.bf16 %v3776, %v3775
    %v3786 = vpack.c.bf16 %v3778, %v3777
    %3787 = vst [vmem:[#allocation6 + $0x10] sm:$0xff] %v3779
    %3788 = vst [vmem:[#allocation6 + $0x58] sm:$0xff] %v3780
    %3789 = vst [vmem:[#allocation6 + $0xa0] sm:$0xff] %v3781
    %3790 = vst [vmem:[#allocation6 + $0xe8] sm:$0xff] %v3782
    %3791 = vst [vmem:[#allocation6 + $0x130] sm:$0xff] %v3783
    %3792 = vst [vmem:[#allocation6 + $0x178] sm:$0xff] %v3784
    %3793 = vst [vmem:[#allocation6 + $0x1c0] sm:$0xff] %v3785
    %3794 = vst [vmem:[#allocation6 + $0x208] sm:$0xff] %v3786
    %v3795 = vld [vmem:[%s3682] sm:$0xff]
    %v3796 = vld [vmem:[%s3682 + $0x10] sm:$0xff]
    %v3797 = vld [vmem:[%s3682 + $0x20] sm:$0xff]
    %v3798 = vld [vmem:[%s3682 + $0x30] sm:$0xff]
    %v3799 = vld [vmem:[%s3682 + $0x40] sm:$0xff]
    %v3800 = vld [vmem:[%s3682 + $0x50] sm:$0xff]
    %v3801 = vld [vmem:[%s3682 + $0x60] sm:$0xff]
    %v3802 = vld [vmem:[%s3682 + $0x70] sm:$0xff]
    %v3803 = vld [vmem:[%s3682 + $0xa0] sm:$0xff]
    %v3804 = vld [vmem:[%s3682 + $0xb0] sm:$0xff]
    %v3805 = vld [vmem:[%s3682 + $0xc0] sm:$0xff]
    %v3806 = vld [vmem:[%s3682 + $0xd0] sm:$0xff]
    %v3807 = vld [vmem:[%s3682 + $0xe0] sm:$0xff]
    %v3808 = vld [vmem:[%s3682 + $0xf0] sm:$0xff]
    %v3809 = vld [vmem:[%s3682 + $0x100] sm:$0xff]
    %v3810 = vld [vmem:[%s3682 + $0x110] sm:$0xff]
    %v3811 = vpack.c.bf16 %v3796, %v3795
    %v3812 = vpack.c.bf16 %v3798, %v3797
    %v3813 = vpack.c.bf16 %v3800, %v3799
    %v3814 = vpack.c.bf16 %v3802, %v3801
    %v3815 = vpack.c.bf16 %v3804, %v3803
    %v3816 = vpack.c.bf16 %v3806, %v3805
    %v3817 = vpack.c.bf16 %v3808, %v3807
    %v3818 = vpack.c.bf16 %v3810, %v3809
    %3819 = vst [vmem:[#allocation6 + $0x18] sm:$0xff] %v3811
    %3820 = vst [vmem:[#allocation6 + $0x60] sm:$0xff] %v3812
    %3821 = vst [vmem:[#allocation6 + $0xa8] sm:$0xff] %v3813
    %3822 = vst [vmem:[#allocation6 + $0xf0] sm:$0xff] %v3814
    %3823 = vst [vmem:[#allocation6 + $0x138] sm:$0xff] %v3815
    %3824 = vst [vmem:[#allocation6 + $0x180] sm:$0xff] %v3816
    %3825 = vst [vmem:[#allocation6 + $0x1c8] sm:$0xff] %v3817
    %3826 = vst [vmem:[#allocation6 + $0x210] sm:$0xff] %v3818
    %v3827 = vld [vmem:[%s3682 + $0x1] sm:$0xff]
    %v3828 = vld [vmem:[%s3682 + $0x11] sm:$0xff]
    %v3829 = vld [vmem:[%s3682 + $0x21] sm:$0xff]
    %v3830 = vld [vmem:[%s3682 + $0x31] sm:$0xff]
    %v3831 = vld [vmem:[%s3682 + $0x41] sm:$0xff]
    %v3832 = vld [vmem:[%s3682 + $0x51] sm:$0xff]
    %v3833 = vld [vmem:[%s3682 + $0x61] sm:$0xff]
    %v3834 = vld [vmem:[%s3682 + $0x71] sm:$0xff]
    %v3835 = vld [vmem:[%s3682 + $0xa1] sm:$0xff]
    %v3836 = vld [vmem:[%s3682 + $0xb1] sm:$0xff]
    %v3837 = vld [vmem:[%s3682 + $0xc1] sm:$0xff]
    %v3838 = vld [vmem:[%s3682 + $0xd1] sm:$0xff]
    %v3839 = vld [vmem:[%s3682 + $0xe1] sm:$0xff]
    %v3840 = vld [vmem:[%s3682 + $0xf1] sm:$0xff]
    %v3841 = vld [vmem:[%s3682 + $0x101] sm:$0xff]
    %v3842 = vld [vmem:[%s3682 + $0x111] sm:$0xff]
    %v3843 = vpack.c.bf16 %v3828, %v3827
    %v3844 = vpack.c.bf16 %v3830, %v3829
    %v3845 = vpack.c.bf16 %v3832, %v3831
    %v3846 = vpack.c.bf16 %v3834, %v3833
    %v3847 = vpack.c.bf16 %v3836, %v3835
    %v3848 = vpack.c.bf16 %v3838, %v3837
    %v3849 = vpack.c.bf16 %v3840, %v3839
    %v3850 = vpack.c.bf16 %v3842, %v3841
    %3851 = vst [vmem:[#allocation6 + $0x20] sm:$0xff] %v3843
    %3852 = vst [vmem:[#allocation6 + $0x68] sm:$0xff] %v3844
    %3853 = vst [vmem:[#allocation6 + $0xb0] sm:$0xff] %v3845
    %3854 = vst [vmem:[#allocation6 + $0xf8] sm:$0xff] %v3846
    %3855 = vst [vmem:[#allocation6 + $0x140] sm:$0xff] %v3847
    %3856 = vst [vmem:[#allocation6 + $0x188] sm:$0xff] %v3848
    %3857 = vst [vmem:[#allocation6 + $0x1d0] sm:$0xff] %v3849
    %3858 = vst [vmem:[#allocation6 + $0x218] sm:$0xff] %v3850
    %v3859 = vld [vmem:[%s3682 + $0x2] sm:$0xff]
    %v3860 = vld [vmem:[%s3682 + $0x12] sm:$0xff]
    %v3861 = vld [vmem:[%s3682 + $0x22] sm:$0xff]
    %v3862 = vld [vmem:[%s3682 + $0x32] sm:$0xff]
    %v3863 = vld [vmem:[%s3682 + $0x42] sm:$0xff]
    %v3864 = vld [vmem:[%s3682 + $0x52] sm:$0xff]
    %v3865 = vld [vmem:[%s3682 + $0x62] sm:$0xff]
    %v3866 = vld [vmem:[%s3682 + $0x72] sm:$0xff]
    %v3867 = vld [vmem:[%s3682 + $0xa2] sm:$0xff]
    %v3868 = vld [vmem:[%s3682 + $0xb2] sm:$0xff]
    %v3869 = vld [vmem:[%s3682 + $0xc2] sm:$0xff]
    %v3870 = vld [vmem:[%s3682 + $0xd2] sm:$0xff]
    %v3871 = vld [vmem:[%s3682 + $0xe2] sm:$0xff]
    %v3872 = vld [vmem:[%s3682 + $0xf2] sm:$0xff]
    %v3873 = vld [vmem:[%s3682 + $0x102] sm:$0xff]
    %v3874 = vld [vmem:[%s3682 + $0x112] sm:$0xff]
    %v3875 = vpack.c.bf16 %v3860, %v3859
    %v3876 = vpack.c.bf16 %v3862, %v3861
    %v3877 = vpack.c.bf16 %v3864, %v3863
    %v3878 = vpack.c.bf16 %v3866, %v3865
    %v3879 = vpack.c.bf16 %v3868, %v3867
    %v3880 = vpack.c.bf16 %v3870, %v3869
    %v3881 = vpack.c.bf16 %v3872, %v3871
    %v3882 = vpack.c.bf16 %v3874, %v3873
    %3883 = vst [vmem:[#allocation6 + $0x28] sm:$0xff] %v3875
    %3884 = vst [vmem:[#allocation6 + $0x70] sm:$0xff] %v3876
    %3885 = vst [vmem:[#allocation6 + $0xb8] sm:$0xff] %v3877
    %3886 = vst [vmem:[#allocation6 + $0x100] sm:$0xff] %v3878
    %3887 = vst [vmem:[#allocation6 + $0x148] sm:$0xff] %v3879
    %3888 = vst [vmem:[#allocation6 + $0x190] sm:$0xff] %v3880
    %3889 = vst [vmem:[#allocation6 + $0x1d8] sm:$0xff] %v3881
    %3890 = vst [vmem:[#allocation6 + $0x220] sm:$0xff] %v3882
    %s3891 = scalar_lea.vmem [#allocation5], 32
    %v3892 = vld [vmem:[%s3891] sm:$0xff]
    %v3893 = vld [vmem:[%s3891 + $0x10] sm:$0xff]
    %v3894 = vld [vmem:[%s3891 + $0x20] sm:$0xff]
    %v3895 = vld [vmem:[%s3891 + $0x30] sm:$0xff]
    %v3896 = vld [vmem:[%s3891 + $0x40] sm:$0xff]
    %v3897 = vld [vmem:[%s3891 + $0x50] sm:$0xff]
    %v3898 = vld [vmem:[%s3891 + $0x60] sm:$0xff]
    %v3899 = vld [vmem:[%s3891 + $0x70] sm:$0xff]
    %v3900 = vld [vmem:[%s3891 + $0xa0] sm:$0xff]
    %v3901 = vld [vmem:[%s3891 + $0xb0] sm:$0xff]
    %v3902 = vld [vmem:[%s3891 + $0xc0] sm:$0xff]
    %v3903 = vld [vmem:[%s3891 + $0xd0] sm:$0xff]
    %v3904 = vld [vmem:[%s3891 + $0xe0] sm:$0xff]
    %v3905 = vld [vmem:[%s3891 + $0xf0] sm:$0xff]
    %v3906 = vld [vmem:[%s3891 + $0x100] sm:$0xff]
    %v3907 = vld [vmem:[%s3891 + $0x110] sm:$0xff]
    %v3908 = vpack.c.bf16 %v3893, %v3892
    %v3909 = vpack.c.bf16 %v3895, %v3894
    %v3910 = vpack.c.bf16 %v3897, %v3896
    %v3911 = vpack.c.bf16 %v3899, %v3898
    %v3912 = vpack.c.bf16 %v3901, %v3900
    %v3913 = vpack.c.bf16 %v3903, %v3902
    %v3914 = vpack.c.bf16 %v3905, %v3904
    %v3915 = vpack.c.bf16 %v3907, %v3906
    %3916 = vst [vmem:[#allocation6 + $0x30] sm:$0xff] %v3908
    %3917 = vst [vmem:[#allocation6 + $0x78] sm:$0xff] %v3909
    %3918 = vst [vmem:[#allocation6 + $0xc0] sm:$0xff] %v3910
    %3919 = vst [vmem:[#allocation6 + $0x108] sm:$0xff] %v3911
    %3920 = vst [vmem:[#allocation6 + $0x150] sm:$0xff] %v3912
    %3921 = vst [vmem:[#allocation6 + $0x198] sm:$0xff] %v3913
    %3922 = vst [vmem:[#allocation6 + $0x1e0] sm:$0xff] %v3914
    %3923 = vst [vmem:[#allocation6 + $0x228] sm:$0xff] %v3915
    %v3924 = vld [vmem:[%s3891 + $0x1] sm:$0xff]
    %v3925 = vld [vmem:[%s3891 + $0x11] sm:$0xff]
    %v3926 = vld [vmem:[%s3891 + $0x21] sm:$0xff]
    %v3927 = vld [vmem:[%s3891 + $0x31] sm:$0xff]
    %v3928 = vld [vmem:[%s3891 + $0x41] sm:$0xff]
    %v3929 = vld [vmem:[%s3891 + $0x51] sm:$0xff]
    %v3930 = vld [vmem:[%s3891 + $0x61] sm:$0xff]
    %v3931 = vld [vmem:[%s3891 + $0x71] sm:$0xff]
    %v3932 = vld [vmem:[%s3891 + $0xa1] sm:$0xff]
    %v3933 = vld [vmem:[%s3891 + $0xb1] sm:$0xff]
    %v3934 = vld [vmem:[%s3891 + $0xc1] sm:$0xff]
    %v3935 = vld [vmem:[%s3891 + $0xd1] sm:$0xff]
    %v3936 = vld [vmem:[%s3891 + $0xe1] sm:$0xff]
    %v3937 = vld [vmem:[%s3891 + $0xf1] sm:$0xff]
    %v3938 = vld [vmem:[%s3891 + $0x101] sm:$0xff]
    %v3939 = vld [vmem:[%s3891 + $0x111] sm:$0xff]
    %v3940 = vpack.c.bf16 %v3925, %v3924
    %v3941 = vpack.c.bf16 %v3927, %v3926
    %v3942 = vpack.c.bf16 %v3929, %v3928
    %v3943 = vpack.c.bf16 %v3931, %v3930
    %v3944 = vpack.c.bf16 %v3933, %v3932
    %v3945 = vpack.c.bf16 %v3935, %v3934
    %v3946 = vpack.c.bf16 %v3937, %v3936
    %v3947 = vpack.c.bf16 %v3939, %v3938
    %3948 = vst [vmem:[#allocation6 + $0x38] sm:$0xff] %v3940
    %3949 = vst [vmem:[#allocation6 + $0x80] sm:$0xff] %v3941
    %3950 = vst [vmem:[#allocation6 + $0xc8] sm:$0xff] %v3942
    %3951 = vst [vmem:[#allocation6 + $0x110] sm:$0xff] %v3943
    %3952 = vst [vmem:[#allocation6 + $0x158] sm:$0xff] %v3944
    %3953 = vst [vmem:[#allocation6 + $0x1a0] sm:$0xff] %v3945
    %3954 = vst [vmem:[#allocation6 + $0x1e8] sm:$0xff] %v3946
    %3955 = vst [vmem:[#allocation6 + $0x230] sm:$0xff] %v3947
    %v3956 = vld [vmem:[%s3891 + $0x2] sm:$0xff]
    %v3957 = vld [vmem:[%s3891 + $0x12] sm:$0xff]
    %v3958 = vld [vmem:[%s3891 + $0x22] sm:$0xff]
    %v3959 = vld [vmem:[%s3891 + $0x32] sm:$0xff]
    %v3960 = vld [vmem:[%s3891 + $0x42] sm:$0xff]
    %v3961 = vld [vmem:[%s3891 + $0x52] sm:$0xff]
    %v3962 = vld [vmem:[%s3891 + $0x62] sm:$0xff]
    %v3963 = vld [vmem:[%s3891 + $0x72] sm:$0xff]
    %v3964 = vld [vmem:[%s3891 + $0xa2] sm:$0xff]
    %v3965 = vld [vmem:[%s3891 + $0xb2] sm:$0xff]
    %v3966 = vld [vmem:[%s3891 + $0xc2] sm:$0xff]
    %v3967 = vld [vmem:[%s3891 + $0xd2] sm:$0xff]
    %v3968 = vld [vmem:[%s3891 + $0xe2] sm:$0xff]
    %v3969 = vld [vmem:[%s3891 + $0xf2] sm:$0xff]
    %v3970 = vld [vmem:[%s3891 + $0x102] sm:$0xff]
    %v3971 = vld [vmem:[%s3891 + $0x112] sm:$0xff]
    %v3972 = vpack.c.bf16 %v3957, %v3956
    %v3973 = vpack.c.bf16 %v3959, %v3958
    %v3974 = vpack.c.bf16 %v3961, %v3960
    %v3975 = vpack.c.bf16 %v3963, %v3962
    %v3976 = vpack.c.bf16 %v3965, %v3964
    %v3977 = vpack.c.bf16 %v3967, %v3966
    %v3978 = vpack.c.bf16 %v3969, %v3968
    %v3979 = vpack.c.bf16 %v3971, %v3970
    %3980 = vst [vmem:[#allocation6 + $0x40] sm:$0xff] %v3972
    %3981 = vst [vmem:[#allocation6 + $0x88] sm:$0xff] %v3973
    %3982 = vst [vmem:[#allocation6 + $0xd0] sm:$0xff] %v3974
    %3983 = vst [vmem:[#allocation6 + $0x118] sm:$0xff] %v3975
    %3984 = vst [vmem:[#allocation6 + $0x160] sm:$0xff] %v3976
    %3985 = vst [vmem:[#allocation6 + $0x1a8] sm:$0xff] %v3977
    %3986 = vst [vmem:[#allocation6 + $0x1f0] sm:$0xff] %v3978
    %3987 = vst [vmem:[#allocation6 + $0x238] sm:$0xff] %v3979
    %v3988 = vld [vmem:[#allocation6] sm:$0xff]
    %v3989 = vld [vmem:[#allocation6 + $0x8] sm:$0xff]
    %v3990 = vld [vmem:[#allocation6 + $0x10] sm:$0xff]
    %v3991 = vld [vmem:[#allocation6 + $0x18] sm:$0xff]
    %v3992 = vld [vmem:[#allocation6 + $0x20] sm:$0xff]
    %v3993 = vld [vmem:[#allocation6 + $0x28] sm:$0xff]
    %v3994 = vld [vmem:[#allocation6 + $0x30] sm:$0xff]
    %v3995 = vld [vmem:[#allocation6 + $0x38] sm:$0xff]
    %v3996 = vld [vmem:[#allocation6 + $0x40] sm:$0xff]
    %v3997 = vld [vmem:[#allocation6 + $0x48] sm:$0xff]
    %v3998 = vld [vmem:[#allocation6 + $0x50] sm:$0xff]
    %v3999 = vld [vmem:[#allocation6 + $0x58] sm:$0xff]
    %v4000 = vld [vmem:[#allocation6 + $0x60] sm:$0xff]
    %v4001 = vld [vmem:[#allocation6 + $0x68] sm:$0xff]
    %v4002 = vld [vmem:[#allocation6 + $0x70] sm:$0xff]
    %v4003 = vld [vmem:[#allocation6 + $0x78] sm:$0xff]
    %v4004 = vld [vmem:[#allocation6 + $0x80] sm:$0xff]
    %v4005 = vld [vmem:[#allocation6 + $0x88] sm:$0xff]
    %v4006 = vld [vmem:[#allocation6 + $0x90] sm:$0xff]
    %v4007 = vld [vmem:[#allocation6 + $0x98] sm:$0xff]
    %v4008 = vld [vmem:[#allocation6 + $0xa0] sm:$0xff]
    %v4009 = vld [vmem:[#allocation6 + $0xa8] sm:$0xff]
    %v4010 = vld [vmem:[#allocation6 + $0xb0] sm:$0xff]
    %v4011 = vld [vmem:[#allocation6 + $0xb8] sm:$0xff]
    %v4012 = vld [vmem:[#allocation6 + $0xc0] sm:$0xff]
    %v4013 = vld [vmem:[#allocation6 + $0xc8] sm:$0xff]
    %v4014 = vld [vmem:[#allocation6 + $0xd0] sm:$0xff]
    %v4015 = vld [vmem:[#allocation6 + $0xd8] sm:$0xff]
    %v4016 = vld [vmem:[#allocation6 + $0xe0] sm:$0xff]
    %v4017 = vld [vmem:[#allocation6 + $0xe8] sm:$0xff]
    %v4018 = vld [vmem:[#allocation6 + $0xf0] sm:$0xff]
    %v4019 = vld [vmem:[#allocation6 + $0xf8] sm:$0xff]
    %v4020 = vld [vmem:[#allocation6 + $0x100] sm:$0xff]
    %v4021 = vld [vmem:[#allocation6 + $0x108] sm:$0xff]
    %v4022 = vld [vmem:[#allocation6 + $0x110] sm:$0xff]
    %v4023 = vld [vmem:[#allocation6 + $0x118] sm:$0xff]
    %v4024 = vld [vmem:[#allocation6 + $0x120] sm:$0xff]
    %v4025 = vld [vmem:[#allocation6 + $0x128] sm:$0xff]
    %v4026 = vld [vmem:[#allocation6 + $0x130] sm:$0xff]
    %v4027 = vld [vmem:[#allocation6 + $0x138] sm:$0xff]
    %v4028 = vld [vmem:[#allocation6 + $0x140] sm:$0xff]
    %v4029 = vld [vmem:[#allocation6 + $0x148] sm:$0xff]
    %v4030 = vld [vmem:[#allocation6 + $0x150] sm:$0xff]
    %v4031 = vld [vmem:[#allocation6 + $0x158] sm:$0xff]
    %v4032 = vld [vmem:[#allocation6 + $0x160] sm:$0xff]
    %v4033 = vld [vmem:[#allocation6 + $0x168] sm:$0xff]
    %v4034 = vld [vmem:[#allocation6 + $0x170] sm:$0xff]
    %v4035 = vld [vmem:[#allocation6 + $0x178] sm:$0xff]
    %v4036 = vld [vmem:[#allocation6 + $0x180] sm:$0xff]
    %v4037 = vld [vmem:[#allocation6 + $0x188] sm:$0xff]
    %v4038 = vld [vmem:[#allocation6 + $0x190] sm:$0xff]
    %v4039 = vld [vmem:[#allocation6 + $0x198] sm:$0xff]
    %v4040 = vld [vmem:[#allocation6 + $0x1a0] sm:$0xff]
    %v4041 = vld [vmem:[#allocation6 + $0x1a8] sm:$0xff]
    %v4042 = vld [vmem:[#allocation6 + $0x1b0] sm:$0xff]
    %v4043 = vld [vmem:[#allocation6 + $0x1b8] sm:$0xff]
    %v4044 = vld [vmem:[#allocation6 + $0x1c0] sm:$0xff]
    %v4045 = vld [vmem:[#allocation6 + $0x1c8] sm:$0xff]
    %v4046 = vld [vmem:[#allocation6 + $0x1d0] sm:$0xff]
    %v4047 = vld [vmem:[#allocation6 + $0x1d8] sm:$0xff]
    %v4048 = vld [vmem:[#allocation6 + $0x1e0] sm:$0xff]
    %v4049 = vld [vmem:[#allocation6 + $0x1e8] sm:$0xff]
    %v4050 = vld [vmem:[#allocation6 + $0x1f0] sm:$0xff]
    %v4051 = vld [vmem:[#allocation6 + $0x1f8] sm:$0xff]
    %v4052 = vld [vmem:[#allocation6 + $0x200] sm:$0xff]
    %v4053 = vld [vmem:[#allocation6 + $0x208] sm:$0xff]
    %v4054 = vld [vmem:[#allocation6 + $0x210] sm:$0xff]
    %v4055 = vld [vmem:[#allocation6 + $0x218] sm:$0xff]
    %v4056 = vld [vmem:[#allocation6 + $0x220] sm:$0xff]
    %v4057 = vld [vmem:[#allocation6 + $0x228] sm:$0xff]
    %v4058 = vld [vmem:[#allocation6 + $0x230] sm:$0xff]
    %v4059 = vld [vmem:[#allocation6 + $0x238] sm:$0xff]
    %v4060 = vld [vmem:[%s3] sm:$0xf]
    %v4061 = vld [vmem:[%s3 + $0x4] sm:$0xf]
    %v4062 = vld [vmem:[%s3 + $0x8] sm:$0xf]
    %v4063 = vld [vmem:[%s3 + $0xc] sm:$0xf]
    %v4064 = vld [vmem:[%s3 + $0x10] sm:$0xf]
    %v4065 = vld [vmem:[%s3 + $0x14] sm:$0xf]
    %v4066 = vld [vmem:[%s3 + $0x18] sm:$0xf]
    %v4067 = vld [vmem:[%s3 + $0x1c] sm:$0xf]
    %v4068 = vld [vmem:[%s3 + $0x20] sm:$0xf]
    %v4069 = vld [vmem:[%s3 + $0x24] sm:$0xf]
    %v4070 = vld [vmem:[%s3 + $0x28] sm:$0xf]
    %v4071 = vld [vmem:[%s3 + $0x2c] sm:$0xf]
    %v4072 = vld [vmem:[%s3 + $0x30] sm:$0xf]
    %v4073 = vld [vmem:[%s3 + $0x34] sm:$0xf]
    %v4074 = vld [vmem:[%s3 + $0x38] sm:$0xf]
    %v4075 = vld [vmem:[%s3 + $0x3c] sm:$0xf]
    %v4076 = vld [vmem:[%s3 + $0x40] sm:$0xf]
    %v4077 = vld [vmem:[%s3 + $0x44] sm:$0xf]
    %v4078 = vld [vmem:[%s3 + $0x48] sm:$0xf]
    %v4079 = vld [vmem:[%s3 + $0x4c] sm:$0xf]
    %v4080 = vld [vmem:[%s3 + $0x50] sm:$0xf]
    %v4081 = vld [vmem:[%s3 + $0x54] sm:$0xf]
    %v4082 = vld [vmem:[%s3 + $0x58] sm:$0xf]
    %v4083 = vld [vmem:[%s3 + $0x5c] sm:$0xf]
    %v4084 = vld [vmem:[%s3 + $0x60] sm:$0xf]
    %v4085 = vld [vmem:[%s3 + $0x64] sm:$0xf]
    %v4086 = vld [vmem:[%s3 + $0x68] sm:$0xf]
    %v4087 = vld [vmem:[%s3 + $0x6c] sm:$0xf]
    %v4088 = vld [vmem:[%s3 + $0x70] sm:$0xf]
    %v4089 = vld [vmem:[%s3 + $0x74] sm:$0xf]
    %v4090 = vld [vmem:[%s3 + $0x78] sm:$0xf]
    %v4091 = vld [vmem:[%s3 + $0x7c] sm:$0xf]
    %v4092 = vld [vmem:[%s3 + $0x80] sm:$0xf]
    %v4093 = vld [vmem:[%s3 + $0x84] sm:$0xf]
    %v4094 = vld [vmem:[%s3 + $0x88] sm:$0xf]
    %v4095 = vld [vmem:[%s3 + $0x8c] sm:$0xf]
    %v4096 = vld [vmem:[%s3 + $0x90] sm:$0xf]
    %v4097 = vld [vmem:[%s3 + $0x94] sm:$0xf]
    %v4098 = vld [vmem:[%s3 + $0x98] sm:$0xf]
    %v4099 = vld [vmem:[%s3 + $0x9c] sm:$0xf]
    %v4100 = vld [vmem:[%s3 + $0xa0] sm:$0xf]
    %v4101 = vld [vmem:[%s3 + $0xa4] sm:$0xf]
    %v4102 = vld [vmem:[%s3 + $0xa8] sm:$0xf]
    %v4103 = vld [vmem:[%s3 + $0xac] sm:$0xf]
    %v4104 = vld [vmem:[%s3 + $0xb0] sm:$0xf]
    %v4105 = vld [vmem:[%s3 + $0xb4] sm:$0xf]
    %v4106 = vld [vmem:[%s3 + $0xb8] sm:$0xf]
    %v4107 = vld [vmem:[%s3 + $0xbc] sm:$0xf]
    %v4108 = vld [vmem:[%s3 + $0xc0] sm:$0xf]
    %v4109 = vld [vmem:[%s3 + $0xc4] sm:$0xf]
    %v4110 = vld [vmem:[%s3 + $0xc8] sm:$0xf]
    %v4111 = vld [vmem:[%s3 + $0xcc] sm:$0xf]
    %v4112 = vld [vmem:[%s3 + $0xd0] sm:$0xf]
    %v4113 = vld [vmem:[%s3 + $0xd4] sm:$0xf]
    %v4114 = vld [vmem:[%s3 + $0xd8] sm:$0xf]
    %v4115 = vld [vmem:[%s3 + $0xdc] sm:$0xf]
    %v4116 = vld [vmem:[%s3 + $0xe0] sm:$0xf]
    %v4117 = vld [vmem:[%s3 + $0xe4] sm:$0xf]
    %v4118 = vld [vmem:[%s3 + $0xe8] sm:$0xf]
    %v4119 = vld [vmem:[%s3 + $0xec] sm:$0xf]
    %v4120 = vld [vmem:[%s3 + $0xf0] sm:$0xf]
    %v4121 = vld [vmem:[%s3 + $0xf4] sm:$0xf]
    %v4122 = vld [vmem:[%s3 + $0xf8] sm:$0xf]
    %v4123 = vld [vmem:[%s3 + $0xfc] sm:$0xf]
    %v4124 = vld [vmem:[%s3 + $0x100] sm:$0xf]
    %v4125 = vld [vmem:[%s3 + $0x104] sm:$0xf]
    %v4126 = vld [vmem:[%s3 + $0x108] sm:$0xf]
    %v4127 = vld [vmem:[%s3 + $0x10c] sm:$0xf]
    %v4128 = vld [vmem:[%s3 + $0x110] sm:$0xf]
    %v4129 = vld [vmem:[%s3 + $0x114] sm:$0xf]
    %v4130 = vld [vmem:[%s3 + $0x118] sm:$0xf]
    %v4131 = vld [vmem:[%s3 + $0x11c] sm:$0xf]
    %v4132 = vld [vmem:[%s3 + $0x120] sm:$0xf]
    %v4133 = vld [vmem:[%s3 + $0x124] sm:$0xf]
    %v4134 = vld [vmem:[%s3 + $0x128] sm:$0xf]
    %v4135 = vld [vmem:[%s3 + $0x12c] sm:$0xf]
    %v4136 = vld [vmem:[%s3 + $0x130] sm:$0xf]
    %v4137 = vld [vmem:[%s3 + $0x134] sm:$0xf]
    %v4138 = vld [vmem:[%s3 + $0x138] sm:$0xf]
    %v4139 = vld [vmem:[%s3 + $0x13c] sm:$0xf]
    %v4140 = vld [vmem:[%s3 + $0x140] sm:$0xf]
    %v4141 = vld [vmem:[%s3 + $0x144] sm:$0xf]
    %v4142 = vld [vmem:[%s3 + $0x148] sm:$0xf]
    %v4143 = vld [vmem:[%s3 + $0x14c] sm:$0xf]
    %v4144 = vld [vmem:[%s3 + $0x150] sm:$0xf]
    %v4145 = vld [vmem:[%s3 + $0x154] sm:$0xf]
    %v4146 = vld [vmem:[%s3 + $0x158] sm:$0xf]
    %v4147 = vld [vmem:[%s3 + $0x15c] sm:$0xf]
    %v4148 = vld [vmem:[%s3 + $0x160] sm:$0xf]
    %v4149 = vld [vmem:[%s3 + $0x164] sm:$0xf]
    %v4150 = vld [vmem:[%s3 + $0x168] sm:$0xf]
    %v4151 = vld [vmem:[%s3 + $0x16c] sm:$0xf]
    %v4152 = vld [vmem:[%s3 + $0x170] sm:$0xf]
    %v4153 = vld [vmem:[%s3 + $0x174] sm:$0xf]
    %v4154 = vld [vmem:[%s3 + $0x178] sm:$0xf]
    %v4155 = vld [vmem:[%s3 + $0x17c] sm:$0xf]
    %v4156 = vld [vmem:[%s3 + $0x180] sm:$0xf]
    %v4157 = vld [vmem:[%s3 + $0x184] sm:$0xf]
    %v4158 = vld [vmem:[%s3 + $0x188] sm:$0xf]
    %v4159 = vld [vmem:[%s3 + $0x18c] sm:$0xf]
    %v4160 = vld [vmem:[%s3 + $0x190] sm:$0xf]
    %v4161 = vld [vmem:[%s3 + $0x194] sm:$0xf]
    %v4162 = vld [vmem:[%s3 + $0x198] sm:$0xf]
    %v4163 = vld [vmem:[%s3 + $0x19c] sm:$0xf]
    %v4164 = vld [vmem:[%s3 + $0x1a0] sm:$0xf]
    %v4165 = vld [vmem:[%s3 + $0x1a4] sm:$0xf]
    %v4166 = vld [vmem:[%s3 + $0x1a8] sm:$0xf]
    %v4167 = vld [vmem:[%s3 + $0x1ac] sm:$0xf]
    %v4168 = vld [vmem:[%s3 + $0x1b0] sm:$0xf]
    %v4169 = vld [vmem:[%s3 + $0x1b4] sm:$0xf]
    %v4170 = vld [vmem:[%s3 + $0x1b8] sm:$0xf]
    %v4171 = vld [vmem:[%s3 + $0x1bc] sm:$0xf]
    %v4172 = vld [vmem:[%s3 + $0x1c0] sm:$0xf]
    %v4173 = vld [vmem:[%s3 + $0x1c4] sm:$0xf]
    %v4174 = vld [vmem:[%s3 + $0x1c8] sm:$0xf]
    %v4175 = vld [vmem:[%s3 + $0x1cc] sm:$0xf]
    %v4176 = vld [vmem:[%s3 + $0x1d0] sm:$0xf]
    %v4177 = vld [vmem:[%s3 + $0x1d4] sm:$0xf]
    %v4178 = vld [vmem:[%s3 + $0x1d8] sm:$0xf]
    %v4179 = vld [vmem:[%s3 + $0x1dc] sm:$0xf]
    %v4180 = vld [vmem:[%s3 + $0x1e0] sm:$0xf]
    %v4181 = vld [vmem:[%s3 + $0x1e4] sm:$0xf]
    %v4182 = vld [vmem:[%s3 + $0x1e8] sm:$0xf]
    %v4183 = vld [vmem:[%s3 + $0x1ec] sm:$0xf]
    %v4184 = vld [vmem:[%s3 + $0x1f0] sm:$0xf]
    %v4185 = vld [vmem:[%s3 + $0x1f4] sm:$0xf]
    %v4186 = vld [vmem:[%s3 + $0x1f8] sm:$0xf]
    %v4187 = vld [vmem:[%s3 + $0x1fc] sm:$0xf]
    %v4188 = vld [vmem:[%s3 + $0x200] sm:$0xf]
    %v4189 = vld [vmem:[%s3 + $0x204] sm:$0xf]
    %v4190 = vld [vmem:[%s3 + $0x208] sm:$0xf]
    %v4191 = vld [vmem:[%s3 + $0x20c] sm:$0xf]
    %v4192 = vld [vmem:[%s3 + $0x210] sm:$0xf]
    %v4193 = vld [vmem:[%s3 + $0x214] sm:$0xf]
    %v4194 = vld [vmem:[%s3 + $0x218] sm:$0xf]
    %v4195 = vld [vmem:[%s3 + $0x21c] sm:$0xf]
    %v4196 = vld [vmem:[%s3 + $0x220] sm:$0xf]
    %v4197 = vld [vmem:[%s3 + $0x224] sm:$0xf]
    %v4198 = vld [vmem:[%s3 + $0x228] sm:$0xf]
    %v4199 = vld [vmem:[%s3 + $0x22c] sm:$0xf]
    %v4200 = vld [vmem:[%s3 + $0x230] sm:$0xf]
    %v4201 = vld [vmem:[%s3 + $0x234] sm:$0xf]
    %v4202 = vld [vmem:[%s3 + $0x238] sm:$0xf]
    %v4203 = vld [vmem:[%s3 + $0x23c] sm:$0xf]
    %v4348 = vunpack.c.l.b16 %v4060
    %v4349 = vunpack.c.l.b16 %v4061
    %v4350 = vunpack.c.l.b16 %v4062
    %v4351 = vunpack.c.l.b16 %v4063
    %v4352 = vunpack.c.l.b16 %v4064
    %v4353 = vunpack.c.l.b16 %v4065
    %v4354 = vunpack.c.l.b16 %v4066
    %v4355 = vunpack.c.l.b16 %v4067
    %v4356 = vunpack.c.l.b16 %v4068
    %v4357 = vunpack.c.l.b16 %v4069
    %v4358 = vunpack.c.l.b16 %v4070
    %v4359 = vunpack.c.l.b16 %v4071
    %v4360 = vunpack.c.l.b16 %v4072
    %v4361 = vunpack.c.l.b16 %v4073
    %v4362 = vunpack.c.l.b16 %v4074
    %v4363 = vunpack.c.l.b16 %v4075
    %v4364 = vunpack.c.l.b16 %v4076
    %v4365 = vunpack.c.l.b16 %v4077
    %v4366 = vunpack.c.l.b16 %v4078
    %v4367 = vunpack.c.l.b16 %v4079
    %v4368 = vunpack.c.l.b16 %v4080
    %v4369 = vunpack.c.l.b16 %v4081
    %v4370 = vunpack.c.l.b16 %v4082
    %v4371 = vunpack.c.l.b16 %v4083
    %v4372 = vunpack.c.l.b16 %v4084
    %v4373 = vunpack.c.l.b16 %v4085
    %v4374 = vunpack.c.l.b16 %v4086
    %v4375 = vunpack.c.l.b16 %v4087
    %v4376 = vunpack.c.l.b16 %v4088
    %v4377 = vunpack.c.l.b16 %v4089
    %v4378 = vunpack.c.l.b16 %v4090
    %v4379 = vunpack.c.l.b16 %v4091
    %v4380 = vunpack.c.l.b16 %v4092
    %v4381 = vunpack.c.l.b16 %v4093
    %v4382 = vunpack.c.l.b16 %v4094
    %v4383 = vunpack.c.l.b16 %v4095
    %v4384 = vunpack.c.l.b16 %v4096
    %v4385 = vunpack.c.l.b16 %v4097
    %v4386 = vunpack.c.l.b16 %v4098
    %v4387 = vunpack.c.l.b16 %v4099
    %v4388 = vunpack.c.l.b16 %v4100
    %v4389 = vunpack.c.l.b16 %v4101
    %v4390 = vunpack.c.l.b16 %v4102
    %v4391 = vunpack.c.l.b16 %v4103
    %v4392 = vunpack.c.l.b16 %v4104
    %v4393 = vunpack.c.l.b16 %v4105
    %v4394 = vunpack.c.l.b16 %v4106
    %v4395 = vunpack.c.l.b16 %v4107
    %v4396 = vunpack.c.l.b16 %v4108
    %v4397 = vunpack.c.l.b16 %v4109
    %v4398 = vunpack.c.l.b16 %v4110
    %v4399 = vunpack.c.l.b16 %v4111
    %v4400 = vunpack.c.l.b16 %v4112
    %v4401 = vunpack.c.l.b16 %v4113
    %v4402 = vunpack.c.l.b16 %v4114
    %v4403 = vunpack.c.l.b16 %v4115
    %v4404 = vunpack.c.l.b16 %v4116
    %v4405 = vunpack.c.l.b16 %v4117
    %v4406 = vunpack.c.l.b16 %v4118
    %v4407 = vunpack.c.l.b16 %v4119
    %v4408 = vunpack.c.l.b16 %v4120
    %v4409 = vunpack.c.l.b16 %v4121
    %v4410 = vunpack.c.l.b16 %v4122
    %v4411 = vunpack.c.l.b16 %v4123
    %v4412 = vunpack.c.l.b16 %v4124
    %v4413 = vunpack.c.l.b16 %v4125
    %v4414 = vunpack.c.l.b16 %v4126
    %v4415 = vunpack.c.l.b16 %v4127
    %v4416 = vunpack.c.l.b16 %v4128
    %v4417 = vunpack.c.l.b16 %v4129
    %v4418 = vunpack.c.l.b16 %v4130
    %v4419 = vunpack.c.l.b16 %v4131
    %v4420 = vunpack.c.l.b16 %v4132
    %v4421 = vunpack.c.l.b16 %v4133
    %v4422 = vunpack.c.l.b16 %v4134
    %v4423 = vunpack.c.l.b16 %v4135
    %v4424 = vunpack.c.l.b16 %v4136
    %v4425 = vunpack.c.l.b16 %v4137
    %v4426 = vunpack.c.l.b16 %v4138
    %v4427 = vunpack.c.l.b16 %v4139
    %v4428 = vunpack.c.l.b16 %v4140
    %v4429 = vunpack.c.l.b16 %v4141
    %v4430 = vunpack.c.l.b16 %v4142
    %v4431 = vunpack.c.l.b16 %v4143
    %v4432 = vunpack.c.l.b16 %v4144
    %v4433 = vunpack.c.l.b16 %v4145
    %v4434 = vunpack.c.l.b16 %v4146
    %v4435 = vunpack.c.l.b16 %v4147
    %v4436 = vunpack.c.l.b16 %v4148
    %v4437 = vunpack.c.l.b16 %v4149
    %v4438 = vunpack.c.l.b16 %v4150
    %v4439 = vunpack.c.l.b16 %v4151
    %v4440 = vunpack.c.l.b16 %v4152
    %v4441 = vunpack.c.l.b16 %v4153
    %v4442 = vunpack.c.l.b16 %v4154
    %v4443 = vunpack.c.l.b16 %v4155
    %v4444 = vunpack.c.l.b16 %v4156
    %v4445 = vunpack.c.l.b16 %v4157
    %v4446 = vunpack.c.l.b16 %v4158
    %v4447 = vunpack.c.l.b16 %v4159
    %v4448 = vunpack.c.l.b16 %v4160
    %v4449 = vunpack.c.l.b16 %v4161
    %v4450 = vunpack.c.l.b16 %v4162
    %v4451 = vunpack.c.l.b16 %v4163
    %v4452 = vunpack.c.l.b16 %v4164
    %v4453 = vunpack.c.l.b16 %v4165
    %v4454 = vunpack.c.l.b16 %v4166
    %v4455 = vunpack.c.l.b16 %v4167
    %v4456 = vunpack.c.l.b16 %v4168
    %v4457 = vunpack.c.l.b16 %v4169
    %v4458 = vunpack.c.l.b16 %v4170
    %v4459 = vunpack.c.l.b16 %v4171
    %v4460 = vunpack.c.l.b16 %v4172
    %v4461 = vunpack.c.l.b16 %v4173
    %v4462 = vunpack.c.l.b16 %v4174
    %v4463 = vunpack.c.l.b16 %v4175
    %v4464 = vunpack.c.l.b16 %v4176
    %v4465 = vunpack.c.l.b16 %v4177
    %v4466 = vunpack.c.l.b16 %v4178
    %v4467 = vunpack.c.l.b16 %v4179
    %v4468 = vunpack.c.l.b16 %v4180
    %v4469 = vunpack.c.l.b16 %v4181
    %v4470 = vunpack.c.l.b16 %v4182
    %v4471 = vunpack.c.l.b16 %v4183
    %v4472 = vunpack.c.l.b16 %v4184
    %v4473 = vunpack.c.l.b16 %v4185
    %v4474 = vunpack.c.l.b16 %v4186
    %v4475 = vunpack.c.l.b16 %v4187
    %v4476 = vunpack.c.l.b16 %v4188
    %v4477 = vunpack.c.l.b16 %v4189
    %v4478 = vunpack.c.l.b16 %v4190
    %v4479 = vunpack.c.l.b16 %v4191
    %v4480 = vunpack.c.l.b16 %v4192
    %v4481 = vunpack.c.l.b16 %v4193
    %v4482 = vunpack.c.l.b16 %v4194
    %v4483 = vunpack.c.l.b16 %v4195
    %v4484 = vunpack.c.l.b16 %v4196
    %v4485 = vunpack.c.l.b16 %v4197
    %v4486 = vunpack.c.l.b16 %v4198
    %v4487 = vunpack.c.l.b16 %v4199
    %v4488 = vunpack.c.l.b16 %v4200
    %v4489 = vunpack.c.l.b16 %v4201
    %v4490 = vunpack.c.l.b16 %v4202
    %v4491 = vunpack.c.l.b16 %v4203
    %v4492 = vpack.c.b16 %v4349, %v4348
    %v4493 = vpack.c.b16 %v4351, %v4350
    %v4494 = vpack.c.b16 %v4353, %v4352
    %v4495 = vpack.c.b16 %v4355, %v4354
    %v4496 = vpack.c.b16 %v4357, %v4356
    %v4497 = vpack.c.b16 %v4359, %v4358
    %v4498 = vpack.c.b16 %v4361, %v4360
    %v4499 = vpack.c.b16 %v4363, %v4362
    %v4500 = vpack.c.b16 %v4365, %v4364
    %v4501 = vpack.c.b16 %v4367, %v4366
    %v4502 = vpack.c.b16 %v4369, %v4368
    %v4503 = vpack.c.b16 %v4371, %v4370
    %v4504 = vpack.c.b16 %v4373, %v4372
    %v4505 = vpack.c.b16 %v4375, %v4374
    %v4506 = vpack.c.b16 %v4377, %v4376
    %v4507 = vpack.c.b16 %v4379, %v4378
    %v4508 = vpack.c.b16 %v4381, %v4380
    %v4509 = vpack.c.b16 %v4383, %v4382
    %v4510 = vpack.c.b16 %v4385, %v4384
    %v4511 = vpack.c.b16 %v4387, %v4386
    %v4512 = vpack.c.b16 %v4389, %v4388
    %v4513 = vpack.c.b16 %v4391, %v4390
    %v4514 = vpack.c.b16 %v4393, %v4392
    %v4515 = vpack.c.b16 %v4395, %v4394
    %v4516 = vpack.c.b16 %v4397, %v4396
    %v4517 = vpack.c.b16 %v4399, %v4398
    %v4518 = vpack.c.b16 %v4401, %v4400
    %v4519 = vpack.c.b16 %v4403, %v4402
    %v4520 = vpack.c.b16 %v4405, %v4404
    %v4521 = vpack.c.b16 %v4407, %v4406
    %v4522 = vpack.c.b16 %v4409, %v4408
    %v4523 = vpack.c.b16 %v4411, %v4410
    %v4524 = vpack.c.b16 %v4413, %v4412
    %v4525 = vpack.c.b16 %v4415, %v4414
    %v4526 = vpack.c.b16 %v4417, %v4416
    %v4527 = vpack.c.b16 %v4419, %v4418
    %v4528 = vpack.c.b16 %v4421, %v4420
    %v4529 = vpack.c.b16 %v4423, %v4422
    %v4530 = vpack.c.b16 %v4425, %v4424
    %v4531 = vpack.c.b16 %v4427, %v4426
    %v4532 = vpack.c.b16 %v4429, %v4428
    %v4533 = vpack.c.b16 %v4431, %v4430
    %v4534 = vpack.c.b16 %v4433, %v4432
    %v4535 = vpack.c.b16 %v4435, %v4434
    %v4536 = vpack.c.b16 %v4437, %v4436
    %v4537 = vpack.c.b16 %v4439, %v4438
    %v4538 = vpack.c.b16 %v4441, %v4440
    %v4539 = vpack.c.b16 %v4443, %v4442
    %v4540 = vpack.c.b16 %v4445, %v4444
    %v4541 = vpack.c.b16 %v4447, %v4446
    %v4542 = vpack.c.b16 %v4449, %v4448
    %v4543 = vpack.c.b16 %v4451, %v4450
    %v4544 = vpack.c.b16 %v4453, %v4452
    %v4545 = vpack.c.b16 %v4455, %v4454
    %v4546 = vpack.c.b16 %v4457, %v4456
    %v4547 = vpack.c.b16 %v4459, %v4458
    %v4548 = vpack.c.b16 %v4461, %v4460
    %v4549 = vpack.c.b16 %v4463, %v4462
    %v4550 = vpack.c.b16 %v4465, %v4464
    %v4551 = vpack.c.b16 %v4467, %v4466
    %v4552 = vpack.c.b16 %v4469, %v4468
    %v4553 = vpack.c.b16 %v4471, %v4470
    %v4554 = vpack.c.b16 %v4473, %v4472
    %v4555 = vpack.c.b16 %v4475, %v4474
    %v4556 = vpack.c.b16 %v4477, %v4476
    %v4557 = vpack.c.b16 %v4479, %v4478
    %v4558 = vpack.c.b16 %v4481, %v4480
    %v4559 = vpack.c.b16 %v4483, %v4482
    %v4560 = vpack.c.b16 %v4485, %v4484
    %v4561 = vpack.c.b16 %v4487, %v4486
    %v4562 = vpack.c.b16 %v4489, %v4488
    %v4563 = vpack.c.b16 %v4491, %v4490
    %4636 = vmatprep.subr.bf16.mxu0 0
    %4637 = vmatpush1.bf16.msra.mxu0 %v4492
    %4638 = vmatprep.subr.bf16.mxu0 0
    %4639 = vmatpush1.bf16.msra.mxu0 %v4493
    %4640 = vmatprep.subr.bf16.mxu0 0
    %4641 = vmatpush1.bf16.msra.mxu0 %v4494
    %4642 = vmatprep.subr.bf16.mxu0 0
    %4643 = vmatpush1.bf16.msra.mxu0 %v4495
    %4644 = vmatprep.subr.bf16.mxu0 0
    %4645 = vmatpush1.bf16.msra.mxu0 %v4496
    %4646 = vmatprep.subr.bf16.mxu0 0
    %4647 = vmatpush1.bf16.msra.mxu0 %v4497
    %4648 = vmatprep.subr.bf16.mxu0 0
    %4649 = vmatpush1.bf16.msra.mxu0 %v4498
    %4650 = vmatprep.subr.bf16.mxu0 0
    %4651 = vmatpush1.bf16.msra.mxu0 %v4499
    %4652 = vmatprep.subr.bf16.mxu0 0
    %4653 = vmatpush1.bf16.msra.mxu0 %v4500
    %4654 = vmatprep.subr.bf16.mxu0 0
    %4655 = vmatpush1.bf16.msra.mxu0 %v4501
    %4656 = vmatprep.subr.bf16.mxu0 0
    %4657 = vmatpush1.bf16.msra.mxu0 %v4502
    %4658 = vmatprep.subr.bf16.mxu0 0
    %4659 = vmatpush1.bf16.msra.mxu0 %v4503
    %4660 = vmatprep.subr.bf16.mxu0 0
    %4661 = vmatpush1.bf16.msra.mxu0 %v4504
    %4662 = vmatprep.subr.bf16.mxu0 0
    %4663 = vmatpush1.bf16.msra.mxu0 %v4505
    %4664 = vmatprep.subr.bf16.mxu0 0
    %4665 = vmatpush1.bf16.msra.mxu0 %v4506
    %4666 = vmatprep.subr.bf16.mxu0 0
    %4667 = vmatpush1.bf16.msra.mxu0 %v4507
    %4668 = vmatprep.mubr.bf16.mxu0 %v3989
    %4669 = vmatmul.mubr.bf16.gmra.mrb[0].mxu0 %v3988
    %v4670 = vpop.f32.mrb[0].mxu0
    %v4671 = vadd.f32 0.0, %v4670
    %v4672 = vpop.f32.mrb[0].mxu0
    %v4673 = vpop.f32.mrb[0].mxu0
    %v4674 = vadd.f32 0.0, %v4673
    %v4675 = vpop.f32.mrb[0].mxu0
    %4676 = vmatprep.mubr.bf16.mxu0 %v3998
    %4677 = vmatmul.mubr.bf16.gmra.mrb[0].mxu0 %v3997
    %v4678 = vpop.f32.mrb[0].mxu0
    %v4679 = vadd.f32 0.0, %v4678
    %v4680 = vpop.f32.mrb[0].mxu0
    %v4681 = vpop.f32.mrb[0].mxu0
    %v4682 = vadd.f32 0.0, %v4681
    %v4683 = vpop.f32.mrb[0].mxu0
    %4684 = vmatprep.mubr.bf16.mxu0 %v4007
    %4685 = vmatmul.mubr.bf16.gmra.mrb[0].mxu0 %v4006
    %v4686 = vpop.f32.mrb[0].mxu0
    %v4687 = vadd.f32 0.0, %v4686
    %v4688 = vpop.f32.mrb[0].mxu0
    %v4689 = vpop.f32.mrb[0].mxu0
    %v4690 = vadd.f32 0.0, %v4689
    %v4691 = vpop.f32.mrb[0].mxu0
    %4692 = vmatprep.mubr.bf16.mxu0 %v4016
    %4693 = vmatmul.mubr.bf16.gmra.mrb[0].mxu0 %v4015
    %v4694 = vpop.f32.mrb[0].mxu0
    %v4695 = vadd.f32 0.0, %v4694
    %v4696 = vpop.f32.mrb[0].mxu0
    %v4697 = vpop.f32.mrb[0].mxu0
    %v4698 = vadd.f32 0.0, %v4697
    %v4699 = vpop.f32.mrb[0].mxu0
    %4700 = vmatprep.mubr.bf16.mxu0 %v4025
    %4701 = vmatmul.mubr.bf16.gmra.mrb[0].mxu0 %v4024
    %v4702 = vpop.f32.mrb[0].mxu0
    %v4703 = vadd.f32 0.0, %v4702
    %v4704 = vpop.f32.mrb[0].mxu0
    %v4705 = vpop.f32.mrb[0].mxu0
    %v4706 = vadd.f32 0.0, %v4705
    %v4707 = vpop.f32.mrb[0].mxu0
    %4708 = vmatprep.mubr.bf16.mxu0 %v4034
    %4709 = vmatmul.mubr.bf16.gmra.mrb[0].mxu0 %v4033
    %v4710 = vpop.f32.mrb[0].mxu0
    %v4711 = vadd.f32 0.0, %v4710
    %v4712 = vpop.f32.mrb[0].mxu0
    %v4713 = vpop.f32.mrb[0].mxu0
    %v4714 = vadd.f32 0.0, %v4713
    %v4715 = vpop.f32.mrb[0].mxu0
    %4716 = vmatprep.mubr.bf16.mxu0 %v4043
    %4717 = vmatmul.mubr.bf16.gmra.mrb[0].mxu0 %v4042
    %v4718 = vpop.f32.mrb[0].mxu0
    %v4719 = vadd.f32 0.0, %v4718
    %v4720 = vpop.f32.mrb[0].mxu0
    %v4721 = vpop.f32.mrb[0].mxu0
    %v4722 = vadd.f32 0.0, %v4721
    %v4723 = vpop.f32.mrb[0].mxu0
    %4724 = vmatprep.mubr.bf16.mxu0 %v4052
    %4725 = vmatmul.mubr.bf16.gmra.mrb[0].mxu0 %v4051
    %v4726 = vpop.f32.mrb[0].mxu0
    %v4727 = vadd.f32 0.0, %v4726
    %v4728 = vpop.f32.mrb[0].mxu0
    %v4729 = vpop.f32.mrb[0].mxu0
    %v4730 = vadd.f32 0.0, %v4729
    %v4731 = vpop.f32.mrb[0].mxu0
    %4732 = vdwg.mxu0
    %4733 = vmatprep.subr.bf16.mxu0 0
    %4734 = vmatpush1.bf16.msra.mxu0 %v4508
    %4735 = vmatprep.subr.bf16.mxu0 0
    %4736 = vmatpush1.bf16.msra.mxu0 %v4509
    %4737 = vmatprep.subr.bf16.mxu0 0
    %4738 = vmatpush1.bf16.msra.mxu0 %v4510
    %4739 = vmatprep.subr.bf16.mxu0 0
    %4740 = vmatpush1.bf16.msra.mxu0 %v4511
    %4741 = vmatprep.subr.bf16.mxu0 0
    %4742 = vmatpush1.bf16.msra.mxu0 %v4512
    %4743 = vmatprep.subr.bf16.mxu0 0
    %4744 = vmatpush1.bf16.msra.mxu0 %v4513
    %4745 = vmatprep.subr.bf16.mxu0 0
    %4746 = vmatpush1.bf16.msra.mxu0 %v4514
    %4747 = vmatprep.subr.bf16.mxu0 0
    %4748 = vmatpush1.bf16.msra.mxu0 %v4515
    %4749 = vmatprep.subr.bf16.mxu0 0
    %4750 = vmatpush1.bf16.msra.mxu0 %v4516
    %4751 = vmatprep.subr.bf16.mxu0 0
    %4752 = vmatpush1.bf16.msra.mxu0 %v4517
    %4753 = vmatprep.subr.bf16.mxu0 0
    %4754 = vmatpush1.bf16.msra.mxu0 %v4518
    %4755 = vmatprep.subr.bf16.mxu0 0
    %4756 = vmatpush1.bf16.msra.mxu0 %v4519
    %4757 = vmatprep.subr.bf16.mxu0 0
    %4758 = vmatpush1.bf16.msra.mxu0 %v4520
    %4759 = vmatprep.subr.bf16.mxu0 0
    %4760 = vmatpush1.bf16.msra.mxu0 %v4521
    %4761 = vmatprep.subr.bf16.mxu0 0
    %4762 = vmatpush1.bf16.msra.mxu0 %v4522
    %4763 = vmatprep.subr.bf16.mxu0 0
    %4764 = vmatpush1.bf16.msra.mxu0 %v4523
    %4765 = vmatprep.mubr.bf16.mxu0 %v3991
    %4766 = vmatmul.mubr.bf16.gmra.mrb[0].mxu0 %v3990
    %v4767 = vpop.f32.mrb[0].mxu0
    %v4768 = vadd.f32 %v4671, %v4767
    %v4769 = vpop.f32.mrb[0].mxu0
    %v4770 = vpop.f32.mrb[0].mxu0
    %v4771 = vadd.f32 %v4674, %v4770
    %v4772 = vpop.f32.mrb[0].mxu0
    %4773 = vmatprep.mubr.bf16.mxu0 %v4000
    %4774 = vmatmul.mubr.bf16.gmra.mrb[0].mxu0 %v3999
    %v4775 = vpop.f32.mrb[0].mxu0
    %v4776 = vadd.f32 %v4679, %v4775
    %v4777 = vpop.f32.mrb[0].mxu0
    %v4778 = vpop.f32.mrb[0].mxu0
    %v4779 = vadd.f32 %v4682, %v4778
    %v4780 = vpop.f32.mrb[0].mxu0
    %4781 = vmatprep.mubr.bf16.mxu0 %v4009
    %4782 = vmatmul.mubr.bf16.gmra.mrb[0].mxu0 %v4008
    %v4783 = vpop.f32.mrb[0].mxu0
    %v4784 = vadd.f32 %v4687, %v4783
    %v4785 = vpop.f32.mrb[0].mxu0
    %v4786 = vpop.f32.mrb[0].mxu0
    %v4787 = vadd.f32 %v4690, %v4786
    %v4788 = vpop.f32.mrb[0].mxu0
    %4789 = vmatprep.mubr.bf16.mxu0 %v4018
    %4790 = vmatmul.mubr.bf16.gmra.mrb[0].mxu0 %v4017
    %v4791 = vpop.f32.mrb[0].mxu0
    %v4792 = vadd.f32 %v4695, %v4791
    %v4793 = vpop.f32.mrb[0].mxu0
    %v4794 = vpop.f32.mrb[0].mxu0
    %v4795 = vadd.f32 %v4698, %v4794
    %v4796 = vpop.f32.mrb[0].mxu0
    %4797 = vmatprep.mubr.bf16.mxu0 %v4027
    %4798 = vmatmul.mubr.bf16.gmra.mrb[0].mxu0 %v4026
    %v4799 = vpop.f32.mrb[0].mxu0
    %v4800 = vadd.f32 %v4703, %v4799
    %v4801 = vpop.f32.mrb[0].mxu0
    %v4802 = vpop.f32.mrb[0].mxu0
    %v4803 = vadd.f32 %v4706, %v4802
    %v4804 = vpop.f32.mrb[0].mxu0
    %4805 = vmatprep.mubr.bf16.mxu0 %v4036
    %4806 = vmatmul.mubr.bf16.gmra.mrb[0].mxu0 %v4035
    %v4807 = vpop.f32.mrb[0].mxu0
    %v4808 = vadd.f32 %v4711, %v4807
    %v4809 = vpop.f32.mrb[0].mxu0
    %v4810 = vpop.f32.mrb[0].mxu0
    %v4811 = vadd.f32 %v4714, %v4810
    %v4812 = vpop.f32.mrb[0].mxu0
    %4813 = vmatprep.mubr.bf16.mxu0 %v4045
    %4814 = vmatmul.mubr.bf16.gmra.mrb[0].mxu0 %v4044
    %v4815 = vpop.f32.mrb[0].mxu0
    %v4816 = vadd.f32 %v4719, %v4815
    %v4817 = vpop.f32.mrb[0].mxu0
    %v4818 = vpop.f32.mrb[0].mxu0
    %v4819 = vadd.f32 %v4722, %v4818
    %v4820 = vpop.f32.mrb[0].mxu0
    %4821 = vmatprep.mubr.bf16.mxu0 %v4054
    %4822 = vmatmul.mubr.bf16.gmra.mrb[0].mxu0 %v4053
    %v4823 = vpop.f32.mrb[0].mxu0
    %v4824 = vadd.f32 %v4727, %v4823
    %v4825 = vpop.f32.mrb[0].mxu0
    %v4826 = vpop.f32.mrb[0].mxu0
    %v4827 = vadd.f32 %v4730, %v4826
    %v4828 = vpop.f32.mrb[0].mxu0
    %4829 = vdwg.mxu0
    %4830 = vmatprep.subr.bf16.mxu0 0
    %4831 = vmatpush1.bf16.msra.mxu0 %v4524
    %4832 = vmatprep.subr.bf16.mxu0 0
    %4833 = vmatpush1.bf16.msra.mxu0 %v4525
    %4834 = vmatprep.subr.bf16.mxu0 0
    %4835 = vmatpush1.bf16.msra.mxu0 %v4526
    %4836 = vmatprep.subr.bf16.mxu0 0
    %4837 = vmatpush1.bf16.msra.mxu0 %v4527
    %4838 = vmatprep.subr.bf16.mxu0 0
    %4839 = vmatpush1.bf16.msra.mxu0 %v4528
    %4840 = vmatprep.subr.bf16.mxu0 0
    %4841 = vmatpush1.bf16.msra.mxu0 %v4529
    %4842 = vmatprep.subr.bf16.mxu0 0
    %4843 = vmatpush1.bf16.msra.mxu0 %v4530
    %4844 = vmatprep.subr.bf16.mxu0 0
    %4845 = vmatpush1.bf16.msra.mxu0 %v4531
    %4846 = vmatprep.subr.bf16.mxu0 0
    %4847 = vmatpush1.bf16.msra.mxu0 %v4532
    %4848 = vmatprep.subr.bf16.mxu0 0
    %4849 = vmatpush1.bf16.msra.mxu0 %v4533
    %4850 = vmatprep.subr.bf16.mxu0 0
    %4851 = vmatpush1.bf16.msra.mxu0 %v4534
    %4852 = vmatprep.subr.bf16.mxu0 0
    %4853 = vmatpush1.bf16.msra.mxu0 %v4535
    %4854 = vmatprep.subr.bf16.mxu0 0
    %4855 = vmatpush1.bf16.msra.mxu0 %v4536
    %4856 = vmatprep.subr.bf16.mxu0 0
    %4857 = vmatpush1.bf16.msra.mxu0 %v4537
    %4858 = vmatprep.subr.bf16.mxu0 0
    %4859 = vmatpush1.bf16.msra.mxu0 %v4538
    %4860 = vmatprep.subr.bf16.mxu0 0
    %4861 = vmatpush1.bf16.msra.mxu0 %v4539
    %4862 = vmatprep.mubr.bf16.mxu0 %v3993
    %4863 = vmatmul.mubr.bf16.gmra.mrb[0].mxu0 %v3992
    %v4864 = vpop.f32.mrb[0].mxu0
    %v4865 = vadd.f32 %v4768, %v4864
    %v4866 = vpop.f32.mrb[0].mxu0
    %v4867 = vpop.f32.mrb[0].mxu0
    %v4868 = vadd.f32 %v4771, %v4867
    %v4869 = vpop.f32.mrb[0].mxu0
    %4870 = vmatprep.mubr.bf16.mxu0 %v4002
    %4871 = vmatmul.mubr.bf16.gmra.mrb[0].mxu0 %v4001
    %v4872 = vpop.f32.mrb[0].mxu0
    %v4873 = vadd.f32 %v4776, %v4872
    %v4874 = vpop.f32.mrb[0].mxu0
    %v4875 = vpop.f32.mrb[0].mxu0
    %v4876 = vadd.f32 %v4779, %v4875
    %v4877 = vpop.f32.mrb[0].mxu0
    %4878 = vmatprep.mubr.bf16.mxu0 %v4011
    %4879 = vmatmul.mubr.bf16.gmra.mrb[0].mxu0 %v4010
    %v4880 = vpop.f32.mrb[0].mxu0
    %v4881 = vadd.f32 %v4784, %v4880
    %v4882 = vpop.f32.mrb[0].mxu0
    %v4883 = vpop.f32.mrb[0].mxu0
    %v4884 = vadd.f32 %v4787, %v4883
    %v4885 = vpop.f32.mrb[0].mxu0
    %4886 = vmatprep.mubr.bf16.mxu0 %v4020
    %4887 = vmatmul.mubr.bf16.gmra.mrb[0].mxu0 %v4019
    %v4888 = vpop.f32.mrb[0].mxu0
    %v4889 = vadd.f32 %v4792, %v4888
    %v4890 = vpop.f32.mrb[0].mxu0
    %v4891 = vpop.f32.mrb[0].mxu0
    %v4892 = vadd.f32 %v4795, %v4891
    %v4893 = vpop.f32.mrb[0].mxu0
    %4894 = vmatprep.mubr.bf16.mxu0 %v4029
    %4895 = vmatmul.mubr.bf16.gmra.mrb[0].mxu0 %v4028
    %v4896 = vpop.f32.mrb[0].mxu0
    %v4897 = vadd.f32 %v4800, %v4896
    %v4898 = vpop.f32.mrb[0].mxu0
    %v4899 = vpop.f32.mrb[0].mxu0
    %v4900 = vadd.f32 %v4803, %v4899
    %v4901 = vpop.f32.mrb[0].mxu0
    %4902 = vmatprep.mubr.bf16.mxu0 %v4038
    %4903 = vmatmul.mubr.bf16.gmra.mrb[0].mxu0 %v4037
    %v4904 = vpop.f32.mrb[0].mxu0
    %v4905 = vadd.f32 %v4808, %v4904
    %v4906 = vpop.f32.mrb[0].mxu0
    %v4907 = vpop.f32.mrb[0].mxu0
    %v4908 = vadd.f32 %v4811, %v4907
    %v4909 = vpop.f32.mrb[0].mxu0
    %4910 = vmatprep.mubr.bf16.mxu0 %v4047
    %4911 = vmatmul.mubr.bf16.gmra.mrb[0].mxu0 %v4046
    %v4912 = vpop.f32.mrb[0].mxu0
    %v4913 = vadd.f32 %v4816, %v4912
    %v4914 = vpop.f32.mrb[0].mxu0
    %v4915 = vpop.f32.mrb[0].mxu0
    %v4916 = vadd.f32 %v4819, %v4915
    %v4917 = vpop.f32.mrb[0].mxu0
    %4918 = vmatprep.mubr.bf16.mxu0 %v4056
    %4919 = vmatmul.mubr.bf16.gmra.mrb[0].mxu0 %v4055
    %v4920 = vpop.f32.mrb[0].mxu0
    %v4921 = vadd.f32 %v4824, %v4920
    %v4922 = vpop.f32.mrb[0].mxu0
    %v4923 = vpop.f32.mrb[0].mxu0
    %v4924 = vadd.f32 %v4827, %v4923
    %v4925 = vpop.f32.mrb[0].mxu0
    %4926 = vdwg.mxu0
    %4927 = vmatprep.subr.bf16.mxu0 0
    %4928 = vmatpush1.bf16.msra.mxu0 %v4540
    %4929 = vmatprep.subr.bf16.mxu0 0
    %4930 = vmatpush1.bf16.msra.mxu0 %v4541
    %4931 = vmatprep.subr.bf16.mxu0 0
    %4932 = vmatpush1.bf16.msra.mxu0 %v4542
    %4933 = vmatprep.subr.bf16.mxu0 0
    %4934 = vmatpush1.bf16.msra.mxu0 %v4543
    %4935 = vmatprep.subr.bf16.mxu0 0
    %4936 = vmatpush1.bf16.msra.mxu0 %v4544
    %4937 = vmatprep.subr.bf16.mxu0 0
    %4938 = vmatpush1.bf16.msra.mxu0 %v4545
    %4939 = vmatprep.subr.bf16.mxu0 0
    %4940 = vmatpush1.bf16.msra.mxu0 %v4546
    %4941 = vmatprep.subr.bf16.mxu0 0
    %4942 = vmatpush1.bf16.msra.mxu0 %v4547
    %4943 = vmatprep.subr.bf16.mxu0 0
    %4944 = vmatpush1.bf16.msra.mxu0 %v4548
    %4945 = vmatprep.subr.bf16.mxu0 0
    %4946 = vmatpush1.bf16.msra.mxu0 %v4549
    %4947 = vmatprep.subr.bf16.mxu0 0
    %4948 = vmatpush1.bf16.msra.mxu0 %v4550
    %4949 = vmatprep.subr.bf16.mxu0 0
    %4950 = vmatpush1.bf16.msra.mxu0 %v4551
    %4951 = vmatprep.subr.bf16.mxu0 0
    %4952 = vmatpush1.bf16.msra.mxu0 %v4552
    %4953 = vmatprep.subr.bf16.mxu0 0
    %4954 = vmatpush1.bf16.msra.mxu0 %v4553
    %4955 = vmatprep.subr.bf16.mxu0 0
    %4956 = vmatpush1.bf16.msra.mxu0 %v4554
    %4957 = vmatprep.subr.bf16.mxu0 0
    %4958 = vmatpush1.bf16.msra.mxu0 %v4555
    %4959 = vmatprep.mubr.bf16.mxu0 %v3995
    %4960 = vmatmul.mubr.bf16.gmra.mrb[0].mxu0 %v3994
    %v4961 = vpop.f32.mrb[0].mxu0
    %v4962 = vadd.f32 %v4865, %v4961
    %v4963 = vpop.f32.mrb[0].mxu0
    %v4964 = vpop.f32.mrb[0].mxu0
    %v4965 = vadd.f32 %v4868, %v4964
    %v4966 = vpop.f32.mrb[0].mxu0
    %4967 = vmatprep.mubr.bf16.mxu0 %v4004
    %4968 = vmatmul.mubr.bf16.gmra.mrb[0].mxu0 %v4003
    %v4969 = vpop.f32.mrb[0].mxu0
    %v4970 = vadd.f32 %v4873, %v4969
    %v4971 = vpop.f32.mrb[0].mxu0
    %v4972 = vpop.f32.mrb[0].mxu0
    %v4973 = vadd.f32 %v4876, %v4972
    %v4974 = vpop.f32.mrb[0].mxu0
    %4975 = vmatprep.mubr.bf16.mxu0 %v4013
    %4976 = vmatmul.mubr.bf16.gmra.mrb[0].mxu0 %v4012
    %v4977 = vpop.f32.mrb[0].mxu0
    %v4978 = vadd.f32 %v4881, %v4977
    %v4979 = vpop.f32.mrb[0].mxu0
    %v4980 = vpop.f32.mrb[0].mxu0
    %v4981 = vadd.f32 %v4884, %v4980
    %v4982 = vpop.f32.mrb[0].mxu0
    %4983 = vmatprep.mubr.bf16.mxu0 %v4022
    %4984 = vmatmul.mubr.bf16.gmra.mrb[0].mxu0 %v4021
    %v4985 = vpop.f32.mrb[0].mxu0
    %v4986 = vadd.f32 %v4889, %v4985
    %v4987 = vpop.f32.mrb[0].mxu0
    %v4988 = vpop.f32.mrb[0].mxu0
    %v4989 = vadd.f32 %v4892, %v4988
    %v4990 = vpop.f32.mrb[0].mxu0
    %4991 = vmatprep.mubr.bf16.mxu0 %v4031
    %4992 = vmatmul.mubr.bf16.gmra.mrb[0].mxu0 %v4030
    %v4993 = vpop.f32.mrb[0].mxu0
    %v4994 = vadd.f32 %v4897, %v4993
    %v4995 = vpop.f32.mrb[0].mxu0
    %v4996 = vpop.f32.mrb[0].mxu0
    %v4997 = vadd.f32 %v4900, %v4996
    %v4998 = vpop.f32.mrb[0].mxu0
    %4999 = vmatprep.mubr.bf16.mxu0 %v4040
    %5000 = vmatmul.mubr.bf16.gmra.mrb[0].mxu0 %v4039
    %v5001 = vpop.f32.mrb[0].mxu0
    %v5002 = vadd.f32 %v4905, %v5001
    %v5003 = vpop.f32.mrb[0].mxu0
    %v5004 = vpop.f32.mrb[0].mxu0
    %v5005 = vadd.f32 %v4908, %v5004
    %v5006 = vpop.f32.mrb[0].mxu0
    %5007 = vmatprep.mubr.bf16.mxu0 %v4049
    %5008 = vmatmul.mubr.bf16.gmra.mrb[0].mxu0 %v4048
    %v5009 = vpop.f32.mrb[0].mxu0
    %v5010 = vadd.f32 %v4913, %v5009
    %v5011 = vpop.f32.mrb[0].mxu0
    %v5012 = vpop.f32.mrb[0].mxu0
    %v5013 = vadd.f32 %v4916, %v5012
    %v5014 = vpop.f32.mrb[0].mxu0
    %5015 = vmatprep.mubr.bf16.mxu0 %v4058
    %5016 = vmatmul.mubr.bf16.gmra.mrb[0].mxu0 %v4057
    %v5017 = vpop.f32.mrb[0].mxu0
    %v5018 = vadd.f32 %v4921, %v5017
    %v5019 = vpop.f32.mrb[0].mxu0
    %v5020 = vpop.f32.mrb[0].mxu0
    %v5021 = vadd.f32 %v4924, %v5020
    %v5022 = vpop.f32.mrb[0].mxu0
    %5023 = vdwg.mxu0
    %5024 = vmatprep.subr.bf16.mxu0 0
    %5025 = vmatpush1.bf16.msra.mxu0 %v4556
    %5026 = vmatprep.subr.bf16.mxu0 0
    %5027 = vmatpush1.bf16.msra.mxu0 %v4557
    %5028 = vmatprep.subr.bf16.mxu0 0
    %5029 = vmatpush1.bf16.msra.mxu0 %v4558
    %5030 = vmatprep.subr.bf16.mxu0 0
    %5031 = vmatpush1.bf16.msra.mxu0 %v4559
    %5032 = vmatprep.subr.bf16.mxu0 0
    %5033 = vmatpush1.bf16.msra.mxu0 %v4560
    %5034 = vmatprep.subr.bf16.mxu0 0
    %5035 = vmatpush1.bf16.msra.mxu0 %v4561
    %5036 = vmatprep.subr.bf16.mxu0 0
    %5037 = vmatpush1.bf16.msra.mxu0 %v4562
    %5038 = vmatprep.subr.bf16.mxu0 0
    %5039 = vmatpush1.bf16.msra.mxu0 %v4563
    %5040 = vmatprep.subr.bf16.mxu0 0
    %5041 = vmatpush1.bf16.msra.mxu0 0
    %5042 = vmatprep.subr.bf16.mxu0 0
    %5043 = vmatpush1.bf16.msra.mxu0 0
    %5044 = vmatprep.subr.bf16.mxu0 0
    %5045 = vmatpush1.bf16.msra.mxu0 0
    %5046 = vmatprep.subr.bf16.mxu0 0
    %5047 = vmatpush1.bf16.msra.mxu0 0
    %5048 = vmatprep.subr.bf16.mxu0 0
    %5049 = vmatpush1.bf16.msra.mxu0 0
    %5050 = vmatprep.subr.bf16.mxu0 0
    %5051 = vmatpush1.bf16.msra.mxu0 0
    %5052 = vmatprep.subr.bf16.mxu0 0
    %5053 = vmatpush1.bf16.msra.mxu0 0
    %5054 = vmatprep.subr.bf16.mxu0 0
    %5055 = vmatpush1.bf16.msra.mxu0 0
    %5056 = vmatprep.mubr.bf16.mxu0 0
    %5057 = vmatmul.mubr.bf16.gmra.mrb[0].mxu0 %v3996
    %v5058 = vpop.f32.mrb[0].mxu0
    %v5059 = vadd.f32 %v4962, %v5058
    %v5060 = vpop.f32.mrb[0].mxu0
    %v5061 = vpop.f32.mrb[0].mxu0
    %v5062 = vadd.f32 %v4965, %v5061
    %v5063 = vpop.f32.mrb[0].mxu0
    %5064 = vmatprep.mubr.bf16.mxu0 0
    %5065 = vmatmul.mubr.bf16.gmra.mrb[0].mxu0 %v4005
    %v5066 = vpop.f32.mrb[0].mxu0
    %v5067 = vadd.f32 %v4970, %v5066
    %v5068 = vpop.f32.mrb[0].mxu0
    %v5069 = vpop.f32.mrb[0].mxu0
    %v5070 = vadd.f32 %v4973, %v5069
    %v5071 = vpop.f32.mrb[0].mxu0
    %5072 = vmatprep.mubr.bf16.mxu0 0
    %5073 = vmatmul.mubr.bf16.gmra.mrb[0].mxu0 %v4014
    %v5074 = vpop.f32.mrb[0].mxu0
    %v5075 = vadd.f32 %v4978, %v5074
    %v5076 = vpop.f32.mrb[0].mxu0
    %v5077 = vpop.f32.mrb[0].mxu0
    %v5078 = vadd.f32 %v4981, %v5077
    %v5079 = vpop.f32.mrb[0].mxu0
    %5080 = vmatprep.mubr.bf16.mxu0 0
    %5081 = vmatmul.mubr.bf16.gmra.mrb[0].mxu0 %v4023
    %v5082 = vpop.f32.mrb[0].mxu0
    %v5083 = vadd.f32 %v4986, %v5082
    %v5084 = vpop.f32.mrb[0].mxu0
    %v5085 = vpop.f32.mrb[0].mxu0
    %v5086 = vadd.f32 %v4989, %v5085
    %v5087 = vpop.f32.mrb[0].mxu0
    %5088 = vmatprep.mubr.bf16.mxu0 0
    %5089 = vmatmul.mubr.bf16.gmra.mrb[0].mxu0 %v4032
    %v5090 = vpop.f32.mrb[0].mxu0
    %v5091 = vadd.f32 %v4994, %v5090
    %v5092 = vpop.f32.mrb[0].mxu0
    %v5093 = vpop.f32.mrb[0].mxu0
    %v5094 = vadd.f32 %v4997, %v5093
    %v5095 = vpop.f32.mrb[0].mxu0
    %5096 = vmatprep.mubr.bf16.mxu0 0
    %5097 = vmatmul.mubr.bf16.gmra.mrb[0].mxu0 %v4041
    %v5098 = vpop.f32.mrb[0].mxu0
    %v5099 = vadd.f32 %v5002, %v5098
    %v5100 = vpop.f32.mrb[0].mxu0
    %v5101 = vpop.f32.mrb[0].mxu0
    %v5102 = vadd.f32 %v5005, %v5101
    %v5103 = vpop.f32.mrb[0].mxu0
    %5104 = vmatprep.mubr.bf16.mxu0 0
    %5105 = vmatmul.mubr.bf16.gmra.mrb[0].mxu0 %v4050
    %v5106 = vpop.f32.mrb[0].mxu0
    %v5107 = vadd.f32 %v5010, %v5106
    %v5108 = vpop.f32.mrb[0].mxu0
    %v5109 = vpop.f32.mrb[0].mxu0
    %v5110 = vadd.f32 %v5013, %v5109
    %v5111 = vpop.f32.mrb[0].mxu0
    %5112 = vmatprep.mubr.bf16.mxu0 0
    %5113 = vmatmul.mubr.bf16.gmra.mrb[0].mxu0 %v4059
    %v5114 = vpop.f32.mrb[0].mxu0
    %v5115 = vadd.f32 %v5018, %v5114
    %v5116 = vpop.f32.mrb[0].mxu0
    %v5117 = vpop.f32.mrb[0].mxu0
    %v5118 = vadd.f32 %v5021, %v5117
    %v5119 = vpop.f32.mrb[0].mxu0
    %5120 = vdwg.mxu0
    %v5121 = vld [vmem:[%s8] sm:$0x1]
    %v5122 = vld [vmem:[%s9] sm:$0x1]
    %v5123 = vsel %vm297, %v5059, 0.0
    %v5124 = vsel %vm297, %v5062, 0.0
    %v5125 = vadd.f32 %v5123, %v5124
    %v5126 = vsel %vm297, %v5067, 0.0
    %v5127 = vadd.f32 %v5125, %v5126
    %v5128 = vsel %vm297, %v5070, 0.0
    %v5129 = vadd.f32 %v5127, %v5128
    %v5130 = vsel %vm297, %v5075, 0.0
    %v5131 = vadd.f32 %v5129, %v5130
    %v5132 = vsel %vm297, %v5078, 0.0
    %v5133 = vadd.f32 %v5131, %v5132
    %v5134 = vsel %vm297, %v5083, 0.0
    %v5135 = vadd.f32 %v5133, %v5134
    %v5136 = vsel %vm297, %v5086, 0.0
    %v5137 = vadd.f32 %v5135, %v5136
    %v5138 = vsel %vm297, %v5091, 0.0
    %v5139 = vadd.f32 %v5137, %v5138
    %v5140 = vsel %vm297, %v5094, 0.0
    %v5141 = vadd.f32 %v5139, %v5140
    %v5142 = vsel %vm297, %v5099, 0.0
    %v5143 = vadd.f32 %v5141, %v5142
    %v5144 = vsel %vm297, %v5102, 0.0
    %v5145 = vadd.f32 %v5143, %v5144
    %v5146 = vsel %vm297, %v5107, 0.0
    %v5147 = vadd.f32 %v5145, %v5146
    %v5148 = vsel %vm297, %v5110, 0.0
    %v5149 = vadd.f32 %v5147, %v5148
    %v5150 = vsel %vm297, %v5115, 0.0
    %v5151 = vadd.f32 %v5149, %v5150
    %v5152 = vsel %vm297, %v5118, 0.0
    %v5153 = vadd.f32 %v5151, %v5152
    %v5154 = vrot.slane %v5153, 4
    %v5155 = vadd.f32 %v5153, %v5154
    %v5156 = vrot.slane %v5155, 2
    %v5157 = vadd.f32 %v5155, %v5156
    %v5158 = vrot.slane %v5157, 1
    %v5159 = vadd.f32 %v5157, %v5158
    %v5160 = vmul.f32 %v5159, 0.0078125
    %v5161 = vsub.f32 %v5059, %v5160
    %v5162 = vsub.f32 %v5062, %v5160
    %v5163 = vsub.f32 %v5067, %v5160
    %v5164 = vsub.f32 %v5070, %v5160
    %v5165 = vsub.f32 %v5075, %v5160
    %v5166 = vsub.f32 %v5078, %v5160
    %v5167 = vsub.f32 %v5083, %v5160
    %v5168 = vsub.f32 %v5086, %v5160
    %v5169 = vsub.f32 %v5091, %v5160
    %v5170 = vsub.f32 %v5094, %v5160
    %v5171 = vsub.f32 %v5099, %v5160
    %v5172 = vsub.f32 %v5102, %v5160
    %v5173 = vsub.f32 %v5107, %v5160
    %v5174 = vsub.f32 %v5110, %v5160
    %v5175 = vsub.f32 %v5115, %v5160
    %v5176 = vsub.f32 %v5118, %v5160
    %v5177 = vmul.f32 %v5161, %v5161
    %v5178 = vmul.f32 %v5162, %v5162
    %v5179 = vmul.f32 %v5163, %v5163
    %v5180 = vmul.f32 %v5164, %v5164
    %v5181 = vmul.f32 %v5165, %v5165
    %v5182 = vmul.f32 %v5166, %v5166
    %v5183 = vmul.f32 %v5167, %v5167
    %v5184 = vmul.f32 %v5168, %v5168
    %v5185 = vmul.f32 %v5169, %v5169
    %v5186 = vmul.f32 %v5170, %v5170
    %v5187 = vmul.f32 %v5171, %v5171
    %v5188 = vmul.f32 %v5172, %v5172
    %v5189 = vmul.f32 %v5173, %v5173
    %v5190 = vmul.f32 %v5174, %v5174
    %v5191 = vmul.f32 %v5175, %v5175
    %v5192 = vmul.f32 %v5176, %v5176
    %v5193 = vsel %vm297, %v5177, 0.0
    %v5194 = vsel %vm297, %v5178, 0.0
    %v5195 = vadd.f32 %v5193, %v5194
    %v5196 = vsel %vm297, %v5179, 0.0
    %v5197 = vadd.f32 %v5195, %v5196
    %v5198 = vsel %vm297, %v5180, 0.0
    %v5199 = vadd.f32 %v5197, %v5198
    %v5200 = vsel %vm297, %v5181, 0.0
    %v5201 = vadd.f32 %v5199, %v5200
    %v5202 = vsel %vm297, %v5182, 0.0
    %v5203 = vadd.f32 %v5201, %v5202
    %v5204 = vsel %vm297, %v5183, 0.0
    %v5205 = vadd.f32 %v5203, %v5204
    %v5206 = vsel %vm297, %v5184, 0.0
    %v5207 = vadd.f32 %v5205, %v5206
    %v5208 = vsel %vm297, %v5185, 0.0
    %v5209 = vadd.f32 %v5207, %v5208
    %v5210 = vsel %vm297, %v5186, 0.0
    %v5211 = vadd.f32 %v5209, %v5210
    %v5212 = vsel %vm297, %v5187, 0.0
    %v5213 = vadd.f32 %v5211, %v5212
    %v5214 = vsel %vm297, %v5188, 0.0
    %v5215 = vadd.f32 %v5213, %v5214
    %v5216 = vsel %vm297, %v5189, 0.0
    %v5217 = vadd.f32 %v5215, %v5216
    %v5218 = vsel %vm297, %v5190, 0.0
    %v5219 = vadd.f32 %v5217, %v5218
    %v5220 = vsel %vm297, %v5191, 0.0
    %v5221 = vadd.f32 %v5219, %v5220
    %v5222 = vsel %vm297, %v5192, 0.0
    %v5223 = vadd.f32 %v5221, %v5222
    %v5224 = vrot.slane %v5223, 4
    %v5225 = vadd.f32 %v5223, %v5224
    %v5226 = vrot.slane %v5225, 2
    %v5227 = vadd.f32 %v5225, %v5226
    %v5228 = vrot.slane %v5227, 1
    %v5229 = vadd.f32 %v5227, %v5228
    %v5230 = vmul.f32 %v5229, 0.0078125
    %v5231 = vadd.f32 %v5230, 1e-05
    %v5232 = vrsqrt.pop %v5231
    %v5233 = vmul.f32 %v5121, %v5232
    %v5235 = vlaneseq
    %v5236 = vshrl.u32 %v5235, 7
    %v5237 = vsub.s32 0, %v5236
    %v5238 = vrot.slane %v5233, %v5237
    %v5240 = vmul.f32 %v5161, %v5238
    %v5241 = vmul.f32 %v5162, %v5238
    %v5242 = vmul.f32 %v5163, %v5238
    %v5243 = vmul.f32 %v5164, %v5238
    %v5244 = vmul.f32 %v5165, %v5238
    %v5245 = vmul.f32 %v5166, %v5238
    %v5246 = vmul.f32 %v5167, %v5238
    %v5247 = vmul.f32 %v5168, %v5238
    %v5248 = vmul.f32 %v5169, %v5238
    %v5249 = vmul.f32 %v5170, %v5238
    %v5250 = vmul.f32 %v5171, %v5238
    %v5251 = vmul.f32 %v5172, %v5238
    %v5252 = vmul.f32 %v5173, %v5238
    %v5253 = vmul.f32 %v5174, %v5238
    %v5254 = vmul.f32 %v5175, %v5238
    %v5255 = vmul.f32 %v5176, %v5238
    %v5257 = vlaneseq
    %v5258 = vshrl.u32 %v5257, 7
    %v5259 = vsub.s32 0, %v5258
    %v5260 = vrot.slane %v5122, %v5259
    %v5262 = vadd.f32 %v5240, %v5260
    %v5263 = vadd.f32 %v5241, %v5260
    %v5264 = vadd.f32 %v5242, %v5260
    %v5265 = vadd.f32 %v5243, %v5260
    %v5266 = vadd.f32 %v5244, %v5260
    %v5267 = vadd.f32 %v5245, %v5260
    %v5268 = vadd.f32 %v5246, %v5260
    %v5269 = vadd.f32 %v5247, %v5260
    %v5270 = vadd.f32 %v5248, %v5260
    %v5271 = vadd.f32 %v5249, %v5260
    %v5272 = vadd.f32 %v5250, %v5260
    %v5273 = vadd.f32 %v5251, %v5260
    %v5274 = vadd.f32 %v5252, %v5260
    %v5275 = vadd.f32 %v5253, %v5260
    %v5276 = vadd.f32 %v5254, %v5260
    %v5277 = vadd.f32 %v5255, %v5260
    %v5278 = vtanh.pop %v5262
    %v5279 = vtanh.pop %v5263
    %v5280 = vtanh.pop %v5264
    %v5281 = vtanh.pop %v5265
    %v5282 = vtanh.pop %v5266
    %v5283 = vtanh.pop %v5267
    %v5284 = vtanh.pop %v5268
    %v5285 = vtanh.pop %v5269
    %v5286 = vtanh.pop %v5270
    %v5287 = vtanh.pop %v5271
    %v5288 = vtanh.pop %v5272
    %v5289 = vtanh.pop %v5273
    %v5290 = vtanh.pop %v5274
    %v5291 = vtanh.pop %v5275
    %v5292 = vtanh.pop %v5276
    %v5293 = vtanh.pop %v5277
    %5294 = vst.msk [vmem:[#allocation9] sm:$0xff] %vm297, %v5278
    %5295 = vst.msk [vmem:[#allocation9 + $0x8] sm:$0xff] %vm297, %v5279
    %5296 = vst.msk [vmem:[#allocation9 + $0x10] sm:$0xff] %vm297, %v5280
    %5297 = vst.msk [vmem:[#allocation9 + $0x18] sm:$0xff] %vm297, %v5281
    %5298 = vst.msk [vmem:[#allocation9 + $0x20] sm:$0xff] %vm297, %v5282
    %5299 = vst.msk [vmem:[#allocation9 + $0x28] sm:$0xff] %vm297, %v5283
    %5300 = vst.msk [vmem:[#allocation9 + $0x30] sm:$0xff] %vm297, %v5284
    %5301 = vst.msk [vmem:[#allocation9 + $0x38] sm:$0xff] %vm297, %v5285
    %5302 = vst.msk [vmem:[#allocation9 + $0x40] sm:$0xff] %vm297, %v5286
    %5303 = vst.msk [vmem:[#allocation9 + $0x48] sm:$0xff] %vm297, %v5287
    %5304 = vst.msk [vmem:[#allocation9 + $0x50] sm:$0xff] %vm297, %v5288
    %5305 = vst.msk [vmem:[#allocation9 + $0x58] sm:$0xff] %vm297, %v5289
    %5306 = vst.msk [vmem:[#allocation9 + $0x60] sm:$0xff] %vm297, %v5290
    %5307 = vst.msk [vmem:[#allocation9 + $0x68] sm:$0xff] %vm297, %v5291
    %5308 = vst.msk [vmem:[#allocation9 + $0x70] sm:$0xff] %vm297, %v5292
    %5309 = vst.msk [vmem:[#allocation9 + $0x78] sm:$0xff] %vm297, %v5293
    // Predicated region
    $region42: #{encoder_forward.1} parent=1 // pred_check
      _
    $region43: #{encoder_forward.1} parent=1 // pred_check_branch
      %5311 = sbr.rel (0) target = $region45
    $region44: #{encoder_forward.1} parent=1 // pred_region
      _
    $region45: #{encoder_forward.1} parent=1 // pred_fallthru
      _
    // Predicated region
    $region46: #{encoder_forward.1} parent=1 // pred_check
      _
    $region47: #{encoder_forward.1} parent=1 // pred_check_branch
      %5313 = sbr.rel (0) target = $region49
    $region48: #{encoder_forward.1} parent=1 // pred_region
      %s5315 = ssub.s32 2048, 2048
      %5316 = vsyncadd [#allocation8], %s5315
      %s5317 = sshll.u32 [#allocation7], 4
      %s5318 = int_to_ptr.vmem [resolvable:$true] %s5317
      %5323 = dma.vmem_to_hbm [thread:$0]  %s5318, 2048, %s11, [#allocation8], 128, 128, 8
    $region49: #{encoder_forward.1} parent=1 // pred_fallthru
      _
    // Predicated region
    $region50: #{encoder_forward.1} parent=1 // pred_check
      _
    $region51: #{encoder_forward.1} parent=1 // pred_check_branch
      %5325 = sbr.rel (0) target = $region53
    $region52: #{encoder_forward.1} parent=1 // pred_region
      %s5327 = ssub.s32 2048, 2048
      %5328 = vsyncadd [#allocation10], %s5327
      %s5329 = sshll.u32 [#allocation9], 4
      %s5330 = int_to_ptr.vmem [resolvable:$true] %s5329
      %5335 = dma.vmem_to_hbm [thread:$0]  %s5330, 2048, %s12, [#allocation10], 128, 128, 8
    $region53: #{encoder_forward.1} parent=1 // pred_fallthru
      _
    // Predicated region
    $region54: #{encoder_forward.1} parent=1 // pred_check
      _
    $region55: #{encoder_forward.1} parent=1 // pred_check_branch
      %5337 = sbr.rel (0) target = $region57
    $region56: #{encoder_forward.1} parent=1 // pred_region
      _
    $region57: #{encoder_forward.1} parent=1 // pred_fallthru
      _
    // Predicated region
    $region58: #{encoder_forward.1} parent=1 // pred_check
      _
    $region59: #{encoder_forward.1} parent=1 // pred_check_branch
      %5339 = sbr.rel (0) target = $region61
    $region60: #{encoder_forward.1} parent=1 // pred_region
      %5340 = dma.done [#allocation8], 2048
    $region61: #{encoder_forward.1} parent=1 // pred_fallthru
      _
    // Predicated region
    $region62: #{encoder_forward.1} parent=1 // pred_check
      _
    $region63: #{encoder_forward.1} parent=1 // pred_check_branch
      %5342 = sbr.rel (0) target = $region65
    $region64: #{encoder_forward.1} parent=1 // pred_region
      %5343 = dma.done [#allocation10], 2048
    $region65: #{encoder_forward.1} parent=1 // pred_fallthru
      _
    %5344 = vsyncpa [#allocation8], 1
    %5345 = vsyncpa [#allocation10], 1

</llo_original>
